<compile_context>
chip_gen: v6e
topology: v6e:2x2x1
jax: 0.10.0
libtpu: 0.0.40
codegen_flags: <defaults>
</compile_context>

<pallas_src>
import numpy as np
import jax
import jax.numpy as jnp
from jax.experimental import pallas as pl
from jax.experimental.pallas import tpu as pltpu

_CDT = jnp.bfloat16   # MXU operand dtype; gate / elementwise math stays f32


# ----------------------------------------------------------------------------
# Fused Pallas kernel
# ----------------------------------------------------------------------------
def _build_fused_kernel(T, Bp, H):
    """Fused 2-layer LSTM + MLP-head kernel for static (T, Bp, H)."""

    def gate_update(gates, c_prev):
        # Gates laid out [i | f | o | g] (reordered in the wrapper): one sigmoid
        # over a contiguous (Bp, 3H) slab, one tanh over (Bp, H).
        sig = jax.nn.sigmoid(gates[:, :3 * H])
        g = jnp.tanh(gates[:, 3 * H:])
        i = sig[:, 0 * H:1 * H]
        f = sig[:, 1 * H:2 * H]
        o = sig[:, 2 * H:3 * H]
        c_new = f * c_prev + i * g
        h_new = o * jnp.tanh(c_new)
        return h_new, c_new

    def kernel(x_ref,                       # (T*Bp, D)  bf16, time-major
               wih0_ref, whh0_ref, b0_ref,  # (D,4H) (H,4H) bf16, (1,4H) f32
               wih1_ref, whh1_ref, b1_ref,  # (H,4H) (H,4H) bf16, (1,4H) f32
               hw1_ref, hb1_ref,            # (H, H//2) bf16, (1, H//2) f32
               hw2_ref, hb2_ref,            # (H//2, Cp) bf16, (1, Cp) f32
               out_ref,                     # (Bp, Cp) f32 logits (padded)
               xp0_ref,                     # scratch (T*Bp, 4H) f32
               h0_ref, c0_ref,              # scratch (Bp, H) f32
               h1_ref, c1_ref):             # scratch (Bp, H) f32

        # ---- layer 0: hoisted input projection (one big MXU matmul) ----
        xp0_ref[...] = (
            jnp.dot(x_ref[...], wih0_ref[...], preferred_element_type=jnp.float32)
            + b0_ref[...])

        h0_ref[...] = jnp.zeros_like(h0_ref)
        c0_ref[...] = jnp.zeros_like(c0_ref)
        h1_ref[...] = jnp.zeros_like(h1_ref)
        c1_ref[...] = jnp.zeros_like(c1_ref)

        def layer1_step(h0_in):
            # Both matmuls here depend only on values available at iteration
            # start, so they co-issue with the layer-0 chain of the same step.
            g1 = (jnp.dot(h0_in.astype(_CDT), wih1_ref[...],
                          preferred_element_type=jnp.float32)
                  + b1_ref[...]
                  + jnp.dot(h1_ref[...].astype(_CDT), whh1_ref[...],
                            preferred_element_type=jnp.float32))
            return gate_update(g1, c1_ref[...])

        # ---- software-pipelined recurrence: layer-0 step t + layer-1 step t-1 ----
        for t in range(T):                      # T is tiny & static: full unroll
            h0_prev = h0_ref[...]
            c0_prev = c0_ref[...]

            g0 = xp0_ref[pl.ds(t * Bp, Bp), :] + jnp.dot(
                h0_prev.astype(_CDT), whh0_ref[...],
                preferred_element_type=jnp.float32)
            h0_new, c0_new = gate_update(g0, c0_prev)

            if t > 0:
                h1_new, c1_new = layer1_step(h0_prev)   # layer-1 step t-1
                h1_ref[...] = h1_new
                c1_ref[...] = c1_new

            h0_ref[...] = h0_new
            c0_ref[...] = c0_new

        # ---- epilogue: layer-1 step T-1 on the final layer-0 output ----
        h1_last, _ = layer1_step(h0_ref[...])

        # ---- MLP head on final layer-1 hidden state (h_n[-1]); dropout = id ----
        hmid = jnp.dot(h1_last.astype(_CDT), hw1_ref[...],
                       preferred_element_type=jnp.float32) + hb1_ref[...]
        hmid = jnp.maximum(hmid, 0.0)
        logits = jnp.dot(hmid.astype(_CDT), hw2_ref[...],
                         preferred_element_type=jnp.float32) + hb2_ref[...]
        out_ref[...] = logits.astype(out_ref.dtype)

    return kernel


# ----------------------------------------------------------------------------
# Wrapper
# ----------------------------------------------------------------------------
_VMEM = pl.BlockSpec(memory_space=pltpu.MemorySpace.VMEM)


def _reorder_gates(w):
    """Permute 4H gate columns from PyTorch [i,f,g,o] to kernel [i,f,o,g]."""
    H = w.shape[-1] // 4
    return jnp.concatenate(
        [w[..., :2 * H], w[..., 3 * H:], w[..., 2 * H:3 * H]], axis=-1)


def lstm_classifier_forward(x, params):
    """x: (B, T, D) batch_first, like the PyTorch module. Returns (B, C) logits."""
    B, T, D = x.shape
    H = params["w_hh0_t"].shape[0]
    C = params["hw2_t"].shape[1]

    Bp = ((B + 7) // 8) * 8                 # pad batch to full sublanes
    Cp = ((C + 127) // 128) * 128           # pad classes to full lanes

    # batch pad -> time-major -> flatten to (T*Bp, D); bf16 for the MXU.
    x_pad = jnp.zeros((Bp, T, D), jnp.float32).at[:B].set(x.astype(jnp.float32))
    x_tb = jnp.transpose(x_pad, (1, 0, 2)).reshape(T * Bp, D).astype(_CDT)

    # gate reorder + bf16 cast for MXU operands (biases stay f32)
    wih0 = _reorder_gates(params["w_ih0_t"]).astype(_CDT)
    whh0 = _reorder_gates(params["w_hh0_t"]).astype(_CDT)
    b0 = _reorder_gates(params["b0"])
    wih1 = _reorder_gates(params["w_ih1_t"]).astype(_CDT)
    whh1 = _reorder_gates(params["w_hh1_t"]).astype(_CDT)
    b1 = _reorder_gates(params["b1"])

    hw1 = params["hw1_t"].astype(_CDT)
    hb1 = params["hb1"]
    # lane-pad the final head layer so the logits store is unmasked (Bp, Cp)
    hw2 = jnp.zeros((H // 2, Cp), jnp.float32).at[:, :C].set(
        params["hw2_t"]).astype(_CDT)
    hb2 = jnp.zeros((1, Cp), jnp.float32).at[:, :C].set(params["hb2"])

    out = pl.pallas_call(
        _build_fused_kernel(T, Bp, H),
        out_shape=jax.ShapeDtypeStruct((Bp, Cp), jnp.float32),
        in_specs=[_VMEM] * 11,
        out_specs=_VMEM,
        scratch_shapes=[
            pltpu.VMEM((T * Bp, 4 * H), jnp.float32),   # xp0 (hoisted projection)
            pltpu.VMEM((Bp, H), jnp.float32),           # h0
            pltpu.VMEM((Bp, H), jnp.float32),           # c0
            pltpu.VMEM((Bp, H), jnp.float32),           # h1
            pltpu.VMEM((Bp, H), jnp.float32),           # c1
        ],
    )(x_tb, wih0, whh0, b0, wih1, whh1, b1, hw1, hb1, hw2, hb2)

    return out[:B, :C]


# ----------------------------------------------------------------------------
# Pure-JAX reference (PyTorch gate order [i,f,g,o], f32 everywhere)
# ----------------------------------------------------------------------------
def ref_forward(x, params):
    B, T, _ = x.shape
    H = params["w_hh0_t"].shape[0]

    def run_layer(inp, wih_t, whh_t, b):
        h = jnp.zeros((B, H), jnp.float32)
        c = jnp.zeros((B, H), jnp.float32)
        outs = []
        for t in range(T):
            gates = inp[:, t, :] @ wih_t + h @ whh_t + b
            i = jax.nn.sigmoid(gates[:, 0 * H:1 * H])
            f = jax.nn.sigmoid(gates[:, 1 * H:2 * H])
            g = jnp.tanh(gates[:, 2 * H:3 * H])
            o = jax.nn.sigmoid(gates[:, 3 * H:4 * H])
            c = f * c + i * g
            h = o * jnp.tanh(c)
            outs.append(h)
        return jnp.stack(outs, axis=1)  # (B, T, H)

    o0 = run_layer(x, params["w_ih0_t"], params["w_hh0_t"], params["b0"])
    o1 = run_layer(o0, params["w_ih1_t"], params["w_hh1_t"], params["b1"])
    last = o1[:, -1, :]
    h1 = jnp.maximum(last @ params["hw1_t"] + params["hb1"], 0.0)
    return h1 @ params["hw2_t"] + params["hb2"]


# ----------------------------------------------------------------------------
# Parameter init (deterministic, PyTorch-style uniform(-1/sqrt(H), 1/sqrt(H)))
# ----------------------------------------------------------------------------
def init_params(key, input_dim, hidden_dim, num_classes):
    k = 1.0 / np.sqrt(hidden_dim)
    keys = jax.random.split(key, 16)

    def u(kk, shape, bound):
        return jax.random.uniform(kk, shape, jnp.float32, -bound, bound)

    H = hidden_dim
    return {
        # LSTM layer 0: W_ih (4H, D) -> stored transposed (D, 4H), [i,f,g,o] order
        "w_ih0_t": u(keys[0], (input_dim, 4 * H), k),
        "w_hh0_t": u(keys[1], (H, 4 * H), k),
        "b0":      u(keys[2], (1, 4 * H), k) + u(keys[3], (1, 4 * H), k),  # b_ih + b_hh
        # LSTM layer 1: input is hidden_dim wide
        "w_ih1_t": u(keys[4], (H, 4 * H), k),
        "w_hh1_t": u(keys[5], (H, 4 * H), k),
        "b1":      u(keys[6], (1, 4 * H), k) + u(keys[7], (1, 4 * H), k),
        # Head: Linear(H, H//2), Linear(H//2, num_classes)
        "hw1_t": u(keys[8], (H, H // 2), 1.0 / np.sqrt(H)),
        "hb1":   u(keys[9], (1, H // 2), 1.0 / np.sqrt(H)),
        "hw2_t": u(keys[10], (H // 2, num_classes), 1.0 / np.sqrt(H // 2)),
        "hb2":   u(keys[11], (1, num_classes), 1.0 / np.sqrt(H // 2)),
    }


# ----------------------------------------------------------------------------
if __name__ == "__main__":
    CLASSES = ['block', 'cross', 'idle', 'jab', 'left_hook', 'left_uppercut',
               'right_hook', 'right_uppercut']

    BATCH = 2
    SEQ = 8
    INPUT_DIM = 16      # sample_x.shape[2]
    HIDDEN_DIM = 128    # module default
    NUM_CLASSES = len(CLASSES)

    key = jax.random.PRNGKey(0)
    k_x, k_p = jax.random.split(key)

    x = jax.random.normal(k_x, (BATCH, SEQ, INPUT_DIM), jnp.float32)
    params = init_params(k_p, INPUT_DIM, HIDDEN_DIM, NUM_CLASSES)

    logits = lstm_classifier_forward(x, params)
    logits = jax.block_until_ready(logits)

    ref = jax.block_until_ready(ref_forward(x, params))
    # bf16 MXU operands -> tolerance loosened vs. the pure-f32 reference.
    np.testing.assert_allclose(np.asarray(logits), np.asarray(ref),
                               atol=3e-2, rtol=3e-2)

    print("KERNEL_OK")
</pallas_src>

<mosaic_0001>
module attributes {stable_mosaic.version = 11 : i64} {
  func.func @kernel(%arg0: memref<64x16xbf16, #tpu.memory_space<vmem>>, %arg1: memref<16x512xbf16, #tpu.memory_space<vmem>>, %arg2: memref<128x512xbf16, #tpu.memory_space<vmem>>, %arg3: memref<1x512xf32, #tpu.memory_space<vmem>>, %arg4: memref<128x512xbf16, #tpu.memory_space<vmem>>, %arg5: memref<128x512xbf16, #tpu.memory_space<vmem>>, %arg6: memref<1x512xf32, #tpu.memory_space<vmem>>, %arg7: memref<128x64xbf16, #tpu.memory_space<vmem>>, %arg8: memref<1x64xf32, #tpu.memory_space<vmem>>, %arg9: memref<64x128xbf16, #tpu.memory_space<vmem>>, %arg10: memref<1x128xf32, #tpu.memory_space<vmem>>, %arg11: memref<8x128xf32, #tpu.memory_space<vmem>>, %arg12: memref<64x512xf32, #tpu.memory_space<vmem>>, %arg13: memref<8x128xf32, #tpu.memory_space<vmem>>, %arg14: memref<8x128xf32, #tpu.memory_space<vmem>>, %arg15: memref<8x128xf32, #tpu.memory_space<vmem>>, %arg16: memref<8x128xf32, #tpu.memory_space<vmem>>) attributes {dimension_semantics = [], scalar_prefetch = 0 : i64, scratch_operands = 5 : i64, tpu.core_type = #tpu.core_type<tc>} {
    %c0 = arith.constant 0 : index
    %c0_0 = arith.constant 0 : index
    %0 = vector.load %arg0[%c0, %c0_0] : memref<64x16xbf16, #tpu.memory_space<vmem>>, vector<64x16xbf16>
    %c0_1 = arith.constant 0 : index
    %c0_2 = arith.constant 0 : index
    %1 = vector.load %arg1[%c0_1, %c0_2] : memref<16x512xbf16, #tpu.memory_space<vmem>>, vector<16x512xbf16>
    %cst = arith.constant dense<0.000000e+00> : vector<64x512xf32>
    %2 = tpu.matmul %0, %1, %cst {dimension_numbers = #tpu.dot_dimension_numbers<[1], [0], [0], [1], [0, 0, 1, 1], [], []>} : vector<64x16xbf16>, vector<16x512xbf16>, vector<64x512xf32> -> vector<64x512xf32>
    %c0_3 = arith.constant 0 : index
    %c0_4 = arith.constant 0 : index
    %3 = vector.load %arg3[%c0_3, %c0_4] : memref<1x512xf32, #tpu.memory_space<vmem>>, vector<1x512xf32>
    %4 = vector.broadcast %3 : vector<1x512xf32> to vector<64x512xf32>
    %5 = arith.addf %2, %4 : vector<64x512xf32>
    %c0_5 = arith.constant 0 : index
    %c0_6 = arith.constant 0 : index
    %6 = vector.load %arg12[%c0_5, %c0_6] : memref<64x512xf32, #tpu.memory_space<vmem>>, vector<64x512xf32>
    tpu.vector_store %arg12[%c0_5, %c0_6], %5 {strides = array<i32>} : memref<64x512xf32, #tpu.memory_space<vmem>>, vector<64x512xf32>,
    %cst_7 = arith.constant 0.000000e+00 : f32
    %7 = vector.broadcast %cst_7 : f32 to vector<8x128xf32>
    %c0_8 = arith.constant 0 : index
    %c0_9 = arith.constant 0 : index
    %8 = vector.load %arg13[%c0_8, %c0_9] : memref<8x128xf32, #tpu.memory_space<vmem>>, vector<8x128xf32>
    tpu.vector_store %arg13[%c0_8, %c0_9], %7 {strides = array<i32>} : memref<8x128xf32, #tpu.memory_space<vmem>>, vector<8x128xf32>,
    %cst_10 = arith.constant 0.000000e+00 : f32
    %9 = vector.broadcast %cst_10 : f32 to vector<8x128xf32>
    %c0_11 = arith.constant 0 : index
    %c0_12 = arith.constant 0 : index
    %10 = vector.load %arg14[%c0_11, %c0_12] : memref<8x128xf32, #tpu.memory_space<vmem>>, vector<8x128xf32>
    tpu.vector_store %arg14[%c0_11, %c0_12], %9 {strides = array<i32>} : memref<8x128xf32, #tpu.memory_space<vmem>>, vector<8x128xf32>,
    %cst_13 = arith.constant 0.000000e+00 : f32
    %11 = vector.broadcast %cst_13 : f32 to vector<8x128xf32>
    %c0_14 = arith.constant 0 : index
    %c0_15 = arith.constant 0 : index
    %12 = vector.load %arg15[%c0_14, %c0_15] : memref<8x128xf32, #tpu.memory_space<vmem>>, vector<8x128xf32>
    tpu.vector_store %arg15[%c0_14, %c0_15], %11 {strides = array<i32>} : memref<8x128xf32, #tpu.memory_space<vmem>>, vector<8x128xf32>,
    %cst_16 = arith.constant 0.000000e+00 : f32
    %13 = vector.broadcast %cst_16 : f32 to vector<8x128xf32>
    %c0_17 = arith.constant 0 : index
    %c0_18 = arith.constant 0 : index
    %14 = vector.load %arg16[%c0_17, %c0_18] : memref<8x128xf32, #tpu.memory_space<vmem>>, vector<8x128xf32>
    tpu.vector_store %arg16[%c0_17, %c0_18], %13 {strides = array<i32>} : memref<8x128xf32, #tpu.memory_space<vmem>>, vector<8x128xf32>,
    %c0_19 = arith.constant 0 : index
    %c0_20 = arith.constant 0 : index
    %15 = vector.load %arg13[%c0_19, %c0_20] : memref<8x128xf32, #tpu.memory_space<vmem>>, vector<8x128xf32>
    %c0_21 = arith.constant 0 : index
    %c0_22 = arith.constant 0 : index
    %16 = vector.load %arg14[%c0_21, %c0_22] : memref<8x128xf32, #tpu.memory_space<vmem>>, vector<8x128xf32>
    %c0_23 = arith.constant 0 : index
    %c0_24 = arith.constant 0 : index
    %17 = vector.load %arg12[%c0_23, %c0_24] : memref<64x512xf32, #tpu.memory_space<vmem>>, vector<8x512xf32>
    %18 = arith.truncf %15 : vector<8x128xf32> to vector<8x128xbf16>
    %c0_25 = arith.constant 0 : index
    %c0_26 = arith.constant 0 : index
    %19 = vector.load %arg2[%c0_25, %c0_26] : memref<128x512xbf16, #tpu.memory_space<vmem>>, vector<128x512xbf16>
    %cst_27 = arith.constant dense<0.000000e+00> : vector<8x512xf32>
    %20 = tpu.matmul %18, %19, %cst_27 {dimension_numbers = #tpu.dot_dimension_numbers<[1], [0], [0], [1], [0, 0, 1, 1], [], []>} : vector<8x128xbf16>, vector<128x512xbf16>, vector<8x512xf32> -> vector<8x512xf32>
    %21 = arith.addf %17, %20 : vector<8x512xf32>
    %22 = vector.extract_strided_slice %21 {offsets = [0, 0], sizes = [8, 384], strides = [1, 1]} : vector<8x512xf32> to vector<8x384xf32>
    %23 = arith.negf %22 : vector<8x384xf32>
    %24 = math.exp %23 : vector<8x384xf32>
    %cst_28 = arith.constant 1.000000e+00 : f32
    %25 = vector.broadcast %cst_28 : f32 to vector<8x384xf32>
    %26 = arith.addf %25, %24 : vector<8x384xf32>
    %27 = arith.divf %25, %26 : vector<8x384xf32>
    %28 = vector.extract_strided_slice %21 {offsets = [0, 384], sizes = [8, 128], strides = [1, 1]} : vector<8x512xf32> to vector<8x128xf32>
    %29 = math.tanh %28 : vector<8x128xf32>
    %30 = vector.extract_strided_slice %27 {offsets = [0, 0], sizes = [8, 128], strides = [1, 1]} : vector<8x384xf32> to vector<8x128xf32>
    %31 = vector.extract_strided_slice %27 {offsets = [0, 128], sizes = [8, 128], strides = [1, 1]} : vector<8x384xf32> to vector<8x128xf32>
    %32 = vector.extract_strided_slice %27 {offsets = [0, 256], sizes = [8, 128], strides = [1, 1]} : vector<8x384xf32> to vector<8x128xf32>
    %33 = arith.mulf %31, %16 : vector<8x128xf32>
    %34 = arith.mulf %30, %29 : vector<8x128xf32>
    %35 = arith.addf %33, %34 : vector<8x128xf32>
    %36 = math.tanh %35 : vector<8x128xf32>
    %37 = arith.mulf %32, %36 : vector<8x128xf32>
    %c0_29 = arith.constant 0 : index
    %c0_30 = arith.constant 0 : index
    %38 = vector.load %arg13[%c0_29, %c0_30] : memref<8x128xf32, #tpu.memory_space<vmem>>, vector<8x128xf32>
    tpu.vector_store %arg13[%c0_29, %c0_30], %37 {strides = array<i32>} : memref<8x128xf32, #tpu.memory_space<vmem>>, vector<8x128xf32>,
    %c0_31 = arith.constant 0 : index
    %c0_32 = arith.constant 0 : index
    %39 = vector.load %arg14[%c0_31, %c0_32] : memref<8x128xf32, #tpu.memory_space<vmem>>, vector<8x128xf32>
    tpu.vector_store %arg14[%c0_31, %c0_32], %35 {strides = array<i32>} : memref<8x128xf32, #tpu.memory_space<vmem>>, vector<8x128xf32>,
    %c0_33 = arith.constant 0 : index
    %c0_34 = arith.constant 0 : index
    %40 = vector.load %arg13[%c0_33, %c0_34] : memref<8x128xf32, #tpu.memory_space<vmem>>, vector<8x128xf32>
    %c0_35 = arith.constant 0 : index
    %c0_36 = arith.constant 0 : index
    %41 = vector.load %arg14[%c0_35, %c0_36] : memref<8x128xf32, #tpu.memory_space<vmem>>, vector<8x128xf32>
    %c8 = arith.constant 8 : index
    %c0_37 = arith.constant 0 : index
    %42 = vector.load %arg12[%c8, %c0_37] : memref<64x512xf32, #tpu.memory_space<vmem>>, vector<8x512xf32>
    %43 = arith.truncf %40 : vector<8x128xf32> to vector<8x128xbf16>
    %c0_38 = arith.constant 0 : index
    %c0_39 = arith.constant 0 : index
    %44 = vector.load %arg2[%c0_38, %c0_39] : memref<128x512xbf16, #tpu.memory_space<vmem>>, vector<128x512xbf16>
    %cst_40 = arith.constant dense<0.000000e+00> : vector<8x512xf32>
    %45 = tpu.matmul %43, %44, %cst_40 {dimension_numbers = #tpu.dot_dimension_numbers<[1], [0], [0], [1], [0, 0, 1, 1], [], []>} : vector<8x128xbf16>, vector<128x512xbf16>, vector<8x512xf32> -> vector<8x512xf32>
    %46 = arith.addf %42, %45 : vector<8x512xf32>
    %47 = vector.extract_strided_slice %46 {offsets = [0, 0], sizes = [8, 384], strides = [1, 1]} : vector<8x512xf32> to vector<8x384xf32>
    %48 = arith.negf %47 : vector<8x384xf32>
    %49 = math.exp %48 : vector<8x384xf32>
    %cst_41 = arith.constant 1.000000e+00 : f32
    %50 = vector.broadcast %cst_41 : f32 to vector<8x384xf32>
    %51 = arith.addf %50, %49 : vector<8x384xf32>
    %52 = arith.divf %50, %51 : vector<8x384xf32>
    %53 = vector.extract_strided_slice %46 {offsets = [0, 384], sizes = [8, 128], strides = [1, 1]} : vector<8x512xf32> to vector<8x128xf32>
    %54 = math.tanh %53 : vector<8x128xf32>
    %55 = vector.extract_strided_slice %52 {offsets = [0, 0], sizes = [8, 128], strides = [1, 1]} : vector<8x384xf32> to vector<8x128xf32>
    %56 = vector.extract_strided_slice %52 {offsets = [0, 128], sizes = [8, 128], strides = [1, 1]} : vector<8x384xf32> to vector<8x128xf32>
    %57 = vector.extract_strided_slice %52 {offsets = [0, 256], sizes = [8, 128], strides = [1, 1]} : vector<8x384xf32> to vector<8x128xf32>
    %58 = arith.mulf %56, %41 : vector<8x128xf32>
    %59 = arith.mulf %55, %54 : vector<8x128xf32>
    %60 = arith.addf %58, %59 : vector<8x128xf32>
    %61 = math.tanh %60 : vector<8x128xf32>
    %62 = arith.mulf %57, %61 : vector<8x128xf32>
    %63 = arith.truncf %40 : vector<8x128xf32> to vector<8x128xbf16>
    %c0_42 = arith.constant 0 : index
    %c0_43 = arith.constant 0 : index
    %64 = vector.load %arg4[%c0_42, %c0_43] : memref<128x512xbf16, #tpu.memory_space<vmem>>, vector<128x512xbf16>
    %cst_44 = arith.constant dense<0.000000e+00> : vector<8x512xf32>
    %65 = tpu.matmul %63, %64, %cst_44 {dimension_numbers = #tpu.dot_dimension_numbers<[1], [0], [0], [1], [0, 0, 1, 1], [], []>} : vector<8x128xbf16>, vector<128x512xbf16>, vector<8x512xf32> -> vector<8x512xf32>
    %c0_45 = arith.constant 0 : index
    %c0_46 = arith.constant 0 : index
    %66 = vector.load %arg6[%c0_45, %c0_46] : memref<1x512xf32, #tpu.memory_space<vmem>>, vector<1x512xf32>
    %67 = vector.broadcast %66 : vector<1x512xf32> to vector<8x512xf32>
    %68 = arith.addf %65, %67 : vector<8x512xf32>
    %c0_47 = arith.constant 0 : index
    %c0_48 = arith.constant 0 : index
    %69 = vector.load %arg15[%c0_47, %c0_48] : memref<8x128xf32, #tpu.memory_space<vmem>>, vector<8x128xf32>
    %70 = arith.truncf %69 : vector<8x128xf32> to vector<8x128xbf16>
    %c0_49 = arith.constant 0 : index
    %c0_50 = arith.constant 0 : index
    %71 = vector.load %arg5[%c0_49, %c0_50] : memref<128x512xbf16, #tpu.memory_space<vmem>>, vector<128x512xbf16>
    %cst_51 = arith.constant dense<0.000000e+00> : vector<8x512xf32>
    %72 = tpu.matmul %70, %71, %cst_51 {dimension_numbers = #tpu.dot_dimension_numbers<[1], [0], [0], [1], [0, 0, 1, 1], [], []>} : vector<8x128xbf16>, vector<128x512xbf16>, vector<8x512xf32> -> vector<8x512xf32>
    %73 = arith.addf %68, %72 : vector<8x512xf32>
    %c0_52 = arith.constant 0 : index
    %c0_53 = arith.constant 0 : index
    %74 = vector.load %arg16[%c0_52, %c0_53] : memref<8x128xf32, #tpu.memory_space<vmem>>, vector<8x128xf32>
    %75 = vector.extract_strided_slice %73 {offsets = [0, 0], sizes = [8, 384], strides = [1, 1]} : vector<8x512xf32> to vector<8x384xf32>
    %76 = arith.negf %75 : vector<8x384xf32>
    %77 = math.exp %76 : vector<8x384xf32>
    %cst_54 = arith.constant 1.000000e+00 : f32
    %78 = vector.broadcast %cst_54 : f32 to vector<8x384xf32>
    %79 = arith.addf %78, %77 : vector<8x384xf32>
    %80 = arith.divf %78, %79 : vector<8x384xf32>
    %81 = vector.extract_strided_slice %73 {offsets = [0, 384], sizes = [8, 128], strides = [1, 1]} : vector<8x512xf32> to vector<8x128xf32>
    %82 = math.tanh %81 : vector<8x128xf32>
    %83 = vector.extract_strided_slice %80 {offsets = [0, 0], sizes = [8, 128], strides = [1, 1]} : vector<8x384xf32> to vector<8x128xf32>
    %84 = vector.extract_strided_slice %80 {offsets = [0, 128], sizes = [8, 128], strides = [1, 1]} : vector<8x384xf32> to vector<8x128xf32>
    %85 = vector.extract_strided_slice %80 {offsets = [0, 256], sizes = [8, 128], strides = [1, 1]} : vector<8x384xf32> to vector<8x128xf32>
    %86 = arith.mulf %84, %74 : vector<8x128xf32>
    %87 = arith.mulf %83, %82 : vector<8x128xf32>
    %88 = arith.addf %86, %87 : vector<8x128xf32>
    %89 = math.tanh %88 : vector<8x128xf32>
    %90 = arith.mulf %85, %89 : vector<8x128xf32>
    %c0_55 = arith.constant 0 : index
    %c0_56 = arith.constant 0 : index
    %91 = vector.load %arg15[%c0_55, %c0_56] : memref<8x128xf32, #tpu.memory_space<vmem>>, vector<8x128xf32>
    tpu.vector_store %arg15[%c0_55, %c0_56], %90 {strides = array<i32>} : memref<8x128xf32, #tpu.memory_space<vmem>>, vector<8x128xf32>,
    %c0_57 = arith.constant 0 : index
    %c0_58 = arith.constant 0 : index
    %92 = vector.load %arg16[%c0_57, %c0_58] : memref<8x128xf32, #tpu.memory_space<vmem>>, vector<8x128xf32>
    tpu.vector_store %arg16[%c0_57, %c0_58], %88 {strides = array<i32>} : memref<8x128xf32, #tpu.memory_space<vmem>>, vector<8x128xf32>,
    %c0_59 = arith.constant 0 : index
    %c0_60 = arith.constant 0 : index
    %93 = vector.load %arg13[%c0_59, %c0_60] : memref<8x128xf32, #tpu.memory_space<vmem>>, vector<8x128xf32>
    tpu.vector_store %arg13[%c0_59, %c0_60], %62 {strides = array<i32>} : memref<8x128xf32, #tpu.memory_space<vmem>>, vector<8x128xf32>,
    %c0_61 = arith.constant 0 : index
    %c0_62 = arith.constant 0 : index
    %94 = vector.load %arg14[%c0_61, %c0_62] : memref<8x128xf32, #tpu.memory_space<vmem>>, vector<8x128xf32>
    tpu.vector_store %arg14[%c0_61, %c0_62], %60 {strides = array<i32>} : memref<8x128xf32, #tpu.memory_space<vmem>>, vector<8x128xf32>,
    %c0_63 = arith.constant 0 : index
    %c0_64 = arith.constant 0 : index
    %95 = vector.load %arg13[%c0_63, %c0_64] : memref<8x128xf32, #tpu.memory_space<vmem>>, vector<8x128xf32>
    %c0_65 = arith.constant 0 : index
    %c0_66 = arith.constant 0 : index
    %96 = vector.load %arg14[%c0_65, %c0_66] : memref<8x128xf32, #tpu.memory_space<vmem>>, vector<8x128xf32>
    %c16 = arith.constant 16 : index
    %c0_67 = arith.constant 0 : index
    %97 = vector.load %arg12[%c16, %c0_67] : memref<64x512xf32, #tpu.memory_space<vmem>>, vector<8x512xf32>
    %98 = arith.truncf %95 : vector<8x128xf32> to vector<8x128xbf16>
    %c0_68 = arith.constant 0 : index
    %c0_69 = arith.constant 0 : index
    %99 = vector.load %arg2[%c0_68, %c0_69] : memref<128x512xbf16, #tpu.memory_space<vmem>>, vector<128x512xbf16>
    %cst_70 = arith.constant dense<0.000000e+00> : vector<8x512xf32>
    %100 = tpu.matmul %98, %99, %cst_70 {dimension_numbers = #tpu.dot_dimension_numbers<[1], [0], [0], [1], [0, 0, 1, 1], [], []>} : vector<8x128xbf16>, vector<128x512xbf16>, vector<8x512xf32> -> vector<8x512xf32>
    %101 = arith.addf %97, %100 : vector<8x512xf32>
    %102 = vector.extract_strided_slice %101 {offsets = [0, 0], sizes = [8, 384], strides = [1, 1]} : vector<8x512xf32> to vector<8x384xf32>
    %103 = arith.negf %102 : vector<8x384xf32>
    %104 = math.exp %103 : vector<8x384xf32>
    %cst_71 = arith.constant 1.000000e+00 : f32
    %105 = vector.broadcast %cst_71 : f32 to vector<8x384xf32>
    %106 = arith.addf %105, %104 : vector<8x384xf32>
    %107 = arith.divf %105, %106 : vector<8x384xf32>
    %108 = vector.extract_strided_slice %101 {offsets = [0, 384], sizes = [8, 128], strides = [1, 1]} : vector<8x512xf32> to vector<8x128xf32>
    %109 = math.tanh %108 : vector<8x128xf32>
    %110 = vector.extract_strided_slice %107 {offsets = [0, 0], sizes = [8, 128], strides = [1, 1]} : vector<8x384xf32> to vector<8x128xf32>
    %111 = vector.extract_strided_slice %107 {offsets = [0, 128], sizes = [8, 128], strides = [1, 1]} : vector<8x384xf32> to vector<8x128xf32>
    %112 = vector.extract_strided_slice %107 {offsets = [0, 256], sizes = [8, 128], strides = [1, 1]} : vector<8x384xf32> to vector<8x128xf32>
    %113 = arith.mulf %111, %96 : vector<8x128xf32>
    %114 = arith.mulf %110, %109 : vector<8x128xf32>
    %115 = arith.addf %113, %114 : vector<8x128xf32>
    %116 = math.tanh %115 : vector<8x128xf32>
    %117 = arith.mulf %112, %116 : vector<8x128xf32>
    %118 = arith.truncf %95 : vector<8x128xf32> to vector<8x128xbf16>
    %c0_72 = arith.constant 0 : index
    %c0_73 = arith.constant 0 : index
    %119 = vector.load %arg4[%c0_72, %c0_73] : memref<128x512xbf16, #tpu.memory_space<vmem>>, vector<128x512xbf16>
    %cst_74 = arith.constant dense<0.000000e+00> : vector<8x512xf32>
    %120 = tpu.matmul %118, %119, %cst_74 {dimension_numbers = #tpu.dot_dimension_numbers<[1], [0], [0], [1], [0, 0, 1, 1], [], []>} : vector<8x128xbf16>, vector<128x512xbf16>, vector<8x512xf32> -> vector<8x512xf32>
    %c0_75 = arith.constant 0 : index
    %c0_76 = arith.constant 0 : index
    %121 = vector.load %arg6[%c0_75, %c0_76] : memref<1x512xf32, #tpu.memory_space<vmem>>, vector<1x512xf32>
    %122 = vector.broadcast %121 : vector<1x512xf32> to vector<8x512xf32>
    %123 = arith.addf %120, %122 : vector<8x512xf32>
    %c0_77 = arith.constant 0 : index
    %c0_78 = arith.constant 0 : index
    %124 = vector.load %arg15[%c0_77, %c0_78] : memref<8x128xf32, #tpu.memory_space<vmem>>, vector<8x128xf32>
    %125 = arith.truncf %124 : vector<8x128xf32> to vector<8x128xbf16>
    %c0_79 = arith.constant 0 : index
    %c0_80 = arith.constant 0 : index
    %126 = vector.load %arg5[%c0_79, %c0_80] : memref<128x512xbf16, #tpu.memory_space<vmem>>, vector<128x512xbf16>
    %cst_81 = arith.constant dense<0.000000e+00> : vector<8x512xf32>
    %127 = tpu.matmul %125, %126, %cst_81 {dimension_numbers = #tpu.dot_dimension_numbers<[1], [0], [0], [1], [0, 0, 1, 1], [], []>} : vector<8x128xbf16>, vector<128x512xbf16>, vector<8x512xf32> -> vector<8x512xf32>
    %128 = arith.addf %123, %127 : vector<8x512xf32>
    %c0_82 = arith.constant 0 : index
    %c0_83 = arith.constant 0 : index
    %129 = vector.load %arg16[%c0_82, %c0_83] : memref<8x128xf32, #tpu.memory_space<vmem>>, vector<8x128xf32>
    %130 = vector.extract_strided_slice %128 {offsets = [0, 0], sizes = [8, 384], strides = [1, 1]} : vector<8x512xf32> to vector<8x384xf32>
    %131 = arith.negf %130 : vector<8x384xf32>
    %132 = math.exp %131 : vector<8x384xf32>
    %cst_84 = arith.constant 1.000000e+00 : f32
    %133 = vector.broadcast %cst_84 : f32 to vector<8x384xf32>
    %134 = arith.addf %133, %132 : vector<8x384xf32>
    %135 = arith.divf %133, %134 : vector<8x384xf32>
    %136 = vector.extract_strided_slice %128 {offsets = [0, 384], sizes = [8, 128], strides = [1, 1]} : vector<8x512xf32> to vector<8x128xf32>
    %137 = math.tanh %136 : vector<8x128xf32>
    %138 = vector.extract_strided_slice %135 {offsets = [0, 0], sizes = [8, 128], strides = [1, 1]} : vector<8x384xf32> to vector<8x128xf32>
    %139 = vector.extract_strided_slice %135 {offsets = [0, 128], sizes = [8, 128], strides = [1, 1]} : vector<8x384xf32> to vector<8x128xf32>
    %140 = vector.extract_strided_slice %135 {offsets = [0, 256], sizes = [8, 128], strides = [1, 1]} : vector<8x384xf32> to vector<8x128xf32>
    %141 = arith.mulf %139, %129 : vector<8x128xf32>
    %142 = arith.mulf %138, %137 : vector<8x128xf32>
    %143 = arith.addf %141, %142 : vector<8x128xf32>
    %144 = math.tanh %143 : vector<8x128xf32>
    %145 = arith.mulf %140, %144 : vector<8x128xf32>
    %c0_85 = arith.constant 0 : index
    %c0_86 = arith.constant 0 : index
    %146 = vector.load %arg15[%c0_85, %c0_86] : memref<8x128xf32, #tpu.memory_space<vmem>>, vector<8x128xf32>
    tpu.vector_store %arg15[%c0_85, %c0_86], %145 {strides = array<i32>} : memref<8x128xf32, #tpu.memory_space<vmem>>, vector<8x128xf32>,
    %c0_87 = arith.constant 0 : index
    %c0_88 = arith.constant 0 : index
    %147 = vector.load %arg16[%c0_87, %c0_88] : memref<8x128xf32, #tpu.memory_space<vmem>>, vector<8x128xf32>
    tpu.vector_store %arg16[%c0_87, %c0_88], %143 {strides = array<i32>} : memref<8x128xf32, #tpu.memory_space<vmem>>, vector<8x128xf32>,
    %c0_89 = arith.constant 0 : index
    %c0_90 = arith.constant 0 : index
    %148 = vector.load %arg13[%c0_89, %c0_90] : memref<8x128xf32, #tpu.memory_space<vmem>>, vector<8x128xf32>
    tpu.vector_store %arg13[%c0_89, %c0_90], %117 {strides = array<i32>} : memref<8x128xf32, #tpu.memory_space<vmem>>, vector<8x128xf32>,
    %c0_91 = arith.constant 0 : index
    %c0_92 = arith.constant 0 : index
    %149 = vector.load %arg14[%c0_91, %c0_92] : memref<8x128xf32, #tpu.memory_space<vmem>>, vector<8x128xf32>
    tpu.vector_store %arg14[%c0_91, %c0_92], %115 {strides = array<i32>} : memref<8x128xf32, #tpu.memory_space<vmem>>, vector<8x128xf32>,
    %c0_93 = arith.constant 0 : index
    %c0_94 = arith.constant 0 : index
    %150 = vector.load %arg13[%c0_93, %c0_94] : memref<8x128xf32, #tpu.memory_space<vmem>>, vector<8x128xf32>
    %c0_95 = arith.constant 0 : index
    %c0_96 = arith.constant 0 : index
    %151 = vector.load %arg14[%c0_95, %c0_96] : memref<8x128xf32, #tpu.memory_space<vmem>>, vector<8x128xf32>
    %c24 = arith.constant 24 : index
    %c0_97 = arith.constant 0 : index
    %152 = vector.load %arg12[%c24, %c0_97] : memref<64x512xf32, #tpu.memory_space<vmem>>, vector<8x512xf32>
    %153 = arith.truncf %150 : vector<8x128xf32> to vector<8x128xbf16>
    %c0_98 = arith.constant 0 : index
    %c0_99 = arith.constant 0 : index
    %154 = vector.load %arg2[%c0_98, %c0_99] : memref<128x512xbf16, #tpu.memory_space<vmem>>, vector<128x512xbf16>
    %cst_100 = arith.constant dense<0.000000e+00> : vector<8x512xf32>
    %155 = tpu.matmul %153, %154, %cst_100 {dimension_numbers = #tpu.dot_dimension_numbers<[1], [0], [0], [1], [0, 0, 1, 1], [], []>} : vector<8x128xbf16>, vector<128x512xbf16>, vector<8x512xf32> -> vector<8x512xf32>
    %156 = arith.addf %152, %155 : vector<8x512xf32>
    %157 = vector.extract_strided_slice %156 {offsets = [0, 0], sizes = [8, 384], strides = [1, 1]} : vector<8x512xf32> to vector<8x384xf32>
    %158 = arith.negf %157 : vector<8x384xf32>
    %159 = math.exp %158 : vector<8x384xf32>
    %cst_101 = arith.constant 1.000000e+00 : f32
    %160 = vector.broadcast %cst_101 : f32 to vector<8x384xf32>
    %161 = arith.addf %160, %159 : vector<8x384xf32>
    %162 = arith.divf %160, %161 : vector<8x384xf32>
    %163 = vector.extract_strided_slice %156 {offsets = [0, 384], sizes = [8, 128], strides = [1, 1]} : vector<8x512xf32> to vector<8x128xf32>
    %164 = math.tanh %163 : vector<8x128xf32>
    %165 = vector.extract_strided_slice %162 {offsets = [0, 0], sizes = [8, 128], strides = [1, 1]} : vector<8x384xf32> to vector<8x128xf32>
    %166 = vector.extract_strided_slice %162 {offsets = [0, 128], sizes = [8, 128], strides = [1, 1]} : vector<8x384xf32> to vector<8x128xf32>
    %167 = vector.extract_strided_slice %162 {offsets = [0, 256], sizes = [8, 128], strides = [1, 1]} : vector<8x384xf32> to vector<8x128xf32>
    %168 = arith.mulf %166, %151 : vector<8x128xf32>
    %169 = arith.mulf %165, %164 : vector<8x128xf32>
    %170 = arith.addf %168, %169 : vector<8x128xf32>
    %171 = math.tanh %170 : vector<8x128xf32>
    %172 = arith.mulf %167, %171 : vector<8x128xf32>
    %173 = arith.truncf %150 : vector<8x128xf32> to vector<8x128xbf16>
    %c0_102 = arith.constant 0 : index
    %c0_103 = arith.constant 0 : index
    %174 = vector.load %arg4[%c0_102, %c0_103] : memref<128x512xbf16, #tpu.memory_space<vmem>>, vector<128x512xbf16>
    %cst_104 = arith.constant dense<0.000000e+00> : vector<8x512xf32>
    %175 = tpu.matmul %173, %174, %cst_104 {dimension_numbers = #tpu.dot_dimension_numbers<[1], [0], [0], [1], [0, 0, 1, 1], [], []>} : vector<8x128xbf16>, vector<128x512xbf16>, vector<8x512xf32> -> vector<8x512xf32>
    %c0_105 = arith.constant 0 : index
    %c0_106 = arith.constant 0 : index
    %176 = vector.load %arg6[%c0_105, %c0_106] : memref<1x512xf32, #tpu.memory_space<vmem>>, vector<1x512xf32>
    %177 = vector.broadcast %176 : vector<1x512xf32> to vector<8x512xf32>
    %178 = arith.addf %175, %177 : vector<8x512xf32>
    %c0_107 = arith.constant 0 : index
    %c0_108 = arith.constant 0 : index
    %179 = vector.load %arg15[%c0_107, %c0_108] : memref<8x128xf32, #tpu.memory_space<vmem>>, vector<8x128xf32>
    %180 = arith.truncf %179 : vector<8x128xf32> to vector<8x128xbf16>
    %c0_109 = arith.constant 0 : index
    %c0_110 = arith.constant 0 : index
    %181 = vector.load %arg5[%c0_109, %c0_110] : memref<128x512xbf16, #tpu.memory_space<vmem>>, vector<128x512xbf16>
    %cst_111 = arith.constant dense<0.000000e+00> : vector<8x512xf32>
    %182 = tpu.matmul %180, %181, %cst_111 {dimension_numbers = #tpu.dot_dimension_numbers<[1], [0], [0], [1], [0, 0, 1, 1], [], []>} : vector<8x128xbf16>, vector<128x512xbf16>, vector<8x512xf32> -> vector<8x512xf32>
    %183 = arith.addf %178, %182 : vector<8x512xf32>
    %c0_112 = arith.constant 0 : index
    %c0_113 = arith.constant 0 : index
    %184 = vector.load %arg16[%c0_112, %c0_113] : memref<8x128xf32, #tpu.memory_space<vmem>>, vector<8x128xf32>
    %185 = vector.extract_strided_slice %183 {offsets = [0, 0], sizes = [8, 384], strides = [1, 1]} : vector<8x512xf32> to vector<8x384xf32>
    %186 = arith.negf %185 : vector<8x384xf32>
    %187 = math.exp %186 : vector<8x384xf32>
    %cst_114 = arith.constant 1.000000e+00 : f32
    %188 = vector.broadcast %cst_114 : f32 to vector<8x384xf32>
    %189 = arith.addf %188, %187 : vector<8x384xf32>
    %190 = arith.divf %188, %189 : vector<8x384xf32>
    %191 = vector.extract_strided_slice %183 {offsets = [0, 384], sizes = [8, 128], strides = [1, 1]} : vector<8x512xf32> to vector<8x128xf32>
    %192 = math.tanh %191 : vector<8x128xf32>
    %193 = vector.extract_strided_slice %190 {offsets = [0, 0], sizes = [8, 128], strides = [1, 1]} : vector<8x384xf32> to vector<8x128xf32>
    %194 = vector.extract_strided_slice %190 {offsets = [0, 128], sizes = [8, 128], strides = [1, 1]} : vector<8x384xf32> to vector<8x128xf32>
    %195 = vector.extract_strided_slice %190 {offsets = [0, 256], sizes = [8, 128], strides = [1, 1]} : vector<8x384xf32> to vector<8x128xf32>
    %196 = arith.mulf %194, %184 : vector<8x128xf32>
    %197 = arith.mulf %193, %192 : vector<8x128xf32>
    %198 = arith.addf %196, %197 : vector<8x128xf32>
    %199 = math.tanh %198 : vector<8x128xf32>
    %200 = arith.mulf %195, %199 : vector<8x128xf32>
    %c0_115 = arith.constant 0 : index
    %c0_116 = arith.constant 0 : index
    %201 = vector.load %arg15[%c0_115, %c0_116] : memref<8x128xf32, #tpu.memory_space<vmem>>, vector<8x128xf32>
    tpu.vector_store %arg15[%c0_115, %c0_116], %200 {strides = array<i32>} : memref<8x128xf32, #tpu.memory_space<vmem>>, vector<8x128xf32>,
    %c0_117 = arith.constant 0 : index
    %c0_118 = arith.constant 0 : index
    %202 = vector.load %arg16[%c0_117, %c0_118] : memref<8x128xf32, #tpu.memory_space<vmem>>, vector<8x128xf32>
    tpu.vector_store %arg16[%c0_117, %c0_118], %198 {strides = array<i32>} : memref<8x128xf32, #tpu.memory_space<vmem>>, vector<8x128xf32>,
    %c0_119 = arith.constant 0 : index
    %c0_120 = arith.constant 0 : index
    %203 = vector.load %arg13[%c0_119, %c0_120] : memref<8x128xf32, #tpu.memory_space<vmem>>, vector<8x128xf32>
    tpu.vector_store %arg13[%c0_119, %c0_120], %172 {strides = array<i32>} : memref<8x128xf32, #tpu.memory_space<vmem>>, vector<8x128xf32>,
    %c0_121 = arith.constant 0 : index
    %c0_122 = arith.constant 0 : index
    %204 = vector.load %arg14[%c0_121, %c0_122] : memref<8x128xf32, #tpu.memory_space<vmem>>, vector<8x128xf32>
    tpu.vector_store %arg14[%c0_121, %c0_122], %170 {strides = array<i32>} : memref<8x128xf32, #tpu.memory_space<vmem>>, vector<8x128xf32>,
    %c0_123 = arith.constant 0 : index
    %c0_124 = arith.constant 0 : index
    %205 = vector.load %arg13[%c0_123, %c0_124] : memref<8x128xf32, #tpu.memory_space<vmem>>, vector<8x128xf32>
    %c0_125 = arith.constant 0 : index
    %c0_126 = arith.constant 0 : index
    %206 = vector.load %arg14[%c0_125, %c0_126] : memref<8x128xf32, #tpu.memory_space<vmem>>, vector<8x128xf32>
    %c32 = arith.constant 32 : index
    %c0_127 = arith.constant 0 : index
    %207 = vector.load %arg12[%c32, %c0_127] : memref<64x512xf32, #tpu.memory_space<vmem>>, vector<8x512xf32>
    %208 = arith.truncf %205 : vector<8x128xf32> to vector<8x128xbf16>
    %c0_128 = arith.constant 0 : index
    %c0_129 = arith.constant 0 : index
    %209 = vector.load %arg2[%c0_128, %c0_129] : memref<128x512xbf16, #tpu.memory_space<vmem>>, vector<128x512xbf16>
    %cst_130 = arith.constant dense<0.000000e+00> : vector<8x512xf32>
    %210 = tpu.matmul %208, %209, %cst_130 {dimension_numbers = #tpu.dot_dimension_numbers<[1], [0], [0], [1], [0, 0, 1, 1], [], []>} : vector<8x128xbf16>, vector<128x512xbf16>, vector<8x512xf32> -> vector<8x512xf32>
    %211 = arith.addf %207, %210 : vector<8x512xf32>
    %212 = vector.extract_strided_slice %211 {offsets = [0, 0], sizes = [8, 384], strides = [1, 1]} : vector<8x512xf32> to vector<8x384xf32>
    %213 = arith.negf %212 : vector<8x384xf32>
    %214 = math.exp %213 : vector<8x384xf32>
    %cst_131 = arith.constant 1.000000e+00 : f32
    %215 = vector.broadcast %cst_131 : f32 to vector<8x384xf32>
    %216 = arith.addf %215, %214 : vector<8x384xf32>
    %217 = arith.divf %215, %216 : vector<8x384xf32>
    %218 = vector.extract_strided_slice %211 {offsets = [0, 384], sizes = [8, 128], strides = [1, 1]} : vector<8x512xf32> to vector<8x128xf32>
    %219 = math.tanh %218 : vector<8x128xf32>
    %220 = vector.extract_strided_slice %217 {offsets = [0, 0], sizes = [8, 128], strides = [1, 1]} : vector<8x384xf32> to vector<8x128xf32>
    %221 = vector.extract_strided_slice %217 {offsets = [0, 128], sizes = [8, 128], strides = [1, 1]} : vector<8x384xf32> to vector<8x128xf32>
    %222 = vector.extract_strided_slice %217 {offsets = [0, 256], sizes = [8, 128], strides = [1, 1]} : vector<8x384xf32> to vector<8x128xf32>
    %223 = arith.mulf %221, %206 : vector<8x128xf32>
    %224 = arith.mulf %220, %219 : vector<8x128xf32>
    %225 = arith.addf %223, %224 : vector<8x128xf32>
    %226 = math.tanh %225 : vector<8x128xf32>
    %227 = arith.mulf %222, %226 : vector<8x128xf32>
    %228 = arith.truncf %205 : vector<8x128xf32> to vector<8x128xbf16>
    %c0_132 = arith.constant 0 : index
    %c0_133 = arith.constant 0 : index
    %229 = vector.load %arg4[%c0_132, %c0_133] : memref<128x512xbf16, #tpu.memory_space<vmem>>, vector<128x512xbf16>
    %cst_134 = arith.constant dense<0.000000e+00> : vector<8x512xf32>
    %230 = tpu.matmul %228, %229, %cst_134 {dimension_numbers = #tpu.dot_dimension_numbers<[1], [0], [0], [1], [0, 0, 1, 1], [], []>} : vector<8x128xbf16>, vector<128x512xbf16>, vector<8x512xf32> -> vector<8x512xf32>
    %c0_135 = arith.constant 0 : index
    %c0_136 = arith.constant 0 : index
    %231 = vector.load %arg6[%c0_135, %c0_136] : memref<1x512xf32, #tpu.memory_space<vmem>>, vector<1x512xf32>
    %232 = vector.broadcast %231 : vector<1x512xf32> to vector<8x512xf32>
    %233 = arith.addf %230, %232 : vector<8x512xf32>
    %c0_137 = arith.constant 0 : index
    %c0_138 = arith.constant 0 : index
    %234 = vector.load %arg15[%c0_137, %c0_138] : memref<8x128xf32, #tpu.memory_space<vmem>>, vector<8x128xf32>
    %235 = arith.truncf %234 : vector<8x128xf32> to vector<8x128xbf16>
    %c0_139 = arith.constant 0 : index
    %c0_140 = arith.constant 0 : index
    %236 = vector.load %arg5[%c0_139, %c0_140] : memref<128x512xbf16, #tpu.memory_space<vmem>>, vector<128x512xbf16>
    %cst_141 = arith.constant dense<0.000000e+00> : vector<8x512xf32>
    %237 = tpu.matmul %235, %236, %cst_141 {dimension_numbers = #tpu.dot_dimension_numbers<[1], [0], [0], [1], [0, 0, 1, 1], [], []>} : vector<8x128xbf16>, vector<128x512xbf16>, vector<8x512xf32> -> vector<8x512xf32>
    %238 = arith.addf %233, %237 : vector<8x512xf32>
    %c0_142 = arith.constant 0 : index
    %c0_143 = arith.constant 0 : index
    %239 = vector.load %arg16[%c0_142, %c0_143] : memref<8x128xf32, #tpu.memory_space<vmem>>, vector<8x128xf32>
    %240 = vector.extract_strided_slice %238 {offsets = [0, 0], sizes = [8, 384], strides = [1, 1]} : vector<8x512xf32> to vector<8x384xf32>
    %241 = arith.negf %240 : vector<8x384xf32>
    %242 = math.exp %241 : vector<8x384xf32>
    %cst_144 = arith.constant 1.000000e+00 : f32
    %243 = vector.broadcast %cst_144 : f32 to vector<8x384xf32>
    %244 = arith.addf %243, %242 : vector<8x384xf32>
    %245 = arith.divf %243, %244 : vector<8x384xf32>
    %246 = vector.extract_strided_slice %238 {offsets = [0, 384], sizes = [8, 128], strides = [1, 1]} : vector<8x512xf32> to vector<8x128xf32>
    %247 = math.tanh %246 : vector<8x128xf32>
    %248 = vector.extract_strided_slice %245 {offsets = [0, 0], sizes = [8, 128], strides = [1, 1]} : vector<8x384xf32> to vector<8x128xf32>
    %249 = vector.extract_strided_slice %245 {offsets = [0, 128], sizes = [8, 128], strides = [1, 1]} : vector<8x384xf32> to vector<8x128xf32>
    %250 = vector.extract_strided_slice %245 {offsets = [0, 256], sizes = [8, 128], strides = [1, 1]} : vector<8x384xf32> to vector<8x128xf32>
    %251 = arith.mulf %249, %239 : vector<8x128xf32>
    %252 = arith.mulf %248, %247 : vector<8x128xf32>
    %253 = arith.addf %251, %252 : vector<8x128xf32>
    %254 = math.tanh %253 : vector<8x128xf32>
    %255 = arith.mulf %250, %254 : vector<8x128xf32>
    %c0_145 = arith.constant 0 : index
    %c0_146 = arith.constant 0 : index
    %256 = vector.load %arg15[%c0_145, %c0_146] : memref<8x128xf32, #tpu.memory_space<vmem>>, vector<8x128xf32>
    tpu.vector_store %arg15[%c0_145, %c0_146], %255 {strides = array<i32>} : memref<8x128xf32, #tpu.memory_space<vmem>>, vector<8x128xf32>,
    %c0_147 = arith.constant 0 : index
    %c0_148 = arith.constant 0 : index
    %257 = vector.load %arg16[%c0_147, %c0_148] : memref<8x128xf32, #tpu.memory_space<vmem>>, vector<8x128xf32>
    tpu.vector_store %arg16[%c0_147, %c0_148], %253 {strides = array<i32>} : memref<8x128xf32, #tpu.memory_space<vmem>>, vector<8x128xf32>,
    %c0_149 = arith.constant 0 : index
    %c0_150 = arith.constant 0 : index
    %258 = vector.load %arg13[%c0_149, %c0_150] : memref<8x128xf32, #tpu.memory_space<vmem>>, vector<8x128xf32>
    tpu.vector_store %arg13[%c0_149, %c0_150], %227 {strides = array<i32>} : memref<8x128xf32, #tpu.memory_space<vmem>>, vector<8x128xf32>,
    %c0_151 = arith.constant 0 : index
    %c0_152 = arith.constant 0 : index
    %259 = vector.load %arg14[%c0_151, %c0_152] : memref<8x128xf32, #tpu.memory_space<vmem>>, vector<8x128xf32>
    tpu.vector_store %arg14[%c0_151, %c0_152], %225 {strides = array<i32>} : memref<8x128xf32, #tpu.memory_space<vmem>>, vector<8x128xf32>,
    %c0_153 = arith.constant 0 : index
    %c0_154 = arith.constant 0 : index
    %260 = vector.load %arg13[%c0_153, %c0_154] : memref<8x128xf32, #tpu.memory_space<vmem>>, vector<8x128xf32>
    %c0_155 = arith.constant 0 : index
    %c0_156 = arith.constant 0 : index
    %261 = vector.load %arg14[%c0_155, %c0_156] : memref<8x128xf32, #tpu.memory_space<vmem>>, vector<8x128xf32>
    %c40 = arith.constant 40 : index
    %c0_157 = arith.constant 0 : index
    %262 = vector.load %arg12[%c40, %c0_157] : memref<64x512xf32, #tpu.memory_space<vmem>>, vector<8x512xf32>
    %263 = arith.truncf %260 : vector<8x128xf32> to vector<8x128xbf16>
    %c0_158 = arith.constant 0 : index
    %c0_159 = arith.constant 0 : index
    %264 = vector.load %arg2[%c0_158, %c0_159] : memref<128x512xbf16, #tpu.memory_space<vmem>>, vector<128x512xbf16>
    %cst_160 = arith.constant dense<0.000000e+00> : vector<8x512xf32>
    %265 = tpu.matmul %263, %264, %cst_160 {dimension_numbers = #tpu.dot_dimension_numbers<[1], [0], [0], [1], [0, 0, 1, 1], [], []>} : vector<8x128xbf16>, vector<128x512xbf16>, vector<8x512xf32> -> vector<8x512xf32>
    %266 = arith.addf %262, %265 : vector<8x512xf32>
    %267 = vector.extract_strided_slice %266 {offsets = [0, 0], sizes = [8, 384], strides = [1, 1]} : vector<8x512xf32> to vector<8x384xf32>
    %268 = arith.negf %267 : vector<8x384xf32>
    %269 = math.exp %268 : vector<8x384xf32>
    %cst_161 = arith.constant 1.000000e+00 : f32
    %270 = vector.broadcast %cst_161 : f32 to vector<8x384xf32>
    %271 = arith.addf %270, %269 : vector<8x384xf32>
    %272 = arith.divf %270, %271 : vector<8x384xf32>
    %273 = vector.extract_strided_slice %266 {offsets = [0, 384], sizes = [8, 128], strides = [1, 1]} : vector<8x512xf32> to vector<8x128xf32>
    %274 = math.tanh %273 : vector<8x128xf32>
    %275 = vector.extract_strided_slice %272 {offsets = [0, 0], sizes = [8, 128], strides = [1, 1]} : vector<8x384xf32> to vector<8x128xf32>
    %276 = vector.extract_strided_slice %272 {offsets = [0, 128], sizes = [8, 128], strides = [1, 1]} : vector<8x384xf32> to vector<8x128xf32>
    %277 = vector.extract_strided_slice %272 {offsets = [0, 256], sizes = [8, 128], strides = [1, 1]} : vector<8x384xf32> to vector<8x128xf32>
    %278 = arith.mulf %276, %261 : vector<8x128xf32>
    %279 = arith.mulf %275, %274 : vector<8x128xf32>
    %280 = arith.addf %278, %279 : vector<8x128xf32>
    %281 = math.tanh %280 : vector<8x128xf32>
    %282 = arith.mulf %277, %281 : vector<8x128xf32>
    %283 = arith.truncf %260 : vector<8x128xf32> to vector<8x128xbf16>
    %c0_162 = arith.constant 0 : index
    %c0_163 = arith.constant 0 : index
    %284 = vector.load %arg4[%c0_162, %c0_163] : memref<128x512xbf16, #tpu.memory_space<vmem>>, vector<128x512xbf16>
    %cst_164 = arith.constant dense<0.000000e+00> : vector<8x512xf32>
    %285 = tpu.matmul %283, %284, %cst_164 {dimension_numbers = #tpu.dot_dimension_numbers<[1], [0], [0], [1], [0, 0, 1, 1], [], []>} : vector<8x128xbf16>, vector<128x512xbf16>, vector<8x512xf32> -> vector<8x512xf32>
    %c0_165 = arith.constant 0 : index
    %c0_166 = arith.constant 0 : index
    %286 = vector.load %arg6[%c0_165, %c0_166] : memref<1x512xf32, #tpu.memory_space<vmem>>, vector<1x512xf32>
    %287 = vector.broadcast %286 : vector<1x512xf32> to vector<8x512xf32>
    %288 = arith.addf %285, %287 : vector<8x512xf32>
    %c0_167 = arith.constant 0 : index
    %c0_168 = arith.constant 0 : index
    %289 = vector.load %arg15[%c0_167, %c0_168] : memref<8x128xf32, #tpu.memory_space<vmem>>, vector<8x128xf32>
    %290 = arith.truncf %289 : vector<8x128xf32> to vector<8x128xbf16>
    %c0_169 = arith.constant 0 : index
    %c0_170 = arith.constant 0 : index
    %291 = vector.load %arg5[%c0_169, %c0_170] : memref<128x512xbf16, #tpu.memory_space<vmem>>, vector<128x512xbf16>
    %cst_171 = arith.constant dense<0.000000e+00> : vector<8x512xf32>
    %292 = tpu.matmul %290, %291, %cst_171 {dimension_numbers = #tpu.dot_dimension_numbers<[1], [0], [0], [1], [0, 0, 1, 1], [], []>} : vector<8x128xbf16>, vector<128x512xbf16>, vector<8x512xf32> -> vector<8x512xf32>
    %293 = arith.addf %288, %292 : vector<8x512xf32>
    %c0_172 = arith.constant 0 : index
    %c0_173 = arith.constant 0 : index
    %294 = vector.load %arg16[%c0_172, %c0_173] : memref<8x128xf32, #tpu.memory_space<vmem>>, vector<8x128xf32>
    %295 = vector.extract_strided_slice %293 {offsets = [0, 0], sizes = [8, 384], strides = [1, 1]} : vector<8x512xf32> to vector<8x384xf32>
    %296 = arith.negf %295 : vector<8x384xf32>
    %297 = math.exp %296 : vector<8x384xf32>
    %cst_174 = arith.constant 1.000000e+00 : f32
    %298 = vector.broadcast %cst_174 : f32 to vector<8x384xf32>
    %299 = arith.addf %298, %297 : vector<8x384xf32>
    %300 = arith.divf %298, %299 : vector<8x384xf32>
    %301 = vector.extract_strided_slice %293 {offsets = [0, 384], sizes = [8, 128], strides = [1, 1]} : vector<8x512xf32> to vector<8x128xf32>
    %302 = math.tanh %301 : vector<8x128xf32>
    %303 = vector.extract_strided_slice %300 {offsets = [0, 0], sizes = [8, 128], strides = [1, 1]} : vector<8x384xf32> to vector<8x128xf32>
    %304 = vector.extract_strided_slice %300 {offsets = [0, 128], sizes = [8, 128], strides = [1, 1]} : vector<8x384xf32> to vector<8x128xf32>
    %305 = vector.extract_strided_slice %300 {offsets = [0, 256], sizes = [8, 128], strides = [1, 1]} : vector<8x384xf32> to vector<8x128xf32>
    %306 = arith.mulf %304, %294 : vector<8x128xf32>
    %307 = arith.mulf %303, %302 : vector<8x128xf32>
    %308 = arith.addf %306, %307 : vector<8x128xf32>
    %309 = math.tanh %308 : vector<8x128xf32>
    %310 = arith.mulf %305, %309 : vector<8x128xf32>
    %c0_175 = arith.constant 0 : index
    %c0_176 = arith.constant 0 : index
    %311 = vector.load %arg15[%c0_175, %c0_176] : memref<8x128xf32, #tpu.memory_space<vmem>>, vector<8x128xf32>
    tpu.vector_store %arg15[%c0_175, %c0_176], %310 {strides = array<i32>} : memref<8x128xf32, #tpu.memory_space<vmem>>, vector<8x128xf32>,
    %c0_177 = arith.constant 0 : index
    %c0_178 = arith.constant 0 : index
    %312 = vector.load %arg16[%c0_177, %c0_178] : memref<8x128xf32, #tpu.memory_space<vmem>>, vector<8x128xf32>
    tpu.vector_store %arg16[%c0_177, %c0_178], %308 {strides = array<i32>} : memref<8x128xf32, #tpu.memory_space<vmem>>, vector<8x128xf32>,
    %c0_179 = arith.constant 0 : index
    %c0_180 = arith.constant 0 : index
    %313 = vector.load %arg13[%c0_179, %c0_180] : memref<8x128xf32, #tpu.memory_space<vmem>>, vector<8x128xf32>
    tpu.vector_store %arg13[%c0_179, %c0_180], %282 {strides = array<i32>} : memref<8x128xf32, #tpu.memory_space<vmem>>, vector<8x128xf32>,
    %c0_181 = arith.constant 0 : index
    %c0_182 = arith.constant 0 : index
    %314 = vector.load %arg14[%c0_181, %c0_182] : memref<8x128xf32, #tpu.memory_space<vmem>>, vector<8x128xf32>
    tpu.vector_store %arg14[%c0_181, %c0_182], %280 {strides = array<i32>} : memref<8x128xf32, #tpu.memory_space<vmem>>, vector<8x128xf32>,
    %c0_183 = arith.constant 0 : index
    %c0_184 = arith.constant 0 : index
    %315 = vector.load %arg13[%c0_183, %c0_184] : memref<8x128xf32, #tpu.memory_space<vmem>>, vector<8x128xf32>
    %c0_185 = arith.constant 0 : index
    %c0_186 = arith.constant 0 : index
    %316 = vector.load %arg14[%c0_185, %c0_186] : memref<8x128xf32, #tpu.memory_space<vmem>>, vector<8x128xf32>
    %c48 = arith.constant 48 : index
    %c0_187 = arith.constant 0 : index
    %317 = vector.load %arg12[%c48, %c0_187] : memref<64x512xf32, #tpu.memory_space<vmem>>, vector<8x512xf32>
    %318 = arith.truncf %315 : vector<8x128xf32> to vector<8x128xbf16>
    %c0_188 = arith.constant 0 : index
    %c0_189 = arith.constant 0 : index
    %319 = vector.load %arg2[%c0_188, %c0_189] : memref<128x512xbf16, #tpu.memory_space<vmem>>, vector<128x512xbf16>
    %cst_190 = arith.constant dense<0.000000e+00> : vector<8x512xf32>
    %320 = tpu.matmul %318, %319, %cst_190 {dimension_numbers = #tpu.dot_dimension_numbers<[1], [0], [0], [1], [0, 0, 1, 1], [], []>} : vector<8x128xbf16>, vector<128x512xbf16>, vector<8x512xf32> -> vector<8x512xf32>
    %321 = arith.addf %317, %320 : vector<8x512xf32>
    %322 = vector.extract_strided_slice %321 {offsets = [0, 0], sizes = [8, 384], strides = [1, 1]} : vector<8x512xf32> to vector<8x384xf32>
    %323 = arith.negf %322 : vector<8x384xf32>
    %324 = math.exp %323 : vector<8x384xf32>
    %cst_191 = arith.constant 1.000000e+00 : f32
    %325 = vector.broadcast %cst_191 : f32 to vector<8x384xf32>
    %326 = arith.addf %325, %324 : vector<8x384xf32>
    %327 = arith.divf %325, %326 : vector<8x384xf32>
    %328 = vector.extract_strided_slice %321 {offsets = [0, 384], sizes = [8, 128], strides = [1, 1]} : vector<8x512xf32> to vector<8x128xf32>
    %329 = math.tanh %328 : vector<8x128xf32>
    %330 = vector.extract_strided_slice %327 {offsets = [0, 0], sizes = [8, 128], strides = [1, 1]} : vector<8x384xf32> to vector<8x128xf32>
    %331 = vector.extract_strided_slice %327 {offsets = [0, 128], sizes = [8, 128], strides = [1, 1]} : vector<8x384xf32> to vector<8x128xf32>
    %332 = vector.extract_strided_slice %327 {offsets = [0, 256], sizes = [8, 128], strides = [1, 1]} : vector<8x384xf32> to vector<8x128xf32>
    %333 = arith.mulf %331, %316 : vector<8x128xf32>
    %334 = arith.mulf %330, %329 : vector<8x128xf32>
    %335 = arith.addf %333, %334 : vector<8x128xf32>
    %336 = math.tanh %335 : vector<8x128xf32>
    %337 = arith.mulf %332, %336 : vector<8x128xf32>
    %338 = arith.truncf %315 : vector<8x128xf32> to vector<8x128xbf16>
    %c0_192 = arith.constant 0 : index
    %c0_193 = arith.constant 0 : index
    %339 = vector.load %arg4[%c0_192, %c0_193] : memref<128x512xbf16, #tpu.memory_space<vmem>>, vector<128x512xbf16>
    %cst_194 = arith.constant dense<0.000000e+00> : vector<8x512xf32>
    %340 = tpu.matmul %338, %339, %cst_194 {dimension_numbers = #tpu.dot_dimension_numbers<[1], [0], [0], [1], [0, 0, 1, 1], [], []>} : vector<8x128xbf16>, vector<128x512xbf16>, vector<8x512xf32> -> vector<8x512xf32>
    %c0_195 = arith.constant 0 : index
    %c0_196 = arith.constant 0 : index
    %341 = vector.load %arg6[%c0_195, %c0_196] : memref<1x512xf32, #tpu.memory_space<vmem>>, vector<1x512xf32>
    %342 = vector.broadcast %341 : vector<1x512xf32> to vector<8x512xf32>
    %343 = arith.addf %340, %342 : vector<8x512xf32>
    %c0_197 = arith.constant 0 : index
    %c0_198 = arith.constant 0 : index
    %344 = vector.load %arg15[%c0_197, %c0_198] : memref<8x128xf32, #tpu.memory_space<vmem>>, vector<8x128xf32>
    %345 = arith.truncf %344 : vector<8x128xf32> to vector<8x128xbf16>
    %c0_199 = arith.constant 0 : index
    %c0_200 = arith.constant 0 : index
    %346 = vector.load %arg5[%c0_199, %c0_200] : memref<128x512xbf16, #tpu.memory_space<vmem>>, vector<128x512xbf16>
    %cst_201 = arith.constant dense<0.000000e+00> : vector<8x512xf32>
    %347 = tpu.matmul %345, %346, %cst_201 {dimension_numbers = #tpu.dot_dimension_numbers<[1], [0], [0], [1], [0, 0, 1, 1], [], []>} : vector<8x128xbf16>, vector<128x512xbf16>, vector<8x512xf32> -> vector<8x512xf32>
    %348 = arith.addf %343, %347 : vector<8x512xf32>
    %c0_202 = arith.constant 0 : index
    %c0_203 = arith.constant 0 : index
    %349 = vector.load %arg16[%c0_202, %c0_203] : memref<8x128xf32, #tpu.memory_space<vmem>>, vector<8x128xf32>
    %350 = vector.extract_strided_slice %348 {offsets = [0, 0], sizes = [8, 384], strides = [1, 1]} : vector<8x512xf32> to vector<8x384xf32>
    %351 = arith.negf %350 : vector<8x384xf32>
    %352 = math.exp %351 : vector<8x384xf32>
    %cst_204 = arith.constant 1.000000e+00 : f32
    %353 = vector.broadcast %cst_204 : f32 to vector<8x384xf32>
    %354 = arith.addf %353, %352 : vector<8x384xf32>
    %355 = arith.divf %353, %354 : vector<8x384xf32>
    %356 = vector.extract_strided_slice %348 {offsets = [0, 384], sizes = [8, 128], strides = [1, 1]} : vector<8x512xf32> to vector<8x128xf32>
    %357 = math.tanh %356 : vector<8x128xf32>
    %358 = vector.extract_strided_slice %355 {offsets = [0, 0], sizes = [8, 128], strides = [1, 1]} : vector<8x384xf32> to vector<8x128xf32>
    %359 = vector.extract_strided_slice %355 {offsets = [0, 128], sizes = [8, 128], strides = [1, 1]} : vector<8x384xf32> to vector<8x128xf32>
    %360 = vector.extract_strided_slice %355 {offsets = [0, 256], sizes = [8, 128], strides = [1, 1]} : vector<8x384xf32> to vector<8x128xf32>
    %361 = arith.mulf %359, %349 : vector<8x128xf32>
    %362 = arith.mulf %358, %357 : vector<8x128xf32>
    %363 = arith.addf %361, %362 : vector<8x128xf32>
    %364 = math.tanh %363 : vector<8x128xf32>
    %365 = arith.mulf %360, %364 : vector<8x128xf32>
    %c0_205 = arith.constant 0 : index
    %c0_206 = arith.constant 0 : index
    %366 = vector.load %arg15[%c0_205, %c0_206] : memref<8x128xf32, #tpu.memory_space<vmem>>, vector<8x128xf32>
    tpu.vector_store %arg15[%c0_205, %c0_206], %365 {strides = array<i32>} : memref<8x128xf32, #tpu.memory_space<vmem>>, vector<8x128xf32>,
    %c0_207 = arith.constant 0 : index
    %c0_208 = arith.constant 0 : index
    %367 = vector.load %arg16[%c0_207, %c0_208] : memref<8x128xf32, #tpu.memory_space<vmem>>, vector<8x128xf32>
    tpu.vector_store %arg16[%c0_207, %c0_208], %363 {strides = array<i32>} : memref<8x128xf32, #tpu.memory_space<vmem>>, vector<8x128xf32>,
    %c0_209 = arith.constant 0 : index
    %c0_210 = arith.constant 0 : index
    %368 = vector.load %arg13[%c0_209, %c0_210] : memref<8x128xf32, #tpu.memory_space<vmem>>, vector<8x128xf32>
    tpu.vector_store %arg13[%c0_209, %c0_210], %337 {strides = array<i32>} : memref<8x128xf32, #tpu.memory_space<vmem>>, vector<8x128xf32>,
    %c0_211 = arith.constant 0 : index
    %c0_212 = arith.constant 0 : index
    %369 = vector.load %arg14[%c0_211, %c0_212] : memref<8x128xf32, #tpu.memory_space<vmem>>, vector<8x128xf32>
    tpu.vector_store %arg14[%c0_211, %c0_212], %335 {strides = array<i32>} : memref<8x128xf32, #tpu.memory_space<vmem>>, vector<8x128xf32>,
    %c0_213 = arith.constant 0 : index
    %c0_214 = arith.constant 0 : index
    %370 = vector.load %arg13[%c0_213, %c0_214] : memref<8x128xf32, #tpu.memory_space<vmem>>, vector<8x128xf32>
    %c0_215 = arith.constant 0 : index
    %c0_216 = arith.constant 0 : index
    %371 = vector.load %arg14[%c0_215, %c0_216] : memref<8x128xf32, #tpu.memory_space<vmem>>, vector<8x128xf32>
    %c56 = arith.constant 56 : index
    %c0_217 = arith.constant 0 : index
    %372 = vector.load %arg12[%c56, %c0_217] : memref<64x512xf32, #tpu.memory_space<vmem>>, vector<8x512xf32>
    %373 = arith.truncf %370 : vector<8x128xf32> to vector<8x128xbf16>
    %c0_218 = arith.constant 0 : index
    %c0_219 = arith.constant 0 : index
    %374 = vector.load %arg2[%c0_218, %c0_219] : memref<128x512xbf16, #tpu.memory_space<vmem>>, vector<128x512xbf16>
    %cst_220 = arith.constant dense<0.000000e+00> : vector<8x512xf32>
    %375 = tpu.matmul %373, %374, %cst_220 {dimension_numbers = #tpu.dot_dimension_numbers<[1], [0], [0], [1], [0, 0, 1, 1], [], []>} : vector<8x128xbf16>, vector<128x512xbf16>, vector<8x512xf32> -> vector<8x512xf32>
    %376 = arith.addf %372, %375 : vector<8x512xf32>
    %377 = vector.extract_strided_slice %376 {offsets = [0, 0], sizes = [8, 384], strides = [1, 1]} : vector<8x512xf32> to vector<8x384xf32>
    %378 = arith.negf %377 : vector<8x384xf32>
    %379 = math.exp %378 : vector<8x384xf32>
    %cst_221 = arith.constant 1.000000e+00 : f32
    %380 = vector.broadcast %cst_221 : f32 to vector<8x384xf32>
    %381 = arith.addf %380, %379 : vector<8x384xf32>
    %382 = arith.divf %380, %381 : vector<8x384xf32>
    %383 = vector.extract_strided_slice %376 {offsets = [0, 384], sizes = [8, 128], strides = [1, 1]} : vector<8x512xf32> to vector<8x128xf32>
    %384 = math.tanh %383 : vector<8x128xf32>
    %385 = vector.extract_strided_slice %382 {offsets = [0, 0], sizes = [8, 128], strides = [1, 1]} : vector<8x384xf32> to vector<8x128xf32>
    %386 = vector.extract_strided_slice %382 {offsets = [0, 128], sizes = [8, 128], strides = [1, 1]} : vector<8x384xf32> to vector<8x128xf32>
    %387 = vector.extract_strided_slice %382 {offsets = [0, 256], sizes = [8, 128], strides = [1, 1]} : vector<8x384xf32> to vector<8x128xf32>
    %388 = arith.mulf %386, %371 : vector<8x128xf32>
    %389 = arith.mulf %385, %384 : vector<8x128xf32>
    %390 = arith.addf %388, %389 : vector<8x128xf32>
    %391 = math.tanh %390 : vector<8x128xf32>
    %392 = arith.mulf %387, %391 : vector<8x128xf32>
    %393 = arith.truncf %370 : vector<8x128xf32> to vector<8x128xbf16>
    %c0_222 = arith.constant 0 : index
    %c0_223 = arith.constant 0 : index
    %394 = vector.load %arg4[%c0_222, %c0_223] : memref<128x512xbf16, #tpu.memory_space<vmem>>, vector<128x512xbf16>
    %cst_224 = arith.constant dense<0.000000e+00> : vector<8x512xf32>
    %395 = tpu.matmul %393, %394, %cst_224 {dimension_numbers = #tpu.dot_dimension_numbers<[1], [0], [0], [1], [0, 0, 1, 1], [], []>} : vector<8x128xbf16>, vector<128x512xbf16>, vector<8x512xf32> -> vector<8x512xf32>
    %c0_225 = arith.constant 0 : index
    %c0_226 = arith.constant 0 : index
    %396 = vector.load %arg6[%c0_225, %c0_226] : memref<1x512xf32, #tpu.memory_space<vmem>>, vector<1x512xf32>
    %397 = vector.broadcast %396 : vector<1x512xf32> to vector<8x512xf32>
    %398 = arith.addf %395, %397 : vector<8x512xf32>
    %c0_227 = arith.constant 0 : index
    %c0_228 = arith.constant 0 : index
    %399 = vector.load %arg15[%c0_227, %c0_228] : memref<8x128xf32, #tpu.memory_space<vmem>>, vector<8x128xf32>
    %400 = arith.truncf %399 : vector<8x128xf32> to vector<8x128xbf16>
    %c0_229 = arith.constant 0 : index
    %c0_230 = arith.constant 0 : index
    %401 = vector.load %arg5[%c0_229, %c0_230] : memref<128x512xbf16, #tpu.memory_space<vmem>>, vector<128x512xbf16>
    %cst_231 = arith.constant dense<0.000000e+00> : vector<8x512xf32>
    %402 = tpu.matmul %400, %401, %cst_231 {dimension_numbers = #tpu.dot_dimension_numbers<[1], [0], [0], [1], [0, 0, 1, 1], [], []>} : vector<8x128xbf16>, vector<128x512xbf16>, vector<8x512xf32> -> vector<8x512xf32>
    %403 = arith.addf %398, %402 : vector<8x512xf32>
    %c0_232 = arith.constant 0 : index
    %c0_233 = arith.constant 0 : index
    %404 = vector.load %arg16[%c0_232, %c0_233] : memref<8x128xf32, #tpu.memory_space<vmem>>, vector<8x128xf32>
    %405 = vector.extract_strided_slice %403 {offsets = [0, 0], sizes = [8, 384], strides = [1, 1]} : vector<8x512xf32> to vector<8x384xf32>
    %406 = arith.negf %405 : vector<8x384xf32>
    %407 = math.exp %406 : vector<8x384xf32>
    %cst_234 = arith.constant 1.000000e+00 : f32
    %408 = vector.broadcast %cst_234 : f32 to vector<8x384xf32>
    %409 = arith.addf %408, %407 : vector<8x384xf32>
    %410 = arith.divf %408, %409 : vector<8x384xf32>
    %411 = vector.extract_strided_slice %403 {offsets = [0, 384], sizes = [8, 128], strides = [1, 1]} : vector<8x512xf32> to vector<8x128xf32>
    %412 = math.tanh %411 : vector<8x128xf32>
    %413 = vector.extract_strided_slice %410 {offsets = [0, 0], sizes = [8, 128], strides = [1, 1]} : vector<8x384xf32> to vector<8x128xf32>
    %414 = vector.extract_strided_slice %410 {offsets = [0, 128], sizes = [8, 128], strides = [1, 1]} : vector<8x384xf32> to vector<8x128xf32>
    %415 = vector.extract_strided_slice %410 {offsets = [0, 256], sizes = [8, 128], strides = [1, 1]} : vector<8x384xf32> to vector<8x128xf32>
    %416 = arith.mulf %414, %404 : vector<8x128xf32>
    %417 = arith.mulf %413, %412 : vector<8x128xf32>
    %418 = arith.addf %416, %417 : vector<8x128xf32>
    %419 = math.tanh %418 : vector<8x128xf32>
    %420 = arith.mulf %415, %419 : vector<8x128xf32>
    %c0_235 = arith.constant 0 : index
    %c0_236 = arith.constant 0 : index
    %421 = vector.load %arg15[%c0_235, %c0_236] : memref<8x128xf32, #tpu.memory_space<vmem>>, vector<8x128xf32>
    tpu.vector_store %arg15[%c0_235, %c0_236], %420 {strides = array<i32>} : memref<8x128xf32, #tpu.memory_space<vmem>>, vector<8x128xf32>,
    %c0_237 = arith.constant 0 : index
    %c0_238 = arith.constant 0 : index
    %422 = vector.load %arg16[%c0_237, %c0_238] : memref<8x128xf32, #tpu.memory_space<vmem>>, vector<8x128xf32>
    tpu.vector_store %arg16[%c0_237, %c0_238], %418 {strides = array<i32>} : memref<8x128xf32, #tpu.memory_space<vmem>>, vector<8x128xf32>,
    %c0_239 = arith.constant 0 : index
    %c0_240 = arith.constant 0 : index
    %423 = vector.load %arg13[%c0_239, %c0_240] : memref<8x128xf32, #tpu.memory_space<vmem>>, vector<8x128xf32>
    tpu.vector_store %arg13[%c0_239, %c0_240], %392 {strides = array<i32>} : memref<8x128xf32, #tpu.memory_space<vmem>>, vector<8x128xf32>,
    %c0_241 = arith.constant 0 : index
    %c0_242 = arith.constant 0 : index
    %424 = vector.load %arg14[%c0_241, %c0_242] : memref<8x128xf32, #tpu.memory_space<vmem>>, vector<8x128xf32>
    tpu.vector_store %arg14[%c0_241, %c0_242], %390 {strides = array<i32>} : memref<8x128xf32, #tpu.memory_space<vmem>>, vector<8x128xf32>,
    %c0_243 = arith.constant 0 : index
    %c0_244 = arith.constant 0 : index
    %425 = vector.load %arg13[%c0_243, %c0_244] : memref<8x128xf32, #tpu.memory_space<vmem>>, vector<8x128xf32>
    %426 = arith.truncf %425 : vector<8x128xf32> to vector<8x128xbf16>
    %c0_245 = arith.constant 0 : index
    %c0_246 = arith.constant 0 : index
    %427 = vector.load %arg4[%c0_245, %c0_246] : memref<128x512xbf16, #tpu.memory_space<vmem>>, vector<128x512xbf16>
    %cst_247 = arith.constant dense<0.000000e+00> : vector<8x512xf32>
    %428 = tpu.matmul %426, %427, %cst_247 {dimension_numbers = #tpu.dot_dimension_numbers<[1], [0], [0], [1], [0, 0, 1, 1], [], []>} : vector<8x128xbf16>, vector<128x512xbf16>, vector<8x512xf32> -> vector<8x512xf32>
    %c0_248 = arith.constant 0 : index
    %c0_249 = arith.constant 0 : index
    %429 = vector.load %arg6[%c0_248, %c0_249] : memref<1x512xf32, #tpu.memory_space<vmem>>, vector<1x512xf32>
    %430 = vector.broadcast %429 : vector<1x512xf32> to vector<8x512xf32>
    %431 = arith.addf %428, %430 : vector<8x512xf32>
    %c0_250 = arith.constant 0 : index
    %c0_251 = arith.constant 0 : index
    %432 = vector.load %arg15[%c0_250, %c0_251] : memref<8x128xf32, #tpu.memory_space<vmem>>, vector<8x128xf32>
    %433 = arith.truncf %432 : vector<8x128xf32> to vector<8x128xbf16>
    %c0_252 = arith.constant 0 : index
    %c0_253 = arith.constant 0 : index
    %434 = vector.load %arg5[%c0_252, %c0_253] : memref<128x512xbf16, #tpu.memory_space<vmem>>, vector<128x512xbf16>
    %cst_254 = arith.constant dense<0.000000e+00> : vector<8x512xf32>
    %435 = tpu.matmul %433, %434, %cst_254 {dimension_numbers = #tpu.dot_dimension_numbers<[1], [0], [0], [1], [0, 0, 1, 1], [], []>} : vector<8x128xbf16>, vector<128x512xbf16>, vector<8x512xf32> -> vector<8x512xf32>
    %436 = arith.addf %431, %435 : vector<8x512xf32>
    %c0_255 = arith.constant 0 : index
    %c0_256 = arith.constant 0 : index
    %437 = vector.load %arg16[%c0_255, %c0_256] : memref<8x128xf32, #tpu.memory_space<vmem>>, vector<8x128xf32>
    %438 = vector.extract_strided_slice %436 {offsets = [0, 0], sizes = [8, 384], strides = [1, 1]} : vector<8x512xf32> to vector<8x384xf32>
    %439 = arith.negf %438 : vector<8x384xf32>
    %440 = math.exp %439 : vector<8x384xf32>
    %cst_257 = arith.constant 1.000000e+00 : f32
    %441 = vector.broadcast %cst_257 : f32 to vector<8x384xf32>
    %442 = arith.addf %441, %440 : vector<8x384xf32>
    %443 = arith.divf %441, %442 : vector<8x384xf32>
    %444 = vector.extract_strided_slice %436 {offsets = [0, 384], sizes = [8, 128], strides = [1, 1]} : vector<8x512xf32> to vector<8x128xf32>
    %445 = math.tanh %444 : vector<8x128xf32>
    %446 = vector.extract_strided_slice %443 {offsets = [0, 0], sizes = [8, 128], strides = [1, 1]} : vector<8x384xf32> to vector<8x128xf32>
    %447 = vector.extract_strided_slice %443 {offsets = [0, 128], sizes = [8, 128], strides = [1, 1]} : vector<8x384xf32> to vector<8x128xf32>
    %448 = vector.extract_strided_slice %443 {offsets = [0, 256], sizes = [8, 128], strides = [1, 1]} : vector<8x384xf32> to vector<8x128xf32>
    %449 = arith.mulf %447, %437 : vector<8x128xf32>
    %450 = arith.mulf %446, %445 : vector<8x128xf32>
    %451 = arith.addf %449, %450 : vector<8x128xf32>
    %452 = math.tanh %451 : vector<8x128xf32>
    %453 = arith.mulf %448, %452 : vector<8x128xf32>
    %454 = arith.truncf %453 : vector<8x128xf32> to vector<8x128xbf16>
    %c0_258 = arith.constant 0 : index
    %c0_259 = arith.constant 0 : index
    %455 = vector.load %arg7[%c0_258, %c0_259] : memref<128x64xbf16, #tpu.memory_space<vmem>>, vector<128x64xbf16>
    %cst_260 = arith.constant dense<0.000000e+00> : vector<8x64xf32>
    %456 = tpu.matmul %454, %455, %cst_260 {dimension_numbers = #tpu.dot_dimension_numbers<[1], [0], [0], [1], [0, 0, 1, 1], [], []>} : vector<8x128xbf16>, vector<128x64xbf16>, vector<8x64xf32> -> vector<8x64xf32>
    %c0_261 = arith.constant 0 : index
    %c0_262 = arith.constant 0 : index
    %457 = vector.load %arg8[%c0_261, %c0_262] : memref<1x64xf32, #tpu.memory_space<vmem>>, vector<1x64xf32>
    %458 = vector.broadcast %457 : vector<1x64xf32> to vector<8x64xf32>
    %459 = arith.addf %456, %458 : vector<8x64xf32>
    %cst_263 = arith.constant 0.000000e+00 : f32
    %460 = vector.broadcast %cst_263 : f32 to vector<8x64xf32>
    %461 = arith.maximumf %459, %460 : vector<8x64xf32>
    %462 = arith.truncf %461 : vector<8x64xf32> to vector<8x64xbf16>
    %c0_264 = arith.constant 0 : index
    %c0_265 = arith.constant 0 : index
    %463 = vector.load %arg9[%c0_264, %c0_265] : memref<64x128xbf16, #tpu.memory_space<vmem>>, vector<64x128xbf16>
    %cst_266 = arith.constant dense<0.000000e+00> : vector<8x128xf32>
    %464 = tpu.matmul %462, %463, %cst_266 {dimension_numbers = #tpu.dot_dimension_numbers<[1], [0], [0], [1], [0, 0, 1, 1], [], []>} : vector<8x64xbf16>, vector<64x128xbf16>, vector<8x128xf32> -> vector<8x128xf32>
    %c0_267 = arith.constant 0 : index
    %c0_268 = arith.constant 0 : index
    %465 = vector.load %arg10[%c0_267, %c0_268] : memref<1x128xf32, #tpu.memory_space<vmem>>, vector<1x128xf32>
    %466 = vector.broadcast %465 : vector<1x128xf32> to vector<8x128xf32>
    %467 = arith.addf %464, %466 : vector<8x128xf32>
    %c0_269 = arith.constant 0 : index
    %c0_270 = arith.constant 0 : index
    %468 = vector.load %arg11[%c0_269, %c0_270] : memref<8x128xf32, #tpu.memory_space<vmem>>, vector<8x128xf32>
    tpu.vector_store %arg11[%c0_269, %c0_270], %467 {strides = array<i32>} : memref<8x128xf32, #tpu.memory_space<vmem>>, vector<8x128xf32>,
    return
  }
}

</mosaic_0001>

<llo_original>
// kernel: tpu_custom_call.1
$region0: #{tpu_custom_call.1}
  #allocation0 [shape = 'u32[]', space=smem, size = 0x4, offset = 0x4, fixed_abs, tag = 'smem constant byte address 0x4 - core index']
  #allocation1 [shape = 'u32[144,128]{1,0:T(1,128)}', space=vmem, size = 0x12000, scoped, tag = 'internal scratch']
  #allocation2 [shape = 'f32[64,512]{1,0:T(8,128)}', space=vmem, size = 0x20000, scoped, tag = 'scratch operand']
  #allocation3 [shape = 'f32[8,128]{1,0:T(8,128)}', space=vmem, size = 0x1000, scoped, tag = 'scratch operand']
  #allocation4 [shape = 'f32[8,128]{1,0:T(8,128)}', space=vmem, size = 0x1000, scoped, tag = 'scratch operand']
  #allocation5 [shape = 'f32[8,128]{1,0:T(8,128)}', space=vmem, size = 0x1000, scoped, tag = 'scratch operand']
  #allocation6 [shape = 'f32[8,128]{1,0:T(8,128)}', space=vmem, size = 0x1000, scoped, tag = 'scratch operand']
  %s0 = inlined_call_operand.vmem [shape: bf16[64,16], index: 0, kind: input, shape index: {}]
  %s1 = inlined_call_operand.vmem [shape: bf16[16,512], index: 1, kind: input, shape index: {}]
  %s2 = inlined_call_operand.hbm [shape: bf16[128,512], index: 2, kind: input, shape index: {}]
  %s3 = inlined_call_operand.vmem [shape: f32[1,512], index: 3, kind: input, shape index: {}]
  %s4 = inlined_call_operand.hbm [shape: bf16[128,512], index: 4, kind: input, shape index: {}]
  %s5 = inlined_call_operand.hbm [shape: bf16[128,512], index: 5, kind: input, shape index: {}]
  %s6 = inlined_call_operand.vmem [shape: f32[1,512], index: 6, kind: input, shape index: {}]
  %s7 = inlined_call_operand.vmem [shape: bf16[128,64], index: 7, kind: input, shape index: {}]
  %s8 = inlined_call_operand.vmem [shape: f32[1,64], index: 8, kind: input, shape index: {}]
  %s9 = inlined_call_operand.vmem [shape: bf16[64,128], index: 9, kind: input, shape index: {}]
  %s10 = inlined_call_operand.vmem [shape: f32[1,128], index: 10, kind: input, shape index: {}]
  %s11 = inlined_call_operand.hbm [shape: f32[8,128], index: 11, kind: output, shape index: {}]
  %s12 = sld [smem:[#allocation0]]
  $region66: #{tpu_custom_call.1} parent=0
    _
  %s14 = ssub.s32 1, %s12
  %s15 = scalar_select 0, %s14, %s12
  $region1: #{tpu_custom_call.1} parent=0
    #allocation7 [shape = 'u8[131072]{0}', space=vmem, size = 0x20000, scoped, tag = 'input window, operand 2, single buffered']
    #allocation8 [shape = 's32[1]{0}', space=sflag, size = 0x4, scoped, tag = 'scoped memory for tpu_custom_call.1']
    #allocation9 [shape = 's32[1]{0}', space=sflag, size = 0x4, scoped, tag = 'scoped memory for tpu_custom_call.1']
    #allocation10 [shape = 'u8[131072]{0}', space=vmem, size = 0x20000, scoped, tag = 'input window, operand 4, single buffered']
    #allocation11 [shape = 's32[1]{0}', space=sflag, size = 0x4, scoped, tag = 'scoped memory for tpu_custom_call.1']
    #allocation12 [shape = 'u8[131072]{0}', space=vmem, size = 0x20000, scoped, tag = 'input window, operand 5, single buffered']
    #allocation13 [shape = 'u8[4096]{0}', space=vmem, size = 0x1000, scoped, tag = 'output window, operand 0, single buffered']
    %16 = vsyncpa [#allocation8], 0
    %17 = vsyncpa [#allocation11], 0
    %18 = vsyncpa [#allocation9], 0
    // Predicated region
    $region2: #{tpu_custom_call.1} parent=1 // pred_check
      _
    $region3: #{tpu_custom_call.1} parent=1 // pred_check_branch
      %20 = sbr.rel (0) target = $region5
    $region4: #{tpu_custom_call.1} parent=1 // pred_region
      _
    $region5: #{tpu_custom_call.1} parent=1 // pred_fallthru
      _
    // Predicated region
    $region6: #{tpu_custom_call.1} parent=1 // pred_check
      _
    $region7: #{tpu_custom_call.1} parent=1 // pred_check_branch
      %22 = sbr.rel (0) target = $region9
    $region8: #{tpu_custom_call.1} parent=1 // pred_region
      _
    $region9: #{tpu_custom_call.1} parent=1 // pred_fallthru
      _
    // Predicated region
    $region10: #{tpu_custom_call.1} parent=1 // pred_check
      _
    $region11: #{tpu_custom_call.1} parent=1 // pred_check_branch
      %24 = sbr.rel (0) target = $region13
    $region12: #{tpu_custom_call.1} parent=1 // pred_region
      %s26 = ssub.s32 4096, 4096
      %27 = vsyncadd [#allocation8], %s26
      %s28 = sshll.u32 [#allocation7], 4
      %s29 = int_to_ptr.vmem [resolvable:$true] %s28
      %34 = dma.hbm_to_vmem [thread:$0]  %s2, 4096, %s29, [#allocation8], 256, 256, 16
    $region13: #{tpu_custom_call.1} parent=1 // pred_fallthru
      _
    // Predicated region
    $region14: #{tpu_custom_call.1} parent=1 // pred_check
      _
    $region15: #{tpu_custom_call.1} parent=1 // pred_check_branch
      %36 = sbr.rel (0) target = $region17
    $region16: #{tpu_custom_call.1} parent=1 // pred_region
      _
    $region17: #{tpu_custom_call.1} parent=1 // pred_fallthru
      _
    // Predicated region
    $region18: #{tpu_custom_call.1} parent=1 // pred_check
      _
    $region19: #{tpu_custom_call.1} parent=1 // pred_check_branch
      %38 = sbr.rel (0) target = $region21
    $region20: #{tpu_custom_call.1} parent=1 // pred_region
      %s40 = ssub.s32 4096, 4096
      %41 = vsyncadd [#allocation11], %s40
      %s42 = sshll.u32 [#allocation10], 4
      %s43 = int_to_ptr.vmem [resolvable:$true] %s42
      %48 = dma.hbm_to_vmem [thread:$0]  %s4, 4096, %s43, [#allocation11], 256, 256, 16
    $region21: #{tpu_custom_call.1} parent=1 // pred_fallthru
      _
    // Predicated region
    $region22: #{tpu_custom_call.1} parent=1 // pred_check
      _
    $region23: #{tpu_custom_call.1} parent=1 // pred_check_branch
      %50 = sbr.rel (0) target = $region25
    $region24: #{tpu_custom_call.1} parent=1 // pred_region
      %s52 = ssub.s32 4096, 4096
      %53 = vsyncadd [#allocation11], %s52
      %s54 = sshll.u32 [#allocation12], 4
      %s55 = int_to_ptr.vmem [resolvable:$true] %s54
      %60 = dma.hbm_to_vmem [thread:$0]  %s5, 4096, %s55, [#allocation11], 256, 256, 16
    $region25: #{tpu_custom_call.1} parent=1 // pred_fallthru
      _
    // Predicated region
    $region26: #{tpu_custom_call.1} parent=1 // pred_check
      _
    $region27: #{tpu_custom_call.1} parent=1 // pred_check_branch
      %62 = sbr.rel (0) target = $region29
    $region28: #{tpu_custom_call.1} parent=1 // pred_region
      _
    $region29: #{tpu_custom_call.1} parent=1 // pred_fallthru
      _
    // Predicated region
    $region30: #{tpu_custom_call.1} parent=1 // pred_check
      _
    $region31: #{tpu_custom_call.1} parent=1 // pred_check_branch
      %64 = sbr.rel (0) target = $region33
    $region32: #{tpu_custom_call.1} parent=1 // pred_region
      _
    $region33: #{tpu_custom_call.1} parent=1 // pred_fallthru
      _
    // Predicated region
    $region34: #{tpu_custom_call.1} parent=1 // pred_check
      _
    $region35: #{tpu_custom_call.1} parent=1 // pred_check_branch
      %66 = sbr.rel (0) target = $region37
    $region36: #{tpu_custom_call.1} parent=1 // pred_region
      _
    $region37: #{tpu_custom_call.1} parent=1 // pred_fallthru
      _
    // Predicated region
    $region38: #{tpu_custom_call.1} parent=1 // pred_check
      _
    $region39: #{tpu_custom_call.1} parent=1 // pred_check_branch
      %68 = sbr.rel (0) target = $region41
    $region40: #{tpu_custom_call.1} parent=1 // pred_region
      _
    $region41: #{tpu_custom_call.1} parent=1 // pred_fallthru
      _
    // Predicated region
    $region42: #{tpu_custom_call.1} parent=1 // pred_check
      _
    $region43: #{tpu_custom_call.1} parent=1 // pred_check_branch
      %70 = sbr.rel (0) target = $region45
    $region44: #{tpu_custom_call.1} parent=1 // pred_region
      _
    $region45: #{tpu_custom_call.1} parent=1 // pred_fallthru
      _
    // Predicated region
    $region46: #{tpu_custom_call.1} parent=1 // pred_check
      _
    $region47: #{tpu_custom_call.1} parent=1 // pred_check_branch
      %72 = sbr.rel (0) target = $region49
    $region48: #{tpu_custom_call.1} parent=1 // pred_region
      %73 = dma.done [#allocation8], 4096
    $region49: #{tpu_custom_call.1} parent=1 // pred_fallthru
      _
    // Predicated region
    $region50: #{tpu_custom_call.1} parent=1 // pred_check
      _
    $region51: #{tpu_custom_call.1} parent=1 // pred_check_branch
      %75 = sbr.rel (0) target = $region53
    $region52: #{tpu_custom_call.1} parent=1 // pred_region
      %76 = dma.done [#allocation11], 4096
    $region53: #{tpu_custom_call.1} parent=1 // pred_fallthru
      _
    // Predicated region
    $region54: #{tpu_custom_call.1} parent=1 // pred_check
      _
    $region55: #{tpu_custom_call.1} parent=1 // pred_check_branch
      %78 = sbr.rel (0) target = $region57
    $region56: #{tpu_custom_call.1} parent=1 // pred_region
      %79 = dma.done [#allocation11], 4096
    $region57: #{tpu_custom_call.1} parent=1 // pred_fallthru
      _
    %v81 = vld [vmem:[%s0] sm:$0xf]
    %v82 = vld [vmem:[%s0 + $0x4] sm:$0xf]
    %v83 = vld [vmem:[%s0 + $0x8] sm:$0xf]
    %v84 = vld [vmem:[%s0 + $0xc] sm:$0xf]
    %v85 = vld [vmem:[%s0 + $0x10] sm:$0xf]
    %v86 = vld [vmem:[%s0 + $0x14] sm:$0xf]
    %v87 = vld [vmem:[%s0 + $0x18] sm:$0xf]
    %v88 = vld [vmem:[%s0 + $0x1c] sm:$0xf]
    %v89 = vld [vmem:[%s1] sm:$0xff]
    %v90 = vld [vmem:[%s1 + $0x8] sm:$0xff]
    %v91 = vld [vmem:[%s1 + $0x10] sm:$0xff]
    %v92 = vld [vmem:[%s1 + $0x18] sm:$0xff]
    %v93 = vld [vmem:[%s3] sm:$0xf]
    %v95 = vlaneseq
    %v96 = vshrl.u32 %v95, 7
    %v97 = vsub.s32 0, %v96
    %v98 = vrot.slane %v93, %v97
    %v99 = vlaneseq
    %v100 = vshrl.u32 %v99, 7
    %v101 = vsub.s32 1, %v100
    %v102 = vrot.slane %v93, %v101
    %v103 = vlaneseq
    %v104 = vshrl.u32 %v103, 7
    %v105 = vsub.s32 2, %v104
    %v106 = vrot.slane %v93, %v105
    %v107 = vlaneseq
    %v108 = vshrl.u32 %v107, 7
    %v109 = vsub.s32 3, %v108
    %v110 = vrot.slane %v93, %v109
    %v123 = vunpack.c.l.b16 %v81
    %v124 = vunpack.c.l.b16 %v82
    %v125 = vunpack.c.l.b16 %v83
    %v126 = vunpack.c.l.b16 %v84
    %v127 = vunpack.c.l.b16 %v85
    %v128 = vunpack.c.l.b16 %v86
    %v129 = vunpack.c.l.b16 %v87
    %v130 = vunpack.c.l.b16 %v88
    %v131 = vpack.c.b16 %v124, %v123
    %v132 = vpack.c.b16 %v126, %v125
    %v133 = vpack.c.b16 %v128, %v127
    %v134 = vpack.c.b16 %v130, %v129
    %v139 = vunpack.c.l.b16 %v89
    %v140 = vunpack.c.h.b16 %v89
    %v141 = vunpack.c.l.b16 %v90
    %v142 = vunpack.c.h.b16 %v90
    %v143 = vunpack.c.l.b16 %v91
    %v144 = vunpack.c.h.b16 %v91
    %v145 = vunpack.c.l.b16 %v92
    %v146 = vunpack.c.h.b16 %v92
    %v147 = vpack.c.b16 %v143, %v139
    %v148 = vpack.c.b16 %v144, %v140
    %v149 = vpack.c.b16 %v145, %v141
    %v150 = vpack.c.b16 %v146, %v142
    %vm155 = vcmask 130048
    %v157 = vsel %vm155, %v131, 0
    %v160 = vsel %vm155, %v132, 0
    %v163 = vsel %vm155, %v133, 0
    %v166 = vsel %vm155, %v134, 0
    %168 = vmatprep.subr.bf16.mxu0 0
    %169 = vmatpush1.bf16.msra.mxu0 0
    %170 = vmatprep.subr.bf16.mxu0 0
    %171 = vmatpush1.bf16.msra.mxu0 0
    %172 = vmatprep.subr.bf16.mxu0 0
    %173 = vmatpush1.bf16.msra.mxu0 0
    %174 = vmatprep.subr.bf16.mxu0 0
    %175 = vmatpush1.bf16.msra.mxu0 0
    %176 = vmatprep.subr.bf16.mxu0 0
    %177 = vmatpush1.bf16.msra.mxu0 0
    %178 = vmatprep.subr.bf16.mxu0 0
    %179 = vmatpush1.bf16.msra.mxu0 0
    %180 = vmatprep.subr.bf16.mxu0 0
    %181 = vmatpush1.bf16.msra.mxu0 0
    %182 = vmatprep.subr.bf16.mxu0 %v148
    %183 = vmatpush1.bf16.msra.mxu0 %v147
    %184 = vmatprep.subr.bf16.mxu0 0
    %185 = vmatpush2.bf16.msra.mxu0 0
    %186 = vmatprep.subr.bf16.mxu0 0
    %187 = vmatpush2.bf16.msra.mxu0 0
    %188 = vmatprep.subr.bf16.mxu0 0
    %189 = vmatpush2.bf16.msra.mxu0 0
    %190 = vmatprep.subr.bf16.mxu0 0
    %191 = vmatpush2.bf16.msra.mxu0 0
    %192 = vmatprep.subr.bf16.mxu0 0
    %193 = vmatpush2.bf16.msra.mxu0 0
    %194 = vmatprep.subr.bf16.mxu0 0
    %195 = vmatpush2.bf16.msra.mxu0 0
    %196 = vmatprep.subr.bf16.mxu0 0
    %197 = vmatpush2.bf16.msra.mxu0 0
    %198 = vmatprep.subr.bf16.mxu0 0
    %199 = vmatpush2.bf16.msra.mxu0 0
    %200 = vmatprep.mubr.bf16.mxu0 0
    %201 = vmatmul.mubr.bf16.gmra.mxu0 %v157
    %v202 = vpop.f32.mrf.mxu0
    %v203 = vadd.f32 %v98, %v202
    %v204 = vpop.f32.mrf.mxu0
    %v205 = vadd.f32 %v102, %v204
    %v206 = vpop.f32.mrf.mxu0
    %v207 = vadd.f32 %v98, %v206
    %v208 = vpop.f32.mrf.mxu0
    %v209 = vadd.f32 %v102, %v208
    %210 = vmatprep.mubr.bf16.mxu0 0
    %211 = vmatmul.mubr.bf16.gmra.mxu0 %v160
    %v212 = vpop.f32.mrf.mxu0
    %v213 = vadd.f32 %v98, %v212
    %v214 = vpop.f32.mrf.mxu0
    %v215 = vadd.f32 %v102, %v214
    %v216 = vpop.f32.mrf.mxu0
    %v217 = vadd.f32 %v98, %v216
    %v218 = vpop.f32.mrf.mxu0
    %v219 = vadd.f32 %v102, %v218
    %220 = vmatprep.mubr.bf16.mxu0 0
    %221 = vmatmul.mubr.bf16.gmra.mxu0 %v163
    %v222 = vpop.f32.mrf.mxu0
    %v223 = vadd.f32 %v98, %v222
    %v224 = vpop.f32.mrf.mxu0
    %v225 = vadd.f32 %v102, %v224
    %v226 = vpop.f32.mrf.mxu0
    %v227 = vadd.f32 %v98, %v226
    %v228 = vpop.f32.mrf.mxu0
    %v229 = vadd.f32 %v102, %v228
    %230 = vmatprep.mubr.bf16.mxu0 0
    %231 = vmatmul.mubr.bf16.gmra.mxu0 %v166
    %v232 = vpop.f32.mrf.mxu0
    %v233 = vadd.f32 %v98, %v232
    %v234 = vpop.f32.mrf.mxu0
    %v235 = vadd.f32 %v102, %v234
    %v236 = vpop.f32.mrf.mxu0
    %v237 = vadd.f32 %v98, %v236
    %v238 = vpop.f32.mrf.mxu0
    %v239 = vadd.f32 %v102, %v238
    %240 = vdwg.mxu0
    %241 = vmatprep.subr.bf16.mxu0 0
    %242 = vmatpush1.bf16.msra.mxu0 0
    %243 = vmatprep.subr.bf16.mxu0 0
    %244 = vmatpush1.bf16.msra.mxu0 0
    %245 = vmatprep.subr.bf16.mxu0 0
    %246 = vmatpush1.bf16.msra.mxu0 0
    %247 = vmatprep.subr.bf16.mxu0 0
    %248 = vmatpush1.bf16.msra.mxu0 0
    %249 = vmatprep.subr.bf16.mxu0 0
    %250 = vmatpush1.bf16.msra.mxu0 0
    %251 = vmatprep.subr.bf16.mxu0 0
    %252 = vmatpush1.bf16.msra.mxu0 0
    %253 = vmatprep.subr.bf16.mxu0 0
    %254 = vmatpush1.bf16.msra.mxu0 0
    %255 = vmatprep.subr.bf16.mxu0 %v150
    %256 = vmatpush1.bf16.msra.mxu0 %v149
    %257 = vmatprep.subr.bf16.mxu0 0
    %258 = vmatpush2.bf16.msra.mxu0 0
    %259 = vmatprep.subr.bf16.mxu0 0
    %260 = vmatpush2.bf16.msra.mxu0 0
    %261 = vmatprep.subr.bf16.mxu0 0
    %262 = vmatpush2.bf16.msra.mxu0 0
    %263 = vmatprep.subr.bf16.mxu0 0
    %264 = vmatpush2.bf16.msra.mxu0 0
    %265 = vmatprep.subr.bf16.mxu0 0
    %266 = vmatpush2.bf16.msra.mxu0 0
    %267 = vmatprep.subr.bf16.mxu0 0
    %268 = vmatpush2.bf16.msra.mxu0 0
    %269 = vmatprep.subr.bf16.mxu0 0
    %270 = vmatpush2.bf16.msra.mxu0 0
    %271 = vmatprep.subr.bf16.mxu0 0
    %272 = vmatpush2.bf16.msra.mxu0 0
    %273 = vmatprep.mubr.bf16.mxu0 0
    %274 = vmatmul.mubr.bf16.gmra.mxu0 %v157
    %v275 = vpop.f32.mrf.mxu0
    %v276 = vadd.f32 %v106, %v275
    %v277 = vpop.f32.mrf.mxu0
    %v278 = vadd.f32 %v110, %v277
    %v279 = vpop.f32.mrf.mxu0
    %v280 = vadd.f32 %v106, %v279
    %v281 = vpop.f32.mrf.mxu0
    %v282 = vadd.f32 %v110, %v281
    %283 = vmatprep.mubr.bf16.mxu0 0
    %284 = vmatmul.mubr.bf16.gmra.mxu0 %v160
    %v285 = vpop.f32.mrf.mxu0
    %v286 = vadd.f32 %v106, %v285
    %v287 = vpop.f32.mrf.mxu0
    %v288 = vadd.f32 %v110, %v287
    %v289 = vpop.f32.mrf.mxu0
    %v290 = vadd.f32 %v106, %v289
    %v291 = vpop.f32.mrf.mxu0
    %v292 = vadd.f32 %v110, %v291
    %293 = vmatprep.mubr.bf16.mxu0 0
    %294 = vmatmul.mubr.bf16.gmra.mxu0 %v163
    %v295 = vpop.f32.mrf.mxu0
    %v296 = vadd.f32 %v106, %v295
    %v297 = vpop.f32.mrf.mxu0
    %v298 = vadd.f32 %v110, %v297
    %v299 = vpop.f32.mrf.mxu0
    %v300 = vadd.f32 %v106, %v299
    %v301 = vpop.f32.mrf.mxu0
    %v302 = vadd.f32 %v110, %v301
    %303 = vmatprep.mubr.bf16.mxu0 0
    %304 = vmatmul.mubr.bf16.gmra.mxu0 %v166
    %v305 = vpop.f32.mrf.mxu0
    %v306 = vadd.f32 %v106, %v305
    %v307 = vpop.f32.mrf.mxu0
    %v308 = vadd.f32 %v110, %v307
    %v309 = vpop.f32.mrf.mxu0
    %v310 = vadd.f32 %v106, %v309
    %v311 = vpop.f32.mrf.mxu0
    %v312 = vadd.f32 %v110, %v311
    %313 = vdwg.mxu0
    %314 = vst [vmem:[#allocation2] sm:$0xff] %v203
    %315 = vst [vmem:[#allocation2 + $0x8] sm:$0xff] %v205
    %316 = vst [vmem:[#allocation2 + $0x10] sm:$0xff] %v276
    %317 = vst [vmem:[#allocation2 + $0x18] sm:$0xff] %v278
    %318 = vst [vmem:[#allocation2 + $0x20] sm:$0xff] %v207
    %319 = vst [vmem:[#allocation2 + $0x28] sm:$0xff] %v209
    %320 = vst [vmem:[#allocation2 + $0x30] sm:$0xff] %v280
    %321 = vst [vmem:[#allocation2 + $0x38] sm:$0xff] %v282
    %322 = vst [vmem:[#allocation2 + $0x40] sm:$0xff] %v213
    %323 = vst [vmem:[#allocation2 + $0x48] sm:$0xff] %v215
    %324 = vst [vmem:[#allocation2 + $0x50] sm:$0xff] %v286
    %325 = vst [vmem:[#allocation2 + $0x58] sm:$0xff] %v288
    %326 = vst [vmem:[#allocation2 + $0x60] sm:$0xff] %v217
    %327 = vst [vmem:[#allocation2 + $0x68] sm:$0xff] %v219
    %328 = vst [vmem:[#allocation2 + $0x70] sm:$0xff] %v290
    %329 = vst [vmem:[#allocation2 + $0x78] sm:$0xff] %v292
    %330 = vst [vmem:[#allocation2 + $0x80] sm:$0xff] %v223
    %331 = vst [vmem:[#allocation2 + $0x88] sm:$0xff] %v225
    %332 = vst [vmem:[#allocation2 + $0x90] sm:$0xff] %v296
    %333 = vst [vmem:[#allocation2 + $0x98] sm:$0xff] %v298
    %334 = vst [vmem:[#allocation2 + $0xa0] sm:$0xff] %v227
    %335 = vst [vmem:[#allocation2 + $0xa8] sm:$0xff] %v229
    %336 = vst [vmem:[#allocation2 + $0xb0] sm:$0xff] %v300
    %337 = vst [vmem:[#allocation2 + $0xb8] sm:$0xff] %v302
    %338 = vst [vmem:[#allocation2 + $0xc0] sm:$0xff] %v233
    %339 = vst [vmem:[#allocation2 + $0xc8] sm:$0xff] %v235
    %340 = vst [vmem:[#allocation2 + $0xd0] sm:$0xff] %v306
    %341 = vst [vmem:[#allocation2 + $0xd8] sm:$0xff] %v308
    %342 = vst [vmem:[#allocation2 + $0xe0] sm:$0xff] %v237
    %343 = vst [vmem:[#allocation2 + $0xe8] sm:$0xff] %v239
    %344 = vst [vmem:[#allocation2 + $0xf0] sm:$0xff] %v310
    %345 = vst [vmem:[#allocation2 + $0xf8] sm:$0xff] %v312
    %346 = vst [vmem:[#allocation3] sm:$0xff] 0.0
    %347 = vst [vmem:[#allocation4] sm:$0xff] 0.0
    %348 = vst [vmem:[#allocation5] sm:$0xff] 0.0
    %349 = vst [vmem:[#allocation6] sm:$0xff] 0.0
    %v350 = vld [vmem:[#allocation3] sm:$0xff]
    %v351 = vld [vmem:[#allocation4] sm:$0xff]
    %v352 = vld [vmem:[#allocation2] sm:$0xff]
    %v353 = vld [vmem:[#allocation2 + $0x8] sm:$0xff]
    %v354 = vld [vmem:[#allocation2 + $0x10] sm:$0xff]
    %v355 = vld [vmem:[#allocation2 + $0x18] sm:$0xff]
    %v356 = vpack.c.bf16 %v350, %v350
    %v357 = vld [vmem:[#allocation7] sm:$0xff]
    %v358 = vld [vmem:[#allocation7 + $0x8] sm:$0xff]
    %v359 = vld [vmem:[#allocation7 + $0x10] sm:$0xff]
    %v360 = vld [vmem:[#allocation7 + $0x18] sm:$0xff]
    %v361 = vld [vmem:[#allocation7 + $0x20] sm:$0xff]
    %v362 = vld [vmem:[#allocation7 + $0x28] sm:$0xff]
    %v363 = vld [vmem:[#allocation7 + $0x30] sm:$0xff]
    %v364 = vld [vmem:[#allocation7 + $0x38] sm:$0xff]
    %v365 = vld [vmem:[#allocation7 + $0x40] sm:$0xff]
    %v366 = vld [vmem:[#allocation7 + $0x48] sm:$0xff]
    %v367 = vld [vmem:[#allocation7 + $0x50] sm:$0xff]
    %v368 = vld [vmem:[#allocation7 + $0x58] sm:$0xff]
    %v369 = vld [vmem:[#allocation7 + $0x60] sm:$0xff]
    %v370 = vld [vmem:[#allocation7 + $0x68] sm:$0xff]
    %v371 = vld [vmem:[#allocation7 + $0x70] sm:$0xff]
    %v372 = vld [vmem:[#allocation7 + $0x78] sm:$0xff]
    %v373 = vld [vmem:[#allocation7 + $0x80] sm:$0xff]
    %v374 = vld [vmem:[#allocation7 + $0x88] sm:$0xff]
    %v375 = vld [vmem:[#allocation7 + $0x90] sm:$0xff]
    %v376 = vld [vmem:[#allocation7 + $0x98] sm:$0xff]
    %v377 = vld [vmem:[#allocation7 + $0xa0] sm:$0xff]
    %v378 = vld [vmem:[#allocation7 + $0xa8] sm:$0xff]
    %v379 = vld [vmem:[#allocation7 + $0xb0] sm:$0xff]
    %v380 = vld [vmem:[#allocation7 + $0xb8] sm:$0xff]
    %v381 = vld [vmem:[#allocation7 + $0xc0] sm:$0xff]
    %v382 = vld [vmem:[#allocation7 + $0xc8] sm:$0xff]
    %v383 = vld [vmem:[#allocation7 + $0xd0] sm:$0xff]
    %v384 = vld [vmem:[#allocation7 + $0xd8] sm:$0xff]
    %v385 = vld [vmem:[#allocation7 + $0xe0] sm:$0xff]
    %v386 = vld [vmem:[#allocation7 + $0xe8] sm:$0xff]
    %v387 = vld [vmem:[#allocation7 + $0xf0] sm:$0xff]
    %v388 = vld [vmem:[#allocation7 + $0xf8] sm:$0xff]
    %v421 = vunpack.c.l.b16 %v357
    %v422 = vunpack.c.h.b16 %v357
    %v423 = vunpack.c.l.b16 %v358
    %v424 = vunpack.c.h.b16 %v358
    %v425 = vunpack.c.l.b16 %v359
    %v426 = vunpack.c.h.b16 %v359
    %v427 = vunpack.c.l.b16 %v360
    %v428 = vunpack.c.h.b16 %v360
    %v429 = vunpack.c.l.b16 %v361
    %v430 = vunpack.c.h.b16 %v361
    %v431 = vunpack.c.l.b16 %v362
    %v432 = vunpack.c.h.b16 %v362
    %v433 = vunpack.c.l.b16 %v363
    %v434 = vunpack.c.h.b16 %v363
    %v435 = vunpack.c.l.b16 %v364
    %v436 = vunpack.c.h.b16 %v364
    %v437 = vunpack.c.l.b16 %v365
    %v438 = vunpack.c.h.b16 %v365
    %v439 = vunpack.c.l.b16 %v366
    %v440 = vunpack.c.h.b16 %v366
    %v441 = vunpack.c.l.b16 %v367
    %v442 = vunpack.c.h.b16 %v367
    %v443 = vunpack.c.l.b16 %v368
    %v444 = vunpack.c.h.b16 %v368
    %v445 = vunpack.c.l.b16 %v369
    %v446 = vunpack.c.h.b16 %v369
    %v447 = vunpack.c.l.b16 %v370
    %v448 = vunpack.c.h.b16 %v370
    %v449 = vunpack.c.l.b16 %v371
    %v450 = vunpack.c.h.b16 %v371
    %v451 = vunpack.c.l.b16 %v372
    %v452 = vunpack.c.h.b16 %v372
    %v453 = vunpack.c.l.b16 %v373
    %v454 = vunpack.c.h.b16 %v373
    %v455 = vunpack.c.l.b16 %v374
    %v456 = vunpack.c.h.b16 %v374
    %v457 = vunpack.c.l.b16 %v375
    %v458 = vunpack.c.h.b16 %v375
    %v459 = vunpack.c.l.b16 %v376
    %v460 = vunpack.c.h.b16 %v376
    %v461 = vunpack.c.l.b16 %v377
    %v462 = vunpack.c.h.b16 %v377
    %v463 = vunpack.c.l.b16 %v378
    %v464 = vunpack.c.h.b16 %v378
    %v465 = vunpack.c.l.b16 %v379
    %v466 = vunpack.c.h.b16 %v379
    %v467 = vunpack.c.l.b16 %v380
    %v468 = vunpack.c.h.b16 %v380
    %v469 = vunpack.c.l.b16 %v381
    %v470 = vunpack.c.h.b16 %v381
    %v471 = vunpack.c.l.b16 %v382
    %v472 = vunpack.c.h.b16 %v382
    %v473 = vunpack.c.l.b16 %v383
    %v474 = vunpack.c.h.b16 %v383
    %v475 = vunpack.c.l.b16 %v384
    %v476 = vunpack.c.h.b16 %v384
    %v477 = vunpack.c.l.b16 %v385
    %v478 = vunpack.c.h.b16 %v385
    %v479 = vunpack.c.l.b16 %v386
    %v480 = vunpack.c.h.b16 %v386
    %v481 = vunpack.c.l.b16 %v387
    %v482 = vunpack.c.h.b16 %v387
    %v483 = vunpack.c.l.b16 %v388
    %v484 = vunpack.c.h.b16 %v388
    %v485 = vpack.c.b16 %v425, %v421
    %v486 = vpack.c.b16 %v426, %v422
    %v487 = vpack.c.b16 %v427, %v423
    %v488 = vpack.c.b16 %v428, %v424
    %v489 = vpack.c.b16 %v433, %v429
    %v490 = vpack.c.b16 %v434, %v430
    %v491 = vpack.c.b16 %v435, %v431
    %v492 = vpack.c.b16 %v436, %v432
    %v493 = vpack.c.b16 %v441, %v437
    %v494 = vpack.c.b16 %v442, %v438
    %v495 = vpack.c.b16 %v443, %v439
    %v496 = vpack.c.b16 %v444, %v440
    %v497 = vpack.c.b16 %v449, %v445
    %v498 = vpack.c.b16 %v450, %v446
    %v499 = vpack.c.b16 %v451, %v447
    %v500 = vpack.c.b16 %v452, %v448
    %v501 = vpack.c.b16 %v457, %v453
    %v502 = vpack.c.b16 %v458, %v454
    %v503 = vpack.c.b16 %v459, %v455
    %v504 = vpack.c.b16 %v460, %v456
    %v505 = vpack.c.b16 %v465, %v461
    %v506 = vpack.c.b16 %v466, %v462
    %v507 = vpack.c.b16 %v467, %v463
    %v508 = vpack.c.b16 %v468, %v464
    %v509 = vpack.c.b16 %v473, %v469
    %v510 = vpack.c.b16 %v474, %v470
    %v511 = vpack.c.b16 %v475, %v471
    %v512 = vpack.c.b16 %v476, %v472
    %v513 = vpack.c.b16 %v481, %v477
    %v514 = vpack.c.b16 %v482, %v478
    %v515 = vpack.c.b16 %v483, %v479
    %v516 = vpack.c.b16 %v484, %v480
    %549 = vmatprep.subr.bf16.mxu0 %v514
    %550 = vmatpush1.bf16.msra.mxu0 %v513
    %551 = vmatprep.subr.bf16.mxu0 %v510
    %552 = vmatpush1.bf16.msra.mxu0 %v509
    %553 = vmatprep.subr.bf16.mxu0 %v506
    %554 = vmatpush1.bf16.msra.mxu0 %v505
    %555 = vmatprep.subr.bf16.mxu0 %v502
    %556 = vmatpush1.bf16.msra.mxu0 %v501
    %557 = vmatprep.subr.bf16.mxu0 %v498
    %558 = vmatpush1.bf16.msra.mxu0 %v497
    %559 = vmatprep.subr.bf16.mxu0 %v494
    %560 = vmatpush1.bf16.msra.mxu0 %v493
    %561 = vmatprep.subr.bf16.mxu0 %v490
    %562 = vmatpush1.bf16.msra.mxu0 %v489
    %563 = vmatprep.subr.bf16.mxu0 %v486
    %564 = vmatpush1.bf16.msra.mxu0 %v485
    %565 = vmatprep.subr.bf16.mxu0 0
    %566 = vmatpush2.bf16.msra.mxu0 0
    %567 = vmatprep.subr.bf16.mxu0 0
    %568 = vmatpush2.bf16.msra.mxu0 0
    %569 = vmatprep.subr.bf16.mxu0 0
    %570 = vmatpush2.bf16.msra.mxu0 0
    %571 = vmatprep.subr.bf16.mxu0 0
    %572 = vmatpush2.bf16.msra.mxu0 0
    %573 = vmatprep.subr.bf16.mxu0 0
    %574 = vmatpush2.bf16.msra.mxu0 0
    %575 = vmatprep.subr.bf16.mxu0 0
    %576 = vmatpush2.bf16.msra.mxu0 0
    %577 = vmatprep.subr.bf16.mxu0 0
    %578 = vmatpush2.bf16.msra.mxu0 0
    %579 = vmatprep.subr.bf16.mxu0 0
    %580 = vmatpush2.bf16.msra.mxu0 0
    %581 = vmatprep.mubr.bf16.mxu0 0
    %582 = vmatmul.mubr.bf16.gmra.mxu0 %v356
    %v583 = vpop.f32.mrf.mxu0
    %v584 = vadd.f32 0.0, %v583
    %v585 = vpop.f32.mrf.mxu0
    %v586 = vadd.f32 0.0, %v585
    %v587 = vpop.f32.mrf.mxu0
    %v588 = vpop.f32.mrf.mxu0
    %589 = vdwg.mxu0
    %590 = vmatprep.subr.bf16.mxu0 %v516
    %591 = vmatpush1.bf16.msra.mxu0 %v515
    %592 = vmatprep.subr.bf16.mxu0 %v512
    %593 = vmatpush1.bf16.msra.mxu0 %v511
    %594 = vmatprep.subr.bf16.mxu0 %v508
    %595 = vmatpush1.bf16.msra.mxu0 %v507
    %596 = vmatprep.subr.bf16.mxu0 %v504
    %597 = vmatpush1.bf16.msra.mxu0 %v503
    %598 = vmatprep.subr.bf16.mxu0 %v500
    %599 = vmatpush1.bf16.msra.mxu0 %v499
    %600 = vmatprep.subr.bf16.mxu0 %v496
    %601 = vmatpush1.bf16.msra.mxu0 %v495
    %602 = vmatprep.subr.bf16.mxu0 %v492
    %603 = vmatpush1.bf16.msra.mxu0 %v491
    %604 = vmatprep.subr.bf16.mxu0 %v488
    %605 = vmatpush1.bf16.msra.mxu0 %v487
    %606 = vmatprep.subr.bf16.mxu0 0
    %607 = vmatpush2.bf16.msra.mxu0 0
    %608 = vmatprep.subr.bf16.mxu0 0
    %609 = vmatpush2.bf16.msra.mxu0 0
    %610 = vmatprep.subr.bf16.mxu0 0
    %611 = vmatpush2.bf16.msra.mxu0 0
    %612 = vmatprep.subr.bf16.mxu0 0
    %613 = vmatpush2.bf16.msra.mxu0 0
    %614 = vmatprep.subr.bf16.mxu0 0
    %615 = vmatpush2.bf16.msra.mxu0 0
    %616 = vmatprep.subr.bf16.mxu0 0
    %617 = vmatpush2.bf16.msra.mxu0 0
    %618 = vmatprep.subr.bf16.mxu0 0
    %619 = vmatpush2.bf16.msra.mxu0 0
    %620 = vmatprep.subr.bf16.mxu0 0
    %621 = vmatpush2.bf16.msra.mxu0 0
    %622 = vmatprep.mubr.bf16.mxu0 0
    %623 = vmatmul.mubr.bf16.gmra.mxu0 %v356
    %v624 = vpop.f32.mrf.mxu0
    %v625 = vadd.f32 0.0, %v624
    %v626 = vpop.f32.mrf.mxu0
    %v627 = vadd.f32 0.0, %v626
    %v628 = vpop.f32.mrf.mxu0
    %v629 = vpop.f32.mrf.mxu0
    %630 = vdwg.mxu0
    %v631 = vadd.f32 %v352, %v584
    %v632 = vadd.f32 %v353, %v586
    %v633 = vadd.f32 %v354, %v625
    %v634 = vadd.f32 %v355, %v627
    %v635 = vxor.u32 %v631, 2147483648
    %v636 = vxor.u32 %v632, 2147483648
    %v637 = vxor.u32 %v633, 2147483648
    %v638 = vmul.f32 %v635, 1.442695
    %v639 = vpow.pop %v638
    %v640 = vmul.f32 %v636, 1.442695
    %v641 = vpow.pop %v640
    %v642 = vmul.f32 %v637, 1.442695
    %v643 = vpow.pop %v642
    %v644 = vadd.f32 %v639, 1.0
    %v645 = vadd.f32 %v641, 1.0
    %v646 = vadd.f32 %v643, 1.0
    %v647 = vrcp.pop %v644
    %v648 = vmul.f32 1.0, %v647
    %v649 = vrcp.pop %v645
    %v650 = vmul.f32 1.0, %v649
    %v651 = vrcp.pop %v646
    %v652 = vmul.f32 1.0, %v651
    %v653 = vtanh.pop %v634
    %v654 = vmul.f32 %v650, %v351
    %v655 = vmul.f32 %v648, %v653
    %v656 = vadd.f32 %v654, %v655
    %v657 = vtanh.pop %v656
    %v658 = vmul.f32 %v652, %v657
    %659 = vst [vmem:[#allocation3] sm:$0xff] %v658
    %660 = vst [vmem:[#allocation4] sm:$0xff] %v656
    %v661 = vld [vmem:[#allocation3] sm:$0xff]
    %v662 = vld [vmem:[#allocation4] sm:$0xff]
    %v663 = vld [vmem:[#allocation2 + $0x20] sm:$0xff]
    %v664 = vld [vmem:[#allocation2 + $0x28] sm:$0xff]
    %v665 = vld [vmem:[#allocation2 + $0x30] sm:$0xff]
    %v666 = vld [vmem:[#allocation2 + $0x38] sm:$0xff]
    %v667 = vpack.c.bf16 %v661, %v661
    %v668 = vld [vmem:[#allocation7] sm:$0xff]
    %v669 = vld [vmem:[#allocation7 + $0x8] sm:$0xff]
    %v670 = vld [vmem:[#allocation7 + $0x10] sm:$0xff]
    %v671 = vld [vmem:[#allocation7 + $0x18] sm:$0xff]
    %v672 = vld [vmem:[#allocation7 + $0x20] sm:$0xff]
    %v673 = vld [vmem:[#allocation7 + $0x28] sm:$0xff]
    %v674 = vld [vmem:[#allocation7 + $0x30] sm:$0xff]
    %v675 = vld [vmem:[#allocation7 + $0x38] sm:$0xff]
    %v676 = vld [vmem:[#allocation7 + $0x40] sm:$0xff]
    %v677 = vld [vmem:[#allocation7 + $0x48] sm:$0xff]
    %v678 = vld [vmem:[#allocation7 + $0x50] sm:$0xff]
    %v679 = vld [vmem:[#allocation7 + $0x58] sm:$0xff]
    %v680 = vld [vmem:[#allocation7 + $0x60] sm:$0xff]
    %v681 = vld [vmem:[#allocation7 + $0x68] sm:$0xff]
    %v682 = vld [vmem:[#allocation7 + $0x70] sm:$0xff]
    %v683 = vld [vmem:[#allocation7 + $0x78] sm:$0xff]
    %v684 = vld [vmem:[#allocation7 + $0x80] sm:$0xff]
    %v685 = vld [vmem:[#allocation7 + $0x88] sm:$0xff]
    %v686 = vld [vmem:[#allocation7 + $0x90] sm:$0xff]
    %v687 = vld [vmem:[#allocation7 + $0x98] sm:$0xff]
    %v688 = vld [vmem:[#allocation7 + $0xa0] sm:$0xff]
    %v689 = vld [vmem:[#allocation7 + $0xa8] sm:$0xff]
    %v690 = vld [vmem:[#allocation7 + $0xb0] sm:$0xff]
    %v691 = vld [vmem:[#allocation7 + $0xb8] sm:$0xff]
    %v692 = vld [vmem:[#allocation7 + $0xc0] sm:$0xff]
    %v693 = vld [vmem:[#allocation7 + $0xc8] sm:$0xff]
    %v694 = vld [vmem:[#allocation7 + $0xd0] sm:$0xff]
    %v695 = vld [vmem:[#allocation7 + $0xd8] sm:$0xff]
    %v696 = vld [vmem:[#allocation7 + $0xe0] sm:$0xff]
    %v697 = vld [vmem:[#allocation7 + $0xe8] sm:$0xff]
    %v698 = vld [vmem:[#allocation7 + $0xf0] sm:$0xff]
    %v699 = vld [vmem:[#allocation7 + $0xf8] sm:$0xff]
    %v732 = vunpack.c.l.b16 %v668
    %v733 = vunpack.c.h.b16 %v668
    %v734 = vunpack.c.l.b16 %v669
    %v735 = vunpack.c.h.b16 %v669
    %v736 = vunpack.c.l.b16 %v670
    %v737 = vunpack.c.h.b16 %v670
    %v738 = vunpack.c.l.b16 %v671
    %v739 = vunpack.c.h.b16 %v671
    %v740 = vunpack.c.l.b16 %v672
    %v741 = vunpack.c.h.b16 %v672
    %v742 = vunpack.c.l.b16 %v673
    %v743 = vunpack.c.h.b16 %v673
    %v744 = vunpack.c.l.b16 %v674
    %v745 = vunpack.c.h.b16 %v674
    %v746 = vunpack.c.l.b16 %v675
    %v747 = vunpack.c.h.b16 %v675
    %v748 = vunpack.c.l.b16 %v676
    %v749 = vunpack.c.h.b16 %v676
    %v750 = vunpack.c.l.b16 %v677
    %v751 = vunpack.c.h.b16 %v677
    %v752 = vunpack.c.l.b16 %v678
    %v753 = vunpack.c.h.b16 %v678
    %v754 = vunpack.c.l.b16 %v679
    %v755 = vunpack.c.h.b16 %v679
    %v756 = vunpack.c.l.b16 %v680
    %v757 = vunpack.c.h.b16 %v680
    %v758 = vunpack.c.l.b16 %v681
    %v759 = vunpack.c.h.b16 %v681
    %v760 = vunpack.c.l.b16 %v682
    %v761 = vunpack.c.h.b16 %v682
    %v762 = vunpack.c.l.b16 %v683
    %v763 = vunpack.c.h.b16 %v683
    %v764 = vunpack.c.l.b16 %v684
    %v765 = vunpack.c.h.b16 %v684
    %v766 = vunpack.c.l.b16 %v685
    %v767 = vunpack.c.h.b16 %v685
    %v768 = vunpack.c.l.b16 %v686
    %v769 = vunpack.c.h.b16 %v686
    %v770 = vunpack.c.l.b16 %v687
    %v771 = vunpack.c.h.b16 %v687
    %v772 = vunpack.c.l.b16 %v688
    %v773 = vunpack.c.h.b16 %v688
    %v774 = vunpack.c.l.b16 %v689
    %v775 = vunpack.c.h.b16 %v689
    %v776 = vunpack.c.l.b16 %v690
    %v777 = vunpack.c.h.b16 %v690
    %v778 = vunpack.c.l.b16 %v691
    %v779 = vunpack.c.h.b16 %v691
    %v780 = vunpack.c.l.b16 %v692
    %v781 = vunpack.c.h.b16 %v692
    %v782 = vunpack.c.l.b16 %v693
    %v783 = vunpack.c.h.b16 %v693
    %v784 = vunpack.c.l.b16 %v694
    %v785 = vunpack.c.h.b16 %v694
    %v786 = vunpack.c.l.b16 %v695
    %v787 = vunpack.c.h.b16 %v695
    %v788 = vunpack.c.l.b16 %v696
    %v789 = vunpack.c.h.b16 %v696
    %v790 = vunpack.c.l.b16 %v697
    %v791 = vunpack.c.h.b16 %v697
    %v792 = vunpack.c.l.b16 %v698
    %v793 = vunpack.c.h.b16 %v698
    %v794 = vunpack.c.l.b16 %v699
    %v795 = vunpack.c.h.b16 %v699
    %v796 = vpack.c.b16 %v736, %v732
    %v797 = vpack.c.b16 %v737, %v733
    %v798 = vpack.c.b16 %v738, %v734
    %v799 = vpack.c.b16 %v739, %v735
    %v800 = vpack.c.b16 %v744, %v740
    %v801 = vpack.c.b16 %v745, %v741
    %v802 = vpack.c.b16 %v746, %v742
    %v803 = vpack.c.b16 %v747, %v743
    %v804 = vpack.c.b16 %v752, %v748
    %v805 = vpack.c.b16 %v753, %v749
    %v806 = vpack.c.b16 %v754, %v750
    %v807 = vpack.c.b16 %v755, %v751
    %v808 = vpack.c.b16 %v760, %v756
    %v809 = vpack.c.b16 %v761, %v757
    %v810 = vpack.c.b16 %v762, %v758
    %v811 = vpack.c.b16 %v763, %v759
    %v812 = vpack.c.b16 %v768, %v764
    %v813 = vpack.c.b16 %v769, %v765
    %v814 = vpack.c.b16 %v770, %v766
    %v815 = vpack.c.b16 %v771, %v767
    %v816 = vpack.c.b16 %v776, %v772
    %v817 = vpack.c.b16 %v777, %v773
    %v818 = vpack.c.b16 %v778, %v774
    %v819 = vpack.c.b16 %v779, %v775
    %v820 = vpack.c.b16 %v784, %v780
    %v821 = vpack.c.b16 %v785, %v781
    %v822 = vpack.c.b16 %v786, %v782
    %v823 = vpack.c.b16 %v787, %v783
    %v824 = vpack.c.b16 %v792, %v788
    %v825 = vpack.c.b16 %v793, %v789
    %v826 = vpack.c.b16 %v794, %v790
    %v827 = vpack.c.b16 %v795, %v791
    %860 = vmatprep.subr.bf16.mxu0 %v825
    %861 = vmatpush1.bf16.msra.mxu0 %v824
    %862 = vmatprep.subr.bf16.mxu0 %v821
    %863 = vmatpush1.bf16.msra.mxu0 %v820
    %864 = vmatprep.subr.bf16.mxu0 %v817
    %865 = vmatpush1.bf16.msra.mxu0 %v816
    %866 = vmatprep.subr.bf16.mxu0 %v813
    %867 = vmatpush1.bf16.msra.mxu0 %v812
    %868 = vmatprep.subr.bf16.mxu0 %v809
    %869 = vmatpush1.bf16.msra.mxu0 %v808
    %870 = vmatprep.subr.bf16.mxu0 %v805
    %871 = vmatpush1.bf16.msra.mxu0 %v804
    %872 = vmatprep.subr.bf16.mxu0 %v801
    %873 = vmatpush1.bf16.msra.mxu0 %v800
    %874 = vmatprep.subr.bf16.mxu0 %v797
    %875 = vmatpush1.bf16.msra.mxu0 %v796
    %876 = vmatprep.subr.bf16.mxu0 0
    %877 = vmatpush2.bf16.msra.mxu0 0
    %878 = vmatprep.subr.bf16.mxu0 0
    %879 = vmatpush2.bf16.msra.mxu0 0
    %880 = vmatprep.subr.bf16.mxu0 0
    %881 = vmatpush2.bf16.msra.mxu0 0
    %882 = vmatprep.subr.bf16.mxu0 0
    %883 = vmatpush2.bf16.msra.mxu0 0
    %884 = vmatprep.subr.bf16.mxu0 0
    %885 = vmatpush2.bf16.msra.mxu0 0
    %886 = vmatprep.subr.bf16.mxu0 0
    %887 = vmatpush2.bf16.msra.mxu0 0
    %888 = vmatprep.subr.bf16.mxu0 0
    %889 = vmatpush2.bf16.msra.mxu0 0
    %890 = vmatprep.subr.bf16.mxu0 0
    %891 = vmatpush2.bf16.msra.mxu0 0
    %892 = vmatprep.mubr.bf16.mxu0 0
    %893 = vmatmul.mubr.bf16.gmra.mxu0 %v667
    %v894 = vpop.f32.mrf.mxu0
    %v895 = vadd.f32 0.0, %v894
    %v896 = vpop.f32.mrf.mxu0
    %v897 = vadd.f32 0.0, %v896
    %v898 = vpop.f32.mrf.mxu0
    %v899 = vpop.f32.mrf.mxu0
    %900 = vdwg.mxu0
    %901 = vmatprep.subr.bf16.mxu0 %v827
    %902 = vmatpush1.bf16.msra.mxu0 %v826
    %903 = vmatprep.subr.bf16.mxu0 %v823
    %904 = vmatpush1.bf16.msra.mxu0 %v822
    %905 = vmatprep.subr.bf16.mxu0 %v819
    %906 = vmatpush1.bf16.msra.mxu0 %v818
    %907 = vmatprep.subr.bf16.mxu0 %v815
    %908 = vmatpush1.bf16.msra.mxu0 %v814
    %909 = vmatprep.subr.bf16.mxu0 %v811
    %910 = vmatpush1.bf16.msra.mxu0 %v810
    %911 = vmatprep.subr.bf16.mxu0 %v807
    %912 = vmatpush1.bf16.msra.mxu0 %v806
    %913 = vmatprep.subr.bf16.mxu0 %v803
    %914 = vmatpush1.bf16.msra.mxu0 %v802
    %915 = vmatprep.subr.bf16.mxu0 %v799
    %916 = vmatpush1.bf16.msra.mxu0 %v798
    %917 = vmatprep.subr.bf16.mxu0 0
    %918 = vmatpush2.bf16.msra.mxu0 0
    %919 = vmatprep.subr.bf16.mxu0 0
    %920 = vmatpush2.bf16.msra.mxu0 0
    %921 = vmatprep.subr.bf16.mxu0 0
    %922 = vmatpush2.bf16.msra.mxu0 0
    %923 = vmatprep.subr.bf16.mxu0 0
    %924 = vmatpush2.bf16.msra.mxu0 0
    %925 = vmatprep.subr.bf16.mxu0 0
    %926 = vmatpush2.bf16.msra.mxu0 0
    %927 = vmatprep.subr.bf16.mxu0 0
    %928 = vmatpush2.bf16.msra.mxu0 0
    %929 = vmatprep.subr.bf16.mxu0 0
    %930 = vmatpush2.bf16.msra.mxu0 0
    %931 = vmatprep.subr.bf16.mxu0 0
    %932 = vmatpush2.bf16.msra.mxu0 0
    %933 = vmatprep.mubr.bf16.mxu0 0
    %934 = vmatmul.mubr.bf16.gmra.mxu0 %v667
    %v935 = vpop.f32.mrf.mxu0
    %v936 = vadd.f32 0.0, %v935
    %v937 = vpop.f32.mrf.mxu0
    %v938 = vadd.f32 0.0, %v937
    %v939 = vpop.f32.mrf.mxu0
    %v940 = vpop.f32.mrf.mxu0
    %941 = vdwg.mxu0
    %v942 = vadd.f32 %v663, %v895
    %v943 = vadd.f32 %v664, %v897
    %v944 = vadd.f32 %v665, %v936
    %v945 = vadd.f32 %v666, %v938
    %v946 = vxor.u32 %v942, 2147483648
    %v947 = vxor.u32 %v943, 2147483648
    %v948 = vxor.u32 %v944, 2147483648
    %v949 = vmul.f32 %v946, 1.442695
    %v950 = vpow.pop %v949
    %v951 = vmul.f32 %v947, 1.442695
    %v952 = vpow.pop %v951
    %v953 = vmul.f32 %v948, 1.442695
    %v954 = vpow.pop %v953
    %v955 = vadd.f32 %v950, 1.0
    %v956 = vadd.f32 %v952, 1.0
    %v957 = vadd.f32 %v954, 1.0
    %v958 = vrcp.pop %v955
    %v959 = vmul.f32 1.0, %v958
    %v960 = vrcp.pop %v956
    %v961 = vmul.f32 1.0, %v960
    %v962 = vrcp.pop %v957
    %v963 = vmul.f32 1.0, %v962
    %v964 = vtanh.pop %v945
    %v965 = vmul.f32 %v961, %v662
    %v966 = vmul.f32 %v959, %v964
    %v967 = vadd.f32 %v965, %v966
    %v968 = vtanh.pop %v967
    %v969 = vmul.f32 %v963, %v968
    %v970 = vld [vmem:[#allocation10] sm:$0xff]
    %v971 = vld [vmem:[#allocation10 + $0x8] sm:$0xff]
    %v972 = vld [vmem:[#allocation10 + $0x10] sm:$0xff]
    %v973 = vld [vmem:[#allocation10 + $0x18] sm:$0xff]
    %v974 = vld [vmem:[#allocation10 + $0x20] sm:$0xff]
    %v975 = vld [vmem:[#allocation10 + $0x28] sm:$0xff]
    %v976 = vld [vmem:[#allocation10 + $0x30] sm:$0xff]
    %v977 = vld [vmem:[#allocation10 + $0x38] sm:$0xff]
    %v978 = vld [vmem:[#allocation10 + $0x40] sm:$0xff]
    %v979 = vld [vmem:[#allocation10 + $0x48] sm:$0xff]
    %v980 = vld [vmem:[#allocation10 + $0x50] sm:$0xff]
    %v981 = vld [vmem:[#allocation10 + $0x58] sm:$0xff]
    %v982 = vld [vmem:[#allocation10 + $0x60] sm:$0xff]
    %v983 = vld [vmem:[#allocation10 + $0x68] sm:$0xff]
    %v984 = vld [vmem:[#allocation10 + $0x70] sm:$0xff]
    %v985 = vld [vmem:[#allocation10 + $0x78] sm:$0xff]
    %v986 = vld [vmem:[#allocation10 + $0x80] sm:$0xff]
    %v987 = vld [vmem:[#allocation10 + $0x88] sm:$0xff]
    %v988 = vld [vmem:[#allocation10 + $0x90] sm:$0xff]
    %v989 = vld [vmem:[#allocation10 + $0x98] sm:$0xff]
    %v990 = vld [vmem:[#allocation10 + $0xa0] sm:$0xff]
    %v991 = vld [vmem:[#allocation10 + $0xa8] sm:$0xff]
    %v992 = vld [vmem:[#allocation10 + $0xb0] sm:$0xff]
    %v993 = vld [vmem:[#allocation10 + $0xb8] sm:$0xff]
    %v994 = vld [vmem:[#allocation10 + $0xc0] sm:$0xff]
    %v995 = vld [vmem:[#allocation10 + $0xc8] sm:$0xff]
    %v996 = vld [vmem:[#allocation10 + $0xd0] sm:$0xff]
    %v997 = vld [vmem:[#allocation10 + $0xd8] sm:$0xff]
    %v998 = vld [vmem:[#allocation10 + $0xe0] sm:$0xff]
    %v999 = vld [vmem:[#allocation10 + $0xe8] sm:$0xff]
    %v1000 = vld [vmem:[#allocation10 + $0xf0] sm:$0xff]
    %v1001 = vld [vmem:[#allocation10 + $0xf8] sm:$0xff]
    %v1002 = vld [vmem:[%s6] sm:$0xf]
    %v1004 = vlaneseq
    %v1005 = vshrl.u32 %v1004, 7
    %v1006 = vsub.s32 0, %v1005
    %v1007 = vrot.slane %v1002, %v1006
    %v1008 = vlaneseq
    %v1009 = vshrl.u32 %v1008, 7
    %v1010 = vsub.s32 1, %v1009
    %v1011 = vrot.slane %v1002, %v1010
    %v1012 = vlaneseq
    %v1013 = vshrl.u32 %v1012, 7
    %v1014 = vsub.s32 2, %v1013
    %v1015 = vrot.slane %v1002, %v1014
    %v1016 = vlaneseq
    %v1017 = vshrl.u32 %v1016, 7
    %v1018 = vsub.s32 3, %v1017
    %v1019 = vrot.slane %v1002, %v1018
    %v1056 = vunpack.c.l.b16 %v970
    %v1057 = vunpack.c.h.b16 %v970
    %v1058 = vunpack.c.l.b16 %v971
    %v1059 = vunpack.c.h.b16 %v971
    %v1060 = vunpack.c.l.b16 %v972
    %v1061 = vunpack.c.h.b16 %v972
    %v1062 = vunpack.c.l.b16 %v973
    %v1063 = vunpack.c.h.b16 %v973
    %v1064 = vunpack.c.l.b16 %v974
    %v1065 = vunpack.c.h.b16 %v974
    %v1066 = vunpack.c.l.b16 %v975
    %v1067 = vunpack.c.h.b16 %v975
    %v1068 = vunpack.c.l.b16 %v976
    %v1069 = vunpack.c.h.b16 %v976
    %v1070 = vunpack.c.l.b16 %v977
    %v1071 = vunpack.c.h.b16 %v977
    %v1072 = vunpack.c.l.b16 %v978
    %v1073 = vunpack.c.h.b16 %v978
    %v1074 = vunpack.c.l.b16 %v979
    %v1075 = vunpack.c.h.b16 %v979
    %v1076 = vunpack.c.l.b16 %v980
    %v1077 = vunpack.c.h.b16 %v980
    %v1078 = vunpack.c.l.b16 %v981
    %v1079 = vunpack.c.h.b16 %v981
    %v1080 = vunpack.c.l.b16 %v982
    %v1081 = vunpack.c.h.b16 %v982
    %v1082 = vunpack.c.l.b16 %v983
    %v1083 = vunpack.c.h.b16 %v983
    %v1084 = vunpack.c.l.b16 %v984
    %v1085 = vunpack.c.h.b16 %v984
    %v1086 = vunpack.c.l.b16 %v985
    %v1087 = vunpack.c.h.b16 %v985
    %v1088 = vunpack.c.l.b16 %v986
    %v1089 = vunpack.c.h.b16 %v986
    %v1090 = vunpack.c.l.b16 %v987
    %v1091 = vunpack.c.h.b16 %v987
    %v1092 = vunpack.c.l.b16 %v988
    %v1093 = vunpack.c.h.b16 %v988
    %v1094 = vunpack.c.l.b16 %v989
    %v1095 = vunpack.c.h.b16 %v989
    %v1096 = vunpack.c.l.b16 %v990
    %v1097 = vunpack.c.h.b16 %v990
    %v1098 = vunpack.c.l.b16 %v991
    %v1099 = vunpack.c.h.b16 %v991
    %v1100 = vunpack.c.l.b16 %v992
    %v1101 = vunpack.c.h.b16 %v992
    %v1102 = vunpack.c.l.b16 %v993
    %v1103 = vunpack.c.h.b16 %v993
    %v1104 = vunpack.c.l.b16 %v994
    %v1105 = vunpack.c.h.b16 %v994
    %v1106 = vunpack.c.l.b16 %v995
    %v1107 = vunpack.c.h.b16 %v995
    %v1108 = vunpack.c.l.b16 %v996
    %v1109 = vunpack.c.h.b16 %v996
    %v1110 = vunpack.c.l.b16 %v997
    %v1111 = vunpack.c.h.b16 %v997
    %v1112 = vunpack.c.l.b16 %v998
    %v1113 = vunpack.c.h.b16 %v998
    %v1114 = vunpack.c.l.b16 %v999
    %v1115 = vunpack.c.h.b16 %v999
    %v1116 = vunpack.c.l.b16 %v1000
    %v1117 = vunpack.c.h.b16 %v1000
    %v1118 = vunpack.c.l.b16 %v1001
    %v1119 = vunpack.c.h.b16 %v1001
    %v1120 = vpack.c.b16 %v1060, %v1056
    %v1121 = vpack.c.b16 %v1061, %v1057
    %v1122 = vpack.c.b16 %v1062, %v1058
    %v1123 = vpack.c.b16 %v1063, %v1059
    %v1124 = vpack.c.b16 %v1068, %v1064
    %v1125 = vpack.c.b16 %v1069, %v1065
    %v1126 = vpack.c.b16 %v1070, %v1066
    %v1127 = vpack.c.b16 %v1071, %v1067
    %v1128 = vpack.c.b16 %v1076, %v1072
    %v1129 = vpack.c.b16 %v1077, %v1073
    %v1130 = vpack.c.b16 %v1078, %v1074
    %v1131 = vpack.c.b16 %v1079, %v1075
    %v1132 = vpack.c.b16 %v1084, %v1080
    %v1133 = vpack.c.b16 %v1085, %v1081
    %v1134 = vpack.c.b16 %v1086, %v1082
    %v1135 = vpack.c.b16 %v1087, %v1083
    %v1136 = vpack.c.b16 %v1092, %v1088
    %v1137 = vpack.c.b16 %v1093, %v1089
    %v1138 = vpack.c.b16 %v1094, %v1090
    %v1139 = vpack.c.b16 %v1095, %v1091
    %v1140 = vpack.c.b16 %v1100, %v1096
    %v1141 = vpack.c.b16 %v1101, %v1097
    %v1142 = vpack.c.b16 %v1102, %v1098
    %v1143 = vpack.c.b16 %v1103, %v1099
    %v1144 = vpack.c.b16 %v1108, %v1104
    %v1145 = vpack.c.b16 %v1109, %v1105
    %v1146 = vpack.c.b16 %v1110, %v1106
    %v1147 = vpack.c.b16 %v1111, %v1107
    %v1148 = vpack.c.b16 %v1116, %v1112
    %v1149 = vpack.c.b16 %v1117, %v1113
    %v1150 = vpack.c.b16 %v1118, %v1114
    %v1151 = vpack.c.b16 %v1119, %v1115
    %1184 = vmatprep.subr.bf16.mxu0 %v1149
    %1185 = vmatpush1.bf16.msra.mxu0 %v1148
    %1186 = vmatprep.subr.bf16.mxu0 %v1145
    %1187 = vmatpush1.bf16.msra.mxu0 %v1144
    %1188 = vmatprep.subr.bf16.mxu0 %v1141
    %1189 = vmatpush1.bf16.msra.mxu0 %v1140
    %1190 = vmatprep.subr.bf16.mxu0 %v1137
    %1191 = vmatpush1.bf16.msra.mxu0 %v1136
    %1192 = vmatprep.subr.bf16.mxu0 %v1133
    %1193 = vmatpush1.bf16.msra.mxu0 %v1132
    %1194 = vmatprep.subr.bf16.mxu0 %v1129
    %1195 = vmatpush1.bf16.msra.mxu0 %v1128
    %1196 = vmatprep.subr.bf16.mxu0 %v1125
    %1197 = vmatpush1.bf16.msra.mxu0 %v1124
    %1198 = vmatprep.subr.bf16.mxu0 %v1121
    %1199 = vmatpush1.bf16.msra.mxu0 %v1120
    %1200 = vmatprep.subr.bf16.mxu0 0
    %1201 = vmatpush2.bf16.msra.mxu0 0
    %1202 = vmatprep.subr.bf16.mxu0 0
    %1203 = vmatpush2.bf16.msra.mxu0 0
    %1204 = vmatprep.subr.bf16.mxu0 0
    %1205 = vmatpush2.bf16.msra.mxu0 0
    %1206 = vmatprep.subr.bf16.mxu0 0
    %1207 = vmatpush2.bf16.msra.mxu0 0
    %1208 = vmatprep.subr.bf16.mxu0 0
    %1209 = vmatpush2.bf16.msra.mxu0 0
    %1210 = vmatprep.subr.bf16.mxu0 0
    %1211 = vmatpush2.bf16.msra.mxu0 0
    %1212 = vmatprep.subr.bf16.mxu0 0
    %1213 = vmatpush2.bf16.msra.mxu0 0
    %1214 = vmatprep.subr.bf16.mxu0 0
    %1215 = vmatpush2.bf16.msra.mxu0 0
    %1216 = vmatprep.mubr.bf16.mxu0 0
    %1217 = vmatmul.mubr.bf16.gmra.mxu0 %v667
    %v1218 = vpop.f32.mrf.mxu0
    %v1219 = vadd.f32 %v1007, %v1218
    %v1220 = vpop.f32.mrf.mxu0
    %v1221 = vadd.f32 %v1011, %v1220
    %v1222 = vpop.f32.mrf.mxu0
    %v1223 = vpop.f32.mrf.mxu0
    %1224 = vdwg.mxu0
    %1225 = vmatprep.subr.bf16.mxu0 %v1151
    %1226 = vmatpush1.bf16.msra.mxu0 %v1150
    %1227 = vmatprep.subr.bf16.mxu0 %v1147
    %1228 = vmatpush1.bf16.msra.mxu0 %v1146
    %1229 = vmatprep.subr.bf16.mxu0 %v1143
    %1230 = vmatpush1.bf16.msra.mxu0 %v1142
    %1231 = vmatprep.subr.bf16.mxu0 %v1139
    %1232 = vmatpush1.bf16.msra.mxu0 %v1138
    %1233 = vmatprep.subr.bf16.mxu0 %v1135
    %1234 = vmatpush1.bf16.msra.mxu0 %v1134
    %1235 = vmatprep.subr.bf16.mxu0 %v1131
    %1236 = vmatpush1.bf16.msra.mxu0 %v1130
    %1237 = vmatprep.subr.bf16.mxu0 %v1127
    %1238 = vmatpush1.bf16.msra.mxu0 %v1126
    %1239 = vmatprep.subr.bf16.mxu0 %v1123
    %1240 = vmatpush1.bf16.msra.mxu0 %v1122
    %1241 = vmatprep.subr.bf16.mxu0 0
    %1242 = vmatpush2.bf16.msra.mxu0 0
    %1243 = vmatprep.subr.bf16.mxu0 0
    %1244 = vmatpush2.bf16.msra.mxu0 0
    %1245 = vmatprep.subr.bf16.mxu0 0
    %1246 = vmatpush2.bf16.msra.mxu0 0
    %1247 = vmatprep.subr.bf16.mxu0 0
    %1248 = vmatpush2.bf16.msra.mxu0 0
    %1249 = vmatprep.subr.bf16.mxu0 0
    %1250 = vmatpush2.bf16.msra.mxu0 0
    %1251 = vmatprep.subr.bf16.mxu0 0
    %1252 = vmatpush2.bf16.msra.mxu0 0
    %1253 = vmatprep.subr.bf16.mxu0 0
    %1254 = vmatpush2.bf16.msra.mxu0 0
    %1255 = vmatprep.subr.bf16.mxu0 0
    %1256 = vmatpush2.bf16.msra.mxu0 0
    %1257 = vmatprep.mubr.bf16.mxu0 0
    %1258 = vmatmul.mubr.bf16.gmra.mxu0 %v667
    %v1259 = vpop.f32.mrf.mxu0
    %v1260 = vadd.f32 %v1015, %v1259
    %v1261 = vpop.f32.mrf.mxu0
    %v1262 = vadd.f32 %v1019, %v1261
    %v1263 = vpop.f32.mrf.mxu0
    %v1264 = vpop.f32.mrf.mxu0
    %1265 = vdwg.mxu0
    %v1266 = vld [vmem:[#allocation5] sm:$0xff]
    %v1267 = vpack.c.bf16 %v1266, %v1266
    %v1268 = vld [vmem:[#allocation12] sm:$0xff]
    %v1269 = vld [vmem:[#allocation12 + $0x8] sm:$0xff]
    %v1270 = vld [vmem:[#allocation12 + $0x10] sm:$0xff]
    %v1271 = vld [vmem:[#allocation12 + $0x18] sm:$0xff]
    %v1272 = vld [vmem:[#allocation12 + $0x20] sm:$0xff]
    %v1273 = vld [vmem:[#allocation12 + $0x28] sm:$0xff]
    %v1274 = vld [vmem:[#allocation12 + $0x30] sm:$0xff]
    %v1275 = vld [vmem:[#allocation12 + $0x38] sm:$0xff]
    %v1276 = vld [vmem:[#allocation12 + $0x40] sm:$0xff]
    %v1277 = vld [vmem:[#allocation12 + $0x48] sm:$0xff]
    %v1278 = vld [vmem:[#allocation12 + $0x50] sm:$0xff]
    %v1279 = vld [vmem:[#allocation12 + $0x58] sm:$0xff]
    %v1280 = vld [vmem:[#allocation12 + $0x60] sm:$0xff]
    %v1281 = vld [vmem:[#allocation12 + $0x68] sm:$0xff]
    %v1282 = vld [vmem:[#allocation12 + $0x70] sm:$0xff]
    %v1283 = vld [vmem:[#allocation12 + $0x78] sm:$0xff]
    %v1284 = vld [vmem:[#allocation12 + $0x80] sm:$0xff]
    %v1285 = vld [vmem:[#allocation12 + $0x88] sm:$0xff]
    %v1286 = vld [vmem:[#allocation12 + $0x90] sm:$0xff]
    %v1287 = vld [vmem:[#allocation12 + $0x98] sm:$0xff]
    %v1288 = vld [vmem:[#allocation12 + $0xa0] sm:$0xff]
    %v1289 = vld [vmem:[#allocation12 + $0xa8] sm:$0xff]
    %v1290 = vld [vmem:[#allocation12 + $0xb0] sm:$0xff]
    %v1291 = vld [vmem:[#allocation12 + $0xb8] sm:$0xff]
    %v1292 = vld [vmem:[#allocation12 + $0xc0] sm:$0xff]
    %v1293 = vld [vmem:[#allocation12 + $0xc8] sm:$0xff]
    %v1294 = vld [vmem:[#allocation12 + $0xd0] sm:$0xff]
    %v1295 = vld [vmem:[#allocation12 + $0xd8] sm:$0xff]
    %v1296 = vld [vmem:[#allocation12 + $0xe0] sm:$0xff]
    %v1297 = vld [vmem:[#allocation12 + $0xe8] sm:$0xff]
    %v1298 = vld [vmem:[#allocation12 + $0xf0] sm:$0xff]
    %v1299 = vld [vmem:[#allocation12 + $0xf8] sm:$0xff]
    %v1332 = vunpack.c.l.b16 %v1268
    %v1333 = vunpack.c.h.b16 %v1268
    %v1334 = vunpack.c.l.b16 %v1269
    %v1335 = vunpack.c.h.b16 %v1269
    %v1336 = vunpack.c.l.b16 %v1270
    %v1337 = vunpack.c.h.b16 %v1270
    %v1338 = vunpack.c.l.b16 %v1271
    %v1339 = vunpack.c.h.b16 %v1271
    %v1340 = vunpack.c.l.b16 %v1272
    %v1341 = vunpack.c.h.b16 %v1272
    %v1342 = vunpack.c.l.b16 %v1273
    %v1343 = vunpack.c.h.b16 %v1273
    %v1344 = vunpack.c.l.b16 %v1274
    %v1345 = vunpack.c.h.b16 %v1274
    %v1346 = vunpack.c.l.b16 %v1275
    %v1347 = vunpack.c.h.b16 %v1275
    %v1348 = vunpack.c.l.b16 %v1276
    %v1349 = vunpack.c.h.b16 %v1276
    %v1350 = vunpack.c.l.b16 %v1277
    %v1351 = vunpack.c.h.b16 %v1277
    %v1352 = vunpack.c.l.b16 %v1278
    %v1353 = vunpack.c.h.b16 %v1278
    %v1354 = vunpack.c.l.b16 %v1279
    %v1355 = vunpack.c.h.b16 %v1279
    %v1356 = vunpack.c.l.b16 %v1280
    %v1357 = vunpack.c.h.b16 %v1280
    %v1358 = vunpack.c.l.b16 %v1281
    %v1359 = vunpack.c.h.b16 %v1281
    %v1360 = vunpack.c.l.b16 %v1282
    %v1361 = vunpack.c.h.b16 %v1282
    %v1362 = vunpack.c.l.b16 %v1283
    %v1363 = vunpack.c.h.b16 %v1283
    %v1364 = vunpack.c.l.b16 %v1284
    %v1365 = vunpack.c.h.b16 %v1284
    %v1366 = vunpack.c.l.b16 %v1285
    %v1367 = vunpack.c.h.b16 %v1285
    %v1368 = vunpack.c.l.b16 %v1286
    %v1369 = vunpack.c.h.b16 %v1286
    %v1370 = vunpack.c.l.b16 %v1287
    %v1371 = vunpack.c.h.b16 %v1287
    %v1372 = vunpack.c.l.b16 %v1288
    %v1373 = vunpack.c.h.b16 %v1288
    %v1374 = vunpack.c.l.b16 %v1289
    %v1375 = vunpack.c.h.b16 %v1289
    %v1376 = vunpack.c.l.b16 %v1290
    %v1377 = vunpack.c.h.b16 %v1290
    %v1378 = vunpack.c.l.b16 %v1291
    %v1379 = vunpack.c.h.b16 %v1291
    %v1380 = vunpack.c.l.b16 %v1292
    %v1381 = vunpack.c.h.b16 %v1292
    %v1382 = vunpack.c.l.b16 %v1293
    %v1383 = vunpack.c.h.b16 %v1293
    %v1384 = vunpack.c.l.b16 %v1294
    %v1385 = vunpack.c.h.b16 %v1294
    %v1386 = vunpack.c.l.b16 %v1295
    %v1387 = vunpack.c.h.b16 %v1295
    %v1388 = vunpack.c.l.b16 %v1296
    %v1389 = vunpack.c.h.b16 %v1296
    %v1390 = vunpack.c.l.b16 %v1297
    %v1391 = vunpack.c.h.b16 %v1297
    %v1392 = vunpack.c.l.b16 %v1298
    %v1393 = vunpack.c.h.b16 %v1298
    %v1394 = vunpack.c.l.b16 %v1299
    %v1395 = vunpack.c.h.b16 %v1299
    %v1396 = vpack.c.b16 %v1336, %v1332
    %v1397 = vpack.c.b16 %v1337, %v1333
    %v1398 = vpack.c.b16 %v1338, %v1334
    %v1399 = vpack.c.b16 %v1339, %v1335
    %v1400 = vpack.c.b16 %v1344, %v1340
    %v1401 = vpack.c.b16 %v1345, %v1341
    %v1402 = vpack.c.b16 %v1346, %v1342
    %v1403 = vpack.c.b16 %v1347, %v1343
    %v1404 = vpack.c.b16 %v1352, %v1348
    %v1405 = vpack.c.b16 %v1353, %v1349
    %v1406 = vpack.c.b16 %v1354, %v1350
    %v1407 = vpack.c.b16 %v1355, %v1351
    %v1408 = vpack.c.b16 %v1360, %v1356
    %v1409 = vpack.c.b16 %v1361, %v1357
    %v1410 = vpack.c.b16 %v1362, %v1358
    %v1411 = vpack.c.b16 %v1363, %v1359
    %v1412 = vpack.c.b16 %v1368, %v1364
    %v1413 = vpack.c.b16 %v1369, %v1365
    %v1414 = vpack.c.b16 %v1370, %v1366
    %v1415 = vpack.c.b16 %v1371, %v1367
    %v1416 = vpack.c.b16 %v1376, %v1372
    %v1417 = vpack.c.b16 %v1377, %v1373
    %v1418 = vpack.c.b16 %v1378, %v1374
    %v1419 = vpack.c.b16 %v1379, %v1375
    %v1420 = vpack.c.b16 %v1384, %v1380
    %v1421 = vpack.c.b16 %v1385, %v1381
    %v1422 = vpack.c.b16 %v1386, %v1382
    %v1423 = vpack.c.b16 %v1387, %v1383
    %v1424 = vpack.c.b16 %v1392, %v1388
    %v1425 = vpack.c.b16 %v1393, %v1389
    %v1426 = vpack.c.b16 %v1394, %v1390
    %v1427 = vpack.c.b16 %v1395, %v1391
    %1460 = vmatprep.subr.bf16.mxu0 %v1425
    %1461 = vmatpush1.bf16.msra.mxu0 %v1424
    %1462 = vmatprep.subr.bf16.mxu0 %v1421
    %1463 = vmatpush1.bf16.msra.mxu0 %v1420
    %1464 = vmatprep.subr.bf16.mxu0 %v1417
    %1465 = vmatpush1.bf16.msra.mxu0 %v1416
    %1466 = vmatprep.subr.bf16.mxu0 %v1413
    %1467 = vmatpush1.bf16.msra.mxu0 %v1412
    %1468 = vmatprep.subr.bf16.mxu0 %v1409
    %1469 = vmatpush1.bf16.msra.mxu0 %v1408
    %1470 = vmatprep.subr.bf16.mxu0 %v1405
    %1471 = vmatpush1.bf16.msra.mxu0 %v1404
    %1472 = vmatprep.subr.bf16.mxu0 %v1401
    %1473 = vmatpush1.bf16.msra.mxu0 %v1400
    %1474 = vmatprep.subr.bf16.mxu0 %v1397
    %1475 = vmatpush1.bf16.msra.mxu0 %v1396
    %1476 = vmatprep.subr.bf16.mxu0 0
    %1477 = vmatpush2.bf16.msra.mxu0 0
    %1478 = vmatprep.subr.bf16.mxu0 0
    %1479 = vmatpush2.bf16.msra.mxu0 0
    %1480 = vmatprep.subr.bf16.mxu0 0
    %1481 = vmatpush2.bf16.msra.mxu0 0
    %1482 = vmatprep.subr.bf16.mxu0 0
    %1483 = vmatpush2.bf16.msra.mxu0 0
    %1484 = vmatprep.subr.bf16.mxu0 0
    %1485 = vmatpush2.bf16.msra.mxu0 0
    %1486 = vmatprep.subr.bf16.mxu0 0
    %1487 = vmatpush2.bf16.msra.mxu0 0
    %1488 = vmatprep.subr.bf16.mxu0 0
    %1489 = vmatpush2.bf16.msra.mxu0 0
    %1490 = vmatprep.subr.bf16.mxu0 0
    %1491 = vmatpush2.bf16.msra.mxu0 0
    %1492 = vmatprep.mubr.bf16.mxu0 0
    %1493 = vmatmul.mubr.bf16.gmra.mxu0 %v1267
    %v1494 = vpop.f32.mrf.mxu0
    %v1495 = vadd.f32 0.0, %v1494
    %v1496 = vpop.f32.mrf.mxu0
    %v1497 = vadd.f32 0.0, %v1496
    %v1498 = vpop.f32.mrf.mxu0
    %v1499 = vpop.f32.mrf.mxu0
    %1500 = vdwg.mxu0
    %1501 = vmatprep.subr.bf16.mxu0 %v1427
    %1502 = vmatpush1.bf16.msra.mxu0 %v1426
    %1503 = vmatprep.subr.bf16.mxu0 %v1423
    %1504 = vmatpush1.bf16.msra.mxu0 %v1422
    %1505 = vmatprep.subr.bf16.mxu0 %v1419
    %1506 = vmatpush1.bf16.msra.mxu0 %v1418
    %1507 = vmatprep.subr.bf16.mxu0 %v1415
    %1508 = vmatpush1.bf16.msra.mxu0 %v1414
    %1509 = vmatprep.subr.bf16.mxu0 %v1411
    %1510 = vmatpush1.bf16.msra.mxu0 %v1410
    %1511 = vmatprep.subr.bf16.mxu0 %v1407
    %1512 = vmatpush1.bf16.msra.mxu0 %v1406
    %1513 = vmatprep.subr.bf16.mxu0 %v1403
    %1514 = vmatpush1.bf16.msra.mxu0 %v1402
    %1515 = vmatprep.subr.bf16.mxu0 %v1399
    %1516 = vmatpush1.bf16.msra.mxu0 %v1398
    %1517 = vmatprep.subr.bf16.mxu0 0
    %1518 = vmatpush2.bf16.msra.mxu0 0
    %1519 = vmatprep.subr.bf16.mxu0 0
    %1520 = vmatpush2.bf16.msra.mxu0 0
    %1521 = vmatprep.subr.bf16.mxu0 0
    %1522 = vmatpush2.bf16.msra.mxu0 0
    %1523 = vmatprep.subr.bf16.mxu0 0
    %1524 = vmatpush2.bf16.msra.mxu0 0
    %1525 = vmatprep.subr.bf16.mxu0 0
    %1526 = vmatpush2.bf16.msra.mxu0 0
    %1527 = vmatprep.subr.bf16.mxu0 0
    %1528 = vmatpush2.bf16.msra.mxu0 0
    %1529 = vmatprep.subr.bf16.mxu0 0
    %1530 = vmatpush2.bf16.msra.mxu0 0
    %1531 = vmatprep.subr.bf16.mxu0 0
    %1532 = vmatpush2.bf16.msra.mxu0 0
    %1533 = vmatprep.mubr.bf16.mxu0 0
    %1534 = vmatmul.mubr.bf16.gmra.mxu0 %v1267
    %v1535 = vpop.f32.mrf.mxu0
    %v1536 = vadd.f32 0.0, %v1535
    %v1537 = vpop.f32.mrf.mxu0
    %v1538 = vadd.f32 0.0, %v1537
    %v1539 = vpop.f32.mrf.mxu0
    %v1540 = vpop.f32.mrf.mxu0
    %1541 = vdwg.mxu0
    %v1542 = vadd.f32 %v1219, %v1495
    %v1543 = vadd.f32 %v1221, %v1497
    %v1544 = vadd.f32 %v1260, %v1536
    %v1545 = vadd.f32 %v1262, %v1538
    %v1546 = vld [vmem:[#allocation6] sm:$0xff]
    %v1547 = vxor.u32 %v1542, 2147483648
    %v1548 = vxor.u32 %v1543, 2147483648
    %v1549 = vxor.u32 %v1544, 2147483648
    %v1550 = vmul.f32 %v1547, 1.442695
    %v1551 = vpow.pop %v1550
    %v1552 = vmul.f32 %v1548, 1.442695
    %v1553 = vpow.pop %v1552
    %v1554 = vmul.f32 %v1549, 1.442695
    %v1555 = vpow.pop %v1554
    %v1556 = vadd.f32 %v1551, 1.0
    %v1557 = vadd.f32 %v1553, 1.0
    %v1558 = vadd.f32 %v1555, 1.0
    %v1559 = vrcp.pop %v1556
    %v1560 = vmul.f32 1.0, %v1559
    %v1561 = vrcp.pop %v1557
    %v1562 = vmul.f32 1.0, %v1561
    %v1563 = vrcp.pop %v1558
    %v1564 = vmul.f32 1.0, %v1563
    %v1565 = vtanh.pop %v1545
    %v1566 = vmul.f32 %v1562, %v1546
    %v1567 = vmul.f32 %v1560, %v1565
    %v1568 = vadd.f32 %v1566, %v1567
    %v1569 = vtanh.pop %v1568
    %v1570 = vmul.f32 %v1564, %v1569
    %1571 = vst [vmem:[#allocation5] sm:$0xff] %v1570
    %1572 = vst [vmem:[#allocation6] sm:$0xff] %v1568
    %1573 = vst [vmem:[#allocation3] sm:$0xff] %v969
    %1574 = vst [vmem:[#allocation4] sm:$0xff] %v967
    %v1575 = vld [vmem:[#allocation3] sm:$0xff]
    %v1576 = vld [vmem:[#allocation4] sm:$0xff]
    %v1577 = vld [vmem:[#allocation2 + $0x40] sm:$0xff]
    %v1578 = vld [vmem:[#allocation2 + $0x48] sm:$0xff]
    %v1579 = vld [vmem:[#allocation2 + $0x50] sm:$0xff]
    %v1580 = vld [vmem:[#allocation2 + $0x58] sm:$0xff]
    %v1581 = vpack.c.bf16 %v1575, %v1575
    %v1582 = vld [vmem:[#allocation7] sm:$0xff]
    %v1583 = vld [vmem:[#allocation7 + $0x8] sm:$0xff]
    %v1584 = vld [vmem:[#allocation7 + $0x10] sm:$0xff]
    %v1585 = vld [vmem:[#allocation7 + $0x18] sm:$0xff]
    %v1586 = vld [vmem:[#allocation7 + $0x20] sm:$0xff]
    %v1587 = vld [vmem:[#allocation7 + $0x28] sm:$0xff]
    %v1588 = vld [vmem:[#allocation7 + $0x30] sm:$0xff]
    %v1589 = vld [vmem:[#allocation7 + $0x38] sm:$0xff]
    %v1590 = vld [vmem:[#allocation7 + $0x40] sm:$0xff]
    %v1591 = vld [vmem:[#allocation7 + $0x48] sm:$0xff]
    %v1592 = vld [vmem:[#allocation7 + $0x50] sm:$0xff]
    %v1593 = vld [vmem:[#allocation7 + $0x58] sm:$0xff]
    %v1594 = vld [vmem:[#allocation7 + $0x60] sm:$0xff]
    %v1595 = vld [vmem:[#allocation7 + $0x68] sm:$0xff]
    %v1596 = vld [vmem:[#allocation7 + $0x70] sm:$0xff]
    %v1597 = vld [vmem:[#allocation7 + $0x78] sm:$0xff]
    %v1598 = vld [vmem:[#allocation7 + $0x80] sm:$0xff]
    %v1599 = vld [vmem:[#allocation7 + $0x88] sm:$0xff]
    %v1600 = vld [vmem:[#allocation7 + $0x90] sm:$0xff]
    %v1601 = vld [vmem:[#allocation7 + $0x98] sm:$0xff]
    %v1602 = vld [vmem:[#allocation7 + $0xa0] sm:$0xff]
    %v1603 = vld [vmem:[#allocation7 + $0xa8] sm:$0xff]
    %v1604 = vld [vmem:[#allocation7 + $0xb0] sm:$0xff]
    %v1605 = vld [vmem:[#allocation7 + $0xb8] sm:$0xff]
    %v1606 = vld [vmem:[#allocation7 + $0xc0] sm:$0xff]
    %v1607 = vld [vmem:[#allocation7 + $0xc8] sm:$0xff]
    %v1608 = vld [vmem:[#allocation7 + $0xd0] sm:$0xff]
    %v1609 = vld [vmem:[#allocation7 + $0xd8] sm:$0xff]
    %v1610 = vld [vmem:[#allocation7 + $0xe0] sm:$0xff]
    %v1611 = vld [vmem:[#allocation7 + $0xe8] sm:$0xff]
    %v1612 = vld [vmem:[#allocation7 + $0xf0] sm:$0xff]
    %v1613 = vld [vmem:[#allocation7 + $0xf8] sm:$0xff]
    %v1646 = vunpack.c.l.b16 %v1582
    %v1647 = vunpack.c.h.b16 %v1582
    %v1648 = vunpack.c.l.b16 %v1583
    %v1649 = vunpack.c.h.b16 %v1583
    %v1650 = vunpack.c.l.b16 %v1584
    %v1651 = vunpack.c.h.b16 %v1584
    %v1652 = vunpack.c.l.b16 %v1585
    %v1653 = vunpack.c.h.b16 %v1585
    %v1654 = vunpack.c.l.b16 %v1586
    %v1655 = vunpack.c.h.b16 %v1586
    %v1656 = vunpack.c.l.b16 %v1587
    %v1657 = vunpack.c.h.b16 %v1587
    %v1658 = vunpack.c.l.b16 %v1588
    %v1659 = vunpack.c.h.b16 %v1588
    %v1660 = vunpack.c.l.b16 %v1589
    %v1661 = vunpack.c.h.b16 %v1589
    %v1662 = vunpack.c.l.b16 %v1590
    %v1663 = vunpack.c.h.b16 %v1590
    %v1664 = vunpack.c.l.b16 %v1591
    %v1665 = vunpack.c.h.b16 %v1591
    %v1666 = vunpack.c.l.b16 %v1592
    %v1667 = vunpack.c.h.b16 %v1592
    %v1668 = vunpack.c.l.b16 %v1593
    %v1669 = vunpack.c.h.b16 %v1593
    %v1670 = vunpack.c.l.b16 %v1594
    %v1671 = vunpack.c.h.b16 %v1594
    %v1672 = vunpack.c.l.b16 %v1595
    %v1673 = vunpack.c.h.b16 %v1595
    %v1674 = vunpack.c.l.b16 %v1596
    %v1675 = vunpack.c.h.b16 %v1596
    %v1676 = vunpack.c.l.b16 %v1597
    %v1677 = vunpack.c.h.b16 %v1597
    %v1678 = vunpack.c.l.b16 %v1598
    %v1679 = vunpack.c.h.b16 %v1598
    %v1680 = vunpack.c.l.b16 %v1599
    %v1681 = vunpack.c.h.b16 %v1599
    %v1682 = vunpack.c.l.b16 %v1600
    %v1683 = vunpack.c.h.b16 %v1600
    %v1684 = vunpack.c.l.b16 %v1601
    %v1685 = vunpack.c.h.b16 %v1601
    %v1686 = vunpack.c.l.b16 %v1602
    %v1687 = vunpack.c.h.b16 %v1602
    %v1688 = vunpack.c.l.b16 %v1603
    %v1689 = vunpack.c.h.b16 %v1603
    %v1690 = vunpack.c.l.b16 %v1604
    %v1691 = vunpack.c.h.b16 %v1604
    %v1692 = vunpack.c.l.b16 %v1605
    %v1693 = vunpack.c.h.b16 %v1605
    %v1694 = vunpack.c.l.b16 %v1606
    %v1695 = vunpack.c.h.b16 %v1606
    %v1696 = vunpack.c.l.b16 %v1607
    %v1697 = vunpack.c.h.b16 %v1607
    %v1698 = vunpack.c.l.b16 %v1608
    %v1699 = vunpack.c.h.b16 %v1608
    %v1700 = vunpack.c.l.b16 %v1609
    %v1701 = vunpack.c.h.b16 %v1609
    %v1702 = vunpack.c.l.b16 %v1610
    %v1703 = vunpack.c.h.b16 %v1610
    %v1704 = vunpack.c.l.b16 %v1611
    %v1705 = vunpack.c.h.b16 %v1611
    %v1706 = vunpack.c.l.b16 %v1612
    %v1707 = vunpack.c.h.b16 %v1612
    %v1708 = vunpack.c.l.b16 %v1613
    %v1709 = vunpack.c.h.b16 %v1613
    %v1710 = vpack.c.b16 %v1650, %v1646
    %v1711 = vpack.c.b16 %v1651, %v1647
    %v1712 = vpack.c.b16 %v1652, %v1648
    %v1713 = vpack.c.b16 %v1653, %v1649
    %v1714 = vpack.c.b16 %v1658, %v1654
    %v1715 = vpack.c.b16 %v1659, %v1655
    %v1716 = vpack.c.b16 %v1660, %v1656
    %v1717 = vpack.c.b16 %v1661, %v1657
    %v1718 = vpack.c.b16 %v1666, %v1662
    %v1719 = vpack.c.b16 %v1667, %v1663
    %v1720 = vpack.c.b16 %v1668, %v1664
    %v1721 = vpack.c.b16 %v1669, %v1665
    %v1722 = vpack.c.b16 %v1674, %v1670
    %v1723 = vpack.c.b16 %v1675, %v1671
    %v1724 = vpack.c.b16 %v1676, %v1672
    %v1725 = vpack.c.b16 %v1677, %v1673
    %v1726 = vpack.c.b16 %v1682, %v1678
    %v1727 = vpack.c.b16 %v1683, %v1679
    %v1728 = vpack.c.b16 %v1684, %v1680
    %v1729 = vpack.c.b16 %v1685, %v1681
    %v1730 = vpack.c.b16 %v1690, %v1686
    %v1731 = vpack.c.b16 %v1691, %v1687
    %v1732 = vpack.c.b16 %v1692, %v1688
    %v1733 = vpack.c.b16 %v1693, %v1689
    %v1734 = vpack.c.b16 %v1698, %v1694
    %v1735 = vpack.c.b16 %v1699, %v1695
    %v1736 = vpack.c.b16 %v1700, %v1696
    %v1737 = vpack.c.b16 %v1701, %v1697
    %v1738 = vpack.c.b16 %v1706, %v1702
    %v1739 = vpack.c.b16 %v1707, %v1703
    %v1740 = vpack.c.b16 %v1708, %v1704
    %v1741 = vpack.c.b16 %v1709, %v1705
    %1774 = vmatprep.subr.bf16.mxu0 %v1739
    %1775 = vmatpush1.bf16.msra.mxu0 %v1738
    %1776 = vmatprep.subr.bf16.mxu0 %v1735
    %1777 = vmatpush1.bf16.msra.mxu0 %v1734
    %1778 = vmatprep.subr.bf16.mxu0 %v1731
    %1779 = vmatpush1.bf16.msra.mxu0 %v1730
    %1780 = vmatprep.subr.bf16.mxu0 %v1727
    %1781 = vmatpush1.bf16.msra.mxu0 %v1726
    %1782 = vmatprep.subr.bf16.mxu0 %v1723
    %1783 = vmatpush1.bf16.msra.mxu0 %v1722
    %1784 = vmatprep.subr.bf16.mxu0 %v1719
    %1785 = vmatpush1.bf16.msra.mxu0 %v1718
    %1786 = vmatprep.subr.bf16.mxu0 %v1715
    %1787 = vmatpush1.bf16.msra.mxu0 %v1714
    %1788 = vmatprep.subr.bf16.mxu0 %v1711
    %1789 = vmatpush1.bf16.msra.mxu0 %v1710
    %1790 = vmatprep.subr.bf16.mxu0 0
    %1791 = vmatpush2.bf16.msra.mxu0 0
    %1792 = vmatprep.subr.bf16.mxu0 0
    %1793 = vmatpush2.bf16.msra.mxu0 0
    %1794 = vmatprep.subr.bf16.mxu0 0
    %1795 = vmatpush2.bf16.msra.mxu0 0
    %1796 = vmatprep.subr.bf16.mxu0 0
    %1797 = vmatpush2.bf16.msra.mxu0 0
    %1798 = vmatprep.subr.bf16.mxu0 0
    %1799 = vmatpush2.bf16.msra.mxu0 0
    %1800 = vmatprep.subr.bf16.mxu0 0
    %1801 = vmatpush2.bf16.msra.mxu0 0
    %1802 = vmatprep.subr.bf16.mxu0 0
    %1803 = vmatpush2.bf16.msra.mxu0 0
    %1804 = vmatprep.subr.bf16.mxu0 0
    %1805 = vmatpush2.bf16.msra.mxu0 0
    %1806 = vmatprep.mubr.bf16.mxu0 0
    %1807 = vmatmul.mubr.bf16.gmra.mxu0 %v1581
    %v1808 = vpop.f32.mrf.mxu0
    %v1809 = vadd.f32 0.0, %v1808
    %v1810 = vpop.f32.mrf.mxu0
    %v1811 = vadd.f32 0.0, %v1810
    %v1812 = vpop.f32.mrf.mxu0
    %v1813 = vpop.f32.mrf.mxu0
    %1814 = vdwg.mxu0
    %1815 = vmatprep.subr.bf16.mxu0 %v1741
    %1816 = vmatpush1.bf16.msra.mxu0 %v1740
    %1817 = vmatprep.subr.bf16.mxu0 %v1737
    %1818 = vmatpush1.bf16.msra.mxu0 %v1736
    %1819 = vmatprep.subr.bf16.mxu0 %v1733
    %1820 = vmatpush1.bf16.msra.mxu0 %v1732
    %1821 = vmatprep.subr.bf16.mxu0 %v1729
    %1822 = vmatpush1.bf16.msra.mxu0 %v1728
    %1823 = vmatprep.subr.bf16.mxu0 %v1725
    %1824 = vmatpush1.bf16.msra.mxu0 %v1724
    %1825 = vmatprep.subr.bf16.mxu0 %v1721
    %1826 = vmatpush1.bf16.msra.mxu0 %v1720
    %1827 = vmatprep.subr.bf16.mxu0 %v1717
    %1828 = vmatpush1.bf16.msra.mxu0 %v1716
    %1829 = vmatprep.subr.bf16.mxu0 %v1713
    %1830 = vmatpush1.bf16.msra.mxu0 %v1712
    %1831 = vmatprep.subr.bf16.mxu0 0
    %1832 = vmatpush2.bf16.msra.mxu0 0
    %1833 = vmatprep.subr.bf16.mxu0 0
    %1834 = vmatpush2.bf16.msra.mxu0 0
    %1835 = vmatprep.subr.bf16.mxu0 0
    %1836 = vmatpush2.bf16.msra.mxu0 0
    %1837 = vmatprep.subr.bf16.mxu0 0
    %1838 = vmatpush2.bf16.msra.mxu0 0
    %1839 = vmatprep.subr.bf16.mxu0 0
    %1840 = vmatpush2.bf16.msra.mxu0 0
    %1841 = vmatprep.subr.bf16.mxu0 0
    %1842 = vmatpush2.bf16.msra.mxu0 0
    %1843 = vmatprep.subr.bf16.mxu0 0
    %1844 = vmatpush2.bf16.msra.mxu0 0
    %1845 = vmatprep.subr.bf16.mxu0 0
    %1846 = vmatpush2.bf16.msra.mxu0 0
    %1847 = vmatprep.mubr.bf16.mxu0 0
    %1848 = vmatmul.mubr.bf16.gmra.mxu0 %v1581
    %v1849 = vpop.f32.mrf.mxu0
    %v1850 = vadd.f32 0.0, %v1849
    %v1851 = vpop.f32.mrf.mxu0
    %v1852 = vadd.f32 0.0, %v1851
    %v1853 = vpop.f32.mrf.mxu0
    %v1854 = vpop.f32.mrf.mxu0
    %1855 = vdwg.mxu0
    %v1856 = vadd.f32 %v1577, %v1809
    %v1857 = vadd.f32 %v1578, %v1811
    %v1858 = vadd.f32 %v1579, %v1850
    %v1859 = vadd.f32 %v1580, %v1852
    %v1860 = vxor.u32 %v1856, 2147483648
    %v1861 = vxor.u32 %v1857, 2147483648
    %v1862 = vxor.u32 %v1858, 2147483648
    %v1863 = vmul.f32 %v1860, 1.442695
    %v1864 = vpow.pop %v1863
    %v1865 = vmul.f32 %v1861, 1.442695
    %v1866 = vpow.pop %v1865
    %v1867 = vmul.f32 %v1862, 1.442695
    %v1868 = vpow.pop %v1867
    %v1869 = vadd.f32 %v1864, 1.0
    %v1870 = vadd.f32 %v1866, 1.0
    %v1871 = vadd.f32 %v1868, 1.0
    %v1872 = vrcp.pop %v1869
    %v1873 = vmul.f32 1.0, %v1872
    %v1874 = vrcp.pop %v1870
    %v1875 = vmul.f32 1.0, %v1874
    %v1876 = vrcp.pop %v1871
    %v1877 = vmul.f32 1.0, %v1876
    %v1878 = vtanh.pop %v1859
    %v1879 = vmul.f32 %v1875, %v1576
    %v1880 = vmul.f32 %v1873, %v1878
    %v1881 = vadd.f32 %v1879, %v1880
    %v1882 = vtanh.pop %v1881
    %v1883 = vmul.f32 %v1877, %v1882
    %v1884 = vld [vmem:[#allocation10] sm:$0xff]
    %v1885 = vld [vmem:[#allocation10 + $0x8] sm:$0xff]
    %v1886 = vld [vmem:[#allocation10 + $0x10] sm:$0xff]
    %v1887 = vld [vmem:[#allocation10 + $0x18] sm:$0xff]
    %v1888 = vld [vmem:[#allocation10 + $0x20] sm:$0xff]
    %v1889 = vld [vmem:[#allocation10 + $0x28] sm:$0xff]
    %v1890 = vld [vmem:[#allocation10 + $0x30] sm:$0xff]
    %v1891 = vld [vmem:[#allocation10 + $0x38] sm:$0xff]
    %v1892 = vld [vmem:[#allocation10 + $0x40] sm:$0xff]
    %v1893 = vld [vmem:[#allocation10 + $0x48] sm:$0xff]
    %v1894 = vld [vmem:[#allocation10 + $0x50] sm:$0xff]
    %v1895 = vld [vmem:[#allocation10 + $0x58] sm:$0xff]
    %v1896 = vld [vmem:[#allocation10 + $0x60] sm:$0xff]
    %v1897 = vld [vmem:[#allocation10 + $0x68] sm:$0xff]
    %v1898 = vld [vmem:[#allocation10 + $0x70] sm:$0xff]
    %v1899 = vld [vmem:[#allocation10 + $0x78] sm:$0xff]
    %v1900 = vld [vmem:[#allocation10 + $0x80] sm:$0xff]
    %v1901 = vld [vmem:[#allocation10 + $0x88] sm:$0xff]
    %v1902 = vld [vmem:[#allocation10 + $0x90] sm:$0xff]
    %v1903 = vld [vmem:[#allocation10 + $0x98] sm:$0xff]
    %v1904 = vld [vmem:[#allocation10 + $0xa0] sm:$0xff]
    %v1905 = vld [vmem:[#allocation10 + $0xa8] sm:$0xff]
    %v1906 = vld [vmem:[#allocation10 + $0xb0] sm:$0xff]
    %v1907 = vld [vmem:[#allocation10 + $0xb8] sm:$0xff]
    %v1908 = vld [vmem:[#allocation10 + $0xc0] sm:$0xff]
    %v1909 = vld [vmem:[#allocation10 + $0xc8] sm:$0xff]
    %v1910 = vld [vmem:[#allocation10 + $0xd0] sm:$0xff]
    %v1911 = vld [vmem:[#allocation10 + $0xd8] sm:$0xff]
    %v1912 = vld [vmem:[#allocation10 + $0xe0] sm:$0xff]
    %v1913 = vld [vmem:[#allocation10 + $0xe8] sm:$0xff]
    %v1914 = vld [vmem:[#allocation10 + $0xf0] sm:$0xff]
    %v1915 = vld [vmem:[#allocation10 + $0xf8] sm:$0xff]
    %v1916 = vld [vmem:[%s6] sm:$0xf]
    %v1918 = vlaneseq
    %v1919 = vshrl.u32 %v1918, 7
    %v1920 = vsub.s32 0, %v1919
    %v1921 = vrot.slane %v1916, %v1920
    %v1922 = vlaneseq
    %v1923 = vshrl.u32 %v1922, 7
    %v1924 = vsub.s32 1, %v1923
    %v1925 = vrot.slane %v1916, %v1924
    %v1926 = vlaneseq
    %v1927 = vshrl.u32 %v1926, 7
    %v1928 = vsub.s32 2, %v1927
    %v1929 = vrot.slane %v1916, %v1928
    %v1930 = vlaneseq
    %v1931 = vshrl.u32 %v1930, 7
    %v1932 = vsub.s32 3, %v1931
    %v1933 = vrot.slane %v1916, %v1932
    %v1970 = vunpack.c.l.b16 %v1884
    %v1971 = vunpack.c.h.b16 %v1884
    %v1972 = vunpack.c.l.b16 %v1885
    %v1973 = vunpack.c.h.b16 %v1885
    %v1974 = vunpack.c.l.b16 %v1886
    %v1975 = vunpack.c.h.b16 %v1886
    %v1976 = vunpack.c.l.b16 %v1887
    %v1977 = vunpack.c.h.b16 %v1887
    %v1978 = vunpack.c.l.b16 %v1888
    %v1979 = vunpack.c.h.b16 %v1888
    %v1980 = vunpack.c.l.b16 %v1889
    %v1981 = vunpack.c.h.b16 %v1889
    %v1982 = vunpack.c.l.b16 %v1890
    %v1983 = vunpack.c.h.b16 %v1890
    %v1984 = vunpack.c.l.b16 %v1891
    %v1985 = vunpack.c.h.b16 %v1891
    %v1986 = vunpack.c.l.b16 %v1892
    %v1987 = vunpack.c.h.b16 %v1892
    %v1988 = vunpack.c.l.b16 %v1893
    %v1989 = vunpack.c.h.b16 %v1893
    %v1990 = vunpack.c.l.b16 %v1894
    %v1991 = vunpack.c.h.b16 %v1894
    %v1992 = vunpack.c.l.b16 %v1895
    %v1993 = vunpack.c.h.b16 %v1895
    %v1994 = vunpack.c.l.b16 %v1896
    %v1995 = vunpack.c.h.b16 %v1896
    %v1996 = vunpack.c.l.b16 %v1897
    %v1997 = vunpack.c.h.b16 %v1897
    %v1998 = vunpack.c.l.b16 %v1898
    %v1999 = vunpack.c.h.b16 %v1898
    %v2000 = vunpack.c.l.b16 %v1899
    %v2001 = vunpack.c.h.b16 %v1899
    %v2002 = vunpack.c.l.b16 %v1900
    %v2003 = vunpack.c.h.b16 %v1900
    %v2004 = vunpack.c.l.b16 %v1901
    %v2005 = vunpack.c.h.b16 %v1901
    %v2006 = vunpack.c.l.b16 %v1902
    %v2007 = vunpack.c.h.b16 %v1902
    %v2008 = vunpack.c.l.b16 %v1903
    %v2009 = vunpack.c.h.b16 %v1903
    %v2010 = vunpack.c.l.b16 %v1904
    %v2011 = vunpack.c.h.b16 %v1904
    %v2012 = vunpack.c.l.b16 %v1905
    %v2013 = vunpack.c.h.b16 %v1905
    %v2014 = vunpack.c.l.b16 %v1906
    %v2015 = vunpack.c.h.b16 %v1906
    %v2016 = vunpack.c.l.b16 %v1907
    %v2017 = vunpack.c.h.b16 %v1907
    %v2018 = vunpack.c.l.b16 %v1908
    %v2019 = vunpack.c.h.b16 %v1908
    %v2020 = vunpack.c.l.b16 %v1909
    %v2021 = vunpack.c.h.b16 %v1909
    %v2022 = vunpack.c.l.b16 %v1910
    %v2023 = vunpack.c.h.b16 %v1910
    %v2024 = vunpack.c.l.b16 %v1911
    %v2025 = vunpack.c.h.b16 %v1911
    %v2026 = vunpack.c.l.b16 %v1912
    %v2027 = vunpack.c.h.b16 %v1912
    %v2028 = vunpack.c.l.b16 %v1913
    %v2029 = vunpack.c.h.b16 %v1913
    %v2030 = vunpack.c.l.b16 %v1914
    %v2031 = vunpack.c.h.b16 %v1914
    %v2032 = vunpack.c.l.b16 %v1915
    %v2033 = vunpack.c.h.b16 %v1915
    %v2034 = vpack.c.b16 %v1974, %v1970
    %v2035 = vpack.c.b16 %v1975, %v1971
    %v2036 = vpack.c.b16 %v1976, %v1972
    %v2037 = vpack.c.b16 %v1977, %v1973
    %v2038 = vpack.c.b16 %v1982, %v1978
    %v2039 = vpack.c.b16 %v1983, %v1979
    %v2040 = vpack.c.b16 %v1984, %v1980
    %v2041 = vpack.c.b16 %v1985, %v1981
    %v2042 = vpack.c.b16 %v1990, %v1986
    %v2043 = vpack.c.b16 %v1991, %v1987
    %v2044 = vpack.c.b16 %v1992, %v1988
    %v2045 = vpack.c.b16 %v1993, %v1989
    %v2046 = vpack.c.b16 %v1998, %v1994
    %v2047 = vpack.c.b16 %v1999, %v1995
    %v2048 = vpack.c.b16 %v2000, %v1996
    %v2049 = vpack.c.b16 %v2001, %v1997
    %v2050 = vpack.c.b16 %v2006, %v2002
    %v2051 = vpack.c.b16 %v2007, %v2003
    %v2052 = vpack.c.b16 %v2008, %v2004
    %v2053 = vpack.c.b16 %v2009, %v2005
    %v2054 = vpack.c.b16 %v2014, %v2010
    %v2055 = vpack.c.b16 %v2015, %v2011
    %v2056 = vpack.c.b16 %v2016, %v2012
    %v2057 = vpack.c.b16 %v2017, %v2013
    %v2058 = vpack.c.b16 %v2022, %v2018
    %v2059 = vpack.c.b16 %v2023, %v2019
    %v2060 = vpack.c.b16 %v2024, %v2020
    %v2061 = vpack.c.b16 %v2025, %v2021
    %v2062 = vpack.c.b16 %v2030, %v2026
    %v2063 = vpack.c.b16 %v2031, %v2027
    %v2064 = vpack.c.b16 %v2032, %v2028
    %v2065 = vpack.c.b16 %v2033, %v2029
    %2098 = vmatprep.subr.bf16.mxu0 %v2063
    %2099 = vmatpush1.bf16.msra.mxu0 %v2062
    %2100 = vmatprep.subr.bf16.mxu0 %v2059
    %2101 = vmatpush1.bf16.msra.mxu0 %v2058
    %2102 = vmatprep.subr.bf16.mxu0 %v2055
    %2103 = vmatpush1.bf16.msra.mxu0 %v2054
    %2104 = vmatprep.subr.bf16.mxu0 %v2051
    %2105 = vmatpush1.bf16.msra.mxu0 %v2050
    %2106 = vmatprep.subr.bf16.mxu0 %v2047
    %2107 = vmatpush1.bf16.msra.mxu0 %v2046
    %2108 = vmatprep.subr.bf16.mxu0 %v2043
    %2109 = vmatpush1.bf16.msra.mxu0 %v2042
    %2110 = vmatprep.subr.bf16.mxu0 %v2039
    %2111 = vmatpush1.bf16.msra.mxu0 %v2038
    %2112 = vmatprep.subr.bf16.mxu0 %v2035
    %2113 = vmatpush1.bf16.msra.mxu0 %v2034
    %2114 = vmatprep.subr.bf16.mxu0 0
    %2115 = vmatpush2.bf16.msra.mxu0 0
    %2116 = vmatprep.subr.bf16.mxu0 0
    %2117 = vmatpush2.bf16.msra.mxu0 0
    %2118 = vmatprep.subr.bf16.mxu0 0
    %2119 = vmatpush2.bf16.msra.mxu0 0
    %2120 = vmatprep.subr.bf16.mxu0 0
    %2121 = vmatpush2.bf16.msra.mxu0 0
    %2122 = vmatprep.subr.bf16.mxu0 0
    %2123 = vmatpush2.bf16.msra.mxu0 0
    %2124 = vmatprep.subr.bf16.mxu0 0
    %2125 = vmatpush2.bf16.msra.mxu0 0
    %2126 = vmatprep.subr.bf16.mxu0 0
    %2127 = vmatpush2.bf16.msra.mxu0 0
    %2128 = vmatprep.subr.bf16.mxu0 0
    %2129 = vmatpush2.bf16.msra.mxu0 0
    %2130 = vmatprep.mubr.bf16.mxu0 0
    %2131 = vmatmul.mubr.bf16.gmra.mxu0 %v1581
    %v2132 = vpop.f32.mrf.mxu0
    %v2133 = vadd.f32 %v1921, %v2132
    %v2134 = vpop.f32.mrf.mxu0
    %v2135 = vadd.f32 %v1925, %v2134
    %v2136 = vpop.f32.mrf.mxu0
    %v2137 = vpop.f32.mrf.mxu0
    %2138 = vdwg.mxu0
    %2139 = vmatprep.subr.bf16.mxu0 %v2065
    %2140 = vmatpush1.bf16.msra.mxu0 %v2064
    %2141 = vmatprep.subr.bf16.mxu0 %v2061
    %2142 = vmatpush1.bf16.msra.mxu0 %v2060
    %2143 = vmatprep.subr.bf16.mxu0 %v2057
    %2144 = vmatpush1.bf16.msra.mxu0 %v2056
    %2145 = vmatprep.subr.bf16.mxu0 %v2053
    %2146 = vmatpush1.bf16.msra.mxu0 %v2052
    %2147 = vmatprep.subr.bf16.mxu0 %v2049
    %2148 = vmatpush1.bf16.msra.mxu0 %v2048
    %2149 = vmatprep.subr.bf16.mxu0 %v2045
    %2150 = vmatpush1.bf16.msra.mxu0 %v2044
    %2151 = vmatprep.subr.bf16.mxu0 %v2041
    %2152 = vmatpush1.bf16.msra.mxu0 %v2040
    %2153 = vmatprep.subr.bf16.mxu0 %v2037
    %2154 = vmatpush1.bf16.msra.mxu0 %v2036
    %2155 = vmatprep.subr.bf16.mxu0 0
    %2156 = vmatpush2.bf16.msra.mxu0 0
    %2157 = vmatprep.subr.bf16.mxu0 0
    %2158 = vmatpush2.bf16.msra.mxu0 0
    %2159 = vmatprep.subr.bf16.mxu0 0
    %2160 = vmatpush2.bf16.msra.mxu0 0
    %2161 = vmatprep.subr.bf16.mxu0 0
    %2162 = vmatpush2.bf16.msra.mxu0 0
    %2163 = vmatprep.subr.bf16.mxu0 0
    %2164 = vmatpush2.bf16.msra.mxu0 0
    %2165 = vmatprep.subr.bf16.mxu0 0
    %2166 = vmatpush2.bf16.msra.mxu0 0
    %2167 = vmatprep.subr.bf16.mxu0 0
    %2168 = vmatpush2.bf16.msra.mxu0 0
    %2169 = vmatprep.subr.bf16.mxu0 0
    %2170 = vmatpush2.bf16.msra.mxu0 0
    %2171 = vmatprep.mubr.bf16.mxu0 0
    %2172 = vmatmul.mubr.bf16.gmra.mxu0 %v1581
    %v2173 = vpop.f32.mrf.mxu0
    %v2174 = vadd.f32 %v1929, %v2173
    %v2175 = vpop.f32.mrf.mxu0
    %v2176 = vadd.f32 %v1933, %v2175
    %v2177 = vpop.f32.mrf.mxu0
    %v2178 = vpop.f32.mrf.mxu0
    %2179 = vdwg.mxu0
    %v2180 = vld [vmem:[#allocation5] sm:$0xff]
    %v2181 = vpack.c.bf16 %v2180, %v2180
    %v2182 = vld [vmem:[#allocation12] sm:$0xff]
    %v2183 = vld [vmem:[#allocation12 + $0x8] sm:$0xff]
    %v2184 = vld [vmem:[#allocation12 + $0x10] sm:$0xff]
    %v2185 = vld [vmem:[#allocation12 + $0x18] sm:$0xff]
    %v2186 = vld [vmem:[#allocation12 + $0x20] sm:$0xff]
    %v2187 = vld [vmem:[#allocation12 + $0x28] sm:$0xff]
    %v2188 = vld [vmem:[#allocation12 + $0x30] sm:$0xff]
    %v2189 = vld [vmem:[#allocation12 + $0x38] sm:$0xff]
    %v2190 = vld [vmem:[#allocation12 + $0x40] sm:$0xff]
    %v2191 = vld [vmem:[#allocation12 + $0x48] sm:$0xff]
    %v2192 = vld [vmem:[#allocation12 + $0x50] sm:$0xff]
    %v2193 = vld [vmem:[#allocation12 + $0x58] sm:$0xff]
    %v2194 = vld [vmem:[#allocation12 + $0x60] sm:$0xff]
    %v2195 = vld [vmem:[#allocation12 + $0x68] sm:$0xff]
    %v2196 = vld [vmem:[#allocation12 + $0x70] sm:$0xff]
    %v2197 = vld [vmem:[#allocation12 + $0x78] sm:$0xff]
    %v2198 = vld [vmem:[#allocation12 + $0x80] sm:$0xff]
    %v2199 = vld [vmem:[#allocation12 + $0x88] sm:$0xff]
    %v2200 = vld [vmem:[#allocation12 + $0x90] sm:$0xff]
    %v2201 = vld [vmem:[#allocation12 + $0x98] sm:$0xff]
    %v2202 = vld [vmem:[#allocation12 + $0xa0] sm:$0xff]
    %v2203 = vld [vmem:[#allocation12 + $0xa8] sm:$0xff]
    %v2204 = vld [vmem:[#allocation12 + $0xb0] sm:$0xff]
    %v2205 = vld [vmem:[#allocation12 + $0xb8] sm:$0xff]
    %v2206 = vld [vmem:[#allocation12 + $0xc0] sm:$0xff]
    %v2207 = vld [vmem:[#allocation12 + $0xc8] sm:$0xff]
    %v2208 = vld [vmem:[#allocation12 + $0xd0] sm:$0xff]
    %v2209 = vld [vmem:[#allocation12 + $0xd8] sm:$0xff]
    %v2210 = vld [vmem:[#allocation12 + $0xe0] sm:$0xff]
    %v2211 = vld [vmem:[#allocation12 + $0xe8] sm:$0xff]
    %v2212 = vld [vmem:[#allocation12 + $0xf0] sm:$0xff]
    %v2213 = vld [vmem:[#allocation12 + $0xf8] sm:$0xff]
    %v2246 = vunpack.c.l.b16 %v2182
    %v2247 = vunpack.c.h.b16 %v2182
    %v2248 = vunpack.c.l.b16 %v2183
    %v2249 = vunpack.c.h.b16 %v2183
    %v2250 = vunpack.c.l.b16 %v2184
    %v2251 = vunpack.c.h.b16 %v2184
    %v2252 = vunpack.c.l.b16 %v2185
    %v2253 = vunpack.c.h.b16 %v2185
    %v2254 = vunpack.c.l.b16 %v2186
    %v2255 = vunpack.c.h.b16 %v2186
    %v2256 = vunpack.c.l.b16 %v2187
    %v2257 = vunpack.c.h.b16 %v2187
    %v2258 = vunpack.c.l.b16 %v2188
    %v2259 = vunpack.c.h.b16 %v2188
    %v2260 = vunpack.c.l.b16 %v2189
    %v2261 = vunpack.c.h.b16 %v2189
    %v2262 = vunpack.c.l.b16 %v2190
    %v2263 = vunpack.c.h.b16 %v2190
    %v2264 = vunpack.c.l.b16 %v2191
    %v2265 = vunpack.c.h.b16 %v2191
    %v2266 = vunpack.c.l.b16 %v2192
    %v2267 = vunpack.c.h.b16 %v2192
    %v2268 = vunpack.c.l.b16 %v2193
    %v2269 = vunpack.c.h.b16 %v2193
    %v2270 = vunpack.c.l.b16 %v2194
    %v2271 = vunpack.c.h.b16 %v2194
    %v2272 = vunpack.c.l.b16 %v2195
    %v2273 = vunpack.c.h.b16 %v2195
    %v2274 = vunpack.c.l.b16 %v2196
    %v2275 = vunpack.c.h.b16 %v2196
    %v2276 = vunpack.c.l.b16 %v2197
    %v2277 = vunpack.c.h.b16 %v2197
    %v2278 = vunpack.c.l.b16 %v2198
    %v2279 = vunpack.c.h.b16 %v2198
    %v2280 = vunpack.c.l.b16 %v2199
    %v2281 = vunpack.c.h.b16 %v2199
    %v2282 = vunpack.c.l.b16 %v2200
    %v2283 = vunpack.c.h.b16 %v2200
    %v2284 = vunpack.c.l.b16 %v2201
    %v2285 = vunpack.c.h.b16 %v2201
    %v2286 = vunpack.c.l.b16 %v2202
    %v2287 = vunpack.c.h.b16 %v2202
    %v2288 = vunpack.c.l.b16 %v2203
    %v2289 = vunpack.c.h.b16 %v2203
    %v2290 = vunpack.c.l.b16 %v2204
    %v2291 = vunpack.c.h.b16 %v2204
    %v2292 = vunpack.c.l.b16 %v2205
    %v2293 = vunpack.c.h.b16 %v2205
    %v2294 = vunpack.c.l.b16 %v2206
    %v2295 = vunpack.c.h.b16 %v2206
    %v2296 = vunpack.c.l.b16 %v2207
    %v2297 = vunpack.c.h.b16 %v2207
    %v2298 = vunpack.c.l.b16 %v2208
    %v2299 = vunpack.c.h.b16 %v2208
    %v2300 = vunpack.c.l.b16 %v2209
    %v2301 = vunpack.c.h.b16 %v2209
    %v2302 = vunpack.c.l.b16 %v2210
    %v2303 = vunpack.c.h.b16 %v2210
    %v2304 = vunpack.c.l.b16 %v2211
    %v2305 = vunpack.c.h.b16 %v2211
    %v2306 = vunpack.c.l.b16 %v2212
    %v2307 = vunpack.c.h.b16 %v2212
    %v2308 = vunpack.c.l.b16 %v2213
    %v2309 = vunpack.c.h.b16 %v2213
    %v2310 = vpack.c.b16 %v2250, %v2246
    %v2311 = vpack.c.b16 %v2251, %v2247
    %v2312 = vpack.c.b16 %v2252, %v2248
    %v2313 = vpack.c.b16 %v2253, %v2249
    %v2314 = vpack.c.b16 %v2258, %v2254
    %v2315 = vpack.c.b16 %v2259, %v2255
    %v2316 = vpack.c.b16 %v2260, %v2256
    %v2317 = vpack.c.b16 %v2261, %v2257
    %v2318 = vpack.c.b16 %v2266, %v2262
    %v2319 = vpack.c.b16 %v2267, %v2263
    %v2320 = vpack.c.b16 %v2268, %v2264
    %v2321 = vpack.c.b16 %v2269, %v2265
    %v2322 = vpack.c.b16 %v2274, %v2270
    %v2323 = vpack.c.b16 %v2275, %v2271
    %v2324 = vpack.c.b16 %v2276, %v2272
    %v2325 = vpack.c.b16 %v2277, %v2273
    %v2326 = vpack.c.b16 %v2282, %v2278
    %v2327 = vpack.c.b16 %v2283, %v2279
    %v2328 = vpack.c.b16 %v2284, %v2280
    %v2329 = vpack.c.b16 %v2285, %v2281
    %v2330 = vpack.c.b16 %v2290, %v2286
    %v2331 = vpack.c.b16 %v2291, %v2287
    %v2332 = vpack.c.b16 %v2292, %v2288
    %v2333 = vpack.c.b16 %v2293, %v2289
    %v2334 = vpack.c.b16 %v2298, %v2294
    %v2335 = vpack.c.b16 %v2299, %v2295
    %v2336 = vpack.c.b16 %v2300, %v2296
    %v2337 = vpack.c.b16 %v2301, %v2297
    %v2338 = vpack.c.b16 %v2306, %v2302
    %v2339 = vpack.c.b16 %v2307, %v2303
    %v2340 = vpack.c.b16 %v2308, %v2304
    %v2341 = vpack.c.b16 %v2309, %v2305
    %2374 = vmatprep.subr.bf16.mxu0 %v2339
    %2375 = vmatpush1.bf16.msra.mxu0 %v2338
    %2376 = vmatprep.subr.bf16.mxu0 %v2335
    %2377 = vmatpush1.bf16.msra.mxu0 %v2334
    %2378 = vmatprep.subr.bf16.mxu0 %v2331
    %2379 = vmatpush1.bf16.msra.mxu0 %v2330
    %2380 = vmatprep.subr.bf16.mxu0 %v2327
    %2381 = vmatpush1.bf16.msra.mxu0 %v2326
    %2382 = vmatprep.subr.bf16.mxu0 %v2323
    %2383 = vmatpush1.bf16.msra.mxu0 %v2322
    %2384 = vmatprep.subr.bf16.mxu0 %v2319
    %2385 = vmatpush1.bf16.msra.mxu0 %v2318
    %2386 = vmatprep.subr.bf16.mxu0 %v2315
    %2387 = vmatpush1.bf16.msra.mxu0 %v2314
    %2388 = vmatprep.subr.bf16.mxu0 %v2311
    %2389 = vmatpush1.bf16.msra.mxu0 %v2310
    %2390 = vmatprep.subr.bf16.mxu0 0
    %2391 = vmatpush2.bf16.msra.mxu0 0
    %2392 = vmatprep.subr.bf16.mxu0 0
    %2393 = vmatpush2.bf16.msra.mxu0 0
    %2394 = vmatprep.subr.bf16.mxu0 0
    %2395 = vmatpush2.bf16.msra.mxu0 0
    %2396 = vmatprep.subr.bf16.mxu0 0
    %2397 = vmatpush2.bf16.msra.mxu0 0
    %2398 = vmatprep.subr.bf16.mxu0 0
    %2399 = vmatpush2.bf16.msra.mxu0 0
    %2400 = vmatprep.subr.bf16.mxu0 0
    %2401 = vmatpush2.bf16.msra.mxu0 0
    %2402 = vmatprep.subr.bf16.mxu0 0
    %2403 = vmatpush2.bf16.msra.mxu0 0
    %2404 = vmatprep.subr.bf16.mxu0 0
    %2405 = vmatpush2.bf16.msra.mxu0 0
    %2406 = vmatprep.mubr.bf16.mxu0 0
    %2407 = vmatmul.mubr.bf16.gmra.mxu0 %v2181
    %v2408 = vpop.f32.mrf.mxu0
    %v2409 = vadd.f32 0.0, %v2408
    %v2410 = vpop.f32.mrf.mxu0
    %v2411 = vadd.f32 0.0, %v2410
    %v2412 = vpop.f32.mrf.mxu0
    %v2413 = vpop.f32.mrf.mxu0
    %2414 = vdwg.mxu0
    %2415 = vmatprep.subr.bf16.mxu0 %v2341
    %2416 = vmatpush1.bf16.msra.mxu0 %v2340
    %2417 = vmatprep.subr.bf16.mxu0 %v2337
    %2418 = vmatpush1.bf16.msra.mxu0 %v2336
    %2419 = vmatprep.subr.bf16.mxu0 %v2333
    %2420 = vmatpush1.bf16.msra.mxu0 %v2332
    %2421 = vmatprep.subr.bf16.mxu0 %v2329
    %2422 = vmatpush1.bf16.msra.mxu0 %v2328
    %2423 = vmatprep.subr.bf16.mxu0 %v2325
    %2424 = vmatpush1.bf16.msra.mxu0 %v2324
    %2425 = vmatprep.subr.bf16.mxu0 %v2321
    %2426 = vmatpush1.bf16.msra.mxu0 %v2320
    %2427 = vmatprep.subr.bf16.mxu0 %v2317
    %2428 = vmatpush1.bf16.msra.mxu0 %v2316
    %2429 = vmatprep.subr.bf16.mxu0 %v2313
    %2430 = vmatpush1.bf16.msra.mxu0 %v2312
    %2431 = vmatprep.subr.bf16.mxu0 0
    %2432 = vmatpush2.bf16.msra.mxu0 0
    %2433 = vmatprep.subr.bf16.mxu0 0
    %2434 = vmatpush2.bf16.msra.mxu0 0
    %2435 = vmatprep.subr.bf16.mxu0 0
    %2436 = vmatpush2.bf16.msra.mxu0 0
    %2437 = vmatprep.subr.bf16.mxu0 0
    %2438 = vmatpush2.bf16.msra.mxu0 0
    %2439 = vmatprep.subr.bf16.mxu0 0
    %2440 = vmatpush2.bf16.msra.mxu0 0
    %2441 = vmatprep.subr.bf16.mxu0 0
    %2442 = vmatpush2.bf16.msra.mxu0 0
    %2443 = vmatprep.subr.bf16.mxu0 0
    %2444 = vmatpush2.bf16.msra.mxu0 0
    %2445 = vmatprep.subr.bf16.mxu0 0
    %2446 = vmatpush2.bf16.msra.mxu0 0
    %2447 = vmatprep.mubr.bf16.mxu0 0
    %2448 = vmatmul.mubr.bf16.gmra.mxu0 %v2181
    %v2449 = vpop.f32.mrf.mxu0
    %v2450 = vadd.f32 0.0, %v2449
    %v2451 = vpop.f32.mrf.mxu0
    %v2452 = vadd.f32 0.0, %v2451
    %v2453 = vpop.f32.mrf.mxu0
    %v2454 = vpop.f32.mrf.mxu0
    %2455 = vdwg.mxu0
    %v2456 = vadd.f32 %v2133, %v2409
    %v2457 = vadd.f32 %v2135, %v2411
    %v2458 = vadd.f32 %v2174, %v2450
    %v2459 = vadd.f32 %v2176, %v2452
    %v2460 = vld [vmem:[#allocation6] sm:$0xff]
    %v2461 = vxor.u32 %v2456, 2147483648
    %v2462 = vxor.u32 %v2457, 2147483648
    %v2463 = vxor.u32 %v2458, 2147483648
    %v2464 = vmul.f32 %v2461, 1.442695
    %v2465 = vpow.pop %v2464
    %v2466 = vmul.f32 %v2462, 1.442695
    %v2467 = vpow.pop %v2466
    %v2468 = vmul.f32 %v2463, 1.442695
    %v2469 = vpow.pop %v2468
    %v2470 = vadd.f32 %v2465, 1.0
    %v2471 = vadd.f32 %v2467, 1.0
    %v2472 = vadd.f32 %v2469, 1.0
    %v2473 = vrcp.pop %v2470
    %v2474 = vmul.f32 1.0, %v2473
    %v2475 = vrcp.pop %v2471
    %v2476 = vmul.f32 1.0, %v2475
    %v2477 = vrcp.pop %v2472
    %v2478 = vmul.f32 1.0, %v2477
    %v2479 = vtanh.pop %v2459
    %v2480 = vmul.f32 %v2476, %v2460
    %v2481 = vmul.f32 %v2474, %v2479
    %v2482 = vadd.f32 %v2480, %v2481
    %v2483 = vtanh.pop %v2482
    %v2484 = vmul.f32 %v2478, %v2483
    %2485 = vst [vmem:[#allocation5] sm:$0xff] %v2484
    %2486 = vst [vmem:[#allocation6] sm:$0xff] %v2482
    %2487 = vst [vmem:[#allocation3] sm:$0xff] %v1883
    %2488 = vst [vmem:[#allocation4] sm:$0xff] %v1881
    %v2489 = vld [vmem:[#allocation3] sm:$0xff]
    %v2490 = vld [vmem:[#allocation4] sm:$0xff]
    %v2491 = vld [vmem:[#allocation2 + $0x60] sm:$0xff]
    %v2492 = vld [vmem:[#allocation2 + $0x68] sm:$0xff]
    %v2493 = vld [vmem:[#allocation2 + $0x70] sm:$0xff]
    %v2494 = vld [vmem:[#allocation2 + $0x78] sm:$0xff]
    %v2495 = vpack.c.bf16 %v2489, %v2489
    %v2496 = vld [vmem:[#allocation7] sm:$0xff]
    %v2497 = vld [vmem:[#allocation7 + $0x8] sm:$0xff]
    %v2498 = vld [vmem:[#allocation7 + $0x10] sm:$0xff]
    %v2499 = vld [vmem:[#allocation7 + $0x18] sm:$0xff]
    %v2500 = vld [vmem:[#allocation7 + $0x20] sm:$0xff]
    %v2501 = vld [vmem:[#allocation7 + $0x28] sm:$0xff]
    %v2502 = vld [vmem:[#allocation7 + $0x30] sm:$0xff]
    %v2503 = vld [vmem:[#allocation7 + $0x38] sm:$0xff]
    %v2504 = vld [vmem:[#allocation7 + $0x40] sm:$0xff]
    %v2505 = vld [vmem:[#allocation7 + $0x48] sm:$0xff]
    %v2506 = vld [vmem:[#allocation7 + $0x50] sm:$0xff]
    %v2507 = vld [vmem:[#allocation7 + $0x58] sm:$0xff]
    %v2508 = vld [vmem:[#allocation7 + $0x60] sm:$0xff]
    %v2509 = vld [vmem:[#allocation7 + $0x68] sm:$0xff]
    %v2510 = vld [vmem:[#allocation7 + $0x70] sm:$0xff]
    %v2511 = vld [vmem:[#allocation7 + $0x78] sm:$0xff]
    %v2512 = vld [vmem:[#allocation7 + $0x80] sm:$0xff]
    %v2513 = vld [vmem:[#allocation7 + $0x88] sm:$0xff]
    %v2514 = vld [vmem:[#allocation7 + $0x90] sm:$0xff]
    %v2515 = vld [vmem:[#allocation7 + $0x98] sm:$0xff]
    %v2516 = vld [vmem:[#allocation7 + $0xa0] sm:$0xff]
    %v2517 = vld [vmem:[#allocation7 + $0xa8] sm:$0xff]
    %v2518 = vld [vmem:[#allocation7 + $0xb0] sm:$0xff]
    %v2519 = vld [vmem:[#allocation7 + $0xb8] sm:$0xff]
    %v2520 = vld [vmem:[#allocation7 + $0xc0] sm:$0xff]
    %v2521 = vld [vmem:[#allocation7 + $0xc8] sm:$0xff]
    %v2522 = vld [vmem:[#allocation7 + $0xd0] sm:$0xff]
    %v2523 = vld [vmem:[#allocation7 + $0xd8] sm:$0xff]
    %v2524 = vld [vmem:[#allocation7 + $0xe0] sm:$0xff]
    %v2525 = vld [vmem:[#allocation7 + $0xe8] sm:$0xff]
    %v2526 = vld [vmem:[#allocation7 + $0xf0] sm:$0xff]
    %v2527 = vld [vmem:[#allocation7 + $0xf8] sm:$0xff]
    %v2560 = vunpack.c.l.b16 %v2496
    %v2561 = vunpack.c.h.b16 %v2496
    %v2562 = vunpack.c.l.b16 %v2497
    %v2563 = vunpack.c.h.b16 %v2497
    %v2564 = vunpack.c.l.b16 %v2498
    %v2565 = vunpack.c.h.b16 %v2498
    %v2566 = vunpack.c.l.b16 %v2499
    %v2567 = vunpack.c.h.b16 %v2499
    %v2568 = vunpack.c.l.b16 %v2500
    %v2569 = vunpack.c.h.b16 %v2500
    %v2570 = vunpack.c.l.b16 %v2501
    %v2571 = vunpack.c.h.b16 %v2501
    %v2572 = vunpack.c.l.b16 %v2502
    %v2573 = vunpack.c.h.b16 %v2502
    %v2574 = vunpack.c.l.b16 %v2503
    %v2575 = vunpack.c.h.b16 %v2503
    %v2576 = vunpack.c.l.b16 %v2504
    %v2577 = vunpack.c.h.b16 %v2504
    %v2578 = vunpack.c.l.b16 %v2505
    %v2579 = vunpack.c.h.b16 %v2505
    %v2580 = vunpack.c.l.b16 %v2506
    %v2581 = vunpack.c.h.b16 %v2506
    %v2582 = vunpack.c.l.b16 %v2507
    %v2583 = vunpack.c.h.b16 %v2507
    %v2584 = vunpack.c.l.b16 %v2508
    %v2585 = vunpack.c.h.b16 %v2508
    %v2586 = vunpack.c.l.b16 %v2509
    %v2587 = vunpack.c.h.b16 %v2509
    %v2588 = vunpack.c.l.b16 %v2510
    %v2589 = vunpack.c.h.b16 %v2510
    %v2590 = vunpack.c.l.b16 %v2511
    %v2591 = vunpack.c.h.b16 %v2511
    %v2592 = vunpack.c.l.b16 %v2512
    %v2593 = vunpack.c.h.b16 %v2512
    %v2594 = vunpack.c.l.b16 %v2513
    %v2595 = vunpack.c.h.b16 %v2513
    %v2596 = vunpack.c.l.b16 %v2514
    %v2597 = vunpack.c.h.b16 %v2514
    %v2598 = vunpack.c.l.b16 %v2515
    %v2599 = vunpack.c.h.b16 %v2515
    %v2600 = vunpack.c.l.b16 %v2516
    %v2601 = vunpack.c.h.b16 %v2516
    %v2602 = vunpack.c.l.b16 %v2517
    %v2603 = vunpack.c.h.b16 %v2517
    %v2604 = vunpack.c.l.b16 %v2518
    %v2605 = vunpack.c.h.b16 %v2518
    %v2606 = vunpack.c.l.b16 %v2519
    %v2607 = vunpack.c.h.b16 %v2519
    %v2608 = vunpack.c.l.b16 %v2520
    %v2609 = vunpack.c.h.b16 %v2520
    %v2610 = vunpack.c.l.b16 %v2521
    %v2611 = vunpack.c.h.b16 %v2521
    %v2612 = vunpack.c.l.b16 %v2522
    %v2613 = vunpack.c.h.b16 %v2522
    %v2614 = vunpack.c.l.b16 %v2523
    %v2615 = vunpack.c.h.b16 %v2523
    %v2616 = vunpack.c.l.b16 %v2524
    %v2617 = vunpack.c.h.b16 %v2524
    %v2618 = vunpack.c.l.b16 %v2525
    %v2619 = vunpack.c.h.b16 %v2525
    %v2620 = vunpack.c.l.b16 %v2526
    %v2621 = vunpack.c.h.b16 %v2526
    %v2622 = vunpack.c.l.b16 %v2527
    %v2623 = vunpack.c.h.b16 %v2527
    %v2624 = vpack.c.b16 %v2564, %v2560
    %v2625 = vpack.c.b16 %v2565, %v2561
    %v2626 = vpack.c.b16 %v2566, %v2562
    %v2627 = vpack.c.b16 %v2567, %v2563
    %v2628 = vpack.c.b16 %v2572, %v2568
    %v2629 = vpack.c.b16 %v2573, %v2569
    %v2630 = vpack.c.b16 %v2574, %v2570
    %v2631 = vpack.c.b16 %v2575, %v2571
    %v2632 = vpack.c.b16 %v2580, %v2576
    %v2633 = vpack.c.b16 %v2581, %v2577
    %v2634 = vpack.c.b16 %v2582, %v2578
    %v2635 = vpack.c.b16 %v2583, %v2579
    %v2636 = vpack.c.b16 %v2588, %v2584
    %v2637 = vpack.c.b16 %v2589, %v2585
    %v2638 = vpack.c.b16 %v2590, %v2586
    %v2639 = vpack.c.b16 %v2591, %v2587
    %v2640 = vpack.c.b16 %v2596, %v2592
    %v2641 = vpack.c.b16 %v2597, %v2593
    %v2642 = vpack.c.b16 %v2598, %v2594
    %v2643 = vpack.c.b16 %v2599, %v2595
    %v2644 = vpack.c.b16 %v2604, %v2600
    %v2645 = vpack.c.b16 %v2605, %v2601
    %v2646 = vpack.c.b16 %v2606, %v2602
    %v2647 = vpack.c.b16 %v2607, %v2603
    %v2648 = vpack.c.b16 %v2612, %v2608
    %v2649 = vpack.c.b16 %v2613, %v2609
    %v2650 = vpack.c.b16 %v2614, %v2610
    %v2651 = vpack.c.b16 %v2615, %v2611
    %v2652 = vpack.c.b16 %v2620, %v2616
    %v2653 = vpack.c.b16 %v2621, %v2617
    %v2654 = vpack.c.b16 %v2622, %v2618
    %v2655 = vpack.c.b16 %v2623, %v2619
    %2688 = vmatprep.subr.bf16.mxu0 %v2653
    %2689 = vmatpush1.bf16.msra.mxu0 %v2652
    %2690 = vmatprep.subr.bf16.mxu0 %v2649
    %2691 = vmatpush1.bf16.msra.mxu0 %v2648
    %2692 = vmatprep.subr.bf16.mxu0 %v2645
    %2693 = vmatpush1.bf16.msra.mxu0 %v2644
    %2694 = vmatprep.subr.bf16.mxu0 %v2641
    %2695 = vmatpush1.bf16.msra.mxu0 %v2640
    %2696 = vmatprep.subr.bf16.mxu0 %v2637
    %2697 = vmatpush1.bf16.msra.mxu0 %v2636
    %2698 = vmatprep.subr.bf16.mxu0 %v2633
    %2699 = vmatpush1.bf16.msra.mxu0 %v2632
    %2700 = vmatprep.subr.bf16.mxu0 %v2629
    %2701 = vmatpush1.bf16.msra.mxu0 %v2628
    %2702 = vmatprep.subr.bf16.mxu0 %v2625
    %2703 = vmatpush1.bf16.msra.mxu0 %v2624
    %2704 = vmatprep.subr.bf16.mxu0 0
    %2705 = vmatpush2.bf16.msra.mxu0 0
    %2706 = vmatprep.subr.bf16.mxu0 0
    %2707 = vmatpush2.bf16.msra.mxu0 0
    %2708 = vmatprep.subr.bf16.mxu0 0
    %2709 = vmatpush2.bf16.msra.mxu0 0
    %2710 = vmatprep.subr.bf16.mxu0 0
    %2711 = vmatpush2.bf16.msra.mxu0 0
    %2712 = vmatprep.subr.bf16.mxu0 0
    %2713 = vmatpush2.bf16.msra.mxu0 0
    %2714 = vmatprep.subr.bf16.mxu0 0
    %2715 = vmatpush2.bf16.msra.mxu0 0
    %2716 = vmatprep.subr.bf16.mxu0 0
    %2717 = vmatpush2.bf16.msra.mxu0 0
    %2718 = vmatprep.subr.bf16.mxu0 0
    %2719 = vmatpush2.bf16.msra.mxu0 0
    %2720 = vmatprep.mubr.bf16.mxu0 0
    %2721 = vmatmul.mubr.bf16.gmra.mxu0 %v2495
    %v2722 = vpop.f32.mrf.mxu0
    %v2723 = vadd.f32 0.0, %v2722
    %v2724 = vpop.f32.mrf.mxu0
    %v2725 = vadd.f32 0.0, %v2724
    %v2726 = vpop.f32.mrf.mxu0
    %v2727 = vpop.f32.mrf.mxu0
    %2728 = vdwg.mxu0
    %2729 = vmatprep.subr.bf16.mxu0 %v2655
    %2730 = vmatpush1.bf16.msra.mxu0 %v2654
    %2731 = vmatprep.subr.bf16.mxu0 %v2651
    %2732 = vmatpush1.bf16.msra.mxu0 %v2650
    %2733 = vmatprep.subr.bf16.mxu0 %v2647
    %2734 = vmatpush1.bf16.msra.mxu0 %v2646
    %2735 = vmatprep.subr.bf16.mxu0 %v2643
    %2736 = vmatpush1.bf16.msra.mxu0 %v2642
    %2737 = vmatprep.subr.bf16.mxu0 %v2639
    %2738 = vmatpush1.bf16.msra.mxu0 %v2638
    %2739 = vmatprep.subr.bf16.mxu0 %v2635
    %2740 = vmatpush1.bf16.msra.mxu0 %v2634
    %2741 = vmatprep.subr.bf16.mxu0 %v2631
    %2742 = vmatpush1.bf16.msra.mxu0 %v2630
    %2743 = vmatprep.subr.bf16.mxu0 %v2627
    %2744 = vmatpush1.bf16.msra.mxu0 %v2626
    %2745 = vmatprep.subr.bf16.mxu0 0
    %2746 = vmatpush2.bf16.msra.mxu0 0
    %2747 = vmatprep.subr.bf16.mxu0 0
    %2748 = vmatpush2.bf16.msra.mxu0 0
    %2749 = vmatprep.subr.bf16.mxu0 0
    %2750 = vmatpush2.bf16.msra.mxu0 0
    %2751 = vmatprep.subr.bf16.mxu0 0
    %2752 = vmatpush2.bf16.msra.mxu0 0
    %2753 = vmatprep.subr.bf16.mxu0 0
    %2754 = vmatpush2.bf16.msra.mxu0 0
    %2755 = vmatprep.subr.bf16.mxu0 0
    %2756 = vmatpush2.bf16.msra.mxu0 0
    %2757 = vmatprep.subr.bf16.mxu0 0
    %2758 = vmatpush2.bf16.msra.mxu0 0
    %2759 = vmatprep.subr.bf16.mxu0 0
    %2760 = vmatpush2.bf16.msra.mxu0 0
    %2761 = vmatprep.mubr.bf16.mxu0 0
    %2762 = vmatmul.mubr.bf16.gmra.mxu0 %v2495
    %v2763 = vpop.f32.mrf.mxu0
    %v2764 = vadd.f32 0.0, %v2763
    %v2765 = vpop.f32.mrf.mxu0
    %v2766 = vadd.f32 0.0, %v2765
    %v2767 = vpop.f32.mrf.mxu0
    %v2768 = vpop.f32.mrf.mxu0
    %2769 = vdwg.mxu0
    %v2770 = vadd.f32 %v2491, %v2723
    %v2771 = vadd.f32 %v2492, %v2725
    %v2772 = vadd.f32 %v2493, %v2764
    %v2773 = vadd.f32 %v2494, %v2766
    %v2774 = vxor.u32 %v2770, 2147483648
    %v2775 = vxor.u32 %v2771, 2147483648
    %v2776 = vxor.u32 %v2772, 2147483648
    %v2777 = vmul.f32 %v2774, 1.442695
    %v2778 = vpow.pop %v2777
    %v2779 = vmul.f32 %v2775, 1.442695
    %v2780 = vpow.pop %v2779
    %v2781 = vmul.f32 %v2776, 1.442695
    %v2782 = vpow.pop %v2781
    %v2783 = vadd.f32 %v2778, 1.0
    %v2784 = vadd.f32 %v2780, 1.0
    %v2785 = vadd.f32 %v2782, 1.0
    %v2786 = vrcp.pop %v2783
    %v2787 = vmul.f32 1.0, %v2786
    %v2788 = vrcp.pop %v2784
    %v2789 = vmul.f32 1.0, %v2788
    %v2790 = vrcp.pop %v2785
    %v2791 = vmul.f32 1.0, %v2790
    %v2792 = vtanh.pop %v2773
    %v2793 = vmul.f32 %v2789, %v2490
    %v2794 = vmul.f32 %v2787, %v2792
    %v2795 = vadd.f32 %v2793, %v2794
    %v2796 = vtanh.pop %v2795
    %v2797 = vmul.f32 %v2791, %v2796
    %v2798 = vld [vmem:[#allocation10] sm:$0xff]
    %v2799 = vld [vmem:[#allocation10 + $0x8] sm:$0xff]
    %v2800 = vld [vmem:[#allocation10 + $0x10] sm:$0xff]
    %v2801 = vld [vmem:[#allocation10 + $0x18] sm:$0xff]
    %v2802 = vld [vmem:[#allocation10 + $0x20] sm:$0xff]
    %v2803 = vld [vmem:[#allocation10 + $0x28] sm:$0xff]
    %v2804 = vld [vmem:[#allocation10 + $0x30] sm:$0xff]
    %v2805 = vld [vmem:[#allocation10 + $0x38] sm:$0xff]
    %v2806 = vld [vmem:[#allocation10 + $0x40] sm:$0xff]
    %v2807 = vld [vmem:[#allocation10 + $0x48] sm:$0xff]
    %v2808 = vld [vmem:[#allocation10 + $0x50] sm:$0xff]
    %v2809 = vld [vmem:[#allocation10 + $0x58] sm:$0xff]
    %v2810 = vld [vmem:[#allocation10 + $0x60] sm:$0xff]
    %v2811 = vld [vmem:[#allocation10 + $0x68] sm:$0xff]
    %v2812 = vld [vmem:[#allocation10 + $0x70] sm:$0xff]
    %v2813 = vld [vmem:[#allocation10 + $0x78] sm:$0xff]
    %v2814 = vld [vmem:[#allocation10 + $0x80] sm:$0xff]
    %v2815 = vld [vmem:[#allocation10 + $0x88] sm:$0xff]
    %v2816 = vld [vmem:[#allocation10 + $0x90] sm:$0xff]
    %v2817 = vld [vmem:[#allocation10 + $0x98] sm:$0xff]
    %v2818 = vld [vmem:[#allocation10 + $0xa0] sm:$0xff]
    %v2819 = vld [vmem:[#allocation10 + $0xa8] sm:$0xff]
    %v2820 = vld [vmem:[#allocation10 + $0xb0] sm:$0xff]
    %v2821 = vld [vmem:[#allocation10 + $0xb8] sm:$0xff]
    %v2822 = vld [vmem:[#allocation10 + $0xc0] sm:$0xff]
    %v2823 = vld [vmem:[#allocation10 + $0xc8] sm:$0xff]
    %v2824 = vld [vmem:[#allocation10 + $0xd0] sm:$0xff]
    %v2825 = vld [vmem:[#allocation10 + $0xd8] sm:$0xff]
    %v2826 = vld [vmem:[#allocation10 + $0xe0] sm:$0xff]
    %v2827 = vld [vmem:[#allocation10 + $0xe8] sm:$0xff]
    %v2828 = vld [vmem:[#allocation10 + $0xf0] sm:$0xff]
    %v2829 = vld [vmem:[#allocation10 + $0xf8] sm:$0xff]
    %v2830 = vld [vmem:[%s6] sm:$0xf]
    %v2832 = vlaneseq
    %v2833 = vshrl.u32 %v2832, 7
    %v2834 = vsub.s32 0, %v2833
    %v2835 = vrot.slane %v2830, %v2834
    %v2836 = vlaneseq
    %v2837 = vshrl.u32 %v2836, 7
    %v2838 = vsub.s32 1, %v2837
    %v2839 = vrot.slane %v2830, %v2838
    %v2840 = vlaneseq
    %v2841 = vshrl.u32 %v2840, 7
    %v2842 = vsub.s32 2, %v2841
    %v2843 = vrot.slane %v2830, %v2842
    %v2844 = vlaneseq
    %v2845 = vshrl.u32 %v2844, 7
    %v2846 = vsub.s32 3, %v2845
    %v2847 = vrot.slane %v2830, %v2846
    %v2884 = vunpack.c.l.b16 %v2798
    %v2885 = vunpack.c.h.b16 %v2798
    %v2886 = vunpack.c.l.b16 %v2799
    %v2887 = vunpack.c.h.b16 %v2799
    %v2888 = vunpack.c.l.b16 %v2800
    %v2889 = vunpack.c.h.b16 %v2800
    %v2890 = vunpack.c.l.b16 %v2801
    %v2891 = vunpack.c.h.b16 %v2801
    %v2892 = vunpack.c.l.b16 %v2802
    %v2893 = vunpack.c.h.b16 %v2802
    %v2894 = vunpack.c.l.b16 %v2803
    %v2895 = vunpack.c.h.b16 %v2803
    %v2896 = vunpack.c.l.b16 %v2804
    %v2897 = vunpack.c.h.b16 %v2804
    %v2898 = vunpack.c.l.b16 %v2805
    %v2899 = vunpack.c.h.b16 %v2805
    %v2900 = vunpack.c.l.b16 %v2806
    %v2901 = vunpack.c.h.b16 %v2806
    %v2902 = vunpack.c.l.b16 %v2807
    %v2903 = vunpack.c.h.b16 %v2807
    %v2904 = vunpack.c.l.b16 %v2808
    %v2905 = vunpack.c.h.b16 %v2808
    %v2906 = vunpack.c.l.b16 %v2809
    %v2907 = vunpack.c.h.b16 %v2809
    %v2908 = vunpack.c.l.b16 %v2810
    %v2909 = vunpack.c.h.b16 %v2810
    %v2910 = vunpack.c.l.b16 %v2811
    %v2911 = vunpack.c.h.b16 %v2811
    %v2912 = vunpack.c.l.b16 %v2812
    %v2913 = vunpack.c.h.b16 %v2812
    %v2914 = vunpack.c.l.b16 %v2813
    %v2915 = vunpack.c.h.b16 %v2813
    %v2916 = vunpack.c.l.b16 %v2814
    %v2917 = vunpack.c.h.b16 %v2814
    %v2918 = vunpack.c.l.b16 %v2815
    %v2919 = vunpack.c.h.b16 %v2815
    %v2920 = vunpack.c.l.b16 %v2816
    %v2921 = vunpack.c.h.b16 %v2816
    %v2922 = vunpack.c.l.b16 %v2817
    %v2923 = vunpack.c.h.b16 %v2817
    %v2924 = vunpack.c.l.b16 %v2818
    %v2925 = vunpack.c.h.b16 %v2818
    %v2926 = vunpack.c.l.b16 %v2819
    %v2927 = vunpack.c.h.b16 %v2819
    %v2928 = vunpack.c.l.b16 %v2820
    %v2929 = vunpack.c.h.b16 %v2820
    %v2930 = vunpack.c.l.b16 %v2821
    %v2931 = vunpack.c.h.b16 %v2821
    %v2932 = vunpack.c.l.b16 %v2822
    %v2933 = vunpack.c.h.b16 %v2822
    %v2934 = vunpack.c.l.b16 %v2823
    %v2935 = vunpack.c.h.b16 %v2823
    %v2936 = vunpack.c.l.b16 %v2824
    %v2937 = vunpack.c.h.b16 %v2824
    %v2938 = vunpack.c.l.b16 %v2825
    %v2939 = vunpack.c.h.b16 %v2825
    %v2940 = vunpack.c.l.b16 %v2826
    %v2941 = vunpack.c.h.b16 %v2826
    %v2942 = vunpack.c.l.b16 %v2827
    %v2943 = vunpack.c.h.b16 %v2827
    %v2944 = vunpack.c.l.b16 %v2828
    %v2945 = vunpack.c.h.b16 %v2828
    %v2946 = vunpack.c.l.b16 %v2829
    %v2947 = vunpack.c.h.b16 %v2829
    %v2948 = vpack.c.b16 %v2888, %v2884
    %v2949 = vpack.c.b16 %v2889, %v2885
    %v2950 = vpack.c.b16 %v2890, %v2886
    %v2951 = vpack.c.b16 %v2891, %v2887
    %v2952 = vpack.c.b16 %v2896, %v2892
    %v2953 = vpack.c.b16 %v2897, %v2893
    %v2954 = vpack.c.b16 %v2898, %v2894
    %v2955 = vpack.c.b16 %v2899, %v2895
    %v2956 = vpack.c.b16 %v2904, %v2900
    %v2957 = vpack.c.b16 %v2905, %v2901
    %v2958 = vpack.c.b16 %v2906, %v2902
    %v2959 = vpack.c.b16 %v2907, %v2903
    %v2960 = vpack.c.b16 %v2912, %v2908
    %v2961 = vpack.c.b16 %v2913, %v2909
    %v2962 = vpack.c.b16 %v2914, %v2910
    %v2963 = vpack.c.b16 %v2915, %v2911
    %v2964 = vpack.c.b16 %v2920, %v2916
    %v2965 = vpack.c.b16 %v2921, %v2917
    %v2966 = vpack.c.b16 %v2922, %v2918
    %v2967 = vpack.c.b16 %v2923, %v2919
    %v2968 = vpack.c.b16 %v2928, %v2924
    %v2969 = vpack.c.b16 %v2929, %v2925
    %v2970 = vpack.c.b16 %v2930, %v2926
    %v2971 = vpack.c.b16 %v2931, %v2927
    %v2972 = vpack.c.b16 %v2936, %v2932
    %v2973 = vpack.c.b16 %v2937, %v2933
    %v2974 = vpack.c.b16 %v2938, %v2934
    %v2975 = vpack.c.b16 %v2939, %v2935
    %v2976 = vpack.c.b16 %v2944, %v2940
    %v2977 = vpack.c.b16 %v2945, %v2941
    %v2978 = vpack.c.b16 %v2946, %v2942
    %v2979 = vpack.c.b16 %v2947, %v2943
    %3012 = vmatprep.subr.bf16.mxu0 %v2977
    %3013 = vmatpush1.bf16.msra.mxu0 %v2976
    %3014 = vmatprep.subr.bf16.mxu0 %v2973
    %3015 = vmatpush1.bf16.msra.mxu0 %v2972
    %3016 = vmatprep.subr.bf16.mxu0 %v2969
    %3017 = vmatpush1.bf16.msra.mxu0 %v2968
    %3018 = vmatprep.subr.bf16.mxu0 %v2965
    %3019 = vmatpush1.bf16.msra.mxu0 %v2964
    %3020 = vmatprep.subr.bf16.mxu0 %v2961
    %3021 = vmatpush1.bf16.msra.mxu0 %v2960
    %3022 = vmatprep.subr.bf16.mxu0 %v2957
    %3023 = vmatpush1.bf16.msra.mxu0 %v2956
    %3024 = vmatprep.subr.bf16.mxu0 %v2953
    %3025 = vmatpush1.bf16.msra.mxu0 %v2952
    %3026 = vmatprep.subr.bf16.mxu0 %v2949
    %3027 = vmatpush1.bf16.msra.mxu0 %v2948
    %3028 = vmatprep.subr.bf16.mxu0 0
    %3029 = vmatpush2.bf16.msra.mxu0 0
    %3030 = vmatprep.subr.bf16.mxu0 0
    %3031 = vmatpush2.bf16.msra.mxu0 0
    %3032 = vmatprep.subr.bf16.mxu0 0
    %3033 = vmatpush2.bf16.msra.mxu0 0
    %3034 = vmatprep.subr.bf16.mxu0 0
    %3035 = vmatpush2.bf16.msra.mxu0 0
    %3036 = vmatprep.subr.bf16.mxu0 0
    %3037 = vmatpush2.bf16.msra.mxu0 0
    %3038 = vmatprep.subr.bf16.mxu0 0
    %3039 = vmatpush2.bf16.msra.mxu0 0
    %3040 = vmatprep.subr.bf16.mxu0 0
    %3041 = vmatpush2.bf16.msra.mxu0 0
    %3042 = vmatprep.subr.bf16.mxu0 0
    %3043 = vmatpush2.bf16.msra.mxu0 0
    %3044 = vmatprep.mubr.bf16.mxu0 0
    %3045 = vmatmul.mubr.bf16.gmra.mxu0 %v2495
    %v3046 = vpop.f32.mrf.mxu0
    %v3047 = vadd.f32 %v2835, %v3046
    %v3048 = vpop.f32.mrf.mxu0
    %v3049 = vadd.f32 %v2839, %v3048
    %v3050 = vpop.f32.mrf.mxu0
    %v3051 = vpop.f32.mrf.mxu0
    %3052 = vdwg.mxu0
    %3053 = vmatprep.subr.bf16.mxu0 %v2979
    %3054 = vmatpush1.bf16.msra.mxu0 %v2978
    %3055 = vmatprep.subr.bf16.mxu0 %v2975
    %3056 = vmatpush1.bf16.msra.mxu0 %v2974
    %3057 = vmatprep.subr.bf16.mxu0 %v2971
    %3058 = vmatpush1.bf16.msra.mxu0 %v2970
    %3059 = vmatprep.subr.bf16.mxu0 %v2967
    %3060 = vmatpush1.bf16.msra.mxu0 %v2966
    %3061 = vmatprep.subr.bf16.mxu0 %v2963
    %3062 = vmatpush1.bf16.msra.mxu0 %v2962
    %3063 = vmatprep.subr.bf16.mxu0 %v2959
    %3064 = vmatpush1.bf16.msra.mxu0 %v2958
    %3065 = vmatprep.subr.bf16.mxu0 %v2955
    %3066 = vmatpush1.bf16.msra.mxu0 %v2954
    %3067 = vmatprep.subr.bf16.mxu0 %v2951
    %3068 = vmatpush1.bf16.msra.mxu0 %v2950
    %3069 = vmatprep.subr.bf16.mxu0 0
    %3070 = vmatpush2.bf16.msra.mxu0 0
    %3071 = vmatprep.subr.bf16.mxu0 0
    %3072 = vmatpush2.bf16.msra.mxu0 0
    %3073 = vmatprep.subr.bf16.mxu0 0
    %3074 = vmatpush2.bf16.msra.mxu0 0
    %3075 = vmatprep.subr.bf16.mxu0 0
    %3076 = vmatpush2.bf16.msra.mxu0 0
    %3077 = vmatprep.subr.bf16.mxu0 0
    %3078 = vmatpush2.bf16.msra.mxu0 0
    %3079 = vmatprep.subr.bf16.mxu0 0
    %3080 = vmatpush2.bf16.msra.mxu0 0
    %3081 = vmatprep.subr.bf16.mxu0 0
    %3082 = vmatpush2.bf16.msra.mxu0 0
    %3083 = vmatprep.subr.bf16.mxu0 0
    %3084 = vmatpush2.bf16.msra.mxu0 0
    %3085 = vmatprep.mubr.bf16.mxu0 0
    %3086 = vmatmul.mubr.bf16.gmra.mxu0 %v2495
    %v3087 = vpop.f32.mrf.mxu0
    %v3088 = vadd.f32 %v2843, %v3087
    %v3089 = vpop.f32.mrf.mxu0
    %v3090 = vadd.f32 %v2847, %v3089
    %v3091 = vpop.f32.mrf.mxu0
    %v3092 = vpop.f32.mrf.mxu0
    %3093 = vdwg.mxu0
    %v3094 = vld [vmem:[#allocation5] sm:$0xff]
    %v3095 = vpack.c.bf16 %v3094, %v3094
    %v3096 = vld [vmem:[#allocation12] sm:$0xff]
    %v3097 = vld [vmem:[#allocation12 + $0x8] sm:$0xff]
    %v3098 = vld [vmem:[#allocation12 + $0x10] sm:$0xff]
    %v3099 = vld [vmem:[#allocation12 + $0x18] sm:$0xff]
    %v3100 = vld [vmem:[#allocation12 + $0x20] sm:$0xff]
    %v3101 = vld [vmem:[#allocation12 + $0x28] sm:$0xff]
    %v3102 = vld [vmem:[#allocation12 + $0x30] sm:$0xff]
    %v3103 = vld [vmem:[#allocation12 + $0x38] sm:$0xff]
    %v3104 = vld [vmem:[#allocation12 + $0x40] sm:$0xff]
    %v3105 = vld [vmem:[#allocation12 + $0x48] sm:$0xff]
    %v3106 = vld [vmem:[#allocation12 + $0x50] sm:$0xff]
    %v3107 = vld [vmem:[#allocation12 + $0x58] sm:$0xff]
    %v3108 = vld [vmem:[#allocation12 + $0x60] sm:$0xff]
    %v3109 = vld [vmem:[#allocation12 + $0x68] sm:$0xff]
    %v3110 = vld [vmem:[#allocation12 + $0x70] sm:$0xff]
    %v3111 = vld [vmem:[#allocation12 + $0x78] sm:$0xff]
    %v3112 = vld [vmem:[#allocation12 + $0x80] sm:$0xff]
    %v3113 = vld [vmem:[#allocation12 + $0x88] sm:$0xff]
    %v3114 = vld [vmem:[#allocation12 + $0x90] sm:$0xff]
    %v3115 = vld [vmem:[#allocation12 + $0x98] sm:$0xff]
    %v3116 = vld [vmem:[#allocation12 + $0xa0] sm:$0xff]
    %v3117 = vld [vmem:[#allocation12 + $0xa8] sm:$0xff]
    %v3118 = vld [vmem:[#allocation12 + $0xb0] sm:$0xff]
    %v3119 = vld [vmem:[#allocation12 + $0xb8] sm:$0xff]
    %v3120 = vld [vmem:[#allocation12 + $0xc0] sm:$0xff]
    %v3121 = vld [vmem:[#allocation12 + $0xc8] sm:$0xff]
    %v3122 = vld [vmem:[#allocation12 + $0xd0] sm:$0xff]
    %v3123 = vld [vmem:[#allocation12 + $0xd8] sm:$0xff]
    %v3124 = vld [vmem:[#allocation12 + $0xe0] sm:$0xff]
    %v3125 = vld [vmem:[#allocation12 + $0xe8] sm:$0xff]
    %v3126 = vld [vmem:[#allocation12 + $0xf0] sm:$0xff]
    %v3127 = vld [vmem:[#allocation12 + $0xf8] sm:$0xff]
    %v3160 = vunpack.c.l.b16 %v3096
    %v3161 = vunpack.c.h.b16 %v3096
    %v3162 = vunpack.c.l.b16 %v3097
    %v3163 = vunpack.c.h.b16 %v3097
    %v3164 = vunpack.c.l.b16 %v3098
    %v3165 = vunpack.c.h.b16 %v3098
    %v3166 = vunpack.c.l.b16 %v3099
    %v3167 = vunpack.c.h.b16 %v3099
    %v3168 = vunpack.c.l.b16 %v3100
    %v3169 = vunpack.c.h.b16 %v3100
    %v3170 = vunpack.c.l.b16 %v3101
    %v3171 = vunpack.c.h.b16 %v3101
    %v3172 = vunpack.c.l.b16 %v3102
    %v3173 = vunpack.c.h.b16 %v3102
    %v3174 = vunpack.c.l.b16 %v3103
    %v3175 = vunpack.c.h.b16 %v3103
    %v3176 = vunpack.c.l.b16 %v3104
    %v3177 = vunpack.c.h.b16 %v3104
    %v3178 = vunpack.c.l.b16 %v3105
    %v3179 = vunpack.c.h.b16 %v3105
    %v3180 = vunpack.c.l.b16 %v3106
    %v3181 = vunpack.c.h.b16 %v3106
    %v3182 = vunpack.c.l.b16 %v3107
    %v3183 = vunpack.c.h.b16 %v3107
    %v3184 = vunpack.c.l.b16 %v3108
    %v3185 = vunpack.c.h.b16 %v3108
    %v3186 = vunpack.c.l.b16 %v3109
    %v3187 = vunpack.c.h.b16 %v3109
    %v3188 = vunpack.c.l.b16 %v3110
    %v3189 = vunpack.c.h.b16 %v3110
    %v3190 = vunpack.c.l.b16 %v3111
    %v3191 = vunpack.c.h.b16 %v3111
    %v3192 = vunpack.c.l.b16 %v3112
    %v3193 = vunpack.c.h.b16 %v3112
    %v3194 = vunpack.c.l.b16 %v3113
    %v3195 = vunpack.c.h.b16 %v3113
    %v3196 = vunpack.c.l.b16 %v3114
    %v3197 = vunpack.c.h.b16 %v3114
    %v3198 = vunpack.c.l.b16 %v3115
    %v3199 = vunpack.c.h.b16 %v3115
    %v3200 = vunpack.c.l.b16 %v3116
    %v3201 = vunpack.c.h.b16 %v3116
    %v3202 = vunpack.c.l.b16 %v3117
    %v3203 = vunpack.c.h.b16 %v3117
    %v3204 = vunpack.c.l.b16 %v3118
    %v3205 = vunpack.c.h.b16 %v3118
    %v3206 = vunpack.c.l.b16 %v3119
    %v3207 = vunpack.c.h.b16 %v3119
    %v3208 = vunpack.c.l.b16 %v3120
    %v3209 = vunpack.c.h.b16 %v3120
    %v3210 = vunpack.c.l.b16 %v3121
    %v3211 = vunpack.c.h.b16 %v3121
    %v3212 = vunpack.c.l.b16 %v3122
    %v3213 = vunpack.c.h.b16 %v3122
    %v3214 = vunpack.c.l.b16 %v3123
    %v3215 = vunpack.c.h.b16 %v3123
    %v3216 = vunpack.c.l.b16 %v3124
    %v3217 = vunpack.c.h.b16 %v3124
    %v3218 = vunpack.c.l.b16 %v3125
    %v3219 = vunpack.c.h.b16 %v3125
    %v3220 = vunpack.c.l.b16 %v3126
    %v3221 = vunpack.c.h.b16 %v3126
    %v3222 = vunpack.c.l.b16 %v3127
    %v3223 = vunpack.c.h.b16 %v3127
    %v3224 = vpack.c.b16 %v3164, %v3160
    %v3225 = vpack.c.b16 %v3165, %v3161
    %v3226 = vpack.c.b16 %v3166, %v3162
    %v3227 = vpack.c.b16 %v3167, %v3163
    %v3228 = vpack.c.b16 %v3172, %v3168
    %v3229 = vpack.c.b16 %v3173, %v3169
    %v3230 = vpack.c.b16 %v3174, %v3170
    %v3231 = vpack.c.b16 %v3175, %v3171
    %v3232 = vpack.c.b16 %v3180, %v3176
    %v3233 = vpack.c.b16 %v3181, %v3177
    %v3234 = vpack.c.b16 %v3182, %v3178
    %v3235 = vpack.c.b16 %v3183, %v3179
    %v3236 = vpack.c.b16 %v3188, %v3184
    %v3237 = vpack.c.b16 %v3189, %v3185
    %v3238 = vpack.c.b16 %v3190, %v3186
    %v3239 = vpack.c.b16 %v3191, %v3187
    %v3240 = vpack.c.b16 %v3196, %v3192
    %v3241 = vpack.c.b16 %v3197, %v3193
    %v3242 = vpack.c.b16 %v3198, %v3194
    %v3243 = vpack.c.b16 %v3199, %v3195
    %v3244 = vpack.c.b16 %v3204, %v3200
    %v3245 = vpack.c.b16 %v3205, %v3201
    %v3246 = vpack.c.b16 %v3206, %v3202
    %v3247 = vpack.c.b16 %v3207, %v3203
    %v3248 = vpack.c.b16 %v3212, %v3208
    %v3249 = vpack.c.b16 %v3213, %v3209
    %v3250 = vpack.c.b16 %v3214, %v3210
    %v3251 = vpack.c.b16 %v3215, %v3211
    %v3252 = vpack.c.b16 %v3220, %v3216
    %v3253 = vpack.c.b16 %v3221, %v3217
    %v3254 = vpack.c.b16 %v3222, %v3218
    %v3255 = vpack.c.b16 %v3223, %v3219
    %3288 = vmatprep.subr.bf16.mxu0 %v3253
    %3289 = vmatpush1.bf16.msra.mxu0 %v3252
    %3290 = vmatprep.subr.bf16.mxu0 %v3249
    %3291 = vmatpush1.bf16.msra.mxu0 %v3248
    %3292 = vmatprep.subr.bf16.mxu0 %v3245
    %3293 = vmatpush1.bf16.msra.mxu0 %v3244
    %3294 = vmatprep.subr.bf16.mxu0 %v3241
    %3295 = vmatpush1.bf16.msra.mxu0 %v3240
    %3296 = vmatprep.subr.bf16.mxu0 %v3237
    %3297 = vmatpush1.bf16.msra.mxu0 %v3236
    %3298 = vmatprep.subr.bf16.mxu0 %v3233
    %3299 = vmatpush1.bf16.msra.mxu0 %v3232
    %3300 = vmatprep.subr.bf16.mxu0 %v3229
    %3301 = vmatpush1.bf16.msra.mxu0 %v3228
    %3302 = vmatprep.subr.bf16.mxu0 %v3225
    %3303 = vmatpush1.bf16.msra.mxu0 %v3224
    %3304 = vmatprep.subr.bf16.mxu0 0
    %3305 = vmatpush2.bf16.msra.mxu0 0
    %3306 = vmatprep.subr.bf16.mxu0 0
    %3307 = vmatpush2.bf16.msra.mxu0 0
    %3308 = vmatprep.subr.bf16.mxu0 0
    %3309 = vmatpush2.bf16.msra.mxu0 0
    %3310 = vmatprep.subr.bf16.mxu0 0
    %3311 = vmatpush2.bf16.msra.mxu0 0
    %3312 = vmatprep.subr.bf16.mxu0 0
    %3313 = vmatpush2.bf16.msra.mxu0 0
    %3314 = vmatprep.subr.bf16.mxu0 0
    %3315 = vmatpush2.bf16.msra.mxu0 0
    %3316 = vmatprep.subr.bf16.mxu0 0
    %3317 = vmatpush2.bf16.msra.mxu0 0
    %3318 = vmatprep.subr.bf16.mxu0 0
    %3319 = vmatpush2.bf16.msra.mxu0 0
    %3320 = vmatprep.mubr.bf16.mxu0 0
    %3321 = vmatmul.mubr.bf16.gmra.mxu0 %v3095
    %v3322 = vpop.f32.mrf.mxu0
    %v3323 = vadd.f32 0.0, %v3322
    %v3324 = vpop.f32.mrf.mxu0
    %v3325 = vadd.f32 0.0, %v3324
    %v3326 = vpop.f32.mrf.mxu0
    %v3327 = vpop.f32.mrf.mxu0
    %3328 = vdwg.mxu0
    %3329 = vmatprep.subr.bf16.mxu0 %v3255
    %3330 = vmatpush1.bf16.msra.mxu0 %v3254
    %3331 = vmatprep.subr.bf16.mxu0 %v3251
    %3332 = vmatpush1.bf16.msra.mxu0 %v3250
    %3333 = vmatprep.subr.bf16.mxu0 %v3247
    %3334 = vmatpush1.bf16.msra.mxu0 %v3246
    %3335 = vmatprep.subr.bf16.mxu0 %v3243
    %3336 = vmatpush1.bf16.msra.mxu0 %v3242
    %3337 = vmatprep.subr.bf16.mxu0 %v3239
    %3338 = vmatpush1.bf16.msra.mxu0 %v3238
    %3339 = vmatprep.subr.bf16.mxu0 %v3235
    %3340 = vmatpush1.bf16.msra.mxu0 %v3234
    %3341 = vmatprep.subr.bf16.mxu0 %v3231
    %3342 = vmatpush1.bf16.msra.mxu0 %v3230
    %3343 = vmatprep.subr.bf16.mxu0 %v3227
    %3344 = vmatpush1.bf16.msra.mxu0 %v3226
    %3345 = vmatprep.subr.bf16.mxu0 0
    %3346 = vmatpush2.bf16.msra.mxu0 0
    %3347 = vmatprep.subr.bf16.mxu0 0
    %3348 = vmatpush2.bf16.msra.mxu0 0
    %3349 = vmatprep.subr.bf16.mxu0 0
    %3350 = vmatpush2.bf16.msra.mxu0 0
    %3351 = vmatprep.subr.bf16.mxu0 0
    %3352 = vmatpush2.bf16.msra.mxu0 0
    %3353 = vmatprep.subr.bf16.mxu0 0
    %3354 = vmatpush2.bf16.msra.mxu0 0
    %3355 = vmatprep.subr.bf16.mxu0 0
    %3356 = vmatpush2.bf16.msra.mxu0 0
    %3357 = vmatprep.subr.bf16.mxu0 0
    %3358 = vmatpush2.bf16.msra.mxu0 0
    %3359 = vmatprep.subr.bf16.mxu0 0
    %3360 = vmatpush2.bf16.msra.mxu0 0
    %3361 = vmatprep.mubr.bf16.mxu0 0
    %3362 = vmatmul.mubr.bf16.gmra.mxu0 %v3095
    %v3363 = vpop.f32.mrf.mxu0
    %v3364 = vadd.f32 0.0, %v3363
    %v3365 = vpop.f32.mrf.mxu0
    %v3366 = vadd.f32 0.0, %v3365
    %v3367 = vpop.f32.mrf.mxu0
    %v3368 = vpop.f32.mrf.mxu0
    %3369 = vdwg.mxu0
    %v3370 = vadd.f32 %v3047, %v3323
    %v3371 = vadd.f32 %v3049, %v3325
    %v3372 = vadd.f32 %v3088, %v3364
    %v3373 = vadd.f32 %v3090, %v3366
    %v3374 = vld [vmem:[#allocation6] sm:$0xff]
    %v3375 = vxor.u32 %v3370, 2147483648
    %v3376 = vxor.u32 %v3371, 2147483648
    %v3377 = vxor.u32 %v3372, 2147483648
    %v3378 = vmul.f32 %v3375, 1.442695
    %v3379 = vpow.pop %v3378
    %v3380 = vmul.f32 %v3376, 1.442695
    %v3381 = vpow.pop %v3380
    %v3382 = vmul.f32 %v3377, 1.442695
    %v3383 = vpow.pop %v3382
    %v3384 = vadd.f32 %v3379, 1.0
    %v3385 = vadd.f32 %v3381, 1.0
    %v3386 = vadd.f32 %v3383, 1.0
    %v3387 = vrcp.pop %v3384
    %v3388 = vmul.f32 1.0, %v3387
    %v3389 = vrcp.pop %v3385
    %v3390 = vmul.f32 1.0, %v3389
    %v3391 = vrcp.pop %v3386
    %v3392 = vmul.f32 1.0, %v3391
    %v3393 = vtanh.pop %v3373
    %v3394 = vmul.f32 %v3390, %v3374
    %v3395 = vmul.f32 %v3388, %v3393
    %v3396 = vadd.f32 %v3394, %v3395
    %v3397 = vtanh.pop %v3396
    %v3398 = vmul.f32 %v3392, %v3397
    %3399 = vst [vmem:[#allocation5] sm:$0xff] %v3398
    %3400 = vst [vmem:[#allocation6] sm:$0xff] %v3396
    %3401 = vst [vmem:[#allocation3] sm:$0xff] %v2797
    %3402 = vst [vmem:[#allocation4] sm:$0xff] %v2795
    %v3403 = vld [vmem:[#allocation3] sm:$0xff]
    %v3404 = vld [vmem:[#allocation4] sm:$0xff]
    %v3405 = vld [vmem:[#allocation2 + $0x80] sm:$0xff]
    %v3406 = vld [vmem:[#allocation2 + $0x88] sm:$0xff]
    %v3407 = vld [vmem:[#allocation2 + $0x90] sm:$0xff]
    %v3408 = vld [vmem:[#allocation2 + $0x98] sm:$0xff]
    %v3409 = vpack.c.bf16 %v3403, %v3403
    %v3410 = vld [vmem:[#allocation7] sm:$0xff]
    %v3411 = vld [vmem:[#allocation7 + $0x8] sm:$0xff]
    %v3412 = vld [vmem:[#allocation7 + $0x10] sm:$0xff]
    %v3413 = vld [vmem:[#allocation7 + $0x18] sm:$0xff]
    %v3414 = vld [vmem:[#allocation7 + $0x20] sm:$0xff]
    %v3415 = vld [vmem:[#allocation7 + $0x28] sm:$0xff]
    %v3416 = vld [vmem:[#allocation7 + $0x30] sm:$0xff]
    %v3417 = vld [vmem:[#allocation7 + $0x38] sm:$0xff]
    %v3418 = vld [vmem:[#allocation7 + $0x40] sm:$0xff]
    %v3419 = vld [vmem:[#allocation7 + $0x48] sm:$0xff]
    %v3420 = vld [vmem:[#allocation7 + $0x50] sm:$0xff]
    %v3421 = vld [vmem:[#allocation7 + $0x58] sm:$0xff]
    %v3422 = vld [vmem:[#allocation7 + $0x60] sm:$0xff]
    %v3423 = vld [vmem:[#allocation7 + $0x68] sm:$0xff]
    %v3424 = vld [vmem:[#allocation7 + $0x70] sm:$0xff]
    %v3425 = vld [vmem:[#allocation7 + $0x78] sm:$0xff]
    %v3426 = vld [vmem:[#allocation7 + $0x80] sm:$0xff]
    %v3427 = vld [vmem:[#allocation7 + $0x88] sm:$0xff]
    %v3428 = vld [vmem:[#allocation7 + $0x90] sm:$0xff]
    %v3429 = vld [vmem:[#allocation7 + $0x98] sm:$0xff]
    %v3430 = vld [vmem:[#allocation7 + $0xa0] sm:$0xff]
    %v3431 = vld [vmem:[#allocation7 + $0xa8] sm:$0xff]
    %v3432 = vld [vmem:[#allocation7 + $0xb0] sm:$0xff]
    %v3433 = vld [vmem:[#allocation7 + $0xb8] sm:$0xff]
    %v3434 = vld [vmem:[#allocation7 + $0xc0] sm:$0xff]
    %v3435 = vld [vmem:[#allocation7 + $0xc8] sm:$0xff]
    %v3436 = vld [vmem:[#allocation7 + $0xd0] sm:$0xff]
    %v3437 = vld [vmem:[#allocation7 + $0xd8] sm:$0xff]
    %v3438 = vld [vmem:[#allocation7 + $0xe0] sm:$0xff]
    %v3439 = vld [vmem:[#allocation7 + $0xe8] sm:$0xff]
    %v3440 = vld [vmem:[#allocation7 + $0xf0] sm:$0xff]
    %v3441 = vld [vmem:[#allocation7 + $0xf8] sm:$0xff]
    %v3474 = vunpack.c.l.b16 %v3410
    %v3475 = vunpack.c.h.b16 %v3410
    %v3476 = vunpack.c.l.b16 %v3411
    %v3477 = vunpack.c.h.b16 %v3411
    %v3478 = vunpack.c.l.b16 %v3412
    %v3479 = vunpack.c.h.b16 %v3412
    %v3480 = vunpack.c.l.b16 %v3413
    %v3481 = vunpack.c.h.b16 %v3413
    %v3482 = vunpack.c.l.b16 %v3414
    %v3483 = vunpack.c.h.b16 %v3414
    %v3484 = vunpack.c.l.b16 %v3415
    %v3485 = vunpack.c.h.b16 %v3415
    %v3486 = vunpack.c.l.b16 %v3416
    %v3487 = vunpack.c.h.b16 %v3416
    %v3488 = vunpack.c.l.b16 %v3417
    %v3489 = vunpack.c.h.b16 %v3417
    %v3490 = vunpack.c.l.b16 %v3418
    %v3491 = vunpack.c.h.b16 %v3418
    %v3492 = vunpack.c.l.b16 %v3419
    %v3493 = vunpack.c.h.b16 %v3419
    %v3494 = vunpack.c.l.b16 %v3420
    %v3495 = vunpack.c.h.b16 %v3420
    %v3496 = vunpack.c.l.b16 %v3421
    %v3497 = vunpack.c.h.b16 %v3421
    %v3498 = vunpack.c.l.b16 %v3422
    %v3499 = vunpack.c.h.b16 %v3422
    %v3500 = vunpack.c.l.b16 %v3423
    %v3501 = vunpack.c.h.b16 %v3423
    %v3502 = vunpack.c.l.b16 %v3424
    %v3503 = vunpack.c.h.b16 %v3424
    %v3504 = vunpack.c.l.b16 %v3425
    %v3505 = vunpack.c.h.b16 %v3425
    %v3506 = vunpack.c.l.b16 %v3426
    %v3507 = vunpack.c.h.b16 %v3426
    %v3508 = vunpack.c.l.b16 %v3427
    %v3509 = vunpack.c.h.b16 %v3427
    %v3510 = vunpack.c.l.b16 %v3428
    %v3511 = vunpack.c.h.b16 %v3428
    %v3512 = vunpack.c.l.b16 %v3429
    %v3513 = vunpack.c.h.b16 %v3429
    %v3514 = vunpack.c.l.b16 %v3430
    %v3515 = vunpack.c.h.b16 %v3430
    %v3516 = vunpack.c.l.b16 %v3431
    %v3517 = vunpack.c.h.b16 %v3431
    %v3518 = vunpack.c.l.b16 %v3432
    %v3519 = vunpack.c.h.b16 %v3432
    %v3520 = vunpack.c.l.b16 %v3433
    %v3521 = vunpack.c.h.b16 %v3433
    %v3522 = vunpack.c.l.b16 %v3434
    %v3523 = vunpack.c.h.b16 %v3434
    %v3524 = vunpack.c.l.b16 %v3435
    %v3525 = vunpack.c.h.b16 %v3435
    %v3526 = vunpack.c.l.b16 %v3436
    %v3527 = vunpack.c.h.b16 %v3436
    %v3528 = vunpack.c.l.b16 %v3437
    %v3529 = vunpack.c.h.b16 %v3437
    %v3530 = vunpack.c.l.b16 %v3438
    %v3531 = vunpack.c.h.b16 %v3438
    %v3532 = vunpack.c.l.b16 %v3439
    %v3533 = vunpack.c.h.b16 %v3439
    %v3534 = vunpack.c.l.b16 %v3440
    %v3535 = vunpack.c.h.b16 %v3440
    %v3536 = vunpack.c.l.b16 %v3441
    %v3537 = vunpack.c.h.b16 %v3441
    %v3538 = vpack.c.b16 %v3478, %v3474
    %v3539 = vpack.c.b16 %v3479, %v3475
    %v3540 = vpack.c.b16 %v3480, %v3476
    %v3541 = vpack.c.b16 %v3481, %v3477
    %v3542 = vpack.c.b16 %v3486, %v3482
    %v3543 = vpack.c.b16 %v3487, %v3483
    %v3544 = vpack.c.b16 %v3488, %v3484
    %v3545 = vpack.c.b16 %v3489, %v3485
    %v3546 = vpack.c.b16 %v3494, %v3490
    %v3547 = vpack.c.b16 %v3495, %v3491
    %v3548 = vpack.c.b16 %v3496, %v3492
    %v3549 = vpack.c.b16 %v3497, %v3493
    %v3550 = vpack.c.b16 %v3502, %v3498
    %v3551 = vpack.c.b16 %v3503, %v3499
    %v3552 = vpack.c.b16 %v3504, %v3500
    %v3553 = vpack.c.b16 %v3505, %v3501
    %v3554 = vpack.c.b16 %v3510, %v3506
    %v3555 = vpack.c.b16 %v3511, %v3507
    %v3556 = vpack.c.b16 %v3512, %v3508
    %v3557 = vpack.c.b16 %v3513, %v3509
    %v3558 = vpack.c.b16 %v3518, %v3514
    %v3559 = vpack.c.b16 %v3519, %v3515
    %v3560 = vpack.c.b16 %v3520, %v3516
    %v3561 = vpack.c.b16 %v3521, %v3517
    %v3562 = vpack.c.b16 %v3526, %v3522
    %v3563 = vpack.c.b16 %v3527, %v3523
    %v3564 = vpack.c.b16 %v3528, %v3524
    %v3565 = vpack.c.b16 %v3529, %v3525
    %v3566 = vpack.c.b16 %v3534, %v3530
    %v3567 = vpack.c.b16 %v3535, %v3531
    %v3568 = vpack.c.b16 %v3536, %v3532
    %v3569 = vpack.c.b16 %v3537, %v3533
    %3602 = vmatprep.subr.bf16.mxu0 %v3567
    %3603 = vmatpush1.bf16.msra.mxu0 %v3566
    %3604 = vmatprep.subr.bf16.mxu0 %v3563
    %3605 = vmatpush1.bf16.msra.mxu0 %v3562
    %3606 = vmatprep.subr.bf16.mxu0 %v3559
    %3607 = vmatpush1.bf16.msra.mxu0 %v3558
    %3608 = vmatprep.subr.bf16.mxu0 %v3555
    %3609 = vmatpush1.bf16.msra.mxu0 %v3554
    %3610 = vmatprep.subr.bf16.mxu0 %v3551
    %3611 = vmatpush1.bf16.msra.mxu0 %v3550
    %3612 = vmatprep.subr.bf16.mxu0 %v3547
    %3613 = vmatpush1.bf16.msra.mxu0 %v3546
    %3614 = vmatprep.subr.bf16.mxu0 %v3543
    %3615 = vmatpush1.bf16.msra.mxu0 %v3542
    %3616 = vmatprep.subr.bf16.mxu0 %v3539
    %3617 = vmatpush1.bf16.msra.mxu0 %v3538
    %3618 = vmatprep.subr.bf16.mxu0 0
    %3619 = vmatpush2.bf16.msra.mxu0 0
    %3620 = vmatprep.subr.bf16.mxu0 0
    %3621 = vmatpush2.bf16.msra.mxu0 0
    %3622 = vmatprep.subr.bf16.mxu0 0
    %3623 = vmatpush2.bf16.msra.mxu0 0
    %3624 = vmatprep.subr.bf16.mxu0 0
    %3625 = vmatpush2.bf16.msra.mxu0 0
    %3626 = vmatprep.subr.bf16.mxu0 0
    %3627 = vmatpush2.bf16.msra.mxu0 0
    %3628 = vmatprep.subr.bf16.mxu0 0
    %3629 = vmatpush2.bf16.msra.mxu0 0
    %3630 = vmatprep.subr.bf16.mxu0 0
    %3631 = vmatpush2.bf16.msra.mxu0 0
    %3632 = vmatprep.subr.bf16.mxu0 0
    %3633 = vmatpush2.bf16.msra.mxu0 0
    %3634 = vmatprep.mubr.bf16.mxu0 0
    %3635 = vmatmul.mubr.bf16.gmra.mxu0 %v3409
    %v3636 = vpop.f32.mrf.mxu0
    %v3637 = vadd.f32 0.0, %v3636
    %v3638 = vpop.f32.mrf.mxu0
    %v3639 = vadd.f32 0.0, %v3638
    %v3640 = vpop.f32.mrf.mxu0
    %v3641 = vpop.f32.mrf.mxu0
    %3642 = vdwg.mxu0
    %3643 = vmatprep.subr.bf16.mxu0 %v3569
    %3644 = vmatpush1.bf16.msra.mxu0 %v3568
    %3645 = vmatprep.subr.bf16.mxu0 %v3565
    %3646 = vmatpush1.bf16.msra.mxu0 %v3564
    %3647 = vmatprep.subr.bf16.mxu0 %v3561
    %3648 = vmatpush1.bf16.msra.mxu0 %v3560
    %3649 = vmatprep.subr.bf16.mxu0 %v3557
    %3650 = vmatpush1.bf16.msra.mxu0 %v3556
    %3651 = vmatprep.subr.bf16.mxu0 %v3553
    %3652 = vmatpush1.bf16.msra.mxu0 %v3552
    %3653 = vmatprep.subr.bf16.mxu0 %v3549
    %3654 = vmatpush1.bf16.msra.mxu0 %v3548
    %3655 = vmatprep.subr.bf16.mxu0 %v3545
    %3656 = vmatpush1.bf16.msra.mxu0 %v3544
    %3657 = vmatprep.subr.bf16.mxu0 %v3541
    %3658 = vmatpush1.bf16.msra.mxu0 %v3540
    %3659 = vmatprep.subr.bf16.mxu0 0
    %3660 = vmatpush2.bf16.msra.mxu0 0
    %3661 = vmatprep.subr.bf16.mxu0 0
    %3662 = vmatpush2.bf16.msra.mxu0 0
    %3663 = vmatprep.subr.bf16.mxu0 0
    %3664 = vmatpush2.bf16.msra.mxu0 0
    %3665 = vmatprep.subr.bf16.mxu0 0
    %3666 = vmatpush2.bf16.msra.mxu0 0
    %3667 = vmatprep.subr.bf16.mxu0 0
    %3668 = vmatpush2.bf16.msra.mxu0 0
    %3669 = vmatprep.subr.bf16.mxu0 0
    %3670 = vmatpush2.bf16.msra.mxu0 0
    %3671 = vmatprep.subr.bf16.mxu0 0
    %3672 = vmatpush2.bf16.msra.mxu0 0
    %3673 = vmatprep.subr.bf16.mxu0 0
    %3674 = vmatpush2.bf16.msra.mxu0 0
    %3675 = vmatprep.mubr.bf16.mxu0 0
    %3676 = vmatmul.mubr.bf16.gmra.mxu0 %v3409
    %v3677 = vpop.f32.mrf.mxu0
    %v3678 = vadd.f32 0.0, %v3677
    %v3679 = vpop.f32.mrf.mxu0
    %v3680 = vadd.f32 0.0, %v3679
    %v3681 = vpop.f32.mrf.mxu0
    %v3682 = vpop.f32.mrf.mxu0
    %3683 = vdwg.mxu0
    %v3684 = vadd.f32 %v3405, %v3637
    %v3685 = vadd.f32 %v3406, %v3639
    %v3686 = vadd.f32 %v3407, %v3678
    %v3687 = vadd.f32 %v3408, %v3680
    %v3688 = vxor.u32 %v3684, 2147483648
    %v3689 = vxor.u32 %v3685, 2147483648
    %v3690 = vxor.u32 %v3686, 2147483648
    %v3691 = vmul.f32 %v3688, 1.442695
    %v3692 = vpow.pop %v3691
    %v3693 = vmul.f32 %v3689, 1.442695
    %v3694 = vpow.pop %v3693
    %v3695 = vmul.f32 %v3690, 1.442695
    %v3696 = vpow.pop %v3695
    %v3697 = vadd.f32 %v3692, 1.0
    %v3698 = vadd.f32 %v3694, 1.0
    %v3699 = vadd.f32 %v3696, 1.0
    %v3700 = vrcp.pop %v3697
    %v3701 = vmul.f32 1.0, %v3700
    %v3702 = vrcp.pop %v3698
    %v3703 = vmul.f32 1.0, %v3702
    %v3704 = vrcp.pop %v3699
    %v3705 = vmul.f32 1.0, %v3704
    %v3706 = vtanh.pop %v3687
    %v3707 = vmul.f32 %v3703, %v3404
    %v3708 = vmul.f32 %v3701, %v3706
    %v3709 = vadd.f32 %v3707, %v3708
    %v3710 = vtanh.pop %v3709
    %v3711 = vmul.f32 %v3705, %v3710
    %v3712 = vld [vmem:[#allocation10] sm:$0xff]
    %v3713 = vld [vmem:[#allocation10 + $0x8] sm:$0xff]
    %v3714 = vld [vmem:[#allocation10 + $0x10] sm:$0xff]
    %v3715 = vld [vmem:[#allocation10 + $0x18] sm:$0xff]
    %v3716 = vld [vmem:[#allocation10 + $0x20] sm:$0xff]
    %v3717 = vld [vmem:[#allocation10 + $0x28] sm:$0xff]
    %v3718 = vld [vmem:[#allocation10 + $0x30] sm:$0xff]
    %v3719 = vld [vmem:[#allocation10 + $0x38] sm:$0xff]
    %v3720 = vld [vmem:[#allocation10 + $0x40] sm:$0xff]
    %v3721 = vld [vmem:[#allocation10 + $0x48] sm:$0xff]
    %v3722 = vld [vmem:[#allocation10 + $0x50] sm:$0xff]
    %v3723 = vld [vmem:[#allocation10 + $0x58] sm:$0xff]
    %v3724 = vld [vmem:[#allocation10 + $0x60] sm:$0xff]
    %v3725 = vld [vmem:[#allocation10 + $0x68] sm:$0xff]
    %v3726 = vld [vmem:[#allocation10 + $0x70] sm:$0xff]
    %v3727 = vld [vmem:[#allocation10 + $0x78] sm:$0xff]
    %v3728 = vld [vmem:[#allocation10 + $0x80] sm:$0xff]
    %v3729 = vld [vmem:[#allocation10 + $0x88] sm:$0xff]
    %v3730 = vld [vmem:[#allocation10 + $0x90] sm:$0xff]
    %v3731 = vld [vmem:[#allocation10 + $0x98] sm:$0xff]
    %v3732 = vld [vmem:[#allocation10 + $0xa0] sm:$0xff]
    %v3733 = vld [vmem:[#allocation10 + $0xa8] sm:$0xff]
    %v3734 = vld [vmem:[#allocation10 + $0xb0] sm:$0xff]
    %v3735 = vld [vmem:[#allocation10 + $0xb8] sm:$0xff]
    %v3736 = vld [vmem:[#allocation10 + $0xc0] sm:$0xff]
    %v3737 = vld [vmem:[#allocation10 + $0xc8] sm:$0xff]
    %v3738 = vld [vmem:[#allocation10 + $0xd0] sm:$0xff]
    %v3739 = vld [vmem:[#allocation10 + $0xd8] sm:$0xff]
    %v3740 = vld [vmem:[#allocation10 + $0xe0] sm:$0xff]
    %v3741 = vld [vmem:[#allocation10 + $0xe8] sm:$0xff]
    %v3742 = vld [vmem:[#allocation10 + $0xf0] sm:$0xff]
    %v3743 = vld [vmem:[#allocation10 + $0xf8] sm:$0xff]
    %v3744 = vld [vmem:[%s6] sm:$0xf]
    %v3746 = vlaneseq
    %v3747 = vshrl.u32 %v3746, 7
    %v3748 = vsub.s32 0, %v3747
    %v3749 = vrot.slane %v3744, %v3748
    %v3750 = vlaneseq
    %v3751 = vshrl.u32 %v3750, 7
    %v3752 = vsub.s32 1, %v3751
    %v3753 = vrot.slane %v3744, %v3752
    %v3754 = vlaneseq
    %v3755 = vshrl.u32 %v3754, 7
    %v3756 = vsub.s32 2, %v3755
    %v3757 = vrot.slane %v3744, %v3756
    %v3758 = vlaneseq
    %v3759 = vshrl.u32 %v3758, 7
    %v3760 = vsub.s32 3, %v3759
    %v3761 = vrot.slane %v3744, %v3760
    %v3798 = vunpack.c.l.b16 %v3712
    %v3799 = vunpack.c.h.b16 %v3712
    %v3800 = vunpack.c.l.b16 %v3713
    %v3801 = vunpack.c.h.b16 %v3713
    %v3802 = vunpack.c.l.b16 %v3714
    %v3803 = vunpack.c.h.b16 %v3714
    %v3804 = vunpack.c.l.b16 %v3715
    %v3805 = vunpack.c.h.b16 %v3715
    %v3806 = vunpack.c.l.b16 %v3716
    %v3807 = vunpack.c.h.b16 %v3716
    %v3808 = vunpack.c.l.b16 %v3717
    %v3809 = vunpack.c.h.b16 %v3717
    %v3810 = vunpack.c.l.b16 %v3718
    %v3811 = vunpack.c.h.b16 %v3718
    %v3812 = vunpack.c.l.b16 %v3719
    %v3813 = vunpack.c.h.b16 %v3719
    %v3814 = vunpack.c.l.b16 %v3720
    %v3815 = vunpack.c.h.b16 %v3720
    %v3816 = vunpack.c.l.b16 %v3721
    %v3817 = vunpack.c.h.b16 %v3721
    %v3818 = vunpack.c.l.b16 %v3722
    %v3819 = vunpack.c.h.b16 %v3722
    %v3820 = vunpack.c.l.b16 %v3723
    %v3821 = vunpack.c.h.b16 %v3723
    %v3822 = vunpack.c.l.b16 %v3724
    %v3823 = vunpack.c.h.b16 %v3724
    %v3824 = vunpack.c.l.b16 %v3725
    %v3825 = vunpack.c.h.b16 %v3725
    %v3826 = vunpack.c.l.b16 %v3726
    %v3827 = vunpack.c.h.b16 %v3726
    %v3828 = vunpack.c.l.b16 %v3727
    %v3829 = vunpack.c.h.b16 %v3727
    %v3830 = vunpack.c.l.b16 %v3728
    %v3831 = vunpack.c.h.b16 %v3728
    %v3832 = vunpack.c.l.b16 %v3729
    %v3833 = vunpack.c.h.b16 %v3729
    %v3834 = vunpack.c.l.b16 %v3730
    %v3835 = vunpack.c.h.b16 %v3730
    %v3836 = vunpack.c.l.b16 %v3731
    %v3837 = vunpack.c.h.b16 %v3731
    %v3838 = vunpack.c.l.b16 %v3732
    %v3839 = vunpack.c.h.b16 %v3732
    %v3840 = vunpack.c.l.b16 %v3733
    %v3841 = vunpack.c.h.b16 %v3733
    %v3842 = vunpack.c.l.b16 %v3734
    %v3843 = vunpack.c.h.b16 %v3734
    %v3844 = vunpack.c.l.b16 %v3735
    %v3845 = vunpack.c.h.b16 %v3735
    %v3846 = vunpack.c.l.b16 %v3736
    %v3847 = vunpack.c.h.b16 %v3736
    %v3848 = vunpack.c.l.b16 %v3737
    %v3849 = vunpack.c.h.b16 %v3737
    %v3850 = vunpack.c.l.b16 %v3738
    %v3851 = vunpack.c.h.b16 %v3738
    %v3852 = vunpack.c.l.b16 %v3739
    %v3853 = vunpack.c.h.b16 %v3739
    %v3854 = vunpack.c.l.b16 %v3740
    %v3855 = vunpack.c.h.b16 %v3740
    %v3856 = vunpack.c.l.b16 %v3741
    %v3857 = vunpack.c.h.b16 %v3741
    %v3858 = vunpack.c.l.b16 %v3742
    %v3859 = vunpack.c.h.b16 %v3742
    %v3860 = vunpack.c.l.b16 %v3743
    %v3861 = vunpack.c.h.b16 %v3743
    %v3862 = vpack.c.b16 %v3802, %v3798
    %v3863 = vpack.c.b16 %v3803, %v3799
    %v3864 = vpack.c.b16 %v3804, %v3800
    %v3865 = vpack.c.b16 %v3805, %v3801
    %v3866 = vpack.c.b16 %v3810, %v3806
    %v3867 = vpack.c.b16 %v3811, %v3807
    %v3868 = vpack.c.b16 %v3812, %v3808
    %v3869 = vpack.c.b16 %v3813, %v3809
    %v3870 = vpack.c.b16 %v3818, %v3814
    %v3871 = vpack.c.b16 %v3819, %v3815
    %v3872 = vpack.c.b16 %v3820, %v3816
    %v3873 = vpack.c.b16 %v3821, %v3817
    %v3874 = vpack.c.b16 %v3826, %v3822
    %v3875 = vpack.c.b16 %v3827, %v3823
    %v3876 = vpack.c.b16 %v3828, %v3824
    %v3877 = vpack.c.b16 %v3829, %v3825
    %v3878 = vpack.c.b16 %v3834, %v3830
    %v3879 = vpack.c.b16 %v3835, %v3831
    %v3880 = vpack.c.b16 %v3836, %v3832
    %v3881 = vpack.c.b16 %v3837, %v3833
    %v3882 = vpack.c.b16 %v3842, %v3838
    %v3883 = vpack.c.b16 %v3843, %v3839
    %v3884 = vpack.c.b16 %v3844, %v3840
    %v3885 = vpack.c.b16 %v3845, %v3841
    %v3886 = vpack.c.b16 %v3850, %v3846
    %v3887 = vpack.c.b16 %v3851, %v3847
    %v3888 = vpack.c.b16 %v3852, %v3848
    %v3889 = vpack.c.b16 %v3853, %v3849
    %v3890 = vpack.c.b16 %v3858, %v3854
    %v3891 = vpack.c.b16 %v3859, %v3855
    %v3892 = vpack.c.b16 %v3860, %v3856
    %v3893 = vpack.c.b16 %v3861, %v3857
    %3926 = vmatprep.subr.bf16.mxu0 %v3891
    %3927 = vmatpush1.bf16.msra.mxu0 %v3890
    %3928 = vmatprep.subr.bf16.mxu0 %v3887
    %3929 = vmatpush1.bf16.msra.mxu0 %v3886
    %3930 = vmatprep.subr.bf16.mxu0 %v3883
    %3931 = vmatpush1.bf16.msra.mxu0 %v3882
    %3932 = vmatprep.subr.bf16.mxu0 %v3879
    %3933 = vmatpush1.bf16.msra.mxu0 %v3878
    %3934 = vmatprep.subr.bf16.mxu0 %v3875
    %3935 = vmatpush1.bf16.msra.mxu0 %v3874
    %3936 = vmatprep.subr.bf16.mxu0 %v3871
    %3937 = vmatpush1.bf16.msra.mxu0 %v3870
    %3938 = vmatprep.subr.bf16.mxu0 %v3867
    %3939 = vmatpush1.bf16.msra.mxu0 %v3866
    %3940 = vmatprep.subr.bf16.mxu0 %v3863
    %3941 = vmatpush1.bf16.msra.mxu0 %v3862
    %3942 = vmatprep.subr.bf16.mxu0 0
    %3943 = vmatpush2.bf16.msra.mxu0 0
    %3944 = vmatprep.subr.bf16.mxu0 0
    %3945 = vmatpush2.bf16.msra.mxu0 0
    %3946 = vmatprep.subr.bf16.mxu0 0
    %3947 = vmatpush2.bf16.msra.mxu0 0
    %3948 = vmatprep.subr.bf16.mxu0 0
    %3949 = vmatpush2.bf16.msra.mxu0 0
    %3950 = vmatprep.subr.bf16.mxu0 0
    %3951 = vmatpush2.bf16.msra.mxu0 0
    %3952 = vmatprep.subr.bf16.mxu0 0
    %3953 = vmatpush2.bf16.msra.mxu0 0
    %3954 = vmatprep.subr.bf16.mxu0 0
    %3955 = vmatpush2.bf16.msra.mxu0 0
    %3956 = vmatprep.subr.bf16.mxu0 0
    %3957 = vmatpush2.bf16.msra.mxu0 0
    %3958 = vmatprep.mubr.bf16.mxu0 0
    %3959 = vmatmul.mubr.bf16.gmra.mxu0 %v3409
    %v3960 = vpop.f32.mrf.mxu0
    %v3961 = vadd.f32 %v3749, %v3960
    %v3962 = vpop.f32.mrf.mxu0
    %v3963 = vadd.f32 %v3753, %v3962
    %v3964 = vpop.f32.mrf.mxu0
    %v3965 = vpop.f32.mrf.mxu0
    %3966 = vdwg.mxu0
    %3967 = vmatprep.subr.bf16.mxu0 %v3893
    %3968 = vmatpush1.bf16.msra.mxu0 %v3892
    %3969 = vmatprep.subr.bf16.mxu0 %v3889
    %3970 = vmatpush1.bf16.msra.mxu0 %v3888
    %3971 = vmatprep.subr.bf16.mxu0 %v3885
    %3972 = vmatpush1.bf16.msra.mxu0 %v3884
    %3973 = vmatprep.subr.bf16.mxu0 %v3881
    %3974 = vmatpush1.bf16.msra.mxu0 %v3880
    %3975 = vmatprep.subr.bf16.mxu0 %v3877
    %3976 = vmatpush1.bf16.msra.mxu0 %v3876
    %3977 = vmatprep.subr.bf16.mxu0 %v3873
    %3978 = vmatpush1.bf16.msra.mxu0 %v3872
    %3979 = vmatprep.subr.bf16.mxu0 %v3869
    %3980 = vmatpush1.bf16.msra.mxu0 %v3868
    %3981 = vmatprep.subr.bf16.mxu0 %v3865
    %3982 = vmatpush1.bf16.msra.mxu0 %v3864
    %3983 = vmatprep.subr.bf16.mxu0 0
    %3984 = vmatpush2.bf16.msra.mxu0 0
    %3985 = vmatprep.subr.bf16.mxu0 0
    %3986 = vmatpush2.bf16.msra.mxu0 0
    %3987 = vmatprep.subr.bf16.mxu0 0
    %3988 = vmatpush2.bf16.msra.mxu0 0
    %3989 = vmatprep.subr.bf16.mxu0 0
    %3990 = vmatpush2.bf16.msra.mxu0 0
    %3991 = vmatprep.subr.bf16.mxu0 0
    %3992 = vmatpush2.bf16.msra.mxu0 0
    %3993 = vmatprep.subr.bf16.mxu0 0
    %3994 = vmatpush2.bf16.msra.mxu0 0
    %3995 = vmatprep.subr.bf16.mxu0 0
    %3996 = vmatpush2.bf16.msra.mxu0 0
    %3997 = vmatprep.subr.bf16.mxu0 0
    %3998 = vmatpush2.bf16.msra.mxu0 0
    %3999 = vmatprep.mubr.bf16.mxu0 0
    %4000 = vmatmul.mubr.bf16.gmra.mxu0 %v3409
    %v4001 = vpop.f32.mrf.mxu0
    %v4002 = vadd.f32 %v3757, %v4001
    %v4003 = vpop.f32.mrf.mxu0
    %v4004 = vadd.f32 %v3761, %v4003
    %v4005 = vpop.f32.mrf.mxu0
    %v4006 = vpop.f32.mrf.mxu0
    %4007 = vdwg.mxu0
    %v4008 = vld [vmem:[#allocation5] sm:$0xff]
    %v4009 = vpack.c.bf16 %v4008, %v4008
    %v4010 = vld [vmem:[#allocation12] sm:$0xff]
    %v4011 = vld [vmem:[#allocation12 + $0x8] sm:$0xff]
    %v4012 = vld [vmem:[#allocation12 + $0x10] sm:$0xff]
    %v4013 = vld [vmem:[#allocation12 + $0x18] sm:$0xff]
    %v4014 = vld [vmem:[#allocation12 + $0x20] sm:$0xff]
    %v4015 = vld [vmem:[#allocation12 + $0x28] sm:$0xff]
    %v4016 = vld [vmem:[#allocation12 + $0x30] sm:$0xff]
    %v4017 = vld [vmem:[#allocation12 + $0x38] sm:$0xff]
    %v4018 = vld [vmem:[#allocation12 + $0x40] sm:$0xff]
    %v4019 = vld [vmem:[#allocation12 + $0x48] sm:$0xff]
    %v4020 = vld [vmem:[#allocation12 + $0x50] sm:$0xff]
    %v4021 = vld [vmem:[#allocation12 + $0x58] sm:$0xff]
    %v4022 = vld [vmem:[#allocation12 + $0x60] sm:$0xff]
    %v4023 = vld [vmem:[#allocation12 + $0x68] sm:$0xff]
    %v4024 = vld [vmem:[#allocation12 + $0x70] sm:$0xff]
    %v4025 = vld [vmem:[#allocation12 + $0x78] sm:$0xff]
    %v4026 = vld [vmem:[#allocation12 + $0x80] sm:$0xff]
    %v4027 = vld [vmem:[#allocation12 + $0x88] sm:$0xff]
    %v4028 = vld [vmem:[#allocation12 + $0x90] sm:$0xff]
    %v4029 = vld [vmem:[#allocation12 + $0x98] sm:$0xff]
    %v4030 = vld [vmem:[#allocation12 + $0xa0] sm:$0xff]
    %v4031 = vld [vmem:[#allocation12 + $0xa8] sm:$0xff]
    %v4032 = vld [vmem:[#allocation12 + $0xb0] sm:$0xff]
    %v4033 = vld [vmem:[#allocation12 + $0xb8] sm:$0xff]
    %v4034 = vld [vmem:[#allocation12 + $0xc0] sm:$0xff]
    %v4035 = vld [vmem:[#allocation12 + $0xc8] sm:$0xff]
    %v4036 = vld [vmem:[#allocation12 + $0xd0] sm:$0xff]
    %v4037 = vld [vmem:[#allocation12 + $0xd8] sm:$0xff]
    %v4038 = vld [vmem:[#allocation12 + $0xe0] sm:$0xff]
    %v4039 = vld [vmem:[#allocation12 + $0xe8] sm:$0xff]
    %v4040 = vld [vmem:[#allocation12 + $0xf0] sm:$0xff]
    %v4041 = vld [vmem:[#allocation12 + $0xf8] sm:$0xff]
    %v4074 = vunpack.c.l.b16 %v4010
    %v4075 = vunpack.c.h.b16 %v4010
    %v4076 = vunpack.c.l.b16 %v4011
    %v4077 = vunpack.c.h.b16 %v4011
    %v4078 = vunpack.c.l.b16 %v4012
    %v4079 = vunpack.c.h.b16 %v4012
    %v4080 = vunpack.c.l.b16 %v4013
    %v4081 = vunpack.c.h.b16 %v4013
    %v4082 = vunpack.c.l.b16 %v4014
    %v4083 = vunpack.c.h.b16 %v4014
    %v4084 = vunpack.c.l.b16 %v4015
    %v4085 = vunpack.c.h.b16 %v4015
    %v4086 = vunpack.c.l.b16 %v4016
    %v4087 = vunpack.c.h.b16 %v4016
    %v4088 = vunpack.c.l.b16 %v4017
    %v4089 = vunpack.c.h.b16 %v4017
    %v4090 = vunpack.c.l.b16 %v4018
    %v4091 = vunpack.c.h.b16 %v4018
    %v4092 = vunpack.c.l.b16 %v4019
    %v4093 = vunpack.c.h.b16 %v4019
    %v4094 = vunpack.c.l.b16 %v4020
    %v4095 = vunpack.c.h.b16 %v4020
    %v4096 = vunpack.c.l.b16 %v4021
    %v4097 = vunpack.c.h.b16 %v4021
    %v4098 = vunpack.c.l.b16 %v4022
    %v4099 = vunpack.c.h.b16 %v4022
    %v4100 = vunpack.c.l.b16 %v4023
    %v4101 = vunpack.c.h.b16 %v4023
    %v4102 = vunpack.c.l.b16 %v4024
    %v4103 = vunpack.c.h.b16 %v4024
    %v4104 = vunpack.c.l.b16 %v4025
    %v4105 = vunpack.c.h.b16 %v4025
    %v4106 = vunpack.c.l.b16 %v4026
    %v4107 = vunpack.c.h.b16 %v4026
    %v4108 = vunpack.c.l.b16 %v4027
    %v4109 = vunpack.c.h.b16 %v4027
    %v4110 = vunpack.c.l.b16 %v4028
    %v4111 = vunpack.c.h.b16 %v4028
    %v4112 = vunpack.c.l.b16 %v4029
    %v4113 = vunpack.c.h.b16 %v4029
    %v4114 = vunpack.c.l.b16 %v4030
    %v4115 = vunpack.c.h.b16 %v4030
    %v4116 = vunpack.c.l.b16 %v4031
    %v4117 = vunpack.c.h.b16 %v4031
    %v4118 = vunpack.c.l.b16 %v4032
    %v4119 = vunpack.c.h.b16 %v4032
    %v4120 = vunpack.c.l.b16 %v4033
    %v4121 = vunpack.c.h.b16 %v4033
    %v4122 = vunpack.c.l.b16 %v4034
    %v4123 = vunpack.c.h.b16 %v4034
    %v4124 = vunpack.c.l.b16 %v4035
    %v4125 = vunpack.c.h.b16 %v4035
    %v4126 = vunpack.c.l.b16 %v4036
    %v4127 = vunpack.c.h.b16 %v4036
    %v4128 = vunpack.c.l.b16 %v4037
    %v4129 = vunpack.c.h.b16 %v4037
    %v4130 = vunpack.c.l.b16 %v4038
    %v4131 = vunpack.c.h.b16 %v4038
    %v4132 = vunpack.c.l.b16 %v4039
    %v4133 = vunpack.c.h.b16 %v4039
    %v4134 = vunpack.c.l.b16 %v4040
    %v4135 = vunpack.c.h.b16 %v4040
    %v4136 = vunpack.c.l.b16 %v4041
    %v4137 = vunpack.c.h.b16 %v4041
    %v4138 = vpack.c.b16 %v4078, %v4074
    %v4139 = vpack.c.b16 %v4079, %v4075
    %v4140 = vpack.c.b16 %v4080, %v4076
    %v4141 = vpack.c.b16 %v4081, %v4077
    %v4142 = vpack.c.b16 %v4086, %v4082
    %v4143 = vpack.c.b16 %v4087, %v4083
    %v4144 = vpack.c.b16 %v4088, %v4084
    %v4145 = vpack.c.b16 %v4089, %v4085
    %v4146 = vpack.c.b16 %v4094, %v4090
    %v4147 = vpack.c.b16 %v4095, %v4091
    %v4148 = vpack.c.b16 %v4096, %v4092
    %v4149 = vpack.c.b16 %v4097, %v4093
    %v4150 = vpack.c.b16 %v4102, %v4098
    %v4151 = vpack.c.b16 %v4103, %v4099
    %v4152 = vpack.c.b16 %v4104, %v4100
    %v4153 = vpack.c.b16 %v4105, %v4101
    %v4154 = vpack.c.b16 %v4110, %v4106
    %v4155 = vpack.c.b16 %v4111, %v4107
    %v4156 = vpack.c.b16 %v4112, %v4108
    %v4157 = vpack.c.b16 %v4113, %v4109
    %v4158 = vpack.c.b16 %v4118, %v4114
    %v4159 = vpack.c.b16 %v4119, %v4115
    %v4160 = vpack.c.b16 %v4120, %v4116
    %v4161 = vpack.c.b16 %v4121, %v4117
    %v4162 = vpack.c.b16 %v4126, %v4122
    %v4163 = vpack.c.b16 %v4127, %v4123
    %v4164 = vpack.c.b16 %v4128, %v4124
    %v4165 = vpack.c.b16 %v4129, %v4125
    %v4166 = vpack.c.b16 %v4134, %v4130
    %v4167 = vpack.c.b16 %v4135, %v4131
    %v4168 = vpack.c.b16 %v4136, %v4132
    %v4169 = vpack.c.b16 %v4137, %v4133
    %4202 = vmatprep.subr.bf16.mxu0 %v4167
    %4203 = vmatpush1.bf16.msra.mxu0 %v4166
    %4204 = vmatprep.subr.bf16.mxu0 %v4163
    %4205 = vmatpush1.bf16.msra.mxu0 %v4162
    %4206 = vmatprep.subr.bf16.mxu0 %v4159
    %4207 = vmatpush1.bf16.msra.mxu0 %v4158
    %4208 = vmatprep.subr.bf16.mxu0 %v4155
    %4209 = vmatpush1.bf16.msra.mxu0 %v4154
    %4210 = vmatprep.subr.bf16.mxu0 %v4151
    %4211 = vmatpush1.bf16.msra.mxu0 %v4150
    %4212 = vmatprep.subr.bf16.mxu0 %v4147
    %4213 = vmatpush1.bf16.msra.mxu0 %v4146
    %4214 = vmatprep.subr.bf16.mxu0 %v4143
    %4215 = vmatpush1.bf16.msra.mxu0 %v4142
    %4216 = vmatprep.subr.bf16.mxu0 %v4139
    %4217 = vmatpush1.bf16.msra.mxu0 %v4138
    %4218 = vmatprep.subr.bf16.mxu0 0
    %4219 = vmatpush2.bf16.msra.mxu0 0
    %4220 = vmatprep.subr.bf16.mxu0 0
    %4221 = vmatpush2.bf16.msra.mxu0 0
    %4222 = vmatprep.subr.bf16.mxu0 0
    %4223 = vmatpush2.bf16.msra.mxu0 0
    %4224 = vmatprep.subr.bf16.mxu0 0
    %4225 = vmatpush2.bf16.msra.mxu0 0
    %4226 = vmatprep.subr.bf16.mxu0 0
    %4227 = vmatpush2.bf16.msra.mxu0 0
    %4228 = vmatprep.subr.bf16.mxu0 0
    %4229 = vmatpush2.bf16.msra.mxu0 0
    %4230 = vmatprep.subr.bf16.mxu0 0
    %4231 = vmatpush2.bf16.msra.mxu0 0
    %4232 = vmatprep.subr.bf16.mxu0 0
    %4233 = vmatpush2.bf16.msra.mxu0 0
    %4234 = vmatprep.mubr.bf16.mxu0 0
    %4235 = vmatmul.mubr.bf16.gmra.mxu0 %v4009
    %v4236 = vpop.f32.mrf.mxu0
    %v4237 = vadd.f32 0.0, %v4236
    %v4238 = vpop.f32.mrf.mxu0
    %v4239 = vadd.f32 0.0, %v4238
    %v4240 = vpop.f32.mrf.mxu0
    %v4241 = vpop.f32.mrf.mxu0
    %4242 = vdwg.mxu0
    %4243 = vmatprep.subr.bf16.mxu0 %v4169
    %4244 = vmatpush1.bf16.msra.mxu0 %v4168
    %4245 = vmatprep.subr.bf16.mxu0 %v4165
    %4246 = vmatpush1.bf16.msra.mxu0 %v4164
    %4247 = vmatprep.subr.bf16.mxu0 %v4161
    %4248 = vmatpush1.bf16.msra.mxu0 %v4160
    %4249 = vmatprep.subr.bf16.mxu0 %v4157
    %4250 = vmatpush1.bf16.msra.mxu0 %v4156
    %4251 = vmatprep.subr.bf16.mxu0 %v4153
    %4252 = vmatpush1.bf16.msra.mxu0 %v4152
    %4253 = vmatprep.subr.bf16.mxu0 %v4149
    %4254 = vmatpush1.bf16.msra.mxu0 %v4148
    %4255 = vmatprep.subr.bf16.mxu0 %v4145
    %4256 = vmatpush1.bf16.msra.mxu0 %v4144
    %4257 = vmatprep.subr.bf16.mxu0 %v4141
    %4258 = vmatpush1.bf16.msra.mxu0 %v4140
    %4259 = vmatprep.subr.bf16.mxu0 0
    %4260 = vmatpush2.bf16.msra.mxu0 0
    %4261 = vmatprep.subr.bf16.mxu0 0
    %4262 = vmatpush2.bf16.msra.mxu0 0
    %4263 = vmatprep.subr.bf16.mxu0 0
    %4264 = vmatpush2.bf16.msra.mxu0 0
    %4265 = vmatprep.subr.bf16.mxu0 0
    %4266 = vmatpush2.bf16.msra.mxu0 0
    %4267 = vmatprep.subr.bf16.mxu0 0
    %4268 = vmatpush2.bf16.msra.mxu0 0
    %4269 = vmatprep.subr.bf16.mxu0 0
    %4270 = vmatpush2.bf16.msra.mxu0 0
    %4271 = vmatprep.subr.bf16.mxu0 0
    %4272 = vmatpush2.bf16.msra.mxu0 0
    %4273 = vmatprep.subr.bf16.mxu0 0
    %4274 = vmatpush2.bf16.msra.mxu0 0
    %4275 = vmatprep.mubr.bf16.mxu0 0
    %4276 = vmatmul.mubr.bf16.gmra.mxu0 %v4009
    %v4277 = vpop.f32.mrf.mxu0
    %v4278 = vadd.f32 0.0, %v4277
    %v4279 = vpop.f32.mrf.mxu0
    %v4280 = vadd.f32 0.0, %v4279
    %v4281 = vpop.f32.mrf.mxu0
    %v4282 = vpop.f32.mrf.mxu0
    %4283 = vdwg.mxu0
    %v4284 = vadd.f32 %v3961, %v4237
    %v4285 = vadd.f32 %v3963, %v4239
    %v4286 = vadd.f32 %v4002, %v4278
    %v4287 = vadd.f32 %v4004, %v4280
    %v4288 = vld [vmem:[#allocation6] sm:$0xff]
    %v4289 = vxor.u32 %v4284, 2147483648
    %v4290 = vxor.u32 %v4285, 2147483648
    %v4291 = vxor.u32 %v4286, 2147483648
    %v4292 = vmul.f32 %v4289, 1.442695
    %v4293 = vpow.pop %v4292
    %v4294 = vmul.f32 %v4290, 1.442695
    %v4295 = vpow.pop %v4294
    %v4296 = vmul.f32 %v4291, 1.442695
    %v4297 = vpow.pop %v4296
    %v4298 = vadd.f32 %v4293, 1.0
    %v4299 = vadd.f32 %v4295, 1.0
    %v4300 = vadd.f32 %v4297, 1.0
    %v4301 = vrcp.pop %v4298
    %v4302 = vmul.f32 1.0, %v4301
    %v4303 = vrcp.pop %v4299
    %v4304 = vmul.f32 1.0, %v4303
    %v4305 = vrcp.pop %v4300
    %v4306 = vmul.f32 1.0, %v4305
    %v4307 = vtanh.pop %v4287
    %v4308 = vmul.f32 %v4304, %v4288
    %v4309 = vmul.f32 %v4302, %v4307
    %v4310 = vadd.f32 %v4308, %v4309
    %v4311 = vtanh.pop %v4310
    %v4312 = vmul.f32 %v4306, %v4311
    %4313 = vst [vmem:[#allocation5] sm:$0xff] %v4312
    %4314 = vst [vmem:[#allocation6] sm:$0xff] %v4310
    %4315 = vst [vmem:[#allocation3] sm:$0xff] %v3711
    %4316 = vst [vmem:[#allocation4] sm:$0xff] %v3709
    %v4317 = vld [vmem:[#allocation3] sm:$0xff]
    %v4318 = vld [vmem:[#allocation4] sm:$0xff]
    %v4319 = vld [vmem:[#allocation2 + $0xa0] sm:$0xff]
    %v4320 = vld [vmem:[#allocation2 + $0xa8] sm:$0xff]
    %v4321 = vld [vmem:[#allocation2 + $0xb0] sm:$0xff]
    %v4322 = vld [vmem:[#allocation2 + $0xb8] sm:$0xff]
    %v4323 = vpack.c.bf16 %v4317, %v4317
    %v4324 = vld [vmem:[#allocation7] sm:$0xff]
    %v4325 = vld [vmem:[#allocation7 + $0x8] sm:$0xff]
    %v4326 = vld [vmem:[#allocation7 + $0x10] sm:$0xff]
    %v4327 = vld [vmem:[#allocation7 + $0x18] sm:$0xff]
    %v4328 = vld [vmem:[#allocation7 + $0x20] sm:$0xff]
    %v4329 = vld [vmem:[#allocation7 + $0x28] sm:$0xff]
    %v4330 = vld [vmem:[#allocation7 + $0x30] sm:$0xff]
    %v4331 = vld [vmem:[#allocation7 + $0x38] sm:$0xff]
    %v4332 = vld [vmem:[#allocation7 + $0x40] sm:$0xff]
    %v4333 = vld [vmem:[#allocation7 + $0x48] sm:$0xff]
    %v4334 = vld [vmem:[#allocation7 + $0x50] sm:$0xff]
    %v4335 = vld [vmem:[#allocation7 + $0x58] sm:$0xff]
    %v4336 = vld [vmem:[#allocation7 + $0x60] sm:$0xff]
    %v4337 = vld [vmem:[#allocation7 + $0x68] sm:$0xff]
    %v4338 = vld [vmem:[#allocation7 + $0x70] sm:$0xff]
    %v4339 = vld [vmem:[#allocation7 + $0x78] sm:$0xff]
    %v4340 = vld [vmem:[#allocation7 + $0x80] sm:$0xff]
    %v4341 = vld [vmem:[#allocation7 + $0x88] sm:$0xff]
    %v4342 = vld [vmem:[#allocation7 + $0x90] sm:$0xff]
    %v4343 = vld [vmem:[#allocation7 + $0x98] sm:$0xff]
    %v4344 = vld [vmem:[#allocation7 + $0xa0] sm:$0xff]
    %v4345 = vld [vmem:[#allocation7 + $0xa8] sm:$0xff]
    %v4346 = vld [vmem:[#allocation7 + $0xb0] sm:$0xff]
    %v4347 = vld [vmem:[#allocation7 + $0xb8] sm:$0xff]
    %v4348 = vld [vmem:[#allocation7 + $0xc0] sm:$0xff]
    %v4349 = vld [vmem:[#allocation7 + $0xc8] sm:$0xff]
    %v4350 = vld [vmem:[#allocation7 + $0xd0] sm:$0xff]
    %v4351 = vld [vmem:[#allocation7 + $0xd8] sm:$0xff]
    %v4352 = vld [vmem:[#allocation7 + $0xe0] sm:$0xff]
    %v4353 = vld [vmem:[#allocation7 + $0xe8] sm:$0xff]
    %v4354 = vld [vmem:[#allocation7 + $0xf0] sm:$0xff]
    %v4355 = vld [vmem:[#allocation7 + $0xf8] sm:$0xff]
    %v4388 = vunpack.c.l.b16 %v4324
    %v4389 = vunpack.c.h.b16 %v4324
    %v4390 = vunpack.c.l.b16 %v4325
    %v4391 = vunpack.c.h.b16 %v4325
    %v4392 = vunpack.c.l.b16 %v4326
    %v4393 = vunpack.c.h.b16 %v4326
    %v4394 = vunpack.c.l.b16 %v4327
    %v4395 = vunpack.c.h.b16 %v4327
    %v4396 = vunpack.c.l.b16 %v4328
    %v4397 = vunpack.c.h.b16 %v4328
    %v4398 = vunpack.c.l.b16 %v4329
    %v4399 = vunpack.c.h.b16 %v4329
    %v4400 = vunpack.c.l.b16 %v4330
    %v4401 = vunpack.c.h.b16 %v4330
    %v4402 = vunpack.c.l.b16 %v4331
    %v4403 = vunpack.c.h.b16 %v4331
    %v4404 = vunpack.c.l.b16 %v4332
    %v4405 = vunpack.c.h.b16 %v4332
    %v4406 = vunpack.c.l.b16 %v4333
    %v4407 = vunpack.c.h.b16 %v4333
    %v4408 = vunpack.c.l.b16 %v4334
    %v4409 = vunpack.c.h.b16 %v4334
    %v4410 = vunpack.c.l.b16 %v4335
    %v4411 = vunpack.c.h.b16 %v4335
    %v4412 = vunpack.c.l.b16 %v4336
    %v4413 = vunpack.c.h.b16 %v4336
    %v4414 = vunpack.c.l.b16 %v4337
    %v4415 = vunpack.c.h.b16 %v4337
    %v4416 = vunpack.c.l.b16 %v4338
    %v4417 = vunpack.c.h.b16 %v4338
    %v4418 = vunpack.c.l.b16 %v4339
    %v4419 = vunpack.c.h.b16 %v4339
    %v4420 = vunpack.c.l.b16 %v4340
    %v4421 = vunpack.c.h.b16 %v4340
    %v4422 = vunpack.c.l.b16 %v4341
    %v4423 = vunpack.c.h.b16 %v4341
    %v4424 = vunpack.c.l.b16 %v4342
    %v4425 = vunpack.c.h.b16 %v4342
    %v4426 = vunpack.c.l.b16 %v4343
    %v4427 = vunpack.c.h.b16 %v4343
    %v4428 = vunpack.c.l.b16 %v4344
    %v4429 = vunpack.c.h.b16 %v4344
    %v4430 = vunpack.c.l.b16 %v4345
    %v4431 = vunpack.c.h.b16 %v4345
    %v4432 = vunpack.c.l.b16 %v4346
    %v4433 = vunpack.c.h.b16 %v4346
    %v4434 = vunpack.c.l.b16 %v4347
    %v4435 = vunpack.c.h.b16 %v4347
    %v4436 = vunpack.c.l.b16 %v4348
    %v4437 = vunpack.c.h.b16 %v4348
    %v4438 = vunpack.c.l.b16 %v4349
    %v4439 = vunpack.c.h.b16 %v4349
    %v4440 = vunpack.c.l.b16 %v4350
    %v4441 = vunpack.c.h.b16 %v4350
    %v4442 = vunpack.c.l.b16 %v4351
    %v4443 = vunpack.c.h.b16 %v4351
    %v4444 = vunpack.c.l.b16 %v4352
    %v4445 = vunpack.c.h.b16 %v4352
    %v4446 = vunpack.c.l.b16 %v4353
    %v4447 = vunpack.c.h.b16 %v4353
    %v4448 = vunpack.c.l.b16 %v4354
    %v4449 = vunpack.c.h.b16 %v4354
    %v4450 = vunpack.c.l.b16 %v4355
    %v4451 = vunpack.c.h.b16 %v4355
    %v4452 = vpack.c.b16 %v4392, %v4388
    %v4453 = vpack.c.b16 %v4393, %v4389
    %v4454 = vpack.c.b16 %v4394, %v4390
    %v4455 = vpack.c.b16 %v4395, %v4391
    %v4456 = vpack.c.b16 %v4400, %v4396
    %v4457 = vpack.c.b16 %v4401, %v4397
    %v4458 = vpack.c.b16 %v4402, %v4398
    %v4459 = vpack.c.b16 %v4403, %v4399
    %v4460 = vpack.c.b16 %v4408, %v4404
    %v4461 = vpack.c.b16 %v4409, %v4405
    %v4462 = vpack.c.b16 %v4410, %v4406
    %v4463 = vpack.c.b16 %v4411, %v4407
    %v4464 = vpack.c.b16 %v4416, %v4412
    %v4465 = vpack.c.b16 %v4417, %v4413
    %v4466 = vpack.c.b16 %v4418, %v4414
    %v4467 = vpack.c.b16 %v4419, %v4415
    %v4468 = vpack.c.b16 %v4424, %v4420
    %v4469 = vpack.c.b16 %v4425, %v4421
    %v4470 = vpack.c.b16 %v4426, %v4422
    %v4471 = vpack.c.b16 %v4427, %v4423
    %v4472 = vpack.c.b16 %v4432, %v4428
    %v4473 = vpack.c.b16 %v4433, %v4429
    %v4474 = vpack.c.b16 %v4434, %v4430
    %v4475 = vpack.c.b16 %v4435, %v4431
    %v4476 = vpack.c.b16 %v4440, %v4436
    %v4477 = vpack.c.b16 %v4441, %v4437
    %v4478 = vpack.c.b16 %v4442, %v4438
    %v4479 = vpack.c.b16 %v4443, %v4439
    %v4480 = vpack.c.b16 %v4448, %v4444
    %v4481 = vpack.c.b16 %v4449, %v4445
    %v4482 = vpack.c.b16 %v4450, %v4446
    %v4483 = vpack.c.b16 %v4451, %v4447
    %4516 = vmatprep.subr.bf16.mxu0 %v4481
    %4517 = vmatpush1.bf16.msra.mxu0 %v4480
    %4518 = vmatprep.subr.bf16.mxu0 %v4477
    %4519 = vmatpush1.bf16.msra.mxu0 %v4476
    %4520 = vmatprep.subr.bf16.mxu0 %v4473
    %4521 = vmatpush1.bf16.msra.mxu0 %v4472
    %4522 = vmatprep.subr.bf16.mxu0 %v4469
    %4523 = vmatpush1.bf16.msra.mxu0 %v4468
    %4524 = vmatprep.subr.bf16.mxu0 %v4465
    %4525 = vmatpush1.bf16.msra.mxu0 %v4464
    %4526 = vmatprep.subr.bf16.mxu0 %v4461
    %4527 = vmatpush1.bf16.msra.mxu0 %v4460
    %4528 = vmatprep.subr.bf16.mxu0 %v4457
    %4529 = vmatpush1.bf16.msra.mxu0 %v4456
    %4530 = vmatprep.subr.bf16.mxu0 %v4453
    %4531 = vmatpush1.bf16.msra.mxu0 %v4452
    %4532 = vmatprep.subr.bf16.mxu0 0
    %4533 = vmatpush2.bf16.msra.mxu0 0
    %4534 = vmatprep.subr.bf16.mxu0 0
    %4535 = vmatpush2.bf16.msra.mxu0 0
    %4536 = vmatprep.subr.bf16.mxu0 0
    %4537 = vmatpush2.bf16.msra.mxu0 0
    %4538 = vmatprep.subr.bf16.mxu0 0
    %4539 = vmatpush2.bf16.msra.mxu0 0
    %4540 = vmatprep.subr.bf16.mxu0 0
    %4541 = vmatpush2.bf16.msra.mxu0 0
    %4542 = vmatprep.subr.bf16.mxu0 0
    %4543 = vmatpush2.bf16.msra.mxu0 0
    %4544 = vmatprep.subr.bf16.mxu0 0
    %4545 = vmatpush2.bf16.msra.mxu0 0
    %4546 = vmatprep.subr.bf16.mxu0 0
    %4547 = vmatpush2.bf16.msra.mxu0 0
    %4548 = vmatprep.mubr.bf16.mxu0 0
    %4549 = vmatmul.mubr.bf16.gmra.mxu0 %v4323
    %v4550 = vpop.f32.mrf.mxu0
    %v4551 = vadd.f32 0.0, %v4550
    %v4552 = vpop.f32.mrf.mxu0
    %v4553 = vadd.f32 0.0, %v4552
    %v4554 = vpop.f32.mrf.mxu0
    %v4555 = vpop.f32.mrf.mxu0
    %4556 = vdwg.mxu0
    %4557 = vmatprep.subr.bf16.mxu0 %v4483
    %4558 = vmatpush1.bf16.msra.mxu0 %v4482
    %4559 = vmatprep.subr.bf16.mxu0 %v4479
    %4560 = vmatpush1.bf16.msra.mxu0 %v4478
    %4561 = vmatprep.subr.bf16.mxu0 %v4475
    %4562 = vmatpush1.bf16.msra.mxu0 %v4474
    %4563 = vmatprep.subr.bf16.mxu0 %v4471
    %4564 = vmatpush1.bf16.msra.mxu0 %v4470
    %4565 = vmatprep.subr.bf16.mxu0 %v4467
    %4566 = vmatpush1.bf16.msra.mxu0 %v4466
    %4567 = vmatprep.subr.bf16.mxu0 %v4463
    %4568 = vmatpush1.bf16.msra.mxu0 %v4462
    %4569 = vmatprep.subr.bf16.mxu0 %v4459
    %4570 = vmatpush1.bf16.msra.mxu0 %v4458
    %4571 = vmatprep.subr.bf16.mxu0 %v4455
    %4572 = vmatpush1.bf16.msra.mxu0 %v4454
    %4573 = vmatprep.subr.bf16.mxu0 0
    %4574 = vmatpush2.bf16.msra.mxu0 0
    %4575 = vmatprep.subr.bf16.mxu0 0
    %4576 = vmatpush2.bf16.msra.mxu0 0
    %4577 = vmatprep.subr.bf16.mxu0 0
    %4578 = vmatpush2.bf16.msra.mxu0 0
    %4579 = vmatprep.subr.bf16.mxu0 0
    %4580 = vmatpush2.bf16.msra.mxu0 0
    %4581 = vmatprep.subr.bf16.mxu0 0
    %4582 = vmatpush2.bf16.msra.mxu0 0
    %4583 = vmatprep.subr.bf16.mxu0 0
    %4584 = vmatpush2.bf16.msra.mxu0 0
    %4585 = vmatprep.subr.bf16.mxu0 0
    %4586 = vmatpush2.bf16.msra.mxu0 0
    %4587 = vmatprep.subr.bf16.mxu0 0
    %4588 = vmatpush2.bf16.msra.mxu0 0
    %4589 = vmatprep.mubr.bf16.mxu0 0
    %4590 = vmatmul.mubr.bf16.gmra.mxu0 %v4323
    %v4591 = vpop.f32.mrf.mxu0
    %v4592 = vadd.f32 0.0, %v4591
    %v4593 = vpop.f32.mrf.mxu0
    %v4594 = vadd.f32 0.0, %v4593
    %v4595 = vpop.f32.mrf.mxu0
    %v4596 = vpop.f32.mrf.mxu0
    %4597 = vdwg.mxu0
    %v4598 = vadd.f32 %v4319, %v4551
    %v4599 = vadd.f32 %v4320, %v4553
    %v4600 = vadd.f32 %v4321, %v4592
    %v4601 = vadd.f32 %v4322, %v4594
    %v4602 = vxor.u32 %v4598, 2147483648
    %v4603 = vxor.u32 %v4599, 2147483648
    %v4604 = vxor.u32 %v4600, 2147483648
    %v4605 = vmul.f32 %v4602, 1.442695
    %v4606 = vpow.pop %v4605
    %v4607 = vmul.f32 %v4603, 1.442695
    %v4608 = vpow.pop %v4607
    %v4609 = vmul.f32 %v4604, 1.442695
    %v4610 = vpow.pop %v4609
    %v4611 = vadd.f32 %v4606, 1.0
    %v4612 = vadd.f32 %v4608, 1.0
    %v4613 = vadd.f32 %v4610, 1.0
    %v4614 = vrcp.pop %v4611
    %v4615 = vmul.f32 1.0, %v4614
    %v4616 = vrcp.pop %v4612
    %v4617 = vmul.f32 1.0, %v4616
    %v4618 = vrcp.pop %v4613
    %v4619 = vmul.f32 1.0, %v4618
    %v4620 = vtanh.pop %v4601
    %v4621 = vmul.f32 %v4617, %v4318
    %v4622 = vmul.f32 %v4615, %v4620
    %v4623 = vadd.f32 %v4621, %v4622
    %v4624 = vtanh.pop %v4623
    %v4625 = vmul.f32 %v4619, %v4624
    %v4626 = vld [vmem:[#allocation10] sm:$0xff]
    %v4627 = vld [vmem:[#allocation10 + $0x8] sm:$0xff]
    %v4628 = vld [vmem:[#allocation10 + $0x10] sm:$0xff]
    %v4629 = vld [vmem:[#allocation10 + $0x18] sm:$0xff]
    %v4630 = vld [vmem:[#allocation10 + $0x20] sm:$0xff]
    %v4631 = vld [vmem:[#allocation10 + $0x28] sm:$0xff]
    %v4632 = vld [vmem:[#allocation10 + $0x30] sm:$0xff]
    %v4633 = vld [vmem:[#allocation10 + $0x38] sm:$0xff]
    %v4634 = vld [vmem:[#allocation10 + $0x40] sm:$0xff]
    %v4635 = vld [vmem:[#allocation10 + $0x48] sm:$0xff]
    %v4636 = vld [vmem:[#allocation10 + $0x50] sm:$0xff]
    %v4637 = vld [vmem:[#allocation10 + $0x58] sm:$0xff]
    %v4638 = vld [vmem:[#allocation10 + $0x60] sm:$0xff]
    %v4639 = vld [vmem:[#allocation10 + $0x68] sm:$0xff]
    %v4640 = vld [vmem:[#allocation10 + $0x70] sm:$0xff]
    %v4641 = vld [vmem:[#allocation10 + $0x78] sm:$0xff]
    %v4642 = vld [vmem:[#allocation10 + $0x80] sm:$0xff]
    %v4643 = vld [vmem:[#allocation10 + $0x88] sm:$0xff]
    %v4644 = vld [vmem:[#allocation10 + $0x90] sm:$0xff]
    %v4645 = vld [vmem:[#allocation10 + $0x98] sm:$0xff]
    %v4646 = vld [vmem:[#allocation10 + $0xa0] sm:$0xff]
    %v4647 = vld [vmem:[#allocation10 + $0xa8] sm:$0xff]
    %v4648 = vld [vmem:[#allocation10 + $0xb0] sm:$0xff]
    %v4649 = vld [vmem:[#allocation10 + $0xb8] sm:$0xff]
    %v4650 = vld [vmem:[#allocation10 + $0xc0] sm:$0xff]
    %v4651 = vld [vmem:[#allocation10 + $0xc8] sm:$0xff]
    %v4652 = vld [vmem:[#allocation10 + $0xd0] sm:$0xff]
    %v4653 = vld [vmem:[#allocation10 + $0xd8] sm:$0xff]
    %v4654 = vld [vmem:[#allocation10 + $0xe0] sm:$0xff]
    %v4655 = vld [vmem:[#allocation10 + $0xe8] sm:$0xff]
    %v4656 = vld [vmem:[#allocation10 + $0xf0] sm:$0xff]
    %v4657 = vld [vmem:[#allocation10 + $0xf8] sm:$0xff]
    %v4658 = vld [vmem:[%s6] sm:$0xf]
    %v4660 = vlaneseq
    %v4661 = vshrl.u32 %v4660, 7
    %v4662 = vsub.s32 0, %v4661
    %v4663 = vrot.slane %v4658, %v4662
    %v4664 = vlaneseq
    %v4665 = vshrl.u32 %v4664, 7
    %v4666 = vsub.s32 1, %v4665
    %v4667 = vrot.slane %v4658, %v4666
    %v4668 = vlaneseq
    %v4669 = vshrl.u32 %v4668, 7
    %v4670 = vsub.s32 2, %v4669
    %v4671 = vrot.slane %v4658, %v4670
    %v4672 = vlaneseq
    %v4673 = vshrl.u32 %v4672, 7
    %v4674 = vsub.s32 3, %v4673
    %v4675 = vrot.slane %v4658, %v4674
    %v4712 = vunpack.c.l.b16 %v4626
    %v4713 = vunpack.c.h.b16 %v4626
    %v4714 = vunpack.c.l.b16 %v4627
    %v4715 = vunpack.c.h.b16 %v4627
    %v4716 = vunpack.c.l.b16 %v4628
    %v4717 = vunpack.c.h.b16 %v4628
    %v4718 = vunpack.c.l.b16 %v4629
    %v4719 = vunpack.c.h.b16 %v4629
    %v4720 = vunpack.c.l.b16 %v4630
    %v4721 = vunpack.c.h.b16 %v4630
    %v4722 = vunpack.c.l.b16 %v4631
    %v4723 = vunpack.c.h.b16 %v4631
    %v4724 = vunpack.c.l.b16 %v4632
    %v4725 = vunpack.c.h.b16 %v4632
    %v4726 = vunpack.c.l.b16 %v4633
    %v4727 = vunpack.c.h.b16 %v4633
    %v4728 = vunpack.c.l.b16 %v4634
    %v4729 = vunpack.c.h.b16 %v4634
    %v4730 = vunpack.c.l.b16 %v4635
    %v4731 = vunpack.c.h.b16 %v4635
    %v4732 = vunpack.c.l.b16 %v4636
    %v4733 = vunpack.c.h.b16 %v4636
    %v4734 = vunpack.c.l.b16 %v4637
    %v4735 = vunpack.c.h.b16 %v4637
    %v4736 = vunpack.c.l.b16 %v4638
    %v4737 = vunpack.c.h.b16 %v4638
    %v4738 = vunpack.c.l.b16 %v4639
    %v4739 = vunpack.c.h.b16 %v4639
    %v4740 = vunpack.c.l.b16 %v4640
    %v4741 = vunpack.c.h.b16 %v4640
    %v4742 = vunpack.c.l.b16 %v4641
    %v4743 = vunpack.c.h.b16 %v4641
    %v4744 = vunpack.c.l.b16 %v4642
    %v4745 = vunpack.c.h.b16 %v4642
    %v4746 = vunpack.c.l.b16 %v4643
    %v4747 = vunpack.c.h.b16 %v4643
    %v4748 = vunpack.c.l.b16 %v4644
    %v4749 = vunpack.c.h.b16 %v4644
    %v4750 = vunpack.c.l.b16 %v4645
    %v4751 = vunpack.c.h.b16 %v4645
    %v4752 = vunpack.c.l.b16 %v4646
    %v4753 = vunpack.c.h.b16 %v4646
    %v4754 = vunpack.c.l.b16 %v4647
    %v4755 = vunpack.c.h.b16 %v4647
    %v4756 = vunpack.c.l.b16 %v4648
    %v4757 = vunpack.c.h.b16 %v4648
    %v4758 = vunpack.c.l.b16 %v4649
    %v4759 = vunpack.c.h.b16 %v4649
    %v4760 = vunpack.c.l.b16 %v4650
    %v4761 = vunpack.c.h.b16 %v4650
    %v4762 = vunpack.c.l.b16 %v4651
    %v4763 = vunpack.c.h.b16 %v4651
    %v4764 = vunpack.c.l.b16 %v4652
    %v4765 = vunpack.c.h.b16 %v4652
    %v4766 = vunpack.c.l.b16 %v4653
    %v4767 = vunpack.c.h.b16 %v4653
    %v4768 = vunpack.c.l.b16 %v4654
    %v4769 = vunpack.c.h.b16 %v4654
    %v4770 = vunpack.c.l.b16 %v4655
    %v4771 = vunpack.c.h.b16 %v4655
    %v4772 = vunpack.c.l.b16 %v4656
    %v4773 = vunpack.c.h.b16 %v4656
    %v4774 = vunpack.c.l.b16 %v4657
    %v4775 = vunpack.c.h.b16 %v4657
    %v4776 = vpack.c.b16 %v4716, %v4712
    %v4777 = vpack.c.b16 %v4717, %v4713
    %v4778 = vpack.c.b16 %v4718, %v4714
    %v4779 = vpack.c.b16 %v4719, %v4715
    %v4780 = vpack.c.b16 %v4724, %v4720
    %v4781 = vpack.c.b16 %v4725, %v4721
    %v4782 = vpack.c.b16 %v4726, %v4722
    %v4783 = vpack.c.b16 %v4727, %v4723
    %v4784 = vpack.c.b16 %v4732, %v4728
    %v4785 = vpack.c.b16 %v4733, %v4729
    %v4786 = vpack.c.b16 %v4734, %v4730
    %v4787 = vpack.c.b16 %v4735, %v4731
    %v4788 = vpack.c.b16 %v4740, %v4736
    %v4789 = vpack.c.b16 %v4741, %v4737
    %v4790 = vpack.c.b16 %v4742, %v4738
    %v4791 = vpack.c.b16 %v4743, %v4739
    %v4792 = vpack.c.b16 %v4748, %v4744
    %v4793 = vpack.c.b16 %v4749, %v4745
    %v4794 = vpack.c.b16 %v4750, %v4746
    %v4795 = vpack.c.b16 %v4751, %v4747
    %v4796 = vpack.c.b16 %v4756, %v4752
    %v4797 = vpack.c.b16 %v4757, %v4753
    %v4798 = vpack.c.b16 %v4758, %v4754
    %v4799 = vpack.c.b16 %v4759, %v4755
    %v4800 = vpack.c.b16 %v4764, %v4760
    %v4801 = vpack.c.b16 %v4765, %v4761
    %v4802 = vpack.c.b16 %v4766, %v4762
    %v4803 = vpack.c.b16 %v4767, %v4763
    %v4804 = vpack.c.b16 %v4772, %v4768
    %v4805 = vpack.c.b16 %v4773, %v4769
    %v4806 = vpack.c.b16 %v4774, %v4770
    %v4807 = vpack.c.b16 %v4775, %v4771
    %4840 = vmatprep.subr.bf16.mxu0 %v4805
    %4841 = vmatpush1.bf16.msra.mxu0 %v4804
    %4842 = vmatprep.subr.bf16.mxu0 %v4801
    %4843 = vmatpush1.bf16.msra.mxu0 %v4800
    %4844 = vmatprep.subr.bf16.mxu0 %v4797
    %4845 = vmatpush1.bf16.msra.mxu0 %v4796
    %4846 = vmatprep.subr.bf16.mxu0 %v4793
    %4847 = vmatpush1.bf16.msra.mxu0 %v4792
    %4848 = vmatprep.subr.bf16.mxu0 %v4789
    %4849 = vmatpush1.bf16.msra.mxu0 %v4788
    %4850 = vmatprep.subr.bf16.mxu0 %v4785
    %4851 = vmatpush1.bf16.msra.mxu0 %v4784
    %4852 = vmatprep.subr.bf16.mxu0 %v4781
    %4853 = vmatpush1.bf16.msra.mxu0 %v4780
    %4854 = vmatprep.subr.bf16.mxu0 %v4777
    %4855 = vmatpush1.bf16.msra.mxu0 %v4776
    %4856 = vmatprep.subr.bf16.mxu0 0
    %4857 = vmatpush2.bf16.msra.mxu0 0
    %4858 = vmatprep.subr.bf16.mxu0 0
    %4859 = vmatpush2.bf16.msra.mxu0 0
    %4860 = vmatprep.subr.bf16.mxu0 0
    %4861 = vmatpush2.bf16.msra.mxu0 0
    %4862 = vmatprep.subr.bf16.mxu0 0
    %4863 = vmatpush2.bf16.msra.mxu0 0
    %4864 = vmatprep.subr.bf16.mxu0 0
    %4865 = vmatpush2.bf16.msra.mxu0 0
    %4866 = vmatprep.subr.bf16.mxu0 0
    %4867 = vmatpush2.bf16.msra.mxu0 0
    %4868 = vmatprep.subr.bf16.mxu0 0
    %4869 = vmatpush2.bf16.msra.mxu0 0
    %4870 = vmatprep.subr.bf16.mxu0 0
    %4871 = vmatpush2.bf16.msra.mxu0 0
    %4872 = vmatprep.mubr.bf16.mxu0 0
    %4873 = vmatmul.mubr.bf16.gmra.mxu0 %v4323
    %v4874 = vpop.f32.mrf.mxu0
    %v4875 = vadd.f32 %v4663, %v4874
    %v4876 = vpop.f32.mrf.mxu0
    %v4877 = vadd.f32 %v4667, %v4876
    %v4878 = vpop.f32.mrf.mxu0
    %v4879 = vpop.f32.mrf.mxu0
    %4880 = vdwg.mxu0
    %4881 = vmatprep.subr.bf16.mxu0 %v4807
    %4882 = vmatpush1.bf16.msra.mxu0 %v4806
    %4883 = vmatprep.subr.bf16.mxu0 %v4803
    %4884 = vmatpush1.bf16.msra.mxu0 %v4802
    %4885 = vmatprep.subr.bf16.mxu0 %v4799
    %4886 = vmatpush1.bf16.msra.mxu0 %v4798
    %4887 = vmatprep.subr.bf16.mxu0 %v4795
    %4888 = vmatpush1.bf16.msra.mxu0 %v4794
    %4889 = vmatprep.subr.bf16.mxu0 %v4791
    %4890 = vmatpush1.bf16.msra.mxu0 %v4790
    %4891 = vmatprep.subr.bf16.mxu0 %v4787
    %4892 = vmatpush1.bf16.msra.mxu0 %v4786
    %4893 = vmatprep.subr.bf16.mxu0 %v4783
    %4894 = vmatpush1.bf16.msra.mxu0 %v4782
    %4895 = vmatprep.subr.bf16.mxu0 %v4779
    %4896 = vmatpush1.bf16.msra.mxu0 %v4778
    %4897 = vmatprep.subr.bf16.mxu0 0
    %4898 = vmatpush2.bf16.msra.mxu0 0
    %4899 = vmatprep.subr.bf16.mxu0 0
    %4900 = vmatpush2.bf16.msra.mxu0 0
    %4901 = vmatprep.subr.bf16.mxu0 0
    %4902 = vmatpush2.bf16.msra.mxu0 0
    %4903 = vmatprep.subr.bf16.mxu0 0
    %4904 = vmatpush2.bf16.msra.mxu0 0
    %4905 = vmatprep.subr.bf16.mxu0 0
    %4906 = vmatpush2.bf16.msra.mxu0 0
    %4907 = vmatprep.subr.bf16.mxu0 0
    %4908 = vmatpush2.bf16.msra.mxu0 0
    %4909 = vmatprep.subr.bf16.mxu0 0
    %4910 = vmatpush2.bf16.msra.mxu0 0
    %4911 = vmatprep.subr.bf16.mxu0 0
    %4912 = vmatpush2.bf16.msra.mxu0 0
    %4913 = vmatprep.mubr.bf16.mxu0 0
    %4914 = vmatmul.mubr.bf16.gmra.mxu0 %v4323
    %v4915 = vpop.f32.mrf.mxu0
    %v4916 = vadd.f32 %v4671, %v4915
    %v4917 = vpop.f32.mrf.mxu0
    %v4918 = vadd.f32 %v4675, %v4917
    %v4919 = vpop.f32.mrf.mxu0
    %v4920 = vpop.f32.mrf.mxu0
    %4921 = vdwg.mxu0
    %v4922 = vld [vmem:[#allocation5] sm:$0xff]
    %v4923 = vpack.c.bf16 %v4922, %v4922
    %v4924 = vld [vmem:[#allocation12] sm:$0xff]
    %v4925 = vld [vmem:[#allocation12 + $0x8] sm:$0xff]
    %v4926 = vld [vmem:[#allocation12 + $0x10] sm:$0xff]
    %v4927 = vld [vmem:[#allocation12 + $0x18] sm:$0xff]
    %v4928 = vld [vmem:[#allocation12 + $0x20] sm:$0xff]
    %v4929 = vld [vmem:[#allocation12 + $0x28] sm:$0xff]
    %v4930 = vld [vmem:[#allocation12 + $0x30] sm:$0xff]
    %v4931 = vld [vmem:[#allocation12 + $0x38] sm:$0xff]
    %v4932 = vld [vmem:[#allocation12 + $0x40] sm:$0xff]
    %v4933 = vld [vmem:[#allocation12 + $0x48] sm:$0xff]
    %v4934 = vld [vmem:[#allocation12 + $0x50] sm:$0xff]
    %v4935 = vld [vmem:[#allocation12 + $0x58] sm:$0xff]
    %v4936 = vld [vmem:[#allocation12 + $0x60] sm:$0xff]
    %v4937 = vld [vmem:[#allocation12 + $0x68] sm:$0xff]
    %v4938 = vld [vmem:[#allocation12 + $0x70] sm:$0xff]
    %v4939 = vld [vmem:[#allocation12 + $0x78] sm:$0xff]
    %v4940 = vld [vmem:[#allocation12 + $0x80] sm:$0xff]
    %v4941 = vld [vmem:[#allocation12 + $0x88] sm:$0xff]
    %v4942 = vld [vmem:[#allocation12 + $0x90] sm:$0xff]
    %v4943 = vld [vmem:[#allocation12 + $0x98] sm:$0xff]
    %v4944 = vld [vmem:[#allocation12 + $0xa0] sm:$0xff]
    %v4945 = vld [vmem:[#allocation12 + $0xa8] sm:$0xff]
    %v4946 = vld [vmem:[#allocation12 + $0xb0] sm:$0xff]
    %v4947 = vld [vmem:[#allocation12 + $0xb8] sm:$0xff]
    %v4948 = vld [vmem:[#allocation12 + $0xc0] sm:$0xff]
    %v4949 = vld [vmem:[#allocation12 + $0xc8] sm:$0xff]
    %v4950 = vld [vmem:[#allocation12 + $0xd0] sm:$0xff]
    %v4951 = vld [vmem:[#allocation12 + $0xd8] sm:$0xff]
    %v4952 = vld [vmem:[#allocation12 + $0xe0] sm:$0xff]
    %v4953 = vld [vmem:[#allocation12 + $0xe8] sm:$0xff]
    %v4954 = vld [vmem:[#allocation12 + $0xf0] sm:$0xff]
    %v4955 = vld [vmem:[#allocation12 + $0xf8] sm:$0xff]
    %v4988 = vunpack.c.l.b16 %v4924
    %v4989 = vunpack.c.h.b16 %v4924
    %v4990 = vunpack.c.l.b16 %v4925
    %v4991 = vunpack.c.h.b16 %v4925
    %v4992 = vunpack.c.l.b16 %v4926
    %v4993 = vunpack.c.h.b16 %v4926
    %v4994 = vunpack.c.l.b16 %v4927
    %v4995 = vunpack.c.h.b16 %v4927
    %v4996 = vunpack.c.l.b16 %v4928
    %v4997 = vunpack.c.h.b16 %v4928
    %v4998 = vunpack.c.l.b16 %v4929
    %v4999 = vunpack.c.h.b16 %v4929
    %v5000 = vunpack.c.l.b16 %v4930
    %v5001 = vunpack.c.h.b16 %v4930
    %v5002 = vunpack.c.l.b16 %v4931
    %v5003 = vunpack.c.h.b16 %v4931
    %v5004 = vunpack.c.l.b16 %v4932
    %v5005 = vunpack.c.h.b16 %v4932
    %v5006 = vunpack.c.l.b16 %v4933
    %v5007 = vunpack.c.h.b16 %v4933
    %v5008 = vunpack.c.l.b16 %v4934
    %v5009 = vunpack.c.h.b16 %v4934
    %v5010 = vunpack.c.l.b16 %v4935
    %v5011 = vunpack.c.h.b16 %v4935
    %v5012 = vunpack.c.l.b16 %v4936
    %v5013 = vunpack.c.h.b16 %v4936
    %v5014 = vunpack.c.l.b16 %v4937
    %v5015 = vunpack.c.h.b16 %v4937
    %v5016 = vunpack.c.l.b16 %v4938
    %v5017 = vunpack.c.h.b16 %v4938
    %v5018 = vunpack.c.l.b16 %v4939
    %v5019 = vunpack.c.h.b16 %v4939
    %v5020 = vunpack.c.l.b16 %v4940
    %v5021 = vunpack.c.h.b16 %v4940
    %v5022 = vunpack.c.l.b16 %v4941
    %v5023 = vunpack.c.h.b16 %v4941
    %v5024 = vunpack.c.l.b16 %v4942
    %v5025 = vunpack.c.h.b16 %v4942
    %v5026 = vunpack.c.l.b16 %v4943
    %v5027 = vunpack.c.h.b16 %v4943
    %v5028 = vunpack.c.l.b16 %v4944
    %v5029 = vunpack.c.h.b16 %v4944
    %v5030 = vunpack.c.l.b16 %v4945
    %v5031 = vunpack.c.h.b16 %v4945
    %v5032 = vunpack.c.l.b16 %v4946
    %v5033 = vunpack.c.h.b16 %v4946
    %v5034 = vunpack.c.l.b16 %v4947
    %v5035 = vunpack.c.h.b16 %v4947
    %v5036 = vunpack.c.l.b16 %v4948
    %v5037 = vunpack.c.h.b16 %v4948
    %v5038 = vunpack.c.l.b16 %v4949
    %v5039 = vunpack.c.h.b16 %v4949
    %v5040 = vunpack.c.l.b16 %v4950
    %v5041 = vunpack.c.h.b16 %v4950
    %v5042 = vunpack.c.l.b16 %v4951
    %v5043 = vunpack.c.h.b16 %v4951
    %v5044 = vunpack.c.l.b16 %v4952
    %v5045 = vunpack.c.h.b16 %v4952
    %v5046 = vunpack.c.l.b16 %v4953
    %v5047 = vunpack.c.h.b16 %v4953
    %v5048 = vunpack.c.l.b16 %v4954
    %v5049 = vunpack.c.h.b16 %v4954
    %v5050 = vunpack.c.l.b16 %v4955
    %v5051 = vunpack.c.h.b16 %v4955
    %v5052 = vpack.c.b16 %v4992, %v4988
    %v5053 = vpack.c.b16 %v4993, %v4989
    %v5054 = vpack.c.b16 %v4994, %v4990
    %v5055 = vpack.c.b16 %v4995, %v4991
    %v5056 = vpack.c.b16 %v5000, %v4996
    %v5057 = vpack.c.b16 %v5001, %v4997
    %v5058 = vpack.c.b16 %v5002, %v4998
    %v5059 = vpack.c.b16 %v5003, %v4999
    %v5060 = vpack.c.b16 %v5008, %v5004
    %v5061 = vpack.c.b16 %v5009, %v5005
    %v5062 = vpack.c.b16 %v5010, %v5006
    %v5063 = vpack.c.b16 %v5011, %v5007
    %v5064 = vpack.c.b16 %v5016, %v5012
    %v5065 = vpack.c.b16 %v5017, %v5013
    %v5066 = vpack.c.b16 %v5018, %v5014
    %v5067 = vpack.c.b16 %v5019, %v5015
    %v5068 = vpack.c.b16 %v5024, %v5020
    %v5069 = vpack.c.b16 %v5025, %v5021
    %v5070 = vpack.c.b16 %v5026, %v5022
    %v5071 = vpack.c.b16 %v5027, %v5023
    %v5072 = vpack.c.b16 %v5032, %v5028
    %v5073 = vpack.c.b16 %v5033, %v5029
    %v5074 = vpack.c.b16 %v5034, %v5030
    %v5075 = vpack.c.b16 %v5035, %v5031
    %v5076 = vpack.c.b16 %v5040, %v5036
    %v5077 = vpack.c.b16 %v5041, %v5037
    %v5078 = vpack.c.b16 %v5042, %v5038
    %v5079 = vpack.c.b16 %v5043, %v5039
    %v5080 = vpack.c.b16 %v5048, %v5044
    %v5081 = vpack.c.b16 %v5049, %v5045
    %v5082 = vpack.c.b16 %v5050, %v5046
    %v5083 = vpack.c.b16 %v5051, %v5047
    %5116 = vmatprep.subr.bf16.mxu0 %v5081
    %5117 = vmatpush1.bf16.msra.mxu0 %v5080
    %5118 = vmatprep.subr.bf16.mxu0 %v5077
    %5119 = vmatpush1.bf16.msra.mxu0 %v5076
    %5120 = vmatprep.subr.bf16.mxu0 %v5073
    %5121 = vmatpush1.bf16.msra.mxu0 %v5072
    %5122 = vmatprep.subr.bf16.mxu0 %v5069
    %5123 = vmatpush1.bf16.msra.mxu0 %v5068
    %5124 = vmatprep.subr.bf16.mxu0 %v5065
    %5125 = vmatpush1.bf16.msra.mxu0 %v5064
    %5126 = vmatprep.subr.bf16.mxu0 %v5061
    %5127 = vmatpush1.bf16.msra.mxu0 %v5060
    %5128 = vmatprep.subr.bf16.mxu0 %v5057
    %5129 = vmatpush1.bf16.msra.mxu0 %v5056
    %5130 = vmatprep.subr.bf16.mxu0 %v5053
    %5131 = vmatpush1.bf16.msra.mxu0 %v5052
    %5132 = vmatprep.subr.bf16.mxu0 0
    %5133 = vmatpush2.bf16.msra.mxu0 0
    %5134 = vmatprep.subr.bf16.mxu0 0
    %5135 = vmatpush2.bf16.msra.mxu0 0
    %5136 = vmatprep.subr.bf16.mxu0 0
    %5137 = vmatpush2.bf16.msra.mxu0 0
    %5138 = vmatprep.subr.bf16.mxu0 0
    %5139 = vmatpush2.bf16.msra.mxu0 0
    %5140 = vmatprep.subr.bf16.mxu0 0
    %5141 = vmatpush2.bf16.msra.mxu0 0
    %5142 = vmatprep.subr.bf16.mxu0 0
    %5143 = vmatpush2.bf16.msra.mxu0 0
    %5144 = vmatprep.subr.bf16.mxu0 0
    %5145 = vmatpush2.bf16.msra.mxu0 0
    %5146 = vmatprep.subr.bf16.mxu0 0
    %5147 = vmatpush2.bf16.msra.mxu0 0
    %5148 = vmatprep.mubr.bf16.mxu0 0
    %5149 = vmatmul.mubr.bf16.gmra.mxu0 %v4923
    %v5150 = vpop.f32.mrf.mxu0
    %v5151 = vadd.f32 0.0, %v5150
    %v5152 = vpop.f32.mrf.mxu0
    %v5153 = vadd.f32 0.0, %v5152
    %v5154 = vpop.f32.mrf.mxu0
    %v5155 = vpop.f32.mrf.mxu0
    %5156 = vdwg.mxu0
    %5157 = vmatprep.subr.bf16.mxu0 %v5083
    %5158 = vmatpush1.bf16.msra.mxu0 %v5082
    %5159 = vmatprep.subr.bf16.mxu0 %v5079
    %5160 = vmatpush1.bf16.msra.mxu0 %v5078
    %5161 = vmatprep.subr.bf16.mxu0 %v5075
    %5162 = vmatpush1.bf16.msra.mxu0 %v5074
    %5163 = vmatprep.subr.bf16.mxu0 %v5071
    %5164 = vmatpush1.bf16.msra.mxu0 %v5070
    %5165 = vmatprep.subr.bf16.mxu0 %v5067
    %5166 = vmatpush1.bf16.msra.mxu0 %v5066
    %5167 = vmatprep.subr.bf16.mxu0 %v5063
    %5168 = vmatpush1.bf16.msra.mxu0 %v5062
    %5169 = vmatprep.subr.bf16.mxu0 %v5059
    %5170 = vmatpush1.bf16.msra.mxu0 %v5058
    %5171 = vmatprep.subr.bf16.mxu0 %v5055
    %5172 = vmatpush1.bf16.msra.mxu0 %v5054
    %5173 = vmatprep.subr.bf16.mxu0 0
    %5174 = vmatpush2.bf16.msra.mxu0 0
    %5175 = vmatprep.subr.bf16.mxu0 0
    %5176 = vmatpush2.bf16.msra.mxu0 0
    %5177 = vmatprep.subr.bf16.mxu0 0
    %5178 = vmatpush2.bf16.msra.mxu0 0
    %5179 = vmatprep.subr.bf16.mxu0 0
    %5180 = vmatpush2.bf16.msra.mxu0 0
    %5181 = vmatprep.subr.bf16.mxu0 0
    %5182 = vmatpush2.bf16.msra.mxu0 0
    %5183 = vmatprep.subr.bf16.mxu0 0
    %5184 = vmatpush2.bf16.msra.mxu0 0
    %5185 = vmatprep.subr.bf16.mxu0 0
    %5186 = vmatpush2.bf16.msra.mxu0 0
    %5187 = vmatprep.subr.bf16.mxu0 0
    %5188 = vmatpush2.bf16.msra.mxu0 0
    %5189 = vmatprep.mubr.bf16.mxu0 0
    %5190 = vmatmul.mubr.bf16.gmra.mxu0 %v4923
    %v5191 = vpop.f32.mrf.mxu0
    %v5192 = vadd.f32 0.0, %v5191
    %v5193 = vpop.f32.mrf.mxu0
    %v5194 = vadd.f32 0.0, %v5193
    %v5195 = vpop.f32.mrf.mxu0
    %v5196 = vpop.f32.mrf.mxu0
    %5197 = vdwg.mxu0
    %v5198 = vadd.f32 %v4875, %v5151
    %v5199 = vadd.f32 %v4877, %v5153
    %v5200 = vadd.f32 %v4916, %v5192
    %v5201 = vadd.f32 %v4918, %v5194
    %v5202 = vld [vmem:[#allocation6] sm:$0xff]
    %v5203 = vxor.u32 %v5198, 2147483648
    %v5204 = vxor.u32 %v5199, 2147483648
    %v5205 = vxor.u32 %v5200, 2147483648
    %v5206 = vmul.f32 %v5203, 1.442695
    %v5207 = vpow.pop %v5206
    %v5208 = vmul.f32 %v5204, 1.442695
    %v5209 = vpow.pop %v5208
    %v5210 = vmul.f32 %v5205, 1.442695
    %v5211 = vpow.pop %v5210
    %v5212 = vadd.f32 %v5207, 1.0
    %v5213 = vadd.f32 %v5209, 1.0
    %v5214 = vadd.f32 %v5211, 1.0
    %v5215 = vrcp.pop %v5212
    %v5216 = vmul.f32 1.0, %v5215
    %v5217 = vrcp.pop %v5213
    %v5218 = vmul.f32 1.0, %v5217
    %v5219 = vrcp.pop %v5214
    %v5220 = vmul.f32 1.0, %v5219
    %v5221 = vtanh.pop %v5201
    %v5222 = vmul.f32 %v5218, %v5202
    %v5223 = vmul.f32 %v5216, %v5221
    %v5224 = vadd.f32 %v5222, %v5223
    %v5225 = vtanh.pop %v5224
    %v5226 = vmul.f32 %v5220, %v5225
    %5227 = vst [vmem:[#allocation5] sm:$0xff] %v5226
    %5228 = vst [vmem:[#allocation6] sm:$0xff] %v5224
    %5229 = vst [vmem:[#allocation3] sm:$0xff] %v4625
    %5230 = vst [vmem:[#allocation4] sm:$0xff] %v4623
    %v5231 = vld [vmem:[#allocation3] sm:$0xff]
    %v5232 = vld [vmem:[#allocation4] sm:$0xff]
    %v5233 = vld [vmem:[#allocation2 + $0xc0] sm:$0xff]
    %v5234 = vld [vmem:[#allocation2 + $0xc8] sm:$0xff]
    %v5235 = vld [vmem:[#allocation2 + $0xd0] sm:$0xff]
    %v5236 = vld [vmem:[#allocation2 + $0xd8] sm:$0xff]
    %v5237 = vpack.c.bf16 %v5231, %v5231
    %v5238 = vld [vmem:[#allocation7] sm:$0xff]
    %v5239 = vld [vmem:[#allocation7 + $0x8] sm:$0xff]
    %v5240 = vld [vmem:[#allocation7 + $0x10] sm:$0xff]
    %v5241 = vld [vmem:[#allocation7 + $0x18] sm:$0xff]
    %v5242 = vld [vmem:[#allocation7 + $0x20] sm:$0xff]
    %v5243 = vld [vmem:[#allocation7 + $0x28] sm:$0xff]
    %v5244 = vld [vmem:[#allocation7 + $0x30] sm:$0xff]
    %v5245 = vld [vmem:[#allocation7 + $0x38] sm:$0xff]
    %v5246 = vld [vmem:[#allocation7 + $0x40] sm:$0xff]
    %v5247 = vld [vmem:[#allocation7 + $0x48] sm:$0xff]
    %v5248 = vld [vmem:[#allocation7 + $0x50] sm:$0xff]
    %v5249 = vld [vmem:[#allocation7 + $0x58] sm:$0xff]
    %v5250 = vld [vmem:[#allocation7 + $0x60] sm:$0xff]
    %v5251 = vld [vmem:[#allocation7 + $0x68] sm:$0xff]
    %v5252 = vld [vmem:[#allocation7 + $0x70] sm:$0xff]
    %v5253 = vld [vmem:[#allocation7 + $0x78] sm:$0xff]
    %v5254 = vld [vmem:[#allocation7 + $0x80] sm:$0xff]
    %v5255 = vld [vmem:[#allocation7 + $0x88] sm:$0xff]
    %v5256 = vld [vmem:[#allocation7 + $0x90] sm:$0xff]
    %v5257 = vld [vmem:[#allocation7 + $0x98] sm:$0xff]
    %v5258 = vld [vmem:[#allocation7 + $0xa0] sm:$0xff]
    %v5259 = vld [vmem:[#allocation7 + $0xa8] sm:$0xff]
    %v5260 = vld [vmem:[#allocation7 + $0xb0] sm:$0xff]
    %v5261 = vld [vmem:[#allocation7 + $0xb8] sm:$0xff]
    %v5262 = vld [vmem:[#allocation7 + $0xc0] sm:$0xff]
    %v5263 = vld [vmem:[#allocation7 + $0xc8] sm:$0xff]
    %v5264 = vld [vmem:[#allocation7 + $0xd0] sm:$0xff]
    %v5265 = vld [vmem:[#allocation7 + $0xd8] sm:$0xff]
    %v5266 = vld [vmem:[#allocation7 + $0xe0] sm:$0xff]
    %v5267 = vld [vmem:[#allocation7 + $0xe8] sm:$0xff]
    %v5268 = vld [vmem:[#allocation7 + $0xf0] sm:$0xff]
    %v5269 = vld [vmem:[#allocation7 + $0xf8] sm:$0xff]
    %v5302 = vunpack.c.l.b16 %v5238
    %v5303 = vunpack.c.h.b16 %v5238
    %v5304 = vunpack.c.l.b16 %v5239
    %v5305 = vunpack.c.h.b16 %v5239
    %v5306 = vunpack.c.l.b16 %v5240
    %v5307 = vunpack.c.h.b16 %v5240
    %v5308 = vunpack.c.l.b16 %v5241
    %v5309 = vunpack.c.h.b16 %v5241
    %v5310 = vunpack.c.l.b16 %v5242
    %v5311 = vunpack.c.h.b16 %v5242
    %v5312 = vunpack.c.l.b16 %v5243
    %v5313 = vunpack.c.h.b16 %v5243
    %v5314 = vunpack.c.l.b16 %v5244
    %v5315 = vunpack.c.h.b16 %v5244
    %v5316 = vunpack.c.l.b16 %v5245
    %v5317 = vunpack.c.h.b16 %v5245
    %v5318 = vunpack.c.l.b16 %v5246
    %v5319 = vunpack.c.h.b16 %v5246
    %v5320 = vunpack.c.l.b16 %v5247
    %v5321 = vunpack.c.h.b16 %v5247
    %v5322 = vunpack.c.l.b16 %v5248
    %v5323 = vunpack.c.h.b16 %v5248
    %v5324 = vunpack.c.l.b16 %v5249
    %v5325 = vunpack.c.h.b16 %v5249
    %v5326 = vunpack.c.l.b16 %v5250
    %v5327 = vunpack.c.h.b16 %v5250
    %v5328 = vunpack.c.l.b16 %v5251
    %v5329 = vunpack.c.h.b16 %v5251
    %v5330 = vunpack.c.l.b16 %v5252
    %v5331 = vunpack.c.h.b16 %v5252
    %v5332 = vunpack.c.l.b16 %v5253
    %v5333 = vunpack.c.h.b16 %v5253
    %v5334 = vunpack.c.l.b16 %v5254
    %v5335 = vunpack.c.h.b16 %v5254
    %v5336 = vunpack.c.l.b16 %v5255
    %v5337 = vunpack.c.h.b16 %v5255
    %v5338 = vunpack.c.l.b16 %v5256
    %v5339 = vunpack.c.h.b16 %v5256
    %v5340 = vunpack.c.l.b16 %v5257
    %v5341 = vunpack.c.h.b16 %v5257
    %v5342 = vunpack.c.l.b16 %v5258
    %v5343 = vunpack.c.h.b16 %v5258
    %v5344 = vunpack.c.l.b16 %v5259
    %v5345 = vunpack.c.h.b16 %v5259
    %v5346 = vunpack.c.l.b16 %v5260
    %v5347 = vunpack.c.h.b16 %v5260
    %v5348 = vunpack.c.l.b16 %v5261
    %v5349 = vunpack.c.h.b16 %v5261
    %v5350 = vunpack.c.l.b16 %v5262
    %v5351 = vunpack.c.h.b16 %v5262
    %v5352 = vunpack.c.l.b16 %v5263
    %v5353 = vunpack.c.h.b16 %v5263
    %v5354 = vunpack.c.l.b16 %v5264
    %v5355 = vunpack.c.h.b16 %v5264
    %v5356 = vunpack.c.l.b16 %v5265
    %v5357 = vunpack.c.h.b16 %v5265
    %v5358 = vunpack.c.l.b16 %v5266
    %v5359 = vunpack.c.h.b16 %v5266
    %v5360 = vunpack.c.l.b16 %v5267
    %v5361 = vunpack.c.h.b16 %v5267
    %v5362 = vunpack.c.l.b16 %v5268
    %v5363 = vunpack.c.h.b16 %v5268
    %v5364 = vunpack.c.l.b16 %v5269
    %v5365 = vunpack.c.h.b16 %v5269
    %v5366 = vpack.c.b16 %v5306, %v5302
    %v5367 = vpack.c.b16 %v5307, %v5303
    %v5368 = vpack.c.b16 %v5308, %v5304
    %v5369 = vpack.c.b16 %v5309, %v5305
    %v5370 = vpack.c.b16 %v5314, %v5310
    %v5371 = vpack.c.b16 %v5315, %v5311
    %v5372 = vpack.c.b16 %v5316, %v5312
    %v5373 = vpack.c.b16 %v5317, %v5313
    %v5374 = vpack.c.b16 %v5322, %v5318
    %v5375 = vpack.c.b16 %v5323, %v5319
    %v5376 = vpack.c.b16 %v5324, %v5320
    %v5377 = vpack.c.b16 %v5325, %v5321
    %v5378 = vpack.c.b16 %v5330, %v5326
    %v5379 = vpack.c.b16 %v5331, %v5327
    %v5380 = vpack.c.b16 %v5332, %v5328
    %v5381 = vpack.c.b16 %v5333, %v5329
    %v5382 = vpack.c.b16 %v5338, %v5334
    %v5383 = vpack.c.b16 %v5339, %v5335
    %v5384 = vpack.c.b16 %v5340, %v5336
    %v5385 = vpack.c.b16 %v5341, %v5337
    %v5386 = vpack.c.b16 %v5346, %v5342
    %v5387 = vpack.c.b16 %v5347, %v5343
    %v5388 = vpack.c.b16 %v5348, %v5344
    %v5389 = vpack.c.b16 %v5349, %v5345
    %v5390 = vpack.c.b16 %v5354, %v5350
    %v5391 = vpack.c.b16 %v5355, %v5351
    %v5392 = vpack.c.b16 %v5356, %v5352
    %v5393 = vpack.c.b16 %v5357, %v5353
    %v5394 = vpack.c.b16 %v5362, %v5358
    %v5395 = vpack.c.b16 %v5363, %v5359
    %v5396 = vpack.c.b16 %v5364, %v5360
    %v5397 = vpack.c.b16 %v5365, %v5361
    %5430 = vmatprep.subr.bf16.mxu0 %v5395
    %5431 = vmatpush1.bf16.msra.mxu0 %v5394
    %5432 = vmatprep.subr.bf16.mxu0 %v5391
    %5433 = vmatpush1.bf16.msra.mxu0 %v5390
    %5434 = vmatprep.subr.bf16.mxu0 %v5387
    %5435 = vmatpush1.bf16.msra.mxu0 %v5386
    %5436 = vmatprep.subr.bf16.mxu0 %v5383
    %5437 = vmatpush1.bf16.msra.mxu0 %v5382
    %5438 = vmatprep.subr.bf16.mxu0 %v5379
    %5439 = vmatpush1.bf16.msra.mxu0 %v5378
    %5440 = vmatprep.subr.bf16.mxu0 %v5375
    %5441 = vmatpush1.bf16.msra.mxu0 %v5374
    %5442 = vmatprep.subr.bf16.mxu0 %v5371
    %5443 = vmatpush1.bf16.msra.mxu0 %v5370
    %5444 = vmatprep.subr.bf16.mxu0 %v5367
    %5445 = vmatpush1.bf16.msra.mxu0 %v5366
    %5446 = vmatprep.subr.bf16.mxu0 0
    %5447 = vmatpush2.bf16.msra.mxu0 0
    %5448 = vmatprep.subr.bf16.mxu0 0
    %5449 = vmatpush2.bf16.msra.mxu0 0
    %5450 = vmatprep.subr.bf16.mxu0 0
    %5451 = vmatpush2.bf16.msra.mxu0 0
    %5452 = vmatprep.subr.bf16.mxu0 0
    %5453 = vmatpush2.bf16.msra.mxu0 0
    %5454 = vmatprep.subr.bf16.mxu0 0
    %5455 = vmatpush2.bf16.msra.mxu0 0
    %5456 = vmatprep.subr.bf16.mxu0 0
    %5457 = vmatpush2.bf16.msra.mxu0 0
    %5458 = vmatprep.subr.bf16.mxu0 0
    %5459 = vmatpush2.bf16.msra.mxu0 0
    %5460 = vmatprep.subr.bf16.mxu0 0
    %5461 = vmatpush2.bf16.msra.mxu0 0
    %5462 = vmatprep.mubr.bf16.mxu0 0
    %5463 = vmatmul.mubr.bf16.gmra.mxu0 %v5237
    %v5464 = vpop.f32.mrf.mxu0
    %v5465 = vadd.f32 0.0, %v5464
    %v5466 = vpop.f32.mrf.mxu0
    %v5467 = vadd.f32 0.0, %v5466
    %v5468 = vpop.f32.mrf.mxu0
    %v5469 = vpop.f32.mrf.mxu0
    %5470 = vdwg.mxu0
    %5471 = vmatprep.subr.bf16.mxu0 %v5397
    %5472 = vmatpush1.bf16.msra.mxu0 %v5396
    %5473 = vmatprep.subr.bf16.mxu0 %v5393
    %5474 = vmatpush1.bf16.msra.mxu0 %v5392
    %5475 = vmatprep.subr.bf16.mxu0 %v5389
    %5476 = vmatpush1.bf16.msra.mxu0 %v5388
    %5477 = vmatprep.subr.bf16.mxu0 %v5385
    %5478 = vmatpush1.bf16.msra.mxu0 %v5384
    %5479 = vmatprep.subr.bf16.mxu0 %v5381
    %5480 = vmatpush1.bf16.msra.mxu0 %v5380
    %5481 = vmatprep.subr.bf16.mxu0 %v5377
    %5482 = vmatpush1.bf16.msra.mxu0 %v5376
    %5483 = vmatprep.subr.bf16.mxu0 %v5373
    %5484 = vmatpush1.bf16.msra.mxu0 %v5372
    %5485 = vmatprep.subr.bf16.mxu0 %v5369
    %5486 = vmatpush1.bf16.msra.mxu0 %v5368
    %5487 = vmatprep.subr.bf16.mxu0 0
    %5488 = vmatpush2.bf16.msra.mxu0 0
    %5489 = vmatprep.subr.bf16.mxu0 0
    %5490 = vmatpush2.bf16.msra.mxu0 0
    %5491 = vmatprep.subr.bf16.mxu0 0
    %5492 = vmatpush2.bf16.msra.mxu0 0
    %5493 = vmatprep.subr.bf16.mxu0 0
    %5494 = vmatpush2.bf16.msra.mxu0 0
    %5495 = vmatprep.subr.bf16.mxu0 0
    %5496 = vmatpush2.bf16.msra.mxu0 0
    %5497 = vmatprep.subr.bf16.mxu0 0
    %5498 = vmatpush2.bf16.msra.mxu0 0
    %5499 = vmatprep.subr.bf16.mxu0 0
    %5500 = vmatpush2.bf16.msra.mxu0 0
    %5501 = vmatprep.subr.bf16.mxu0 0
    %5502 = vmatpush2.bf16.msra.mxu0 0
    %5503 = vmatprep.mubr.bf16.mxu0 0
    %5504 = vmatmul.mubr.bf16.gmra.mxu0 %v5237
    %v5505 = vpop.f32.mrf.mxu0
    %v5506 = vadd.f32 0.0, %v5505
    %v5507 = vpop.f32.mrf.mxu0
    %v5508 = vadd.f32 0.0, %v5507
    %v5509 = vpop.f32.mrf.mxu0
    %v5510 = vpop.f32.mrf.mxu0
    %5511 = vdwg.mxu0
    %v5512 = vadd.f32 %v5233, %v5465
    %v5513 = vadd.f32 %v5234, %v5467
    %v5514 = vadd.f32 %v5235, %v5506
    %v5515 = vadd.f32 %v5236, %v5508
    %v5516 = vxor.u32 %v5512, 2147483648
    %v5517 = vxor.u32 %v5513, 2147483648
    %v5518 = vxor.u32 %v5514, 2147483648
    %v5519 = vmul.f32 %v5516, 1.442695
    %v5520 = vpow.pop %v5519
    %v5521 = vmul.f32 %v5517, 1.442695
    %v5522 = vpow.pop %v5521
    %v5523 = vmul.f32 %v5518, 1.442695
    %v5524 = vpow.pop %v5523
    %v5525 = vadd.f32 %v5520, 1.0
    %v5526 = vadd.f32 %v5522, 1.0
    %v5527 = vadd.f32 %v5524, 1.0
    %v5528 = vrcp.pop %v5525
    %v5529 = vmul.f32 1.0, %v5528
    %v5530 = vrcp.pop %v5526
    %v5531 = vmul.f32 1.0, %v5530
    %v5532 = vrcp.pop %v5527
    %v5533 = vmul.f32 1.0, %v5532
    %v5534 = vtanh.pop %v5515
    %v5535 = vmul.f32 %v5531, %v5232
    %v5536 = vmul.f32 %v5529, %v5534
    %v5537 = vadd.f32 %v5535, %v5536
    %v5538 = vtanh.pop %v5537
    %v5539 = vmul.f32 %v5533, %v5538
    %v5540 = vld [vmem:[#allocation10] sm:$0xff]
    %v5541 = vld [vmem:[#allocation10 + $0x8] sm:$0xff]
    %v5542 = vld [vmem:[#allocation10 + $0x10] sm:$0xff]
    %v5543 = vld [vmem:[#allocation10 + $0x18] sm:$0xff]
    %v5544 = vld [vmem:[#allocation10 + $0x20] sm:$0xff]
    %v5545 = vld [vmem:[#allocation10 + $0x28] sm:$0xff]
    %v5546 = vld [vmem:[#allocation10 + $0x30] sm:$0xff]
    %v5547 = vld [vmem:[#allocation10 + $0x38] sm:$0xff]
    %v5548 = vld [vmem:[#allocation10 + $0x40] sm:$0xff]
    %v5549 = vld [vmem:[#allocation10 + $0x48] sm:$0xff]
    %v5550 = vld [vmem:[#allocation10 + $0x50] sm:$0xff]
    %v5551 = vld [vmem:[#allocation10 + $0x58] sm:$0xff]
    %v5552 = vld [vmem:[#allocation10 + $0x60] sm:$0xff]
    %v5553 = vld [vmem:[#allocation10 + $0x68] sm:$0xff]
    %v5554 = vld [vmem:[#allocation10 + $0x70] sm:$0xff]
    %v5555 = vld [vmem:[#allocation10 + $0x78] sm:$0xff]
    %v5556 = vld [vmem:[#allocation10 + $0x80] sm:$0xff]
    %v5557 = vld [vmem:[#allocation10 + $0x88] sm:$0xff]
    %v5558 = vld [vmem:[#allocation10 + $0x90] sm:$0xff]
    %v5559 = vld [vmem:[#allocation10 + $0x98] sm:$0xff]
    %v5560 = vld [vmem:[#allocation10 + $0xa0] sm:$0xff]
    %v5561 = vld [vmem:[#allocation10 + $0xa8] sm:$0xff]
    %v5562 = vld [vmem:[#allocation10 + $0xb0] sm:$0xff]
    %v5563 = vld [vmem:[#allocation10 + $0xb8] sm:$0xff]
    %v5564 = vld [vmem:[#allocation10 + $0xc0] sm:$0xff]
    %v5565 = vld [vmem:[#allocation10 + $0xc8] sm:$0xff]
    %v5566 = vld [vmem:[#allocation10 + $0xd0] sm:$0xff]
    %v5567 = vld [vmem:[#allocation10 + $0xd8] sm:$0xff]
    %v5568 = vld [vmem:[#allocation10 + $0xe0] sm:$0xff]
    %v5569 = vld [vmem:[#allocation10 + $0xe8] sm:$0xff]
    %v5570 = vld [vmem:[#allocation10 + $0xf0] sm:$0xff]
    %v5571 = vld [vmem:[#allocation10 + $0xf8] sm:$0xff]
    %v5572 = vld [vmem:[%s6] sm:$0xf]
    %v5574 = vlaneseq
    %v5575 = vshrl.u32 %v5574, 7
    %v5576 = vsub.s32 0, %v5575
    %v5577 = vrot.slane %v5572, %v5576
    %v5578 = vlaneseq
    %v5579 = vshrl.u32 %v5578, 7
    %v5580 = vsub.s32 1, %v5579
    %v5581 = vrot.slane %v5572, %v5580
    %v5582 = vlaneseq
    %v5583 = vshrl.u32 %v5582, 7
    %v5584 = vsub.s32 2, %v5583
    %v5585 = vrot.slane %v5572, %v5584
    %v5586 = vlaneseq
    %v5587 = vshrl.u32 %v5586, 7
    %v5588 = vsub.s32 3, %v5587
    %v5589 = vrot.slane %v5572, %v5588
    %v5626 = vunpack.c.l.b16 %v5540
    %v5627 = vunpack.c.h.b16 %v5540
    %v5628 = vunpack.c.l.b16 %v5541
    %v5629 = vunpack.c.h.b16 %v5541
    %v5630 = vunpack.c.l.b16 %v5542
    %v5631 = vunpack.c.h.b16 %v5542
    %v5632 = vunpack.c.l.b16 %v5543
    %v5633 = vunpack.c.h.b16 %v5543
    %v5634 = vunpack.c.l.b16 %v5544
    %v5635 = vunpack.c.h.b16 %v5544
    %v5636 = vunpack.c.l.b16 %v5545
    %v5637 = vunpack.c.h.b16 %v5545
    %v5638 = vunpack.c.l.b16 %v5546
    %v5639 = vunpack.c.h.b16 %v5546
    %v5640 = vunpack.c.l.b16 %v5547
    %v5641 = vunpack.c.h.b16 %v5547
    %v5642 = vunpack.c.l.b16 %v5548
    %v5643 = vunpack.c.h.b16 %v5548
    %v5644 = vunpack.c.l.b16 %v5549
    %v5645 = vunpack.c.h.b16 %v5549
    %v5646 = vunpack.c.l.b16 %v5550
    %v5647 = vunpack.c.h.b16 %v5550
    %v5648 = vunpack.c.l.b16 %v5551
    %v5649 = vunpack.c.h.b16 %v5551
    %v5650 = vunpack.c.l.b16 %v5552
    %v5651 = vunpack.c.h.b16 %v5552
    %v5652 = vunpack.c.l.b16 %v5553
    %v5653 = vunpack.c.h.b16 %v5553
    %v5654 = vunpack.c.l.b16 %v5554
    %v5655 = vunpack.c.h.b16 %v5554
    %v5656 = vunpack.c.l.b16 %v5555
    %v5657 = vunpack.c.h.b16 %v5555
    %v5658 = vunpack.c.l.b16 %v5556
    %v5659 = vunpack.c.h.b16 %v5556
    %v5660 = vunpack.c.l.b16 %v5557
    %v5661 = vunpack.c.h.b16 %v5557
    %v5662 = vunpack.c.l.b16 %v5558
    %v5663 = vunpack.c.h.b16 %v5558
    %v5664 = vunpack.c.l.b16 %v5559
    %v5665 = vunpack.c.h.b16 %v5559
    %v5666 = vunpack.c.l.b16 %v5560
    %v5667 = vunpack.c.h.b16 %v5560
    %v5668 = vunpack.c.l.b16 %v5561
    %v5669 = vunpack.c.h.b16 %v5561
    %v5670 = vunpack.c.l.b16 %v5562
    %v5671 = vunpack.c.h.b16 %v5562
    %v5672 = vunpack.c.l.b16 %v5563
    %v5673 = vunpack.c.h.b16 %v5563
    %v5674 = vunpack.c.l.b16 %v5564
    %v5675 = vunpack.c.h.b16 %v5564
    %v5676 = vunpack.c.l.b16 %v5565
    %v5677 = vunpack.c.h.b16 %v5565
    %v5678 = vunpack.c.l.b16 %v5566
    %v5679 = vunpack.c.h.b16 %v5566
    %v5680 = vunpack.c.l.b16 %v5567
    %v5681 = vunpack.c.h.b16 %v5567
    %v5682 = vunpack.c.l.b16 %v5568
    %v5683 = vunpack.c.h.b16 %v5568
    %v5684 = vunpack.c.l.b16 %v5569
    %v5685 = vunpack.c.h.b16 %v5569
    %v5686 = vunpack.c.l.b16 %v5570
    %v5687 = vunpack.c.h.b16 %v5570
    %v5688 = vunpack.c.l.b16 %v5571
    %v5689 = vunpack.c.h.b16 %v5571
    %v5690 = vpack.c.b16 %v5630, %v5626
    %v5691 = vpack.c.b16 %v5631, %v5627
    %v5692 = vpack.c.b16 %v5632, %v5628
    %v5693 = vpack.c.b16 %v5633, %v5629
    %v5694 = vpack.c.b16 %v5638, %v5634
    %v5695 = vpack.c.b16 %v5639, %v5635
    %v5696 = vpack.c.b16 %v5640, %v5636
    %v5697 = vpack.c.b16 %v5641, %v5637
    %v5698 = vpack.c.b16 %v5646, %v5642
    %v5699 = vpack.c.b16 %v5647, %v5643
    %v5700 = vpack.c.b16 %v5648, %v5644
    %v5701 = vpack.c.b16 %v5649, %v5645
    %v5702 = vpack.c.b16 %v5654, %v5650
    %v5703 = vpack.c.b16 %v5655, %v5651
    %v5704 = vpack.c.b16 %v5656, %v5652
    %v5705 = vpack.c.b16 %v5657, %v5653
    %v5706 = vpack.c.b16 %v5662, %v5658
    %v5707 = vpack.c.b16 %v5663, %v5659
    %v5708 = vpack.c.b16 %v5664, %v5660
    %v5709 = vpack.c.b16 %v5665, %v5661
    %v5710 = vpack.c.b16 %v5670, %v5666
    %v5711 = vpack.c.b16 %v5671, %v5667
    %v5712 = vpack.c.b16 %v5672, %v5668
    %v5713 = vpack.c.b16 %v5673, %v5669
    %v5714 = vpack.c.b16 %v5678, %v5674
    %v5715 = vpack.c.b16 %v5679, %v5675
    %v5716 = vpack.c.b16 %v5680, %v5676
    %v5717 = vpack.c.b16 %v5681, %v5677
    %v5718 = vpack.c.b16 %v5686, %v5682
    %v5719 = vpack.c.b16 %v5687, %v5683
    %v5720 = vpack.c.b16 %v5688, %v5684
    %v5721 = vpack.c.b16 %v5689, %v5685
    %5754 = vmatprep.subr.bf16.mxu0 %v5719
    %5755 = vmatpush1.bf16.msra.mxu0 %v5718
    %5756 = vmatprep.subr.bf16.mxu0 %v5715
    %5757 = vmatpush1.bf16.msra.mxu0 %v5714
    %5758 = vmatprep.subr.bf16.mxu0 %v5711
    %5759 = vmatpush1.bf16.msra.mxu0 %v5710
    %5760 = vmatprep.subr.bf16.mxu0 %v5707
    %5761 = vmatpush1.bf16.msra.mxu0 %v5706
    %5762 = vmatprep.subr.bf16.mxu0 %v5703
    %5763 = vmatpush1.bf16.msra.mxu0 %v5702
    %5764 = vmatprep.subr.bf16.mxu0 %v5699
    %5765 = vmatpush1.bf16.msra.mxu0 %v5698
    %5766 = vmatprep.subr.bf16.mxu0 %v5695
    %5767 = vmatpush1.bf16.msra.mxu0 %v5694
    %5768 = vmatprep.subr.bf16.mxu0 %v5691
    %5769 = vmatpush1.bf16.msra.mxu0 %v5690
    %5770 = vmatprep.subr.bf16.mxu0 0
    %5771 = vmatpush2.bf16.msra.mxu0 0
    %5772 = vmatprep.subr.bf16.mxu0 0
    %5773 = vmatpush2.bf16.msra.mxu0 0
    %5774 = vmatprep.subr.bf16.mxu0 0
    %5775 = vmatpush2.bf16.msra.mxu0 0
    %5776 = vmatprep.subr.bf16.mxu0 0
    %5777 = vmatpush2.bf16.msra.mxu0 0
    %5778 = vmatprep.subr.bf16.mxu0 0
    %5779 = vmatpush2.bf16.msra.mxu0 0
    %5780 = vmatprep.subr.bf16.mxu0 0
    %5781 = vmatpush2.bf16.msra.mxu0 0
    %5782 = vmatprep.subr.bf16.mxu0 0
    %5783 = vmatpush2.bf16.msra.mxu0 0
    %5784 = vmatprep.subr.bf16.mxu0 0
    %5785 = vmatpush2.bf16.msra.mxu0 0
    %5786 = vmatprep.mubr.bf16.mxu0 0
    %5787 = vmatmul.mubr.bf16.gmra.mxu0 %v5237
    %v5788 = vpop.f32.mrf.mxu0
    %v5789 = vadd.f32 %v5577, %v5788
    %v5790 = vpop.f32.mrf.mxu0
    %v5791 = vadd.f32 %v5581, %v5790
    %v5792 = vpop.f32.mrf.mxu0
    %v5793 = vpop.f32.mrf.mxu0
    %5794 = vdwg.mxu0
    %5795 = vmatprep.subr.bf16.mxu0 %v5721
    %5796 = vmatpush1.bf16.msra.mxu0 %v5720
    %5797 = vmatprep.subr.bf16.mxu0 %v5717
    %5798 = vmatpush1.bf16.msra.mxu0 %v5716
    %5799 = vmatprep.subr.bf16.mxu0 %v5713
    %5800 = vmatpush1.bf16.msra.mxu0 %v5712
    %5801 = vmatprep.subr.bf16.mxu0 %v5709
    %5802 = vmatpush1.bf16.msra.mxu0 %v5708
    %5803 = vmatprep.subr.bf16.mxu0 %v5705
    %5804 = vmatpush1.bf16.msra.mxu0 %v5704
    %5805 = vmatprep.subr.bf16.mxu0 %v5701
    %5806 = vmatpush1.bf16.msra.mxu0 %v5700
    %5807 = vmatprep.subr.bf16.mxu0 %v5697
    %5808 = vmatpush1.bf16.msra.mxu0 %v5696
    %5809 = vmatprep.subr.bf16.mxu0 %v5693
    %5810 = vmatpush1.bf16.msra.mxu0 %v5692
    %5811 = vmatprep.subr.bf16.mxu0 0
    %5812 = vmatpush2.bf16.msra.mxu0 0
    %5813 = vmatprep.subr.bf16.mxu0 0
    %5814 = vmatpush2.bf16.msra.mxu0 0
    %5815 = vmatprep.subr.bf16.mxu0 0
    %5816 = vmatpush2.bf16.msra.mxu0 0
    %5817 = vmatprep.subr.bf16.mxu0 0
    %5818 = vmatpush2.bf16.msra.mxu0 0
    %5819 = vmatprep.subr.bf16.mxu0 0
    %5820 = vmatpush2.bf16.msra.mxu0 0
    %5821 = vmatprep.subr.bf16.mxu0 0
    %5822 = vmatpush2.bf16.msra.mxu0 0
    %5823 = vmatprep.subr.bf16.mxu0 0
    %5824 = vmatpush2.bf16.msra.mxu0 0
    %5825 = vmatprep.subr.bf16.mxu0 0
    %5826 = vmatpush2.bf16.msra.mxu0 0
    %5827 = vmatprep.mubr.bf16.mxu0 0
    %5828 = vmatmul.mubr.bf16.gmra.mxu0 %v5237
    %v5829 = vpop.f32.mrf.mxu0
    %v5830 = vadd.f32 %v5585, %v5829
    %v5831 = vpop.f32.mrf.mxu0
    %v5832 = vadd.f32 %v5589, %v5831
    %v5833 = vpop.f32.mrf.mxu0
    %v5834 = vpop.f32.mrf.mxu0
    %5835 = vdwg.mxu0
    %v5836 = vld [vmem:[#allocation5] sm:$0xff]
    %v5837 = vpack.c.bf16 %v5836, %v5836
    %v5838 = vld [vmem:[#allocation12] sm:$0xff]
    %v5839 = vld [vmem:[#allocation12 + $0x8] sm:$0xff]
    %v5840 = vld [vmem:[#allocation12 + $0x10] sm:$0xff]
    %v5841 = vld [vmem:[#allocation12 + $0x18] sm:$0xff]
    %v5842 = vld [vmem:[#allocation12 + $0x20] sm:$0xff]
    %v5843 = vld [vmem:[#allocation12 + $0x28] sm:$0xff]
    %v5844 = vld [vmem:[#allocation12 + $0x30] sm:$0xff]
    %v5845 = vld [vmem:[#allocation12 + $0x38] sm:$0xff]
    %v5846 = vld [vmem:[#allocation12 + $0x40] sm:$0xff]
    %v5847 = vld [vmem:[#allocation12 + $0x48] sm:$0xff]
    %v5848 = vld [vmem:[#allocation12 + $0x50] sm:$0xff]
    %v5849 = vld [vmem:[#allocation12 + $0x58] sm:$0xff]
    %v5850 = vld [vmem:[#allocation12 + $0x60] sm:$0xff]
    %v5851 = vld [vmem:[#allocation12 + $0x68] sm:$0xff]
    %v5852 = vld [vmem:[#allocation12 + $0x70] sm:$0xff]
    %v5853 = vld [vmem:[#allocation12 + $0x78] sm:$0xff]
    %v5854 = vld [vmem:[#allocation12 + $0x80] sm:$0xff]
    %v5855 = vld [vmem:[#allocation12 + $0x88] sm:$0xff]
    %v5856 = vld [vmem:[#allocation12 + $0x90] sm:$0xff]
    %v5857 = vld [vmem:[#allocation12 + $0x98] sm:$0xff]
    %v5858 = vld [vmem:[#allocation12 + $0xa0] sm:$0xff]
    %v5859 = vld [vmem:[#allocation12 + $0xa8] sm:$0xff]
    %v5860 = vld [vmem:[#allocation12 + $0xb0] sm:$0xff]
    %v5861 = vld [vmem:[#allocation12 + $0xb8] sm:$0xff]
    %v5862 = vld [vmem:[#allocation12 + $0xc0] sm:$0xff]
    %v5863 = vld [vmem:[#allocation12 + $0xc8] sm:$0xff]
    %v5864 = vld [vmem:[#allocation12 + $0xd0] sm:$0xff]
    %v5865 = vld [vmem:[#allocation12 + $0xd8] sm:$0xff]
    %v5866 = vld [vmem:[#allocation12 + $0xe0] sm:$0xff]
    %v5867 = vld [vmem:[#allocation12 + $0xe8] sm:$0xff]
    %v5868 = vld [vmem:[#allocation12 + $0xf0] sm:$0xff]
    %v5869 = vld [vmem:[#allocation12 + $0xf8] sm:$0xff]
    %v5902 = vunpack.c.l.b16 %v5838
    %v5903 = vunpack.c.h.b16 %v5838
    %v5904 = vunpack.c.l.b16 %v5839
    %v5905 = vunpack.c.h.b16 %v5839
    %v5906 = vunpack.c.l.b16 %v5840
    %v5907 = vunpack.c.h.b16 %v5840
    %v5908 = vunpack.c.l.b16 %v5841
    %v5909 = vunpack.c.h.b16 %v5841
    %v5910 = vunpack.c.l.b16 %v5842
    %v5911 = vunpack.c.h.b16 %v5842
    %v5912 = vunpack.c.l.b16 %v5843
    %v5913 = vunpack.c.h.b16 %v5843
    %v5914 = vunpack.c.l.b16 %v5844
    %v5915 = vunpack.c.h.b16 %v5844
    %v5916 = vunpack.c.l.b16 %v5845
    %v5917 = vunpack.c.h.b16 %v5845
    %v5918 = vunpack.c.l.b16 %v5846
    %v5919 = vunpack.c.h.b16 %v5846
    %v5920 = vunpack.c.l.b16 %v5847
    %v5921 = vunpack.c.h.b16 %v5847
    %v5922 = vunpack.c.l.b16 %v5848
    %v5923 = vunpack.c.h.b16 %v5848
    %v5924 = vunpack.c.l.b16 %v5849
    %v5925 = vunpack.c.h.b16 %v5849
    %v5926 = vunpack.c.l.b16 %v5850
    %v5927 = vunpack.c.h.b16 %v5850
    %v5928 = vunpack.c.l.b16 %v5851
    %v5929 = vunpack.c.h.b16 %v5851
    %v5930 = vunpack.c.l.b16 %v5852
    %v5931 = vunpack.c.h.b16 %v5852
    %v5932 = vunpack.c.l.b16 %v5853
    %v5933 = vunpack.c.h.b16 %v5853
    %v5934 = vunpack.c.l.b16 %v5854
    %v5935 = vunpack.c.h.b16 %v5854
    %v5936 = vunpack.c.l.b16 %v5855
    %v5937 = vunpack.c.h.b16 %v5855
    %v5938 = vunpack.c.l.b16 %v5856
    %v5939 = vunpack.c.h.b16 %v5856
    %v5940 = vunpack.c.l.b16 %v5857
    %v5941 = vunpack.c.h.b16 %v5857
    %v5942 = vunpack.c.l.b16 %v5858
    %v5943 = vunpack.c.h.b16 %v5858
    %v5944 = vunpack.c.l.b16 %v5859
    %v5945 = vunpack.c.h.b16 %v5859
    %v5946 = vunpack.c.l.b16 %v5860
    %v5947 = vunpack.c.h.b16 %v5860
    %v5948 = vunpack.c.l.b16 %v5861
    %v5949 = vunpack.c.h.b16 %v5861
    %v5950 = vunpack.c.l.b16 %v5862
    %v5951 = vunpack.c.h.b16 %v5862
    %v5952 = vunpack.c.l.b16 %v5863
    %v5953 = vunpack.c.h.b16 %v5863
    %v5954 = vunpack.c.l.b16 %v5864
    %v5955 = vunpack.c.h.b16 %v5864
    %v5956 = vunpack.c.l.b16 %v5865
    %v5957 = vunpack.c.h.b16 %v5865
    %v5958 = vunpack.c.l.b16 %v5866
    %v5959 = vunpack.c.h.b16 %v5866
    %v5960 = vunpack.c.l.b16 %v5867
    %v5961 = vunpack.c.h.b16 %v5867
    %v5962 = vunpack.c.l.b16 %v5868
    %v5963 = vunpack.c.h.b16 %v5868
    %v5964 = vunpack.c.l.b16 %v5869
    %v5965 = vunpack.c.h.b16 %v5869
    %v5966 = vpack.c.b16 %v5906, %v5902
    %v5967 = vpack.c.b16 %v5907, %v5903
    %v5968 = vpack.c.b16 %v5908, %v5904
    %v5969 = vpack.c.b16 %v5909, %v5905
    %v5970 = vpack.c.b16 %v5914, %v5910
    %v5971 = vpack.c.b16 %v5915, %v5911
    %v5972 = vpack.c.b16 %v5916, %v5912
    %v5973 = vpack.c.b16 %v5917, %v5913
    %v5974 = vpack.c.b16 %v5922, %v5918
    %v5975 = vpack.c.b16 %v5923, %v5919
    %v5976 = vpack.c.b16 %v5924, %v5920
    %v5977 = vpack.c.b16 %v5925, %v5921
    %v5978 = vpack.c.b16 %v5930, %v5926
    %v5979 = vpack.c.b16 %v5931, %v5927
    %v5980 = vpack.c.b16 %v5932, %v5928
    %v5981 = vpack.c.b16 %v5933, %v5929
    %v5982 = vpack.c.b16 %v5938, %v5934
    %v5983 = vpack.c.b16 %v5939, %v5935
    %v5984 = vpack.c.b16 %v5940, %v5936
    %v5985 = vpack.c.b16 %v5941, %v5937
    %v5986 = vpack.c.b16 %v5946, %v5942
    %v5987 = vpack.c.b16 %v5947, %v5943
    %v5988 = vpack.c.b16 %v5948, %v5944
    %v5989 = vpack.c.b16 %v5949, %v5945
    %v5990 = vpack.c.b16 %v5954, %v5950
    %v5991 = vpack.c.b16 %v5955, %v5951
    %v5992 = vpack.c.b16 %v5956, %v5952
    %v5993 = vpack.c.b16 %v5957, %v5953
    %v5994 = vpack.c.b16 %v5962, %v5958
    %v5995 = vpack.c.b16 %v5963, %v5959
    %v5996 = vpack.c.b16 %v5964, %v5960
    %v5997 = vpack.c.b16 %v5965, %v5961
    %6030 = vmatprep.subr.bf16.mxu0 %v5995
    %6031 = vmatpush1.bf16.msra.mxu0 %v5994
    %6032 = vmatprep.subr.bf16.mxu0 %v5991
    %6033 = vmatpush1.bf16.msra.mxu0 %v5990
    %6034 = vmatprep.subr.bf16.mxu0 %v5987
    %6035 = vmatpush1.bf16.msra.mxu0 %v5986
    %6036 = vmatprep.subr.bf16.mxu0 %v5983
    %6037 = vmatpush1.bf16.msra.mxu0 %v5982
    %6038 = vmatprep.subr.bf16.mxu0 %v5979
    %6039 = vmatpush1.bf16.msra.mxu0 %v5978
    %6040 = vmatprep.subr.bf16.mxu0 %v5975
    %6041 = vmatpush1.bf16.msra.mxu0 %v5974
    %6042 = vmatprep.subr.bf16.mxu0 %v5971
    %6043 = vmatpush1.bf16.msra.mxu0 %v5970
    %6044 = vmatprep.subr.bf16.mxu0 %v5967
    %6045 = vmatpush1.bf16.msra.mxu0 %v5966
    %6046 = vmatprep.subr.bf16.mxu0 0
    %6047 = vmatpush2.bf16.msra.mxu0 0
    %6048 = vmatprep.subr.bf16.mxu0 0
    %6049 = vmatpush2.bf16.msra.mxu0 0
    %6050 = vmatprep.subr.bf16.mxu0 0
    %6051 = vmatpush2.bf16.msra.mxu0 0
    %6052 = vmatprep.subr.bf16.mxu0 0
    %6053 = vmatpush2.bf16.msra.mxu0 0
    %6054 = vmatprep.subr.bf16.mxu0 0
    %6055 = vmatpush2.bf16.msra.mxu0 0
    %6056 = vmatprep.subr.bf16.mxu0 0
    %6057 = vmatpush2.bf16.msra.mxu0 0
    %6058 = vmatprep.subr.bf16.mxu0 0
    %6059 = vmatpush2.bf16.msra.mxu0 0
    %6060 = vmatprep.subr.bf16.mxu0 0
    %6061 = vmatpush2.bf16.msra.mxu0 0
    %6062 = vmatprep.mubr.bf16.mxu0 0
    %6063 = vmatmul.mubr.bf16.gmra.mxu0 %v5837
    %v6064 = vpop.f32.mrf.mxu0
    %v6065 = vadd.f32 0.0, %v6064
    %v6066 = vpop.f32.mrf.mxu0
    %v6067 = vadd.f32 0.0, %v6066
    %v6068 = vpop.f32.mrf.mxu0
    %v6069 = vpop.f32.mrf.mxu0
    %6070 = vdwg.mxu0
    %6071 = vmatprep.subr.bf16.mxu0 %v5997
    %6072 = vmatpush1.bf16.msra.mxu0 %v5996
    %6073 = vmatprep.subr.bf16.mxu0 %v5993
    %6074 = vmatpush1.bf16.msra.mxu0 %v5992
    %6075 = vmatprep.subr.bf16.mxu0 %v5989
    %6076 = vmatpush1.bf16.msra.mxu0 %v5988
    %6077 = vmatprep.subr.bf16.mxu0 %v5985
    %6078 = vmatpush1.bf16.msra.mxu0 %v5984
    %6079 = vmatprep.subr.bf16.mxu0 %v5981
    %6080 = vmatpush1.bf16.msra.mxu0 %v5980
    %6081 = vmatprep.subr.bf16.mxu0 %v5977
    %6082 = vmatpush1.bf16.msra.mxu0 %v5976
    %6083 = vmatprep.subr.bf16.mxu0 %v5973
    %6084 = vmatpush1.bf16.msra.mxu0 %v5972
    %6085 = vmatprep.subr.bf16.mxu0 %v5969
    %6086 = vmatpush1.bf16.msra.mxu0 %v5968
    %6087 = vmatprep.subr.bf16.mxu0 0
    %6088 = vmatpush2.bf16.msra.mxu0 0
    %6089 = vmatprep.subr.bf16.mxu0 0
    %6090 = vmatpush2.bf16.msra.mxu0 0
    %6091 = vmatprep.subr.bf16.mxu0 0
    %6092 = vmatpush2.bf16.msra.mxu0 0
    %6093 = vmatprep.subr.bf16.mxu0 0
    %6094 = vmatpush2.bf16.msra.mxu0 0
    %6095 = vmatprep.subr.bf16.mxu0 0
    %6096 = vmatpush2.bf16.msra.mxu0 0
    %6097 = vmatprep.subr.bf16.mxu0 0
    %6098 = vmatpush2.bf16.msra.mxu0 0
    %6099 = vmatprep.subr.bf16.mxu0 0
    %6100 = vmatpush2.bf16.msra.mxu0 0
    %6101 = vmatprep.subr.bf16.mxu0 0
    %6102 = vmatpush2.bf16.msra.mxu0 0
    %6103 = vmatprep.mubr.bf16.mxu0 0
    %6104 = vmatmul.mubr.bf16.gmra.mxu0 %v5837
    %v6105 = vpop.f32.mrf.mxu0
    %v6106 = vadd.f32 0.0, %v6105
    %v6107 = vpop.f32.mrf.mxu0
    %v6108 = vadd.f32 0.0, %v6107
    %v6109 = vpop.f32.mrf.mxu0
    %v6110 = vpop.f32.mrf.mxu0
    %6111 = vdwg.mxu0
    %v6112 = vadd.f32 %v5789, %v6065
    %v6113 = vadd.f32 %v5791, %v6067
    %v6114 = vadd.f32 %v5830, %v6106
    %v6115 = vadd.f32 %v5832, %v6108
    %v6116 = vld [vmem:[#allocation6] sm:$0xff]
    %v6117 = vxor.u32 %v6112, 2147483648
    %v6118 = vxor.u32 %v6113, 2147483648
    %v6119 = vxor.u32 %v6114, 2147483648
    %v6120 = vmul.f32 %v6117, 1.442695
    %v6121 = vpow.pop %v6120
    %v6122 = vmul.f32 %v6118, 1.442695
    %v6123 = vpow.pop %v6122
    %v6124 = vmul.f32 %v6119, 1.442695
    %v6125 = vpow.pop %v6124
    %v6126 = vadd.f32 %v6121, 1.0
    %v6127 = vadd.f32 %v6123, 1.0
    %v6128 = vadd.f32 %v6125, 1.0
    %v6129 = vrcp.pop %v6126
    %v6130 = vmul.f32 1.0, %v6129
    %v6131 = vrcp.pop %v6127
    %v6132 = vmul.f32 1.0, %v6131
    %v6133 = vrcp.pop %v6128
    %v6134 = vmul.f32 1.0, %v6133
    %v6135 = vtanh.pop %v6115
    %v6136 = vmul.f32 %v6132, %v6116
    %v6137 = vmul.f32 %v6130, %v6135
    %v6138 = vadd.f32 %v6136, %v6137
    %v6139 = vtanh.pop %v6138
    %v6140 = vmul.f32 %v6134, %v6139
    %6141 = vst [vmem:[#allocation5] sm:$0xff] %v6140
    %6142 = vst [vmem:[#allocation6] sm:$0xff] %v6138
    %6143 = vst [vmem:[#allocation3] sm:$0xff] %v5539
    %6144 = vst [vmem:[#allocation4] sm:$0xff] %v5537
    %v6145 = vld [vmem:[#allocation3] sm:$0xff]
    %v6146 = vld [vmem:[#allocation4] sm:$0xff]
    %v6147 = vld [vmem:[#allocation2 + $0xe0] sm:$0xff]
    %v6148 = vld [vmem:[#allocation2 + $0xe8] sm:$0xff]
    %v6149 = vld [vmem:[#allocation2 + $0xf0] sm:$0xff]
    %v6150 = vld [vmem:[#allocation2 + $0xf8] sm:$0xff]
    %v6151 = vpack.c.bf16 %v6145, %v6145
    %v6152 = vld [vmem:[#allocation7] sm:$0xff]
    %v6153 = vld [vmem:[#allocation7 + $0x8] sm:$0xff]
    %v6154 = vld [vmem:[#allocation7 + $0x10] sm:$0xff]
    %v6155 = vld [vmem:[#allocation7 + $0x18] sm:$0xff]
    %v6156 = vld [vmem:[#allocation7 + $0x20] sm:$0xff]
    %v6157 = vld [vmem:[#allocation7 + $0x28] sm:$0xff]
    %v6158 = vld [vmem:[#allocation7 + $0x30] sm:$0xff]
    %v6159 = vld [vmem:[#allocation7 + $0x38] sm:$0xff]
    %v6160 = vld [vmem:[#allocation7 + $0x40] sm:$0xff]
    %v6161 = vld [vmem:[#allocation7 + $0x48] sm:$0xff]
    %v6162 = vld [vmem:[#allocation7 + $0x50] sm:$0xff]
    %v6163 = vld [vmem:[#allocation7 + $0x58] sm:$0xff]
    %v6164 = vld [vmem:[#allocation7 + $0x60] sm:$0xff]
    %v6165 = vld [vmem:[#allocation7 + $0x68] sm:$0xff]
    %v6166 = vld [vmem:[#allocation7 + $0x70] sm:$0xff]
    %v6167 = vld [vmem:[#allocation7 + $0x78] sm:$0xff]
    %v6168 = vld [vmem:[#allocation7 + $0x80] sm:$0xff]
    %v6169 = vld [vmem:[#allocation7 + $0x88] sm:$0xff]
    %v6170 = vld [vmem:[#allocation7 + $0x90] sm:$0xff]
    %v6171 = vld [vmem:[#allocation7 + $0x98] sm:$0xff]
    %v6172 = vld [vmem:[#allocation7 + $0xa0] sm:$0xff]
    %v6173 = vld [vmem:[#allocation7 + $0xa8] sm:$0xff]
    %v6174 = vld [vmem:[#allocation7 + $0xb0] sm:$0xff]
    %v6175 = vld [vmem:[#allocation7 + $0xb8] sm:$0xff]
    %v6176 = vld [vmem:[#allocation7 + $0xc0] sm:$0xff]
    %v6177 = vld [vmem:[#allocation7 + $0xc8] sm:$0xff]
    %v6178 = vld [vmem:[#allocation7 + $0xd0] sm:$0xff]
    %v6179 = vld [vmem:[#allocation7 + $0xd8] sm:$0xff]
    %v6180 = vld [vmem:[#allocation7 + $0xe0] sm:$0xff]
    %v6181 = vld [vmem:[#allocation7 + $0xe8] sm:$0xff]
    %v6182 = vld [vmem:[#allocation7 + $0xf0] sm:$0xff]
    %v6183 = vld [vmem:[#allocation7 + $0xf8] sm:$0xff]
    %v6216 = vunpack.c.l.b16 %v6152
    %v6217 = vunpack.c.h.b16 %v6152
    %v6218 = vunpack.c.l.b16 %v6153
    %v6219 = vunpack.c.h.b16 %v6153
    %v6220 = vunpack.c.l.b16 %v6154
    %v6221 = vunpack.c.h.b16 %v6154
    %v6222 = vunpack.c.l.b16 %v6155
    %v6223 = vunpack.c.h.b16 %v6155
    %v6224 = vunpack.c.l.b16 %v6156
    %v6225 = vunpack.c.h.b16 %v6156
    %v6226 = vunpack.c.l.b16 %v6157
    %v6227 = vunpack.c.h.b16 %v6157
    %v6228 = vunpack.c.l.b16 %v6158
    %v6229 = vunpack.c.h.b16 %v6158
    %v6230 = vunpack.c.l.b16 %v6159
    %v6231 = vunpack.c.h.b16 %v6159
    %v6232 = vunpack.c.l.b16 %v6160
    %v6233 = vunpack.c.h.b16 %v6160
    %v6234 = vunpack.c.l.b16 %v6161
    %v6235 = vunpack.c.h.b16 %v6161
    %v6236 = vunpack.c.l.b16 %v6162
    %v6237 = vunpack.c.h.b16 %v6162
    %v6238 = vunpack.c.l.b16 %v6163
    %v6239 = vunpack.c.h.b16 %v6163
    %v6240 = vunpack.c.l.b16 %v6164
    %v6241 = vunpack.c.h.b16 %v6164
    %v6242 = vunpack.c.l.b16 %v6165
    %v6243 = vunpack.c.h.b16 %v6165
    %v6244 = vunpack.c.l.b16 %v6166
    %v6245 = vunpack.c.h.b16 %v6166
    %v6246 = vunpack.c.l.b16 %v6167
    %v6247 = vunpack.c.h.b16 %v6167
    %v6248 = vunpack.c.l.b16 %v6168
    %v6249 = vunpack.c.h.b16 %v6168
    %v6250 = vunpack.c.l.b16 %v6169
    %v6251 = vunpack.c.h.b16 %v6169
    %v6252 = vunpack.c.l.b16 %v6170
    %v6253 = vunpack.c.h.b16 %v6170
    %v6254 = vunpack.c.l.b16 %v6171
    %v6255 = vunpack.c.h.b16 %v6171
    %v6256 = vunpack.c.l.b16 %v6172
    %v6257 = vunpack.c.h.b16 %v6172
    %v6258 = vunpack.c.l.b16 %v6173
    %v6259 = vunpack.c.h.b16 %v6173
    %v6260 = vunpack.c.l.b16 %v6174
    %v6261 = vunpack.c.h.b16 %v6174
    %v6262 = vunpack.c.l.b16 %v6175
    %v6263 = vunpack.c.h.b16 %v6175
    %v6264 = vunpack.c.l.b16 %v6176
    %v6265 = vunpack.c.h.b16 %v6176
    %v6266 = vunpack.c.l.b16 %v6177
    %v6267 = vunpack.c.h.b16 %v6177
    %v6268 = vunpack.c.l.b16 %v6178
    %v6269 = vunpack.c.h.b16 %v6178
    %v6270 = vunpack.c.l.b16 %v6179
    %v6271 = vunpack.c.h.b16 %v6179
    %v6272 = vunpack.c.l.b16 %v6180
    %v6273 = vunpack.c.h.b16 %v6180
    %v6274 = vunpack.c.l.b16 %v6181
    %v6275 = vunpack.c.h.b16 %v6181
    %v6276 = vunpack.c.l.b16 %v6182
    %v6277 = vunpack.c.h.b16 %v6182
    %v6278 = vunpack.c.l.b16 %v6183
    %v6279 = vunpack.c.h.b16 %v6183
    %v6280 = vpack.c.b16 %v6220, %v6216
    %v6281 = vpack.c.b16 %v6221, %v6217
    %v6282 = vpack.c.b16 %v6222, %v6218
    %v6283 = vpack.c.b16 %v6223, %v6219
    %v6284 = vpack.c.b16 %v6228, %v6224
    %v6285 = vpack.c.b16 %v6229, %v6225
    %v6286 = vpack.c.b16 %v6230, %v6226
    %v6287 = vpack.c.b16 %v6231, %v6227
    %v6288 = vpack.c.b16 %v6236, %v6232
    %v6289 = vpack.c.b16 %v6237, %v6233
    %v6290 = vpack.c.b16 %v6238, %v6234
    %v6291 = vpack.c.b16 %v6239, %v6235
    %v6292 = vpack.c.b16 %v6244, %v6240
    %v6293 = vpack.c.b16 %v6245, %v6241
    %v6294 = vpack.c.b16 %v6246, %v6242
    %v6295 = vpack.c.b16 %v6247, %v6243
    %v6296 = vpack.c.b16 %v6252, %v6248
    %v6297 = vpack.c.b16 %v6253, %v6249
    %v6298 = vpack.c.b16 %v6254, %v6250
    %v6299 = vpack.c.b16 %v6255, %v6251
    %v6300 = vpack.c.b16 %v6260, %v6256
    %v6301 = vpack.c.b16 %v6261, %v6257
    %v6302 = vpack.c.b16 %v6262, %v6258
    %v6303 = vpack.c.b16 %v6263, %v6259
    %v6304 = vpack.c.b16 %v6268, %v6264
    %v6305 = vpack.c.b16 %v6269, %v6265
    %v6306 = vpack.c.b16 %v6270, %v6266
    %v6307 = vpack.c.b16 %v6271, %v6267
    %v6308 = vpack.c.b16 %v6276, %v6272
    %v6309 = vpack.c.b16 %v6277, %v6273
    %v6310 = vpack.c.b16 %v6278, %v6274
    %v6311 = vpack.c.b16 %v6279, %v6275
    %6344 = vmatprep.subr.bf16.mxu0 %v6309
    %6345 = vmatpush1.bf16.msra.mxu0 %v6308
    %6346 = vmatprep.subr.bf16.mxu0 %v6305
    %6347 = vmatpush1.bf16.msra.mxu0 %v6304
    %6348 = vmatprep.subr.bf16.mxu0 %v6301
    %6349 = vmatpush1.bf16.msra.mxu0 %v6300
    %6350 = vmatprep.subr.bf16.mxu0 %v6297
    %6351 = vmatpush1.bf16.msra.mxu0 %v6296
    %6352 = vmatprep.subr.bf16.mxu0 %v6293
    %6353 = vmatpush1.bf16.msra.mxu0 %v6292
    %6354 = vmatprep.subr.bf16.mxu0 %v6289
    %6355 = vmatpush1.bf16.msra.mxu0 %v6288
    %6356 = vmatprep.subr.bf16.mxu0 %v6285
    %6357 = vmatpush1.bf16.msra.mxu0 %v6284
    %6358 = vmatprep.subr.bf16.mxu0 %v6281
    %6359 = vmatpush1.bf16.msra.mxu0 %v6280
    %6360 = vmatprep.subr.bf16.mxu0 0
    %6361 = vmatpush2.bf16.msra.mxu0 0
    %6362 = vmatprep.subr.bf16.mxu0 0
    %6363 = vmatpush2.bf16.msra.mxu0 0
    %6364 = vmatprep.subr.bf16.mxu0 0
    %6365 = vmatpush2.bf16.msra.mxu0 0
    %6366 = vmatprep.subr.bf16.mxu0 0
    %6367 = vmatpush2.bf16.msra.mxu0 0
    %6368 = vmatprep.subr.bf16.mxu0 0
    %6369 = vmatpush2.bf16.msra.mxu0 0
    %6370 = vmatprep.subr.bf16.mxu0 0
    %6371 = vmatpush2.bf16.msra.mxu0 0
    %6372 = vmatprep.subr.bf16.mxu0 0
    %6373 = vmatpush2.bf16.msra.mxu0 0
    %6374 = vmatprep.subr.bf16.mxu0 0
    %6375 = vmatpush2.bf16.msra.mxu0 0
    %6376 = vmatprep.mubr.bf16.mxu0 0
    %6377 = vmatmul.mubr.bf16.gmra.mxu0 %v6151
    %v6378 = vpop.f32.mrf.mxu0
    %v6379 = vadd.f32 0.0, %v6378
    %v6380 = vpop.f32.mrf.mxu0
    %v6381 = vadd.f32 0.0, %v6380
    %v6382 = vpop.f32.mrf.mxu0
    %v6383 = vpop.f32.mrf.mxu0
    %6384 = vdwg.mxu0
    %6385 = vmatprep.subr.bf16.mxu0 %v6311
    %6386 = vmatpush1.bf16.msra.mxu0 %v6310
    %6387 = vmatprep.subr.bf16.mxu0 %v6307
    %6388 = vmatpush1.bf16.msra.mxu0 %v6306
    %6389 = vmatprep.subr.bf16.mxu0 %v6303
    %6390 = vmatpush1.bf16.msra.mxu0 %v6302
    %6391 = vmatprep.subr.bf16.mxu0 %v6299
    %6392 = vmatpush1.bf16.msra.mxu0 %v6298
    %6393 = vmatprep.subr.bf16.mxu0 %v6295
    %6394 = vmatpush1.bf16.msra.mxu0 %v6294
    %6395 = vmatprep.subr.bf16.mxu0 %v6291
    %6396 = vmatpush1.bf16.msra.mxu0 %v6290
    %6397 = vmatprep.subr.bf16.mxu0 %v6287
    %6398 = vmatpush1.bf16.msra.mxu0 %v6286
    %6399 = vmatprep.subr.bf16.mxu0 %v6283
    %6400 = vmatpush1.bf16.msra.mxu0 %v6282
    %6401 = vmatprep.subr.bf16.mxu0 0
    %6402 = vmatpush2.bf16.msra.mxu0 0
    %6403 = vmatprep.subr.bf16.mxu0 0
    %6404 = vmatpush2.bf16.msra.mxu0 0
    %6405 = vmatprep.subr.bf16.mxu0 0
    %6406 = vmatpush2.bf16.msra.mxu0 0
    %6407 = vmatprep.subr.bf16.mxu0 0
    %6408 = vmatpush2.bf16.msra.mxu0 0
    %6409 = vmatprep.subr.bf16.mxu0 0
    %6410 = vmatpush2.bf16.msra.mxu0 0
    %6411 = vmatprep.subr.bf16.mxu0 0
    %6412 = vmatpush2.bf16.msra.mxu0 0
    %6413 = vmatprep.subr.bf16.mxu0 0
    %6414 = vmatpush2.bf16.msra.mxu0 0
    %6415 = vmatprep.subr.bf16.mxu0 0
    %6416 = vmatpush2.bf16.msra.mxu0 0
    %6417 = vmatprep.mubr.bf16.mxu0 0
    %6418 = vmatmul.mubr.bf16.gmra.mxu0 %v6151
    %v6419 = vpop.f32.mrf.mxu0
    %v6420 = vadd.f32 0.0, %v6419
    %v6421 = vpop.f32.mrf.mxu0
    %v6422 = vadd.f32 0.0, %v6421
    %v6423 = vpop.f32.mrf.mxu0
    %v6424 = vpop.f32.mrf.mxu0
    %6425 = vdwg.mxu0
    %v6426 = vadd.f32 %v6147, %v6379
    %v6427 = vadd.f32 %v6148, %v6381
    %v6428 = vadd.f32 %v6149, %v6420
    %v6429 = vadd.f32 %v6150, %v6422
    %v6430 = vxor.u32 %v6426, 2147483648
    %v6431 = vxor.u32 %v6427, 2147483648
    %v6432 = vxor.u32 %v6428, 2147483648
    %v6433 = vmul.f32 %v6430, 1.442695
    %v6434 = vpow.pop %v6433
    %v6435 = vmul.f32 %v6431, 1.442695
    %v6436 = vpow.pop %v6435
    %v6437 = vmul.f32 %v6432, 1.442695
    %v6438 = vpow.pop %v6437
    %v6439 = vadd.f32 %v6434, 1.0
    %v6440 = vadd.f32 %v6436, 1.0
    %v6441 = vadd.f32 %v6438, 1.0
    %v6442 = vrcp.pop %v6439
    %v6443 = vmul.f32 1.0, %v6442
    %v6444 = vrcp.pop %v6440
    %v6445 = vmul.f32 1.0, %v6444
    %v6446 = vrcp.pop %v6441
    %v6447 = vmul.f32 1.0, %v6446
    %v6448 = vtanh.pop %v6429
    %v6449 = vmul.f32 %v6445, %v6146
    %v6450 = vmul.f32 %v6443, %v6448
    %v6451 = vadd.f32 %v6449, %v6450
    %v6452 = vtanh.pop %v6451
    %v6453 = vmul.f32 %v6447, %v6452
    %v6454 = vld [vmem:[#allocation10] sm:$0xff]
    %v6455 = vld [vmem:[#allocation10 + $0x8] sm:$0xff]
    %v6456 = vld [vmem:[#allocation10 + $0x10] sm:$0xff]
    %v6457 = vld [vmem:[#allocation10 + $0x18] sm:$0xff]
    %v6458 = vld [vmem:[#allocation10 + $0x20] sm:$0xff]
    %v6459 = vld [vmem:[#allocation10 + $0x28] sm:$0xff]
    %v6460 = vld [vmem:[#allocation10 + $0x30] sm:$0xff]
    %v6461 = vld [vmem:[#allocation10 + $0x38] sm:$0xff]
    %v6462 = vld [vmem:[#allocation10 + $0x40] sm:$0xff]
    %v6463 = vld [vmem:[#allocation10 + $0x48] sm:$0xff]
    %v6464 = vld [vmem:[#allocation10 + $0x50] sm:$0xff]
    %v6465 = vld [vmem:[#allocation10 + $0x58] sm:$0xff]
    %v6466 = vld [vmem:[#allocation10 + $0x60] sm:$0xff]
    %v6467 = vld [vmem:[#allocation10 + $0x68] sm:$0xff]
    %v6468 = vld [vmem:[#allocation10 + $0x70] sm:$0xff]
    %v6469 = vld [vmem:[#allocation10 + $0x78] sm:$0xff]
    %v6470 = vld [vmem:[#allocation10 + $0x80] sm:$0xff]
    %v6471 = vld [vmem:[#allocation10 + $0x88] sm:$0xff]
    %v6472 = vld [vmem:[#allocation10 + $0x90] sm:$0xff]
    %v6473 = vld [vmem:[#allocation10 + $0x98] sm:$0xff]
    %v6474 = vld [vmem:[#allocation10 + $0xa0] sm:$0xff]
    %v6475 = vld [vmem:[#allocation10 + $0xa8] sm:$0xff]
    %v6476 = vld [vmem:[#allocation10 + $0xb0] sm:$0xff]
    %v6477 = vld [vmem:[#allocation10 + $0xb8] sm:$0xff]
    %v6478 = vld [vmem:[#allocation10 + $0xc0] sm:$0xff]
    %v6479 = vld [vmem:[#allocation10 + $0xc8] sm:$0xff]
    %v6480 = vld [vmem:[#allocation10 + $0xd0] sm:$0xff]
    %v6481 = vld [vmem:[#allocation10 + $0xd8] sm:$0xff]
    %v6482 = vld [vmem:[#allocation10 + $0xe0] sm:$0xff]
    %v6483 = vld [vmem:[#allocation10 + $0xe8] sm:$0xff]
    %v6484 = vld [vmem:[#allocation10 + $0xf0] sm:$0xff]
    %v6485 = vld [vmem:[#allocation10 + $0xf8] sm:$0xff]
    %v6486 = vld [vmem:[%s6] sm:$0xf]
    %v6488 = vlaneseq
    %v6489 = vshrl.u32 %v6488, 7
    %v6490 = vsub.s32 0, %v6489
    %v6491 = vrot.slane %v6486, %v6490
    %v6492 = vlaneseq
    %v6493 = vshrl.u32 %v6492, 7
    %v6494 = vsub.s32 1, %v6493
    %v6495 = vrot.slane %v6486, %v6494
    %v6496 = vlaneseq
    %v6497 = vshrl.u32 %v6496, 7
    %v6498 = vsub.s32 2, %v6497
    %v6499 = vrot.slane %v6486, %v6498
    %v6500 = vlaneseq
    %v6501 = vshrl.u32 %v6500, 7
    %v6502 = vsub.s32 3, %v6501
    %v6503 = vrot.slane %v6486, %v6502
    %v6540 = vunpack.c.l.b16 %v6454
    %v6541 = vunpack.c.h.b16 %v6454
    %v6542 = vunpack.c.l.b16 %v6455
    %v6543 = vunpack.c.h.b16 %v6455
    %v6544 = vunpack.c.l.b16 %v6456
    %v6545 = vunpack.c.h.b16 %v6456
    %v6546 = vunpack.c.l.b16 %v6457
    %v6547 = vunpack.c.h.b16 %v6457
    %v6548 = vunpack.c.l.b16 %v6458
    %v6549 = vunpack.c.h.b16 %v6458
    %v6550 = vunpack.c.l.b16 %v6459
    %v6551 = vunpack.c.h.b16 %v6459
    %v6552 = vunpack.c.l.b16 %v6460
    %v6553 = vunpack.c.h.b16 %v6460
    %v6554 = vunpack.c.l.b16 %v6461
    %v6555 = vunpack.c.h.b16 %v6461
    %v6556 = vunpack.c.l.b16 %v6462
    %v6557 = vunpack.c.h.b16 %v6462
    %v6558 = vunpack.c.l.b16 %v6463
    %v6559 = vunpack.c.h.b16 %v6463
    %v6560 = vunpack.c.l.b16 %v6464
    %v6561 = vunpack.c.h.b16 %v6464
    %v6562 = vunpack.c.l.b16 %v6465
    %v6563 = vunpack.c.h.b16 %v6465
    %v6564 = vunpack.c.l.b16 %v6466
    %v6565 = vunpack.c.h.b16 %v6466
    %v6566 = vunpack.c.l.b16 %v6467
    %v6567 = vunpack.c.h.b16 %v6467
    %v6568 = vunpack.c.l.b16 %v6468
    %v6569 = vunpack.c.h.b16 %v6468
    %v6570 = vunpack.c.l.b16 %v6469
    %v6571 = vunpack.c.h.b16 %v6469
    %v6572 = vunpack.c.l.b16 %v6470
    %v6573 = vunpack.c.h.b16 %v6470
    %v6574 = vunpack.c.l.b16 %v6471
    %v6575 = vunpack.c.h.b16 %v6471
    %v6576 = vunpack.c.l.b16 %v6472
    %v6577 = vunpack.c.h.b16 %v6472
    %v6578 = vunpack.c.l.b16 %v6473
    %v6579 = vunpack.c.h.b16 %v6473
    %v6580 = vunpack.c.l.b16 %v6474
    %v6581 = vunpack.c.h.b16 %v6474
    %v6582 = vunpack.c.l.b16 %v6475
    %v6583 = vunpack.c.h.b16 %v6475
    %v6584 = vunpack.c.l.b16 %v6476
    %v6585 = vunpack.c.h.b16 %v6476
    %v6586 = vunpack.c.l.b16 %v6477
    %v6587 = vunpack.c.h.b16 %v6477
    %v6588 = vunpack.c.l.b16 %v6478
    %v6589 = vunpack.c.h.b16 %v6478
    %v6590 = vunpack.c.l.b16 %v6479
    %v6591 = vunpack.c.h.b16 %v6479
    %v6592 = vunpack.c.l.b16 %v6480
    %v6593 = vunpack.c.h.b16 %v6480
    %v6594 = vunpack.c.l.b16 %v6481
    %v6595 = vunpack.c.h.b16 %v6481
    %v6596 = vunpack.c.l.b16 %v6482
    %v6597 = vunpack.c.h.b16 %v6482
    %v6598 = vunpack.c.l.b16 %v6483
    %v6599 = vunpack.c.h.b16 %v6483
    %v6600 = vunpack.c.l.b16 %v6484
    %v6601 = vunpack.c.h.b16 %v6484
    %v6602 = vunpack.c.l.b16 %v6485
    %v6603 = vunpack.c.h.b16 %v6485
    %v6604 = vpack.c.b16 %v6544, %v6540
    %v6605 = vpack.c.b16 %v6545, %v6541
    %v6606 = vpack.c.b16 %v6546, %v6542
    %v6607 = vpack.c.b16 %v6547, %v6543
    %v6608 = vpack.c.b16 %v6552, %v6548
    %v6609 = vpack.c.b16 %v6553, %v6549
    %v6610 = vpack.c.b16 %v6554, %v6550
    %v6611 = vpack.c.b16 %v6555, %v6551
    %v6612 = vpack.c.b16 %v6560, %v6556
    %v6613 = vpack.c.b16 %v6561, %v6557
    %v6614 = vpack.c.b16 %v6562, %v6558
    %v6615 = vpack.c.b16 %v6563, %v6559
    %v6616 = vpack.c.b16 %v6568, %v6564
    %v6617 = vpack.c.b16 %v6569, %v6565
    %v6618 = vpack.c.b16 %v6570, %v6566
    %v6619 = vpack.c.b16 %v6571, %v6567
    %v6620 = vpack.c.b16 %v6576, %v6572
    %v6621 = vpack.c.b16 %v6577, %v6573
    %v6622 = vpack.c.b16 %v6578, %v6574
    %v6623 = vpack.c.b16 %v6579, %v6575
    %v6624 = vpack.c.b16 %v6584, %v6580
    %v6625 = vpack.c.b16 %v6585, %v6581
    %v6626 = vpack.c.b16 %v6586, %v6582
    %v6627 = vpack.c.b16 %v6587, %v6583
    %v6628 = vpack.c.b16 %v6592, %v6588
    %v6629 = vpack.c.b16 %v6593, %v6589
    %v6630 = vpack.c.b16 %v6594, %v6590
    %v6631 = vpack.c.b16 %v6595, %v6591
    %v6632 = vpack.c.b16 %v6600, %v6596
    %v6633 = vpack.c.b16 %v6601, %v6597
    %v6634 = vpack.c.b16 %v6602, %v6598
    %v6635 = vpack.c.b16 %v6603, %v6599
    %6668 = vmatprep.subr.bf16.mxu0 %v6633
    %6669 = vmatpush1.bf16.msra.mxu0 %v6632
    %6670 = vmatprep.subr.bf16.mxu0 %v6629
    %6671 = vmatpush1.bf16.msra.mxu0 %v6628
    %6672 = vmatprep.subr.bf16.mxu0 %v6625
    %6673 = vmatpush1.bf16.msra.mxu0 %v6624
    %6674 = vmatprep.subr.bf16.mxu0 %v6621
    %6675 = vmatpush1.bf16.msra.mxu0 %v6620
    %6676 = vmatprep.subr.bf16.mxu0 %v6617
    %6677 = vmatpush1.bf16.msra.mxu0 %v6616
    %6678 = vmatprep.subr.bf16.mxu0 %v6613
    %6679 = vmatpush1.bf16.msra.mxu0 %v6612
    %6680 = vmatprep.subr.bf16.mxu0 %v6609
    %6681 = vmatpush1.bf16.msra.mxu0 %v6608
    %6682 = vmatprep.subr.bf16.mxu0 %v6605
    %6683 = vmatpush1.bf16.msra.mxu0 %v6604
    %6684 = vmatprep.subr.bf16.mxu0 0
    %6685 = vmatpush2.bf16.msra.mxu0 0
    %6686 = vmatprep.subr.bf16.mxu0 0
    %6687 = vmatpush2.bf16.msra.mxu0 0
    %6688 = vmatprep.subr.bf16.mxu0 0
    %6689 = vmatpush2.bf16.msra.mxu0 0
    %6690 = vmatprep.subr.bf16.mxu0 0
    %6691 = vmatpush2.bf16.msra.mxu0 0
    %6692 = vmatprep.subr.bf16.mxu0 0
    %6693 = vmatpush2.bf16.msra.mxu0 0
    %6694 = vmatprep.subr.bf16.mxu0 0
    %6695 = vmatpush2.bf16.msra.mxu0 0
    %6696 = vmatprep.subr.bf16.mxu0 0
    %6697 = vmatpush2.bf16.msra.mxu0 0
    %6698 = vmatprep.subr.bf16.mxu0 0
    %6699 = vmatpush2.bf16.msra.mxu0 0
    %6700 = vmatprep.mubr.bf16.mxu0 0
    %6701 = vmatmul.mubr.bf16.gmra.mxu0 %v6151
    %v6702 = vpop.f32.mrf.mxu0
    %v6703 = vadd.f32 %v6491, %v6702
    %v6704 = vpop.f32.mrf.mxu0
    %v6705 = vadd.f32 %v6495, %v6704
    %v6706 = vpop.f32.mrf.mxu0
    %v6707 = vpop.f32.mrf.mxu0
    %6708 = vdwg.mxu0
    %6709 = vmatprep.subr.bf16.mxu0 %v6635
    %6710 = vmatpush1.bf16.msra.mxu0 %v6634
    %6711 = vmatprep.subr.bf16.mxu0 %v6631
    %6712 = vmatpush1.bf16.msra.mxu0 %v6630
    %6713 = vmatprep.subr.bf16.mxu0 %v6627
    %6714 = vmatpush1.bf16.msra.mxu0 %v6626
    %6715 = vmatprep.subr.bf16.mxu0 %v6623
    %6716 = vmatpush1.bf16.msra.mxu0 %v6622
    %6717 = vmatprep.subr.bf16.mxu0 %v6619
    %6718 = vmatpush1.bf16.msra.mxu0 %v6618
    %6719 = vmatprep.subr.bf16.mxu0 %v6615
    %6720 = vmatpush1.bf16.msra.mxu0 %v6614
    %6721 = vmatprep.subr.bf16.mxu0 %v6611
    %6722 = vmatpush1.bf16.msra.mxu0 %v6610
    %6723 = vmatprep.subr.bf16.mxu0 %v6607
    %6724 = vmatpush1.bf16.msra.mxu0 %v6606
    %6725 = vmatprep.subr.bf16.mxu0 0
    %6726 = vmatpush2.bf16.msra.mxu0 0
    %6727 = vmatprep.subr.bf16.mxu0 0
    %6728 = vmatpush2.bf16.msra.mxu0 0
    %6729 = vmatprep.subr.bf16.mxu0 0
    %6730 = vmatpush2.bf16.msra.mxu0 0
    %6731 = vmatprep.subr.bf16.mxu0 0
    %6732 = vmatpush2.bf16.msra.mxu0 0
    %6733 = vmatprep.subr.bf16.mxu0 0
    %6734 = vmatpush2.bf16.msra.mxu0 0
    %6735 = vmatprep.subr.bf16.mxu0 0
    %6736 = vmatpush2.bf16.msra.mxu0 0
    %6737 = vmatprep.subr.bf16.mxu0 0
    %6738 = vmatpush2.bf16.msra.mxu0 0
    %6739 = vmatprep.subr.bf16.mxu0 0
    %6740 = vmatpush2.bf16.msra.mxu0 0
    %6741 = vmatprep.mubr.bf16.mxu0 0
    %6742 = vmatmul.mubr.bf16.gmra.mxu0 %v6151
    %v6743 = vpop.f32.mrf.mxu0
    %v6744 = vadd.f32 %v6499, %v6743
    %v6745 = vpop.f32.mrf.mxu0
    %v6746 = vadd.f32 %v6503, %v6745
    %v6747 = vpop.f32.mrf.mxu0
    %v6748 = vpop.f32.mrf.mxu0
    %6749 = vdwg.mxu0
    %v6750 = vld [vmem:[#allocation5] sm:$0xff]
    %v6751 = vpack.c.bf16 %v6750, %v6750
    %v6752 = vld [vmem:[#allocation12] sm:$0xff]
    %v6753 = vld [vmem:[#allocation12 + $0x8] sm:$0xff]
    %v6754 = vld [vmem:[#allocation12 + $0x10] sm:$0xff]
    %v6755 = vld [vmem:[#allocation12 + $0x18] sm:$0xff]
    %v6756 = vld [vmem:[#allocation12 + $0x20] sm:$0xff]
    %v6757 = vld [vmem:[#allocation12 + $0x28] sm:$0xff]
    %v6758 = vld [vmem:[#allocation12 + $0x30] sm:$0xff]
    %v6759 = vld [vmem:[#allocation12 + $0x38] sm:$0xff]
    %v6760 = vld [vmem:[#allocation12 + $0x40] sm:$0xff]
    %v6761 = vld [vmem:[#allocation12 + $0x48] sm:$0xff]
    %v6762 = vld [vmem:[#allocation12 + $0x50] sm:$0xff]
    %v6763 = vld [vmem:[#allocation12 + $0x58] sm:$0xff]
    %v6764 = vld [vmem:[#allocation12 + $0x60] sm:$0xff]
    %v6765 = vld [vmem:[#allocation12 + $0x68] sm:$0xff]
    %v6766 = vld [vmem:[#allocation12 + $0x70] sm:$0xff]
    %v6767 = vld [vmem:[#allocation12 + $0x78] sm:$0xff]
    %v6768 = vld [vmem:[#allocation12 + $0x80] sm:$0xff]
    %v6769 = vld [vmem:[#allocation12 + $0x88] sm:$0xff]
    %v6770 = vld [vmem:[#allocation12 + $0x90] sm:$0xff]
    %v6771 = vld [vmem:[#allocation12 + $0x98] sm:$0xff]
    %v6772 = vld [vmem:[#allocation12 + $0xa0] sm:$0xff]
    %v6773 = vld [vmem:[#allocation12 + $0xa8] sm:$0xff]
    %v6774 = vld [vmem:[#allocation12 + $0xb0] sm:$0xff]
    %v6775 = vld [vmem:[#allocation12 + $0xb8] sm:$0xff]
    %v6776 = vld [vmem:[#allocation12 + $0xc0] sm:$0xff]
    %v6777 = vld [vmem:[#allocation12 + $0xc8] sm:$0xff]
    %v6778 = vld [vmem:[#allocation12 + $0xd0] sm:$0xff]
    %v6779 = vld [vmem:[#allocation12 + $0xd8] sm:$0xff]
    %v6780 = vld [vmem:[#allocation12 + $0xe0] sm:$0xff]
    %v6781 = vld [vmem:[#allocation12 + $0xe8] sm:$0xff]
    %v6782 = vld [vmem:[#allocation12 + $0xf0] sm:$0xff]
    %v6783 = vld [vmem:[#allocation12 + $0xf8] sm:$0xff]
    %v6816 = vunpack.c.l.b16 %v6752
    %v6817 = vunpack.c.h.b16 %v6752
    %v6818 = vunpack.c.l.b16 %v6753
    %v6819 = vunpack.c.h.b16 %v6753
    %v6820 = vunpack.c.l.b16 %v6754
    %v6821 = vunpack.c.h.b16 %v6754
    %v6822 = vunpack.c.l.b16 %v6755
    %v6823 = vunpack.c.h.b16 %v6755
    %v6824 = vunpack.c.l.b16 %v6756
    %v6825 = vunpack.c.h.b16 %v6756
    %v6826 = vunpack.c.l.b16 %v6757
    %v6827 = vunpack.c.h.b16 %v6757
    %v6828 = vunpack.c.l.b16 %v6758
    %v6829 = vunpack.c.h.b16 %v6758
    %v6830 = vunpack.c.l.b16 %v6759
    %v6831 = vunpack.c.h.b16 %v6759
    %v6832 = vunpack.c.l.b16 %v6760
    %v6833 = vunpack.c.h.b16 %v6760
    %v6834 = vunpack.c.l.b16 %v6761
    %v6835 = vunpack.c.h.b16 %v6761
    %v6836 = vunpack.c.l.b16 %v6762
    %v6837 = vunpack.c.h.b16 %v6762
    %v6838 = vunpack.c.l.b16 %v6763
    %v6839 = vunpack.c.h.b16 %v6763
    %v6840 = vunpack.c.l.b16 %v6764
    %v6841 = vunpack.c.h.b16 %v6764
    %v6842 = vunpack.c.l.b16 %v6765
    %v6843 = vunpack.c.h.b16 %v6765
    %v6844 = vunpack.c.l.b16 %v6766
    %v6845 = vunpack.c.h.b16 %v6766
    %v6846 = vunpack.c.l.b16 %v6767
    %v6847 = vunpack.c.h.b16 %v6767
    %v6848 = vunpack.c.l.b16 %v6768
    %v6849 = vunpack.c.h.b16 %v6768
    %v6850 = vunpack.c.l.b16 %v6769
    %v6851 = vunpack.c.h.b16 %v6769
    %v6852 = vunpack.c.l.b16 %v6770
    %v6853 = vunpack.c.h.b16 %v6770
    %v6854 = vunpack.c.l.b16 %v6771
    %v6855 = vunpack.c.h.b16 %v6771
    %v6856 = vunpack.c.l.b16 %v6772
    %v6857 = vunpack.c.h.b16 %v6772
    %v6858 = vunpack.c.l.b16 %v6773
    %v6859 = vunpack.c.h.b16 %v6773
    %v6860 = vunpack.c.l.b16 %v6774
    %v6861 = vunpack.c.h.b16 %v6774
    %v6862 = vunpack.c.l.b16 %v6775
    %v6863 = vunpack.c.h.b16 %v6775
    %v6864 = vunpack.c.l.b16 %v6776
    %v6865 = vunpack.c.h.b16 %v6776
    %v6866 = vunpack.c.l.b16 %v6777
    %v6867 = vunpack.c.h.b16 %v6777
    %v6868 = vunpack.c.l.b16 %v6778
    %v6869 = vunpack.c.h.b16 %v6778
    %v6870 = vunpack.c.l.b16 %v6779
    %v6871 = vunpack.c.h.b16 %v6779
    %v6872 = vunpack.c.l.b16 %v6780
    %v6873 = vunpack.c.h.b16 %v6780
    %v6874 = vunpack.c.l.b16 %v6781
    %v6875 = vunpack.c.h.b16 %v6781
    %v6876 = vunpack.c.l.b16 %v6782
    %v6877 = vunpack.c.h.b16 %v6782
    %v6878 = vunpack.c.l.b16 %v6783
    %v6879 = vunpack.c.h.b16 %v6783
    %v6880 = vpack.c.b16 %v6820, %v6816
    %v6881 = vpack.c.b16 %v6821, %v6817
    %v6882 = vpack.c.b16 %v6822, %v6818
    %v6883 = vpack.c.b16 %v6823, %v6819
    %v6884 = vpack.c.b16 %v6828, %v6824
    %v6885 = vpack.c.b16 %v6829, %v6825
    %v6886 = vpack.c.b16 %v6830, %v6826
    %v6887 = vpack.c.b16 %v6831, %v6827
    %v6888 = vpack.c.b16 %v6836, %v6832
    %v6889 = vpack.c.b16 %v6837, %v6833
    %v6890 = vpack.c.b16 %v6838, %v6834
    %v6891 = vpack.c.b16 %v6839, %v6835
    %v6892 = vpack.c.b16 %v6844, %v6840
    %v6893 = vpack.c.b16 %v6845, %v6841
    %v6894 = vpack.c.b16 %v6846, %v6842
    %v6895 = vpack.c.b16 %v6847, %v6843
    %v6896 = vpack.c.b16 %v6852, %v6848
    %v6897 = vpack.c.b16 %v6853, %v6849
    %v6898 = vpack.c.b16 %v6854, %v6850
    %v6899 = vpack.c.b16 %v6855, %v6851
    %v6900 = vpack.c.b16 %v6860, %v6856
    %v6901 = vpack.c.b16 %v6861, %v6857
    %v6902 = vpack.c.b16 %v6862, %v6858
    %v6903 = vpack.c.b16 %v6863, %v6859
    %v6904 = vpack.c.b16 %v6868, %v6864
    %v6905 = vpack.c.b16 %v6869, %v6865
    %v6906 = vpack.c.b16 %v6870, %v6866
    %v6907 = vpack.c.b16 %v6871, %v6867
    %v6908 = vpack.c.b16 %v6876, %v6872
    %v6909 = vpack.c.b16 %v6877, %v6873
    %v6910 = vpack.c.b16 %v6878, %v6874
    %v6911 = vpack.c.b16 %v6879, %v6875
    %6944 = vmatprep.subr.bf16.mxu0 %v6909
    %6945 = vmatpush1.bf16.msra.mxu0 %v6908
    %6946 = vmatprep.subr.bf16.mxu0 %v6905
    %6947 = vmatpush1.bf16.msra.mxu0 %v6904
    %6948 = vmatprep.subr.bf16.mxu0 %v6901
    %6949 = vmatpush1.bf16.msra.mxu0 %v6900
    %6950 = vmatprep.subr.bf16.mxu0 %v6897
    %6951 = vmatpush1.bf16.msra.mxu0 %v6896
    %6952 = vmatprep.subr.bf16.mxu0 %v6893
    %6953 = vmatpush1.bf16.msra.mxu0 %v6892
    %6954 = vmatprep.subr.bf16.mxu0 %v6889
    %6955 = vmatpush1.bf16.msra.mxu0 %v6888
    %6956 = vmatprep.subr.bf16.mxu0 %v6885
    %6957 = vmatpush1.bf16.msra.mxu0 %v6884
    %6958 = vmatprep.subr.bf16.mxu0 %v6881
    %6959 = vmatpush1.bf16.msra.mxu0 %v6880
    %6960 = vmatprep.subr.bf16.mxu0 0
    %6961 = vmatpush2.bf16.msra.mxu0 0
    %6962 = vmatprep.subr.bf16.mxu0 0
    %6963 = vmatpush2.bf16.msra.mxu0 0
    %6964 = vmatprep.subr.bf16.mxu0 0
    %6965 = vmatpush2.bf16.msra.mxu0 0
    %6966 = vmatprep.subr.bf16.mxu0 0
    %6967 = vmatpush2.bf16.msra.mxu0 0
    %6968 = vmatprep.subr.bf16.mxu0 0
    %6969 = vmatpush2.bf16.msra.mxu0 0
    %6970 = vmatprep.subr.bf16.mxu0 0
    %6971 = vmatpush2.bf16.msra.mxu0 0
    %6972 = vmatprep.subr.bf16.mxu0 0
    %6973 = vmatpush2.bf16.msra.mxu0 0
    %6974 = vmatprep.subr.bf16.mxu0 0
    %6975 = vmatpush2.bf16.msra.mxu0 0
    %6976 = vmatprep.mubr.bf16.mxu0 0
    %6977 = vmatmul.mubr.bf16.gmra.mxu0 %v6751
    %v6978 = vpop.f32.mrf.mxu0
    %v6979 = vadd.f32 0.0, %v6978
    %v6980 = vpop.f32.mrf.mxu0
    %v6981 = vadd.f32 0.0, %v6980
    %v6982 = vpop.f32.mrf.mxu0
    %v6983 = vpop.f32.mrf.mxu0
    %6984 = vdwg.mxu0
    %6985 = vmatprep.subr.bf16.mxu0 %v6911
    %6986 = vmatpush1.bf16.msra.mxu0 %v6910
    %6987 = vmatprep.subr.bf16.mxu0 %v6907
    %6988 = vmatpush1.bf16.msra.mxu0 %v6906
    %6989 = vmatprep.subr.bf16.mxu0 %v6903
    %6990 = vmatpush1.bf16.msra.mxu0 %v6902
    %6991 = vmatprep.subr.bf16.mxu0 %v6899
    %6992 = vmatpush1.bf16.msra.mxu0 %v6898
    %6993 = vmatprep.subr.bf16.mxu0 %v6895
    %6994 = vmatpush1.bf16.msra.mxu0 %v6894
    %6995 = vmatprep.subr.bf16.mxu0 %v6891
    %6996 = vmatpush1.bf16.msra.mxu0 %v6890
    %6997 = vmatprep.subr.bf16.mxu0 %v6887
    %6998 = vmatpush1.bf16.msra.mxu0 %v6886
    %6999 = vmatprep.subr.bf16.mxu0 %v6883
    %7000 = vmatpush1.bf16.msra.mxu0 %v6882
    %7001 = vmatprep.subr.bf16.mxu0 0
    %7002 = vmatpush2.bf16.msra.mxu0 0
    %7003 = vmatprep.subr.bf16.mxu0 0
    %7004 = vmatpush2.bf16.msra.mxu0 0
    %7005 = vmatprep.subr.bf16.mxu0 0
    %7006 = vmatpush2.bf16.msra.mxu0 0
    %7007 = vmatprep.subr.bf16.mxu0 0
    %7008 = vmatpush2.bf16.msra.mxu0 0
    %7009 = vmatprep.subr.bf16.mxu0 0
    %7010 = vmatpush2.bf16.msra.mxu0 0
    %7011 = vmatprep.subr.bf16.mxu0 0
    %7012 = vmatpush2.bf16.msra.mxu0 0
    %7013 = vmatprep.subr.bf16.mxu0 0
    %7014 = vmatpush2.bf16.msra.mxu0 0
    %7015 = vmatprep.subr.bf16.mxu0 0
    %7016 = vmatpush2.bf16.msra.mxu0 0
    %7017 = vmatprep.mubr.bf16.mxu0 0
    %7018 = vmatmul.mubr.bf16.gmra.mxu0 %v6751
    %v7019 = vpop.f32.mrf.mxu0
    %v7020 = vadd.f32 0.0, %v7019
    %v7021 = vpop.f32.mrf.mxu0
    %v7022 = vadd.f32 0.0, %v7021
    %v7023 = vpop.f32.mrf.mxu0
    %v7024 = vpop.f32.mrf.mxu0
    %7025 = vdwg.mxu0
    %v7026 = vadd.f32 %v6703, %v6979
    %v7027 = vadd.f32 %v6705, %v6981
    %v7028 = vadd.f32 %v6744, %v7020
    %v7029 = vadd.f32 %v6746, %v7022
    %v7030 = vld [vmem:[#allocation6] sm:$0xff]
    %v7031 = vxor.u32 %v7026, 2147483648
    %v7032 = vxor.u32 %v7027, 2147483648
    %v7033 = vxor.u32 %v7028, 2147483648
    %v7034 = vmul.f32 %v7031, 1.442695
    %v7035 = vpow.pop %v7034
    %v7036 = vmul.f32 %v7032, 1.442695
    %v7037 = vpow.pop %v7036
    %v7038 = vmul.f32 %v7033, 1.442695
    %v7039 = vpow.pop %v7038
    %v7040 = vadd.f32 %v7035, 1.0
    %v7041 = vadd.f32 %v7037, 1.0
    %v7042 = vadd.f32 %v7039, 1.0
    %v7043 = vrcp.pop %v7040
    %v7044 = vmul.f32 1.0, %v7043
    %v7045 = vrcp.pop %v7041
    %v7046 = vmul.f32 1.0, %v7045
    %v7047 = vrcp.pop %v7042
    %v7048 = vmul.f32 1.0, %v7047
    %v7049 = vtanh.pop %v7029
    %v7050 = vmul.f32 %v7046, %v7030
    %v7051 = vmul.f32 %v7044, %v7049
    %v7052 = vadd.f32 %v7050, %v7051
    %v7053 = vtanh.pop %v7052
    %v7054 = vmul.f32 %v7048, %v7053
    %7055 = vst [vmem:[#allocation5] sm:$0xff] %v7054
    %7056 = vst [vmem:[#allocation6] sm:$0xff] %v7052
    %7057 = vst [vmem:[#allocation3] sm:$0xff] %v6453
    %7058 = vst [vmem:[#allocation4] sm:$0xff] %v6451
    %v7059 = vld [vmem:[#allocation3] sm:$0xff]
    %v7060 = vpack.c.bf16 %v7059, %v7059
    %v7061 = vld [vmem:[#allocation10] sm:$0xff]
    %v7062 = vld [vmem:[#allocation10 + $0x8] sm:$0xff]
    %v7063 = vld [vmem:[#allocation10 + $0x10] sm:$0xff]
    %v7064 = vld [vmem:[#allocation10 + $0x18] sm:$0xff]
    %v7065 = vld [vmem:[#allocation10 + $0x20] sm:$0xff]
    %v7066 = vld [vmem:[#allocation10 + $0x28] sm:$0xff]
    %v7067 = vld [vmem:[#allocation10 + $0x30] sm:$0xff]
    %v7068 = vld [vmem:[#allocation10 + $0x38] sm:$0xff]
    %v7069 = vld [vmem:[#allocation10 + $0x40] sm:$0xff]
    %v7070 = vld [vmem:[#allocation10 + $0x48] sm:$0xff]
    %v7071 = vld [vmem:[#allocation10 + $0x50] sm:$0xff]
    %v7072 = vld [vmem:[#allocation10 + $0x58] sm:$0xff]
    %v7073 = vld [vmem:[#allocation10 + $0x60] sm:$0xff]
    %v7074 = vld [vmem:[#allocation10 + $0x68] sm:$0xff]
    %v7075 = vld [vmem:[#allocation10 + $0x70] sm:$0xff]
    %v7076 = vld [vmem:[#allocation10 + $0x78] sm:$0xff]
    %v7077 = vld [vmem:[#allocation10 + $0x80] sm:$0xff]
    %v7078 = vld [vmem:[#allocation10 + $0x88] sm:$0xff]
    %v7079 = vld [vmem:[#allocation10 + $0x90] sm:$0xff]
    %v7080 = vld [vmem:[#allocation10 + $0x98] sm:$0xff]
    %v7081 = vld [vmem:[#allocation10 + $0xa0] sm:$0xff]
    %v7082 = vld [vmem:[#allocation10 + $0xa8] sm:$0xff]
    %v7083 = vld [vmem:[#allocation10 + $0xb0] sm:$0xff]
    %v7084 = vld [vmem:[#allocation10 + $0xb8] sm:$0xff]
    %v7085 = vld [vmem:[#allocation10 + $0xc0] sm:$0xff]
    %v7086 = vld [vmem:[#allocation10 + $0xc8] sm:$0xff]
    %v7087 = vld [vmem:[#allocation10 + $0xd0] sm:$0xff]
    %v7088 = vld [vmem:[#allocation10 + $0xd8] sm:$0xff]
    %v7089 = vld [vmem:[#allocation10 + $0xe0] sm:$0xff]
    %v7090 = vld [vmem:[#allocation10 + $0xe8] sm:$0xff]
    %v7091 = vld [vmem:[#allocation10 + $0xf0] sm:$0xff]
    %v7092 = vld [vmem:[#allocation10 + $0xf8] sm:$0xff]
    %v7093 = vld [vmem:[%s6] sm:$0xf]
    %v7095 = vlaneseq
    %v7096 = vshrl.u32 %v7095, 7
    %v7097 = vsub.s32 0, %v7096
    %v7098 = vrot.slane %v7093, %v7097
    %v7099 = vlaneseq
    %v7100 = vshrl.u32 %v7099, 7
    %v7101 = vsub.s32 1, %v7100
    %v7102 = vrot.slane %v7093, %v7101
    %v7103 = vlaneseq
    %v7104 = vshrl.u32 %v7103, 7
    %v7105 = vsub.s32 2, %v7104
    %v7106 = vrot.slane %v7093, %v7105
    %v7107 = vlaneseq
    %v7108 = vshrl.u32 %v7107, 7
    %v7109 = vsub.s32 3, %v7108
    %v7110 = vrot.slane %v7093, %v7109
    %v7147 = vunpack.c.l.b16 %v7061
    %v7148 = vunpack.c.h.b16 %v7061
    %v7149 = vunpack.c.l.b16 %v7062
    %v7150 = vunpack.c.h.b16 %v7062
    %v7151 = vunpack.c.l.b16 %v7063
    %v7152 = vunpack.c.h.b16 %v7063
    %v7153 = vunpack.c.l.b16 %v7064
    %v7154 = vunpack.c.h.b16 %v7064
    %v7155 = vunpack.c.l.b16 %v7065
    %v7156 = vunpack.c.h.b16 %v7065
    %v7157 = vunpack.c.l.b16 %v7066
    %v7158 = vunpack.c.h.b16 %v7066
    %v7159 = vunpack.c.l.b16 %v7067
    %v7160 = vunpack.c.h.b16 %v7067
    %v7161 = vunpack.c.l.b16 %v7068
    %v7162 = vunpack.c.h.b16 %v7068
    %v7163 = vunpack.c.l.b16 %v7069
    %v7164 = vunpack.c.h.b16 %v7069
    %v7165 = vunpack.c.l.b16 %v7070
    %v7166 = vunpack.c.h.b16 %v7070
    %v7167 = vunpack.c.l.b16 %v7071
    %v7168 = vunpack.c.h.b16 %v7071
    %v7169 = vunpack.c.l.b16 %v7072
    %v7170 = vunpack.c.h.b16 %v7072
    %v7171 = vunpack.c.l.b16 %v7073
    %v7172 = vunpack.c.h.b16 %v7073
    %v7173 = vunpack.c.l.b16 %v7074
    %v7174 = vunpack.c.h.b16 %v7074
    %v7175 = vunpack.c.l.b16 %v7075
    %v7176 = vunpack.c.h.b16 %v7075
    %v7177 = vunpack.c.l.b16 %v7076
    %v7178 = vunpack.c.h.b16 %v7076
    %v7179 = vunpack.c.l.b16 %v7077
    %v7180 = vunpack.c.h.b16 %v7077
    %v7181 = vunpack.c.l.b16 %v7078
    %v7182 = vunpack.c.h.b16 %v7078
    %v7183 = vunpack.c.l.b16 %v7079
    %v7184 = vunpack.c.h.b16 %v7079
    %v7185 = vunpack.c.l.b16 %v7080
    %v7186 = vunpack.c.h.b16 %v7080
    %v7187 = vunpack.c.l.b16 %v7081
    %v7188 = vunpack.c.h.b16 %v7081
    %v7189 = vunpack.c.l.b16 %v7082
    %v7190 = vunpack.c.h.b16 %v7082
    %v7191 = vunpack.c.l.b16 %v7083
    %v7192 = vunpack.c.h.b16 %v7083
    %v7193 = vunpack.c.l.b16 %v7084
    %v7194 = vunpack.c.h.b16 %v7084
    %v7195 = vunpack.c.l.b16 %v7085
    %v7196 = vunpack.c.h.b16 %v7085
    %v7197 = vunpack.c.l.b16 %v7086
    %v7198 = vunpack.c.h.b16 %v7086
    %v7199 = vunpack.c.l.b16 %v7087
    %v7200 = vunpack.c.h.b16 %v7087
    %v7201 = vunpack.c.l.b16 %v7088
    %v7202 = vunpack.c.h.b16 %v7088
    %v7203 = vunpack.c.l.b16 %v7089
    %v7204 = vunpack.c.h.b16 %v7089
    %v7205 = vunpack.c.l.b16 %v7090
    %v7206 = vunpack.c.h.b16 %v7090
    %v7207 = vunpack.c.l.b16 %v7091
    %v7208 = vunpack.c.h.b16 %v7091
    %v7209 = vunpack.c.l.b16 %v7092
    %v7210 = vunpack.c.h.b16 %v7092
    %v7211 = vpack.c.b16 %v7151, %v7147
    %v7212 = vpack.c.b16 %v7152, %v7148
    %v7213 = vpack.c.b16 %v7153, %v7149
    %v7214 = vpack.c.b16 %v7154, %v7150
    %v7215 = vpack.c.b16 %v7159, %v7155
    %v7216 = vpack.c.b16 %v7160, %v7156
    %v7217 = vpack.c.b16 %v7161, %v7157
    %v7218 = vpack.c.b16 %v7162, %v7158
    %v7219 = vpack.c.b16 %v7167, %v7163
    %v7220 = vpack.c.b16 %v7168, %v7164
    %v7221 = vpack.c.b16 %v7169, %v7165
    %v7222 = vpack.c.b16 %v7170, %v7166
    %v7223 = vpack.c.b16 %v7175, %v7171
    %v7224 = vpack.c.b16 %v7176, %v7172
    %v7225 = vpack.c.b16 %v7177, %v7173
    %v7226 = vpack.c.b16 %v7178, %v7174
    %v7227 = vpack.c.b16 %v7183, %v7179
    %v7228 = vpack.c.b16 %v7184, %v7180
    %v7229 = vpack.c.b16 %v7185, %v7181
    %v7230 = vpack.c.b16 %v7186, %v7182
    %v7231 = vpack.c.b16 %v7191, %v7187
    %v7232 = vpack.c.b16 %v7192, %v7188
    %v7233 = vpack.c.b16 %v7193, %v7189
    %v7234 = vpack.c.b16 %v7194, %v7190
    %v7235 = vpack.c.b16 %v7199, %v7195
    %v7236 = vpack.c.b16 %v7200, %v7196
    %v7237 = vpack.c.b16 %v7201, %v7197
    %v7238 = vpack.c.b16 %v7202, %v7198
    %v7239 = vpack.c.b16 %v7207, %v7203
    %v7240 = vpack.c.b16 %v7208, %v7204
    %v7241 = vpack.c.b16 %v7209, %v7205
    %v7242 = vpack.c.b16 %v7210, %v7206
    %7275 = vmatprep.subr.bf16.mxu0 %v7240
    %7276 = vmatpush1.bf16.msra.mxu0 %v7239
    %7277 = vmatprep.subr.bf16.mxu0 %v7236
    %7278 = vmatpush1.bf16.msra.mxu0 %v7235
    %7279 = vmatprep.subr.bf16.mxu0 %v7232
    %7280 = vmatpush1.bf16.msra.mxu0 %v7231
    %7281 = vmatprep.subr.bf16.mxu0 %v7228
    %7282 = vmatpush1.bf16.msra.mxu0 %v7227
    %7283 = vmatprep.subr.bf16.mxu0 %v7224
    %7284 = vmatpush1.bf16.msra.mxu0 %v7223
    %7285 = vmatprep.subr.bf16.mxu0 %v7220
    %7286 = vmatpush1.bf16.msra.mxu0 %v7219
    %7287 = vmatprep.subr.bf16.mxu0 %v7216
    %7288 = vmatpush1.bf16.msra.mxu0 %v7215
    %7289 = vmatprep.subr.bf16.mxu0 %v7212
    %7290 = vmatpush1.bf16.msra.mxu0 %v7211
    %7291 = vmatprep.subr.bf16.mxu0 0
    %7292 = vmatpush2.bf16.msra.mxu0 0
    %7293 = vmatprep.subr.bf16.mxu0 0
    %7294 = vmatpush2.bf16.msra.mxu0 0
    %7295 = vmatprep.subr.bf16.mxu0 0
    %7296 = vmatpush2.bf16.msra.mxu0 0
    %7297 = vmatprep.subr.bf16.mxu0 0
    %7298 = vmatpush2.bf16.msra.mxu0 0
    %7299 = vmatprep.subr.bf16.mxu0 0
    %7300 = vmatpush2.bf16.msra.mxu0 0
    %7301 = vmatprep.subr.bf16.mxu0 0
    %7302 = vmatpush2.bf16.msra.mxu0 0
    %7303 = vmatprep.subr.bf16.mxu0 0
    %7304 = vmatpush2.bf16.msra.mxu0 0
    %7305 = vmatprep.subr.bf16.mxu0 0
    %7306 = vmatpush2.bf16.msra.mxu0 0
    %7307 = vmatprep.mubr.bf16.mxu0 0
    %7308 = vmatmul.mubr.bf16.gmra.mxu0 %v7060
    %v7309 = vpop.f32.mrf.mxu0
    %v7310 = vadd.f32 %v7098, %v7309
    %v7311 = vpop.f32.mrf.mxu0
    %v7312 = vadd.f32 %v7102, %v7311
    %v7313 = vpop.f32.mrf.mxu0
    %v7314 = vpop.f32.mrf.mxu0
    %7315 = vdwg.mxu0
    %7316 = vmatprep.subr.bf16.mxu0 %v7242
    %7317 = vmatpush1.bf16.msra.mxu0 %v7241
    %7318 = vmatprep.subr.bf16.mxu0 %v7238
    %7319 = vmatpush1.bf16.msra.mxu0 %v7237
    %7320 = vmatprep.subr.bf16.mxu0 %v7234
    %7321 = vmatpush1.bf16.msra.mxu0 %v7233
    %7322 = vmatprep.subr.bf16.mxu0 %v7230
    %7323 = vmatpush1.bf16.msra.mxu0 %v7229
    %7324 = vmatprep.subr.bf16.mxu0 %v7226
    %7325 = vmatpush1.bf16.msra.mxu0 %v7225
    %7326 = vmatprep.subr.bf16.mxu0 %v7222
    %7327 = vmatpush1.bf16.msra.mxu0 %v7221
    %7328 = vmatprep.subr.bf16.mxu0 %v7218
    %7329 = vmatpush1.bf16.msra.mxu0 %v7217
    %7330 = vmatprep.subr.bf16.mxu0 %v7214
    %7331 = vmatpush1.bf16.msra.mxu0 %v7213
    %7332 = vmatprep.subr.bf16.mxu0 0
    %7333 = vmatpush2.bf16.msra.mxu0 0
    %7334 = vmatprep.subr.bf16.mxu0 0
    %7335 = vmatpush2.bf16.msra.mxu0 0
    %7336 = vmatprep.subr.bf16.mxu0 0
    %7337 = vmatpush2.bf16.msra.mxu0 0
    %7338 = vmatprep.subr.bf16.mxu0 0
    %7339 = vmatpush2.bf16.msra.mxu0 0
    %7340 = vmatprep.subr.bf16.mxu0 0
    %7341 = vmatpush2.bf16.msra.mxu0 0
    %7342 = vmatprep.subr.bf16.mxu0 0
    %7343 = vmatpush2.bf16.msra.mxu0 0
    %7344 = vmatprep.subr.bf16.mxu0 0
    %7345 = vmatpush2.bf16.msra.mxu0 0
    %7346 = vmatprep.subr.bf16.mxu0 0
    %7347 = vmatpush2.bf16.msra.mxu0 0
    %7348 = vmatprep.mubr.bf16.mxu0 0
    %7349 = vmatmul.mubr.bf16.gmra.mxu0 %v7060
    %v7350 = vpop.f32.mrf.mxu0
    %v7351 = vadd.f32 %v7106, %v7350
    %v7352 = vpop.f32.mrf.mxu0
    %v7353 = vadd.f32 %v7110, %v7352
    %v7354 = vpop.f32.mrf.mxu0
    %v7355 = vpop.f32.mrf.mxu0
    %7356 = vdwg.mxu0
    %v7357 = vld [vmem:[#allocation5] sm:$0xff]
    %v7358 = vpack.c.bf16 %v7357, %v7357
    %v7359 = vld [vmem:[#allocation12] sm:$0xff]
    %v7360 = vld [vmem:[#allocation12 + $0x8] sm:$0xff]
    %v7361 = vld [vmem:[#allocation12 + $0x10] sm:$0xff]
    %v7362 = vld [vmem:[#allocation12 + $0x18] sm:$0xff]
    %v7363 = vld [vmem:[#allocation12 + $0x20] sm:$0xff]
    %v7364 = vld [vmem:[#allocation12 + $0x28] sm:$0xff]
    %v7365 = vld [vmem:[#allocation12 + $0x30] sm:$0xff]
    %v7366 = vld [vmem:[#allocation12 + $0x38] sm:$0xff]
    %v7367 = vld [vmem:[#allocation12 + $0x40] sm:$0xff]
    %v7368 = vld [vmem:[#allocation12 + $0x48] sm:$0xff]
    %v7369 = vld [vmem:[#allocation12 + $0x50] sm:$0xff]
    %v7370 = vld [vmem:[#allocation12 + $0x58] sm:$0xff]
    %v7371 = vld [vmem:[#allocation12 + $0x60] sm:$0xff]
    %v7372 = vld [vmem:[#allocation12 + $0x68] sm:$0xff]
    %v7373 = vld [vmem:[#allocation12 + $0x70] sm:$0xff]
    %v7374 = vld [vmem:[#allocation12 + $0x78] sm:$0xff]
    %v7375 = vld [vmem:[#allocation12 + $0x80] sm:$0xff]
    %v7376 = vld [vmem:[#allocation12 + $0x88] sm:$0xff]
    %v7377 = vld [vmem:[#allocation12 + $0x90] sm:$0xff]
    %v7378 = vld [vmem:[#allocation12 + $0x98] sm:$0xff]
    %v7379 = vld [vmem:[#allocation12 + $0xa0] sm:$0xff]
    %v7380 = vld [vmem:[#allocation12 + $0xa8] sm:$0xff]
    %v7381 = vld [vmem:[#allocation12 + $0xb0] sm:$0xff]
    %v7382 = vld [vmem:[#allocation12 + $0xb8] sm:$0xff]
    %v7383 = vld [vmem:[#allocation12 + $0xc0] sm:$0xff]
    %v7384 = vld [vmem:[#allocation12 + $0xc8] sm:$0xff]
    %v7385 = vld [vmem:[#allocation12 + $0xd0] sm:$0xff]
    %v7386 = vld [vmem:[#allocation12 + $0xd8] sm:$0xff]
    %v7387 = vld [vmem:[#allocation12 + $0xe0] sm:$0xff]
    %v7388 = vld [vmem:[#allocation12 + $0xe8] sm:$0xff]
    %v7389 = vld [vmem:[#allocation12 + $0xf0] sm:$0xff]
    %v7390 = vld [vmem:[#allocation12 + $0xf8] sm:$0xff]
    %v7423 = vunpack.c.l.b16 %v7359
    %v7424 = vunpack.c.h.b16 %v7359
    %v7425 = vunpack.c.l.b16 %v7360
    %v7426 = vunpack.c.h.b16 %v7360
    %v7427 = vunpack.c.l.b16 %v7361
    %v7428 = vunpack.c.h.b16 %v7361
    %v7429 = vunpack.c.l.b16 %v7362
    %v7430 = vunpack.c.h.b16 %v7362
    %v7431 = vunpack.c.l.b16 %v7363
    %v7432 = vunpack.c.h.b16 %v7363
    %v7433 = vunpack.c.l.b16 %v7364
    %v7434 = vunpack.c.h.b16 %v7364
    %v7435 = vunpack.c.l.b16 %v7365
    %v7436 = vunpack.c.h.b16 %v7365
    %v7437 = vunpack.c.l.b16 %v7366
    %v7438 = vunpack.c.h.b16 %v7366
    %v7439 = vunpack.c.l.b16 %v7367
    %v7440 = vunpack.c.h.b16 %v7367
    %v7441 = vunpack.c.l.b16 %v7368
    %v7442 = vunpack.c.h.b16 %v7368
    %v7443 = vunpack.c.l.b16 %v7369
    %v7444 = vunpack.c.h.b16 %v7369
    %v7445 = vunpack.c.l.b16 %v7370
    %v7446 = vunpack.c.h.b16 %v7370
    %v7447 = vunpack.c.l.b16 %v7371
    %v7448 = vunpack.c.h.b16 %v7371
    %v7449 = vunpack.c.l.b16 %v7372
    %v7450 = vunpack.c.h.b16 %v7372
    %v7451 = vunpack.c.l.b16 %v7373
    %v7452 = vunpack.c.h.b16 %v7373
    %v7453 = vunpack.c.l.b16 %v7374
    %v7454 = vunpack.c.h.b16 %v7374
    %v7455 = vunpack.c.l.b16 %v7375
    %v7456 = vunpack.c.h.b16 %v7375
    %v7457 = vunpack.c.l.b16 %v7376
    %v7458 = vunpack.c.h.b16 %v7376
    %v7459 = vunpack.c.l.b16 %v7377
    %v7460 = vunpack.c.h.b16 %v7377
    %v7461 = vunpack.c.l.b16 %v7378
    %v7462 = vunpack.c.h.b16 %v7378
    %v7463 = vunpack.c.l.b16 %v7379
    %v7464 = vunpack.c.h.b16 %v7379
    %v7465 = vunpack.c.l.b16 %v7380
    %v7466 = vunpack.c.h.b16 %v7380
    %v7467 = vunpack.c.l.b16 %v7381
    %v7468 = vunpack.c.h.b16 %v7381
    %v7469 = vunpack.c.l.b16 %v7382
    %v7470 = vunpack.c.h.b16 %v7382
    %v7471 = vunpack.c.l.b16 %v7383
    %v7472 = vunpack.c.h.b16 %v7383
    %v7473 = vunpack.c.l.b16 %v7384
    %v7474 = vunpack.c.h.b16 %v7384
    %v7475 = vunpack.c.l.b16 %v7385
    %v7476 = vunpack.c.h.b16 %v7385
    %v7477 = vunpack.c.l.b16 %v7386
    %v7478 = vunpack.c.h.b16 %v7386
    %v7479 = vunpack.c.l.b16 %v7387
    %v7480 = vunpack.c.h.b16 %v7387
    %v7481 = vunpack.c.l.b16 %v7388
    %v7482 = vunpack.c.h.b16 %v7388
    %v7483 = vunpack.c.l.b16 %v7389
    %v7484 = vunpack.c.h.b16 %v7389
    %v7485 = vunpack.c.l.b16 %v7390
    %v7486 = vunpack.c.h.b16 %v7390
    %v7487 = vpack.c.b16 %v7427, %v7423
    %v7488 = vpack.c.b16 %v7428, %v7424
    %v7489 = vpack.c.b16 %v7429, %v7425
    %v7490 = vpack.c.b16 %v7430, %v7426
    %v7491 = vpack.c.b16 %v7435, %v7431
    %v7492 = vpack.c.b16 %v7436, %v7432
    %v7493 = vpack.c.b16 %v7437, %v7433
    %v7494 = vpack.c.b16 %v7438, %v7434
    %v7495 = vpack.c.b16 %v7443, %v7439
    %v7496 = vpack.c.b16 %v7444, %v7440
    %v7497 = vpack.c.b16 %v7445, %v7441
    %v7498 = vpack.c.b16 %v7446, %v7442
    %v7499 = vpack.c.b16 %v7451, %v7447
    %v7500 = vpack.c.b16 %v7452, %v7448
    %v7501 = vpack.c.b16 %v7453, %v7449
    %v7502 = vpack.c.b16 %v7454, %v7450
    %v7503 = vpack.c.b16 %v7459, %v7455
    %v7504 = vpack.c.b16 %v7460, %v7456
    %v7505 = vpack.c.b16 %v7461, %v7457
    %v7506 = vpack.c.b16 %v7462, %v7458
    %v7507 = vpack.c.b16 %v7467, %v7463
    %v7508 = vpack.c.b16 %v7468, %v7464
    %v7509 = vpack.c.b16 %v7469, %v7465
    %v7510 = vpack.c.b16 %v7470, %v7466
    %v7511 = vpack.c.b16 %v7475, %v7471
    %v7512 = vpack.c.b16 %v7476, %v7472
    %v7513 = vpack.c.b16 %v7477, %v7473
    %v7514 = vpack.c.b16 %v7478, %v7474
    %v7515 = vpack.c.b16 %v7483, %v7479
    %v7516 = vpack.c.b16 %v7484, %v7480
    %v7517 = vpack.c.b16 %v7485, %v7481
    %v7518 = vpack.c.b16 %v7486, %v7482
    %7551 = vmatprep.subr.bf16.mxu0 %v7516
    %7552 = vmatpush1.bf16.msra.mxu0 %v7515
    %7553 = vmatprep.subr.bf16.mxu0 %v7512
    %7554 = vmatpush1.bf16.msra.mxu0 %v7511
    %7555 = vmatprep.subr.bf16.mxu0 %v7508
    %7556 = vmatpush1.bf16.msra.mxu0 %v7507
    %7557 = vmatprep.subr.bf16.mxu0 %v7504
    %7558 = vmatpush1.bf16.msra.mxu0 %v7503
    %7559 = vmatprep.subr.bf16.mxu0 %v7500
    %7560 = vmatpush1.bf16.msra.mxu0 %v7499
    %7561 = vmatprep.subr.bf16.mxu0 %v7496
    %7562 = vmatpush1.bf16.msra.mxu0 %v7495
    %7563 = vmatprep.subr.bf16.mxu0 %v7492
    %7564 = vmatpush1.bf16.msra.mxu0 %v7491
    %7565 = vmatprep.subr.bf16.mxu0 %v7488
    %7566 = vmatpush1.bf16.msra.mxu0 %v7487
    %7567 = vmatprep.subr.bf16.mxu0 0
    %7568 = vmatpush2.bf16.msra.mxu0 0
    %7569 = vmatprep.subr.bf16.mxu0 0
    %7570 = vmatpush2.bf16.msra.mxu0 0
    %7571 = vmatprep.subr.bf16.mxu0 0
    %7572 = vmatpush2.bf16.msra.mxu0 0
    %7573 = vmatprep.subr.bf16.mxu0 0
    %7574 = vmatpush2.bf16.msra.mxu0 0
    %7575 = vmatprep.subr.bf16.mxu0 0
    %7576 = vmatpush2.bf16.msra.mxu0 0
    %7577 = vmatprep.subr.bf16.mxu0 0
    %7578 = vmatpush2.bf16.msra.mxu0 0
    %7579 = vmatprep.subr.bf16.mxu0 0
    %7580 = vmatpush2.bf16.msra.mxu0 0
    %7581 = vmatprep.subr.bf16.mxu0 0
    %7582 = vmatpush2.bf16.msra.mxu0 0
    %7583 = vmatprep.mubr.bf16.mxu0 0
    %7584 = vmatmul.mubr.bf16.gmra.mxu0 %v7358
    %v7585 = vpop.f32.mrf.mxu0
    %v7586 = vadd.f32 0.0, %v7585
    %v7587 = vpop.f32.mrf.mxu0
    %v7588 = vadd.f32 0.0, %v7587
    %v7589 = vpop.f32.mrf.mxu0
    %v7590 = vpop.f32.mrf.mxu0
    %7591 = vdwg.mxu0
    %7592 = vmatprep.subr.bf16.mxu0 %v7518
    %7593 = vmatpush1.bf16.msra.mxu0 %v7517
    %7594 = vmatprep.subr.bf16.mxu0 %v7514
    %7595 = vmatpush1.bf16.msra.mxu0 %v7513
    %7596 = vmatprep.subr.bf16.mxu0 %v7510
    %7597 = vmatpush1.bf16.msra.mxu0 %v7509
    %7598 = vmatprep.subr.bf16.mxu0 %v7506
    %7599 = vmatpush1.bf16.msra.mxu0 %v7505
    %7600 = vmatprep.subr.bf16.mxu0 %v7502
    %7601 = vmatpush1.bf16.msra.mxu0 %v7501
    %7602 = vmatprep.subr.bf16.mxu0 %v7498
    %7603 = vmatpush1.bf16.msra.mxu0 %v7497
    %7604 = vmatprep.subr.bf16.mxu0 %v7494
    %7605 = vmatpush1.bf16.msra.mxu0 %v7493
    %7606 = vmatprep.subr.bf16.mxu0 %v7490
    %7607 = vmatpush1.bf16.msra.mxu0 %v7489
    %7608 = vmatprep.subr.bf16.mxu0 0
    %7609 = vmatpush2.bf16.msra.mxu0 0
    %7610 = vmatprep.subr.bf16.mxu0 0
    %7611 = vmatpush2.bf16.msra.mxu0 0
    %7612 = vmatprep.subr.bf16.mxu0 0
    %7613 = vmatpush2.bf16.msra.mxu0 0
    %7614 = vmatprep.subr.bf16.mxu0 0
    %7615 = vmatpush2.bf16.msra.mxu0 0
    %7616 = vmatprep.subr.bf16.mxu0 0
    %7617 = vmatpush2.bf16.msra.mxu0 0
    %7618 = vmatprep.subr.bf16.mxu0 0
    %7619 = vmatpush2.bf16.msra.mxu0 0
    %7620 = vmatprep.subr.bf16.mxu0 0
    %7621 = vmatpush2.bf16.msra.mxu0 0
    %7622 = vmatprep.subr.bf16.mxu0 0
    %7623 = vmatpush2.bf16.msra.mxu0 0
    %7624 = vmatprep.mubr.bf16.mxu0 0
    %7625 = vmatmul.mubr.bf16.gmra.mxu0 %v7358
    %v7626 = vpop.f32.mrf.mxu0
    %v7627 = vadd.f32 0.0, %v7626
    %v7628 = vpop.f32.mrf.mxu0
    %v7629 = vadd.f32 0.0, %v7628
    %v7630 = vpop.f32.mrf.mxu0
    %v7631 = vpop.f32.mrf.mxu0
    %7632 = vdwg.mxu0
    %v7633 = vadd.f32 %v7310, %v7586
    %v7634 = vadd.f32 %v7312, %v7588
    %v7635 = vadd.f32 %v7351, %v7627
    %v7636 = vadd.f32 %v7353, %v7629
    %v7637 = vld [vmem:[#allocation6] sm:$0xff]
    %v7638 = vxor.u32 %v7633, 2147483648
    %v7639 = vxor.u32 %v7634, 2147483648
    %v7640 = vxor.u32 %v7635, 2147483648
    %v7641 = vmul.f32 %v7638, 1.442695
    %v7642 = vpow.pop %v7641
    %v7643 = vmul.f32 %v7639, 1.442695
    %v7644 = vpow.pop %v7643
    %v7645 = vmul.f32 %v7640, 1.442695
    %v7646 = vpow.pop %v7645
    %v7647 = vadd.f32 %v7642, 1.0
    %v7648 = vadd.f32 %v7644, 1.0
    %v7649 = vadd.f32 %v7646, 1.0
    %v7650 = vrcp.pop %v7647
    %v7651 = vmul.f32 1.0, %v7650
    %v7652 = vrcp.pop %v7648
    %v7653 = vmul.f32 1.0, %v7652
    %v7654 = vrcp.pop %v7649
    %v7655 = vmul.f32 1.0, %v7654
    %v7656 = vtanh.pop %v7636
    %v7657 = vmul.f32 %v7653, %v7637
    %v7658 = vmul.f32 %v7651, %v7656
    %v7659 = vadd.f32 %v7657, %v7658
    %v7660 = vtanh.pop %v7659
    %v7661 = vmul.f32 %v7655, %v7660
    %v7662 = vpack.c.bf16 %v7661, %v7661
    %v7663 = vld [vmem:[%s7] sm:$0xf]
    %v7664 = vld [vmem:[%s7 + $0x4] sm:$0xf]
    %v7665 = vld [vmem:[%s7 + $0x8] sm:$0xf]
    %v7666 = vld [vmem:[%s7 + $0xc] sm:$0xf]
    %v7667 = vld [vmem:[%s7 + $0x10] sm:$0xf]
    %v7668 = vld [vmem:[%s7 + $0x14] sm:$0xf]
    %v7669 = vld [vmem:[%s7 + $0x18] sm:$0xf]
    %v7670 = vld [vmem:[%s7 + $0x1c] sm:$0xf]
    %v7671 = vld [vmem:[%s7 + $0x20] sm:$0xf]
    %v7672 = vld [vmem:[%s7 + $0x24] sm:$0xf]
    %v7673 = vld [vmem:[%s7 + $0x28] sm:$0xf]
    %v7674 = vld [vmem:[%s7 + $0x2c] sm:$0xf]
    %v7675 = vld [vmem:[%s7 + $0x30] sm:$0xf]
    %v7676 = vld [vmem:[%s7 + $0x34] sm:$0xf]
    %v7677 = vld [vmem:[%s7 + $0x38] sm:$0xf]
    %v7678 = vld [vmem:[%s7 + $0x3c] sm:$0xf]
    %v7679 = vld [vmem:[%s8] sm:$0x1]
    %v7681 = vlaneseq
    %v7682 = vshrl.u32 %v7681, 7
    %v7683 = vsub.s32 0, %v7682
    %v7684 = vrot.slane %v7679, %v7683
    %v7702 = vunpack.c.l.b16 %v7663
    %v7703 = vunpack.c.l.b16 %v7664
    %v7704 = vunpack.c.l.b16 %v7665
    %v7705 = vunpack.c.l.b16 %v7666
    %v7706 = vunpack.c.l.b16 %v7667
    %v7707 = vunpack.c.l.b16 %v7668
    %v7708 = vunpack.c.l.b16 %v7669
    %v7709 = vunpack.c.l.b16 %v7670
    %v7710 = vunpack.c.l.b16 %v7671
    %v7711 = vunpack.c.l.b16 %v7672
    %v7712 = vunpack.c.l.b16 %v7673
    %v7713 = vunpack.c.l.b16 %v7674
    %v7714 = vunpack.c.l.b16 %v7675
    %v7715 = vunpack.c.l.b16 %v7676
    %v7716 = vunpack.c.l.b16 %v7677
    %v7717 = vunpack.c.l.b16 %v7678
    %v7718 = vpack.c.b16 %v7703, %v7702
    %v7719 = vpack.c.b16 %v7705, %v7704
    %v7720 = vpack.c.b16 %v7707, %v7706
    %v7721 = vpack.c.b16 %v7709, %v7708
    %v7722 = vpack.c.b16 %v7711, %v7710
    %v7723 = vpack.c.b16 %v7713, %v7712
    %v7724 = vpack.c.b16 %v7715, %v7714
    %v7725 = vpack.c.b16 %v7717, %v7716
    %7734 = vmatprep.subr.bf16.mxu0 0
    %7735 = vmatpush1.bf16.msra.mxu0 %v7725
    %7736 = vmatprep.subr.bf16.mxu0 0
    %7737 = vmatpush1.bf16.msra.mxu0 %v7724
    %7738 = vmatprep.subr.bf16.mxu0 0
    %7739 = vmatpush1.bf16.msra.mxu0 %v7723
    %7740 = vmatprep.subr.bf16.mxu0 0
    %7741 = vmatpush1.bf16.msra.mxu0 %v7722
    %7742 = vmatprep.subr.bf16.mxu0 0
    %7743 = vmatpush1.bf16.msra.mxu0 %v7721
    %7744 = vmatprep.subr.bf16.mxu0 0
    %7745 = vmatpush1.bf16.msra.mxu0 %v7720
    %7746 = vmatprep.subr.bf16.mxu0 0
    %7747 = vmatpush1.bf16.msra.mxu0 %v7719
    %7748 = vmatprep.subr.bf16.mxu0 0
    %7749 = vmatpush1.bf16.msra.mxu0 %v7718
    %7750 = vmatprep.subr.bf16.mxu0 0
    %7751 = vmatpush2.bf16.msra.mxu0 0
    %7752 = vmatprep.subr.bf16.mxu0 0
    %7753 = vmatpush2.bf16.msra.mxu0 0
    %7754 = vmatprep.subr.bf16.mxu0 0
    %7755 = vmatpush2.bf16.msra.mxu0 0
    %7756 = vmatprep.subr.bf16.mxu0 0
    %7757 = vmatpush2.bf16.msra.mxu0 0
    %7758 = vmatprep.subr.bf16.mxu0 0
    %7759 = vmatpush2.bf16.msra.mxu0 0
    %7760 = vmatprep.subr.bf16.mxu0 0
    %7761 = vmatpush2.bf16.msra.mxu0 0
    %7762 = vmatprep.subr.bf16.mxu0 0
    %7763 = vmatpush2.bf16.msra.mxu0 0
    %7764 = vmatprep.subr.bf16.mxu0 0
    %7765 = vmatpush2.bf16.msra.mxu0 0
    %7766 = vmatprep.mubr.bf16.mxu0 0
    %7767 = vmatmul.mubr.bf16.gmra.mxu0 %v7662
    %v7768 = vpop.f32.mrf.mxu0
    %v7769 = vadd.f32 %v7684, %v7768
    %v7770 = vpop.f32.mrf.mxu0
    %v7771 = vpop.f32.mrf.mxu0
    %v7772 = vpop.f32.mrf.mxu0
    %7773 = vdwg.mxu0
    %v7774 = vmax.f32 %v7769, 0.0
    %v7775 = vpack.c.bf16 %v7774, %v7774
    %v7776 = vld [vmem:[%s9] sm:$0xf]
    %v7777 = vld [vmem:[%s9 + $0x4] sm:$0xf]
    %v7778 = vld [vmem:[%s9 + $0x8] sm:$0xf]
    %v7779 = vld [vmem:[%s9 + $0xc] sm:$0xf]
    %v7780 = vld [vmem:[%s9 + $0x10] sm:$0xf]
    %v7781 = vld [vmem:[%s9 + $0x14] sm:$0xf]
    %v7782 = vld [vmem:[%s9 + $0x18] sm:$0xf]
    %v7783 = vld [vmem:[%s9 + $0x1c] sm:$0xf]
    %v7784 = vld [vmem:[%s10] sm:$0x1]
    %v7786 = vlaneseq
    %v7787 = vshrl.u32 %v7786, 7
    %v7788 = vsub.s32 0, %v7787
    %v7789 = vrot.slane %v7784, %v7788
    %v7799 = vunpack.c.l.b16 %v7776
    %v7800 = vunpack.c.l.b16 %v7777
    %v7801 = vunpack.c.l.b16 %v7778
    %v7802 = vunpack.c.l.b16 %v7779
    %v7803 = vunpack.c.l.b16 %v7780
    %v7804 = vunpack.c.l.b16 %v7781
    %v7805 = vunpack.c.l.b16 %v7782
    %v7806 = vunpack.c.l.b16 %v7783
    %v7807 = vpack.c.b16 %v7800, %v7799
    %v7808 = vpack.c.b16 %v7802, %v7801
    %v7809 = vpack.c.b16 %v7804, %v7803
    %v7810 = vpack.c.b16 %v7806, %v7805
    %vm7815 = vcmask 523264
    %v7817 = vsel %vm7815, %v7775, 0
    %7819 = vmatprep.subr.bf16.mxu0 0
    %7820 = vmatpush1.bf16.msra.mxu0 0
    %7821 = vmatprep.subr.bf16.mxu0 0
    %7822 = vmatpush1.bf16.msra.mxu0 0
    %7823 = vmatprep.subr.bf16.mxu0 0
    %7824 = vmatpush1.bf16.msra.mxu0 0
    %7825 = vmatprep.subr.bf16.mxu0 0
    %7826 = vmatpush1.bf16.msra.mxu0 0
    %7827 = vmatprep.subr.bf16.mxu0 0
    %7828 = vmatpush1.bf16.msra.mxu0 %v7810
    %7829 = vmatprep.subr.bf16.mxu0 0
    %7830 = vmatpush1.bf16.msra.mxu0 %v7809
    %7831 = vmatprep.subr.bf16.mxu0 0
    %7832 = vmatpush1.bf16.msra.mxu0 %v7808
    %7833 = vmatprep.subr.bf16.mxu0 0
    %7834 = vmatpush1.bf16.msra.mxu0 %v7807
    %7835 = vmatprep.subr.bf16.mxu0 0
    %7836 = vmatpush2.bf16.msra.mxu0 0
    %7837 = vmatprep.subr.bf16.mxu0 0
    %7838 = vmatpush2.bf16.msra.mxu0 0
    %7839 = vmatprep.subr.bf16.mxu0 0
    %7840 = vmatpush2.bf16.msra.mxu0 0
    %7841 = vmatprep.subr.bf16.mxu0 0
    %7842 = vmatpush2.bf16.msra.mxu0 0
    %7843 = vmatprep.subr.bf16.mxu0 0
    %7844 = vmatpush2.bf16.msra.mxu0 0
    %7845 = vmatprep.subr.bf16.mxu0 0
    %7846 = vmatpush2.bf16.msra.mxu0 0
    %7847 = vmatprep.subr.bf16.mxu0 0
    %7848 = vmatpush2.bf16.msra.mxu0 0
    %7849 = vmatprep.subr.bf16.mxu0 0
    %7850 = vmatpush2.bf16.msra.mxu0 0
    %7851 = vmatprep.mubr.bf16.mxu0 0
    %7852 = vmatmul.mubr.bf16.gmra.mxu0 %v7817
    %v7853 = vpop.f32.mrf.mxu0
    %v7854 = vadd.f32 %v7789, %v7853
    %v7855 = vpop.f32.mrf.mxu0
    %v7856 = vpop.f32.mrf.mxu0
    %v7857 = vpop.f32.mrf.mxu0
    %7858 = vdwg.mxu0
    %7859 = vst [vmem:[#allocation13] sm:$0xff] %v7854
    // Predicated region
    $region58: #{tpu_custom_call.1} parent=1 // pred_check
      _
    $region59: #{tpu_custom_call.1} parent=1 // pred_check_branch
      %7861 = sbr.rel (0) target = $region61
    $region60: #{tpu_custom_call.1} parent=1 // pred_region
      %s7863 = ssub.s32 128, 128
      %7864 = vsyncadd [#allocation9], %s7863
      %s7866 = sshll.u32 [#allocation13], 4
      %s7867 = int_to_ptr.vmem [resolvable:$true] %s7866
      %7869 = dma.vmem_to_hbm [thread:$0]  %s7867, 128, %s11, [#allocation9]
    $region61: #{tpu_custom_call.1} parent=1 // pred_fallthru
      _
    // Predicated region
    $region62: #{tpu_custom_call.1} parent=1 // pred_check
      _
    $region63: #{tpu_custom_call.1} parent=1 // pred_check_branch
      %7871 = sbr.rel (0) target = $region65
    $region64: #{tpu_custom_call.1} parent=1 // pred_region
      %7872 = dma.done [#allocation9], 128
    $region65: #{tpu_custom_call.1} parent=1 // pred_fallthru
      _
    %7873 = vsyncpa [#allocation8], 1
    %7874 = vsyncpa [#allocation11], 1
    %7875 = vsyncpa [#allocation9], 1

</llo_original>
